<compile_context>
chip_gen: v6e
topology: v6e:2x2x1
jax: 0.10.0
libtpu: 0.0.40
codegen_flags: <defaults>
</compile_context>

<pallas_src>
import functools
import math

import numpy as np
import jax
import jax.numpy as jnp
from jax import lax
from jax.experimental import pallas as pl
from jax.experimental.pallas import tpu as pltpu


KSIZES = (4, 3, 3, 3, 3, 3)
STRIDES = (2, 2, 2, 2, 1, 1)


# ----------------------------------------------------------------------------
# Pallas kernel A: conv1 as a single lane-dense matmul per batch element.
#   cols_ref: (1, K1, M1) bf16   im2col of the input image (rows = kh,kw,ci)
#   w_ref:    (C1, K1)    bf16   resident weight
#   b_ref:    (C1, 1)     f32    resident bias
#   o_ref:    (1, C1, M1) bf16   lane-dense activation
# ----------------------------------------------------------------------------
def _conv1_kernel(cols_ref, w_ref, b_ref, o_ref):
    acc = jnp.dot(w_ref[...], cols_ref[0], preferred_element_type=jnp.float32)
    acc = jnp.maximum(acc + b_ref[...], 0.0)
    o_ref[0] = acc.astype(o_ref.dtype)


def conv1_forward(cols1, w_row, b_col):
    n, k1, m1 = cols1.shape
    c1 = w_row.shape[0]
    return pl.pallas_call(
        _conv1_kernel,
        out_shape=jax.ShapeDtypeStruct((n, c1, m1), jnp.bfloat16),
        grid=(n,),
        in_specs=[
            pl.BlockSpec((1, k1, m1), lambda i: (i, 0, 0)),
            pl.BlockSpec((c1, k1), lambda i: (0, 0)),   # resident weight
            pl.BlockSpec((c1, 1), lambda i: (0, 0)),    # resident bias
        ],
        out_specs=pl.BlockSpec((1, c1, m1), lambda i: (i, 0, 0)),
        compiler_params=pltpu.CompilerParams(
            dimension_semantics=("parallel",)),
    )(cols1, w_row, b_col)


# ----------------------------------------------------------------------------
# Pallas kernel B: fused tail = conv2 -> conv3 -> conv4 -> conv5 -> conv6
#                               -> fc1 -> fc2, all per batch element.
# conv3..conv6 use per-(kh,kw) selection-matrix gathers:
#   cols_tap = act @ S[tap]          (Cin, Min) @ (Min, Mout)   exact gather
#   acc     += W[tap] @ cols_tap     (Cout, Cin) @ (Cin, Mout)
# ----------------------------------------------------------------------------
def _tail_kernel(cols2_ref,
                 w2_ref, b2_ref,
                 s3_ref, w3_ref, b3_ref,
                 s4_ref, w4_ref, b4_ref,
                 s5_ref, w5_ref, b5_ref,
                 s6_ref, w6_ref, b6_ref,
                 wf1_ref, bf1_ref, wf2_ref, bf2_ref,
                 o_ref):
    # conv2 (im2col columns supplied from outside): (8, 529)
    a = jnp.dot(w2_ref[...], cols2_ref[0], preferred_element_type=jnp.float32)
    a = jnp.maximum(a + b2_ref[...], 0.0).astype(jnp.bfloat16)

    def conv_taps(act, s_ref, w_ref, b_ref):
        n_taps = s_ref.shape[0]
        cout = w_ref.shape[1]
        m_out = s_ref.shape[2]
        acc = jnp.zeros((cout, m_out), jnp.float32)
        for t in range(n_taps):                      # static unroll (9 taps)
            g = jnp.dot(act, s_ref[t], preferred_element_type=jnp.float32)
            acc = acc + jnp.dot(w_ref[t], g.astype(jnp.bfloat16),
                                preferred_element_type=jnp.float32)
        return jnp.maximum(acc + b_ref[...], 0.0).astype(jnp.bfloat16)

    a = conv_taps(a, s3_ref, w3_ref, b3_ref)   # (16, 121)
    a = conv_taps(a, s4_ref, w4_ref, b4_ref)   # (32, 25)
    a = conv_taps(a, s5_ref, w5_ref, b5_ref)   # (64, 9)
    a = conv_taps(a, s6_ref, w6_ref, b6_ref)   # (128, 1)

    h = jnp.dot(wf1_ref[...], a, preferred_element_type=jnp.float32)
    h = jnp.maximum(h + bf1_ref[...], 0.0).astype(jnp.bfloat16)     # (100, 1)
    out = jnp.dot(wf2_ref[...], h, preferred_element_type=jnp.float32)
    o_ref[0] = (out + bf2_ref[...]).astype(o_ref.dtype)             # (1, 1)


def tail_forward(cols2, kp):
    n, k2, m2 = cols2.shape
    operands = [kp["w2row"], kp["b2"],
                kp["s3"], kp["w3"], kp["b3"],
                kp["s4"], kp["w4"], kp["b4"],
                kp["s5"], kp["w5"], kp["b5"],
                kp["s6"], kp["w6"], kp["b6"],
                kp["wf1"], kp["bf1"], kp["wf2"], kp["bf2"]]

    def full_spec(arr):
        nd = arr.ndim
        return pl.BlockSpec(arr.shape, lambda i, _nd=nd: (0,) * _nd)

    in_specs = ([pl.BlockSpec((1, k2, m2), lambda i: (i, 0, 0))]
                + [full_spec(op) for op in operands])
    out = pl.pallas_call(
        _tail_kernel,
        out_shape=jax.ShapeDtypeStruct((n, 1, 1), jnp.float32),
        grid=(n,),
        in_specs=in_specs,
        out_specs=pl.BlockSpec((1, 1, 1), lambda i: (i, 0, 0)),
        compiler_params=pltpu.CompilerParams(
            dimension_semantics=("parallel",)),
    )(cols2, *operands)
    return out.reshape(n, 1)


# ----------------------------------------------------------------------------
# XLA-side im2col (conv1 / conv2 only), batch-leading, rows ordered (kh,kw,ci)
# ----------------------------------------------------------------------------
def im2col_nchw(act, k, stride):
    n, c, h, w = act.shape
    ho = (h - k) // stride + 1
    wo = (w - k) // stride + 1
    parts = []
    for kh in range(k):
        for kw in range(k):
            p = act[:, :, kh:kh + stride * (ho - 1) + 1:stride,
                    kw:kw + stride * (wo - 1) + 1:stride]
            parts.append(p.reshape(n, c, ho * wo))
    return jnp.concatenate(parts, axis=1), ho, wo


# ----------------------------------------------------------------------------
# Prep-time parameter transforms (run once, not per forward)
# ----------------------------------------------------------------------------
def make_selection_stack(h, w, k, stride, dtype=jnp.bfloat16):
    """S[tap, p_in, q_out] = 1 iff input pixel p_in feeds output q_out at tap."""
    ho = (h - k) // stride + 1
    wo = (w - k) // stride + 1
    s = np.zeros((k * k, h * w, ho * wo), np.float32)
    q = np.arange(ho * wo)
    oh, ow = q // wo, q % wo
    for kh in range(k):
        for kw in range(k):
            p = (stride * oh + kh) * w + (stride * ow + kw)
            s[kh * k + kw, p, q] = 1.0
    return jnp.asarray(s, dtype)


def _row_major(w):
    cout, cin, k, _ = w.shape
    return jnp.transpose(w, (0, 2, 3, 1)).reshape(cout, k * k * cin).astype(
        jnp.bfloat16)


def _tap_major(w):
    cout, cin, k, _ = w.shape
    return jnp.transpose(w, (2, 3, 0, 1)).reshape(k * k, cout, cin).astype(
        jnp.bfloat16)


def _col_bias(b):
    return b.reshape(-1, 1).astype(jnp.float32)


def prepare_kernel_params(params, spatial):
    sizes = [spatial]
    for k, s in zip(KSIZES, STRIDES):
        sizes.append((sizes[-1] - k) // s + 1)   # 96,47,23,11,5,3,1
    convs = params["convs"]
    kp = {}
    kp["w1row"], kp["b1"] = _row_major(convs[0][0]), _col_bias(convs[0][1])
    kp["w2row"], kp["b2"] = _row_major(convs[1][0]), _col_bias(convs[1][1])
    for li in range(2, 6):                       # conv3..conv6
        w, b = convs[li]
        hin = sizes[li]
        kp[f"s{li + 1}"] = make_selection_stack(hin, hin, KSIZES[li],
                                                STRIDES[li])
        kp[f"w{li + 1}"] = _tap_major(w)
        kp[f"b{li + 1}"] = _col_bias(b)
    kp["wf1"] = params["fc1"][0].astype(jnp.bfloat16)
    kp["bf1"] = _col_bias(params["fc1"][1])
    kp["wf2"] = params["fc2"][0].astype(jnp.bfloat16)
    kp["bf2"] = _col_bias(params["fc2"][1])
    return kp


# ----------------------------------------------------------------------------
# Parameters (shapes / init exactly as ConvolutionalUnit.__init__)
# ----------------------------------------------------------------------------
def init_params(key, n_imgs):
    ch_in = int(math.log2(n_imgs))
    ch = [2 ** i for i in range(ch_in, ch_in + 7)]

    gain = math.sqrt(2.0)  # nn.init.calculate_gain('relu')
    convs = []
    for i in range(6):
        cin, cout, k = ch[i], ch[i + 1], KSIZES[i]
        fan_in, fan_out = cin * k * k, cout * k * k
        bound = gain * math.sqrt(6.0 / (fan_in + fan_out))  # xavier_uniform_
        key, sub = jax.random.split(key)
        w = jax.random.uniform(sub, (cout, cin, k, k), jnp.float32,
                               -bound, bound)
        b = jnp.full((cout,), 0.1, jnp.float32)              # constant_(0.1)
        convs.append((w, b))

    fcs = []
    for fin, fout in [(ch[-1], 100), (100, 1)]:
        bound = 1.0 / math.sqrt(fin)   # PyTorch default Linear init
        key, sub = jax.random.split(key)
        w = jax.random.uniform(sub, (fout, fin), jnp.float32, -bound, bound)
        key, sub = jax.random.split(key)
        b = jax.random.uniform(sub, (fout,), jnp.float32, -bound, bound)
        fcs.append((w, b))

    return {"convs": convs, "fc1": fcs[0], "fc2": fcs[1], "ch_out": ch[-1]}


# ----------------------------------------------------------------------------
# Forward passes
# ----------------------------------------------------------------------------
@jax.jit
def pallas_forward(x_nchw, kp):
    n = x_nchw.shape[0]
    xb = x_nchw.astype(jnp.bfloat16)
    cols1, ho1, wo1 = im2col_nchw(xb, KSIZES[0], STRIDES[0])   # (N, 32, 2209)
    act1 = conv1_forward(cols1, kp["w1row"], kp["b1"])         # (N, 4, 2209)
    act1 = act1.reshape(n, act1.shape[1], ho1, wo1)
    cols2, _, _ = im2col_nchw(act1, KSIZES[1], STRIDES[1])     # (N, 36, 529)
    return tail_forward(cols2, kp)                             # (N, 1)


def reference_forward(x_nchw, params):
    """Plain-JAX reference mirroring the kernel's bf16 rounding points."""
    bf = lambda t: t.astype(jnp.bfloat16).astype(jnp.float32)
    y = bf(x_nchw)
    for i, (w, b) in enumerate(params["convs"]):
        s = STRIDES[i]
        y = lax.conv_general_dilated(
            y, bf(w), window_strides=(s, s), padding="VALID",
            dimension_numbers=("NCHW", "OIHW", "NCHW"))
        y = bf(jnp.maximum(y + b[None, :, None, None], 0.0))
    y = y.reshape(-1, params["ch_out"])
    w1, b1 = params["fc1"]
    w2, b2 = params["fc2"]
    y = bf(jnp.maximum(y @ bf(w1).T + b1, 0.0))
    return y @ bf(w2).T + b2


# ----------------------------------------------------------------------------
if __name__ == "__main__":
    n_imgs = 2      # input channels = 2**log2(n_imgs) = n_imgs
    batch = 2
    spatial = 96    # 96 -> 47 -> 23 -> 11 -> 5 -> 3 -> 1 through the conv stack

    key = jax.random.PRNGKey(0)
    key, kx = jax.random.split(key)
    params = init_params(key, n_imgs)
    kparams = prepare_kernel_params(params, spatial)
    x = jax.random.normal(kx, (batch, n_imgs, spatial, spatial), jnp.float32)

    out = pallas_forward(x, kparams)
    out = jax.block_until_ready(out)
    assert out.shape == (batch, 1), out.shape

    ref = reference_forward(x, params)
    if not jnp.allclose(out, ref, atol=2e-3, rtol=2e-3):
        raise AssertionError(
            f"Pallas output mismatch: max abs err = "
            f"{jnp.max(jnp.abs(out - ref))}")

    print("KERNEL_OK")
</pallas_src>

<mosaic_0001>
module attributes {stable_mosaic.version = 11 : i64} {
  func.func @_conv1_kernel(%arg0: i32, %arg1: memref<1x32x2209xbf16, #tpu.memory_space<vmem>>, %arg2: memref<4x32xbf16, #tpu.memory_space<vmem>>, %arg3: memref<4x1xf32, #tpu.memory_space<vmem>>, %arg4: memref<1x4x2209xbf16, #tpu.memory_space<vmem>>) attributes {dimension_semantics = [#tpu.dimension_semantics<parallel>], iteration_bounds = array<i64: 2>, scalar_prefetch = 0 : i64, scratch_operands = 0 : i64, tpu.core_type = #tpu.core_type<tc>, window_params = [{transform_indices = @transform_0, window_bounds = array<i64: 1, 32, 2209>}, {pipeline_mode = #tpu.pipeline_mode<synchronous>, transform_indices = @transform_1, window_bounds = array<i64: 4, 32>}, {pipeline_mode = #tpu.pipeline_mode<synchronous>, transform_indices = @transform_2, window_bounds = array<i64: 4, 1>}, {transform_indices = @transform_3, window_bounds = array<i64: 1, 4, 2209>}]} {
    %c0 = arith.constant 0 : index
    %c0_0 = arith.constant 0 : index
    %0 = vector.load %arg2[%c0, %c0_0] : memref<4x32xbf16, #tpu.memory_space<vmem>>, vector<4x32xbf16>
    %c0_1 = arith.constant 0 : index
    %c0_2 = arith.constant 0 : index
    %c0_3 = arith.constant 0 : index
    %1 = vector.load %arg1[%c0_1, %c0_2, %c0_3] : memref<1x32x2209xbf16, #tpu.memory_space<vmem>>, vector<1x32x2209xbf16>
    %2 = vector.shape_cast %1 : vector<1x32x2209xbf16> to vector<32x2209xbf16>
    %cst = arith.constant dense<0.000000e+00> : vector<4x2209xf32>
    %3 = tpu.matmul %0, %2, %cst {dimension_numbers = #tpu.dot_dimension_numbers<[1], [0], [0], [1], [0, 0, 1, 1], [], []>} : vector<4x32xbf16>, vector<32x2209xbf16>, vector<4x2209xf32> -> vector<4x2209xf32>
    %c0_4 = arith.constant 0 : index
    %c0_5 = arith.constant 0 : index
    %4 = vector.load %arg3[%c0_4, %c0_5] : memref<4x1xf32, #tpu.memory_space<vmem>>, vector<4x1xf32>
    %5 = vector.broadcast %4 : vector<4x1xf32> to vector<4x2209xf32>
    %6 = arith.addf %3, %5 : vector<4x2209xf32>
    %cst_6 = arith.constant 0.000000e+00 : f32
    %7 = vector.broadcast %cst_6 : f32 to vector<4x2209xf32>
    %8 = arith.maximumf %6, %7 : vector<4x2209xf32>
    %9 = arith.truncf %8 : vector<4x2209xf32> to vector<4x2209xbf16>
    %c0_7 = arith.constant 0 : index
    %c0_8 = arith.constant 0 : index
    %c0_9 = arith.constant 0 : index
    %10 = vector.load %arg4[%c0_7, %c0_8, %c0_9] : memref<1x4x2209xbf16, #tpu.memory_space<vmem>>, vector<1x4x2209xbf16>
    %11 = vector.shape_cast %10 : vector<1x4x2209xbf16> to vector<4x2209xbf16>
    %12 = vector.shape_cast %9 : vector<4x2209xbf16> to vector<1x4x2209xbf16>
    tpu.vector_store %arg4[%c0_7, %c0_8, %c0_9], %12 {strides = array<i32>} : memref<1x4x2209xbf16, #tpu.memory_space<vmem>>, vector<1x4x2209xbf16>,
    return
  }
  func.func @transform_0(%arg0: i32) -> (i32, i32, i32) {
    %c0_i32 = arith.constant 0 : i32
    %c0_i32_0 = arith.constant 0 : i32
    %c0_i32_1 = arith.constant 0 : i32
    return %arg0, %c0_i32, %c0_i32_0 : i32, i32, i32
  }
  func.func @transform_1(%arg0: i32) -> (i32, i32) {
    %c0_i32 = arith.constant 0 : i32
    %c0_i32_0 = arith.constant 0 : i32
    %c0_i32_1 = arith.constant 0 : i32
    return %c0_i32, %c0_i32_0 : i32, i32
  }
  func.func @transform_2(%arg0: i32) -> (i32, i32) {
    %c0_i32 = arith.constant 0 : i32
    %c0_i32_0 = arith.constant 0 : i32
    %c0_i32_1 = arith.constant 0 : i32
    return %c0_i32, %c0_i32_0 : i32, i32
  }
  func.func @transform_3(%arg0: i32) -> (i32, i32, i32) {
    %c0_i32 = arith.constant 0 : i32
    %c0_i32_0 = arith.constant 0 : i32
    %c0_i32_1 = arith.constant 0 : i32
    return %arg0, %c0_i32, %c0_i32_0 : i32, i32, i32
  }
}

module attributes {stable_mosaic.version = 11 : i64} {
  func.func @_tail_kernel(%arg0: i32, %arg1: memref<1x36x529xbf16, #tpu.memory_space<vmem>>, %arg2: memref<8x36xbf16, #tpu.memory_space<vmem>>, %arg3: memref<8x1xf32, #tpu.memory_space<vmem>>, %arg4: memref<9x529x121xbf16, #tpu.memory_space<vmem>>, %arg5: memref<9x16x8xbf16, #tpu.memory_space<vmem>>, %arg6: memref<16x1xf32, #tpu.memory_space<vmem>>, %arg7: memref<9x121x25xbf16, #tpu.memory_space<vmem>>, %arg8: memref<9x32x16xbf16, #tpu.memory_space<vmem>>, %arg9: memref<32x1xf32, #tpu.memory_space<vmem>>, %arg10: memref<9x25x9xbf16, #tpu.memory_space<vmem>>, %arg11: memref<9x64x32xbf16, #tpu.memory_space<vmem>>, %arg12: memref<64x1xf32, #tpu.memory_space<vmem>>, %arg13: memref<9x9x1xbf16, #tpu.memory_space<vmem>>, %arg14: memref<9x128x64xbf16, #tpu.memory_space<vmem>>, %arg15: memref<128x1xf32, #tpu.memory_space<vmem>>, %arg16: memref<100x128xbf16, #tpu.memory_space<vmem>>, %arg17: memref<100x1xf32, #tpu.memory_space<vmem>>, %arg18: memref<1x100xbf16, #tpu.memory_space<vmem>>, %arg19: memref<1x1xf32, #tpu.memory_space<vmem>>, %arg20: memref<1x1x1xf32, #tpu.memory_space<vmem>>) attributes {dimension_semantics = [#tpu.dimension_semantics<parallel>], iteration_bounds = array<i64: 2>, scalar_prefetch = 0 : i64, scratch_operands = 0 : i64, tpu.core_type = #tpu.core_type<tc>, window_params = [{transform_indices = @transform_0, window_bounds = array<i64: 1, 36, 529>}, {pipeline_mode = #tpu.pipeline_mode<synchronous>, transform_indices = @transform_1, window_bounds = array<i64: 8, 36>}, {pipeline_mode = #tpu.pipeline_mode<synchronous>, transform_indices = @transform_2, window_bounds = array<i64: 8, 1>}, {pipeline_mode = #tpu.pipeline_mode<synchronous>, transform_indices = @transform_3, window_bounds = array<i64: 9, 529, 121>}, {pipeline_mode = #tpu.pipeline_mode<synchronous>, transform_indices = @transform_4, window_bounds = array<i64: 9, 16, 8>}, {pipeline_mode = #tpu.pipeline_mode<synchronous>, transform_indices = @transform_5, window_bounds = array<i64: 16, 1>}, {pipeline_mode = #tpu.pipeline_mode<synchronous>, transform_indices = @transform_6, window_bounds = array<i64: 9, 121, 25>}, {pipeline_mode = #tpu.pipeline_mode<synchronous>, transform_indices = @transform_7, window_bounds = array<i64: 9, 32, 16>}, {pipeline_mode = #tpu.pipeline_mode<synchronous>, transform_indices = @transform_8, window_bounds = array<i64: 32, 1>}, {pipeline_mode = #tpu.pipeline_mode<synchronous>, transform_indices = @transform_9, window_bounds = array<i64: 9, 25, 9>}, {pipeline_mode = #tpu.pipeline_mode<synchronous>, transform_indices = @transform_10, window_bounds = array<i64: 9, 64, 32>}, {pipeline_mode = #tpu.pipeline_mode<synchronous>, transform_indices = @transform_11, window_bounds = array<i64: 64, 1>}, {pipeline_mode = #tpu.pipeline_mode<synchronous>, transform_indices = @transform_12, window_bounds = array<i64: 9, 9, 1>}, {pipeline_mode = #tpu.pipeline_mode<synchronous>, transform_indices = @transform_13, window_bounds = array<i64: 9, 128, 64>}, {pipeline_mode = #tpu.pipeline_mode<synchronous>, transform_indices = @transform_14, window_bounds = array<i64: 128, 1>}, {pipeline_mode = #tpu.pipeline_mode<synchronous>, transform_indices = @transform_15, window_bounds = array<i64: 100, 128>}, {pipeline_mode = #tpu.pipeline_mode<synchronous>, transform_indices = @transform_16, window_bounds = array<i64: 100, 1>}, {pipeline_mode = #tpu.pipeline_mode<synchronous>, transform_indices = @transform_17, window_bounds = array<i64: 1, 100>}, {pipeline_mode = #tpu.pipeline_mode<synchronous>, transform_indices = @transform_18, window_bounds = array<i64: 1, 1>}, {transform_indices = @transform_19, window_bounds = array<i64: 1, 1, 1>}]} {
    %c0 = arith.constant 0 : index
    %c0_0 = arith.constant 0 : index
    %0 = vector.load %arg2[%c0, %c0_0] : memref<8x36xbf16, #tpu.memory_space<vmem>>, vector<8x36xbf16>
    %c0_1 = arith.constant 0 : index
    %c0_2 = arith.constant 0 : index
    %c0_3 = arith.constant 0 : index
    %1 = vector.load %arg1[%c0_1, %c0_2, %c0_3] : memref<1x36x529xbf16, #tpu.memory_space<vmem>>, vector<1x36x529xbf16>
    %2 = vector.shape_cast %1 : vector<1x36x529xbf16> to vector<36x529xbf16>
    %cst = arith.constant dense<0.000000e+00> : vector<8x529xf32>
    %3 = tpu.matmul %0, %2, %cst {dimension_numbers = #tpu.dot_dimension_numbers<[1], [0], [0], [1], [0, 0, 1, 1], [], []>} : vector<8x36xbf16>, vector<36x529xbf16>, vector<8x529xf32> -> vector<8x529xf32>
    %c0_4 = arith.constant 0 : index
    %c0_5 = arith.constant 0 : index
    %4 = vector.load %arg3[%c0_4, %c0_5] : memref<8x1xf32, #tpu.memory_space<vmem>>, vector<8x1xf32>
    %5 = vector.broadcast %4 : vector<8x1xf32> to vector<8x529xf32>
    %6 = arith.addf %3, %5 : vector<8x529xf32>
    %cst_6 = arith.constant 0.000000e+00 : f32
    %7 = vector.broadcast %cst_6 : f32 to vector<8x529xf32>
    %8 = arith.maximumf %6, %7 : vector<8x529xf32>
    %9 = arith.truncf %8 : vector<8x529xf32> to vector<8x529xbf16>
    %cst_7 = arith.constant 0.000000e+00 : f32
    %10 = vector.broadcast %cst_7 : f32 to vector<16x121xf32>
    %c0_8 = arith.constant 0 : index
    %c0_9 = arith.constant 0 : index
    %c0_10 = arith.constant 0 : index
    %11 = vector.load %arg4[%c0_8, %c0_9, %c0_10] : memref<9x529x121xbf16, #tpu.memory_space<vmem>>, vector<1x529x121xbf16>
    %12 = vector.shape_cast %11 : vector<1x529x121xbf16> to vector<529x121xbf16>
    %cst_11 = arith.constant dense<0.000000e+00> : vector<8x121xf32>
    %13 = tpu.matmul %9, %12, %cst_11 {dimension_numbers = #tpu.dot_dimension_numbers<[1], [0], [0], [1], [0, 0, 1, 1], [], []>} : vector<8x529xbf16>, vector<529x121xbf16>, vector<8x121xf32> -> vector<8x121xf32>
    %c0_12 = arith.constant 0 : index
    %c0_13 = arith.constant 0 : index
    %c0_14 = arith.constant 0 : index
    %14 = vector.load %arg5[%c0_12, %c0_13, %c0_14] : memref<9x16x8xbf16, #tpu.memory_space<vmem>>, vector<1x16x8xbf16>
    %15 = vector.shape_cast %14 : vector<1x16x8xbf16> to vector<16x8xbf16>
    %16 = arith.truncf %13 : vector<8x121xf32> to vector<8x121xbf16>
    %cst_15 = arith.constant dense<0.000000e+00> : vector<16x121xf32>
    %17 = tpu.matmul %15, %16, %cst_15 {dimension_numbers = #tpu.dot_dimension_numbers<[1], [0], [0], [1], [0, 0, 1, 1], [], []>} : vector<16x8xbf16>, vector<8x121xbf16>, vector<16x121xf32> -> vector<16x121xf32>
    %18 = arith.addf %10, %17 : vector<16x121xf32>
    %c1 = arith.constant 1 : index
    %c0_16 = arith.constant 0 : index
    %c0_17 = arith.constant 0 : index
    %19 = vector.load %arg4[%c1, %c0_16, %c0_17] : memref<9x529x121xbf16, #tpu.memory_space<vmem>>, vector<1x529x121xbf16>
    %20 = vector.shape_cast %19 : vector<1x529x121xbf16> to vector<529x121xbf16>
    %cst_18 = arith.constant dense<0.000000e+00> : vector<8x121xf32>
    %21 = tpu.matmul %9, %20, %cst_18 {dimension_numbers = #tpu.dot_dimension_numbers<[1], [0], [0], [1], [0, 0, 1, 1], [], []>} : vector<8x529xbf16>, vector<529x121xbf16>, vector<8x121xf32> -> vector<8x121xf32>
    %c1_19 = arith.constant 1 : index
    %c0_20 = arith.constant 0 : index
    %c0_21 = arith.constant 0 : index
    %22 = vector.load %arg5[%c1_19, %c0_20, %c0_21] : memref<9x16x8xbf16, #tpu.memory_space<vmem>>, vector<1x16x8xbf16>
    %23 = vector.shape_cast %22 : vector<1x16x8xbf16> to vector<16x8xbf16>
    %24 = arith.truncf %21 : vector<8x121xf32> to vector<8x121xbf16>
    %cst_22 = arith.constant dense<0.000000e+00> : vector<16x121xf32>
    %25 = tpu.matmul %23, %24, %cst_22 {dimension_numbers = #tpu.dot_dimension_numbers<[1], [0], [0], [1], [0, 0, 1, 1], [], []>} : vector<16x8xbf16>, vector<8x121xbf16>, vector<16x121xf32> -> vector<16x121xf32>
    %26 = arith.addf %18, %25 : vector<16x121xf32>
    %c2 = arith.constant 2 : index
    %c0_23 = arith.constant 0 : index
    %c0_24 = arith.constant 0 : index
    %27 = vector.load %arg4[%c2, %c0_23, %c0_24] : memref<9x529x121xbf16, #tpu.memory_space<vmem>>, vector<1x529x121xbf16>
    %28 = vector.shape_cast %27 : vector<1x529x121xbf16> to vector<529x121xbf16>
    %cst_25 = arith.constant dense<0.000000e+00> : vector<8x121xf32>
    %29 = tpu.matmul %9, %28, %cst_25 {dimension_numbers = #tpu.dot_dimension_numbers<[1], [0], [0], [1], [0, 0, 1, 1], [], []>} : vector<8x529xbf16>, vector<529x121xbf16>, vector<8x121xf32> -> vector<8x121xf32>
    %c2_26 = arith.constant 2 : index
    %c0_27 = arith.constant 0 : index
    %c0_28 = arith.constant 0 : index
    %30 = vector.load %arg5[%c2_26, %c0_27, %c0_28] : memref<9x16x8xbf16, #tpu.memory_space<vmem>>, vector<1x16x8xbf16>
    %31 = vector.shape_cast %30 : vector<1x16x8xbf16> to vector<16x8xbf16>
    %32 = arith.truncf %29 : vector<8x121xf32> to vector<8x121xbf16>
    %cst_29 = arith.constant dense<0.000000e+00> : vector<16x121xf32>
    %33 = tpu.matmul %31, %32, %cst_29 {dimension_numbers = #tpu.dot_dimension_numbers<[1], [0], [0], [1], [0, 0, 1, 1], [], []>} : vector<16x8xbf16>, vector<8x121xbf16>, vector<16x121xf32> -> vector<16x121xf32>
    %34 = arith.addf %26, %33 : vector<16x121xf32>
    %c3 = arith.constant 3 : index
    %c0_30 = arith.constant 0 : index
    %c0_31 = arith.constant 0 : index
    %35 = vector.load %arg4[%c3, %c0_30, %c0_31] : memref<9x529x121xbf16, #tpu.memory_space<vmem>>, vector<1x529x121xbf16>
    %36 = vector.shape_cast %35 : vector<1x529x121xbf16> to vector<529x121xbf16>
    %cst_32 = arith.constant dense<0.000000e+00> : vector<8x121xf32>
    %37 = tpu.matmul %9, %36, %cst_32 {dimension_numbers = #tpu.dot_dimension_numbers<[1], [0], [0], [1], [0, 0, 1, 1], [], []>} : vector<8x529xbf16>, vector<529x121xbf16>, vector<8x121xf32> -> vector<8x121xf32>
    %c3_33 = arith.constant 3 : index
    %c0_34 = arith.constant 0 : index
    %c0_35 = arith.constant 0 : index
    %38 = vector.load %arg5[%c3_33, %c0_34, %c0_35] : memref<9x16x8xbf16, #tpu.memory_space<vmem>>, vector<1x16x8xbf16>
    %39 = vector.shape_cast %38 : vector<1x16x8xbf16> to vector<16x8xbf16>
    %40 = arith.truncf %37 : vector<8x121xf32> to vector<8x121xbf16>
    %cst_36 = arith.constant dense<0.000000e+00> : vector<16x121xf32>
    %41 = tpu.matmul %39, %40, %cst_36 {dimension_numbers = #tpu.dot_dimension_numbers<[1], [0], [0], [1], [0, 0, 1, 1], [], []>} : vector<16x8xbf16>, vector<8x121xbf16>, vector<16x121xf32> -> vector<16x121xf32>
    %42 = arith.addf %34, %41 : vector<16x121xf32>
    %c4 = arith.constant 4 : index
    %c0_37 = arith.constant 0 : index
    %c0_38 = arith.constant 0 : index
    %43 = vector.load %arg4[%c4, %c0_37, %c0_38] : memref<9x529x121xbf16, #tpu.memory_space<vmem>>, vector<1x529x121xbf16>
    %44 = vector.shape_cast %43 : vector<1x529x121xbf16> to vector<529x121xbf16>
    %cst_39 = arith.constant dense<0.000000e+00> : vector<8x121xf32>
    %45 = tpu.matmul %9, %44, %cst_39 {dimension_numbers = #tpu.dot_dimension_numbers<[1], [0], [0], [1], [0, 0, 1, 1], [], []>} : vector<8x529xbf16>, vector<529x121xbf16>, vector<8x121xf32> -> vector<8x121xf32>
    %c4_40 = arith.constant 4 : index
    %c0_41 = arith.constant 0 : index
    %c0_42 = arith.constant 0 : index
    %46 = vector.load %arg5[%c4_40, %c0_41, %c0_42] : memref<9x16x8xbf16, #tpu.memory_space<vmem>>, vector<1x16x8xbf16>
    %47 = vector.shape_cast %46 : vector<1x16x8xbf16> to vector<16x8xbf16>
    %48 = arith.truncf %45 : vector<8x121xf32> to vector<8x121xbf16>
    %cst_43 = arith.constant dense<0.000000e+00> : vector<16x121xf32>
    %49 = tpu.matmul %47, %48, %cst_43 {dimension_numbers = #tpu.dot_dimension_numbers<[1], [0], [0], [1], [0, 0, 1, 1], [], []>} : vector<16x8xbf16>, vector<8x121xbf16>, vector<16x121xf32> -> vector<16x121xf32>
    %50 = arith.addf %42, %49 : vector<16x121xf32>
    %c5 = arith.constant 5 : index
    %c0_44 = arith.constant 0 : index
    %c0_45 = arith.constant 0 : index
    %51 = vector.load %arg4[%c5, %c0_44, %c0_45] : memref<9x529x121xbf16, #tpu.memory_space<vmem>>, vector<1x529x121xbf16>
    %52 = vector.shape_cast %51 : vector<1x529x121xbf16> to vector<529x121xbf16>
    %cst_46 = arith.constant dense<0.000000e+00> : vector<8x121xf32>
    %53 = tpu.matmul %9, %52, %cst_46 {dimension_numbers = #tpu.dot_dimension_numbers<[1], [0], [0], [1], [0, 0, 1, 1], [], []>} : vector<8x529xbf16>, vector<529x121xbf16>, vector<8x121xf32> -> vector<8x121xf32>
    %c5_47 = arith.constant 5 : index
    %c0_48 = arith.constant 0 : index
    %c0_49 = arith.constant 0 : index
    %54 = vector.load %arg5[%c5_47, %c0_48, %c0_49] : memref<9x16x8xbf16, #tpu.memory_space<vmem>>, vector<1x16x8xbf16>
    %55 = vector.shape_cast %54 : vector<1x16x8xbf16> to vector<16x8xbf16>
    %56 = arith.truncf %53 : vector<8x121xf32> to vector<8x121xbf16>
    %cst_50 = arith.constant dense<0.000000e+00> : vector<16x121xf32>
    %57 = tpu.matmul %55, %56, %cst_50 {dimension_numbers = #tpu.dot_dimension_numbers<[1], [0], [0], [1], [0, 0, 1, 1], [], []>} : vector<16x8xbf16>, vector<8x121xbf16>, vector<16x121xf32> -> vector<16x121xf32>
    %58 = arith.addf %50, %57 : vector<16x121xf32>
    %c6 = arith.constant 6 : index
    %c0_51 = arith.constant 0 : index
    %c0_52 = arith.constant 0 : index
    %59 = vector.load %arg4[%c6, %c0_51, %c0_52] : memref<9x529x121xbf16, #tpu.memory_space<vmem>>, vector<1x529x121xbf16>
    %60 = vector.shape_cast %59 : vector<1x529x121xbf16> to vector<529x121xbf16>
    %cst_53 = arith.constant dense<0.000000e+00> : vector<8x121xf32>
    %61 = tpu.matmul %9, %60, %cst_53 {dimension_numbers = #tpu.dot_dimension_numbers<[1], [0], [0], [1], [0, 0, 1, 1], [], []>} : vector<8x529xbf16>, vector<529x121xbf16>, vector<8x121xf32> -> vector<8x121xf32>
    %c6_54 = arith.constant 6 : index
    %c0_55 = arith.constant 0 : index
    %c0_56 = arith.constant 0 : index
    %62 = vector.load %arg5[%c6_54, %c0_55, %c0_56] : memref<9x16x8xbf16, #tpu.memory_space<vmem>>, vector<1x16x8xbf16>
    %63 = vector.shape_cast %62 : vector<1x16x8xbf16> to vector<16x8xbf16>
    %64 = arith.truncf %61 : vector<8x121xf32> to vector<8x121xbf16>
    %cst_57 = arith.constant dense<0.000000e+00> : vector<16x121xf32>
    %65 = tpu.matmul %63, %64, %cst_57 {dimension_numbers = #tpu.dot_dimension_numbers<[1], [0], [0], [1], [0, 0, 1, 1], [], []>} : vector<16x8xbf16>, vector<8x121xbf16>, vector<16x121xf32> -> vector<16x121xf32>
    %66 = arith.addf %58, %65 : vector<16x121xf32>
    %c7 = arith.constant 7 : index
    %c0_58 = arith.constant 0 : index
    %c0_59 = arith.constant 0 : index
    %67 = vector.load %arg4[%c7, %c0_58, %c0_59] : memref<9x529x121xbf16, #tpu.memory_space<vmem>>, vector<1x529x121xbf16>
    %68 = vector.shape_cast %67 : vector<1x529x121xbf16> to vector<529x121xbf16>
    %cst_60 = arith.constant dense<0.000000e+00> : vector<8x121xf32>
    %69 = tpu.matmul %9, %68, %cst_60 {dimension_numbers = #tpu.dot_dimension_numbers<[1], [0], [0], [1], [0, 0, 1, 1], [], []>} : vector<8x529xbf16>, vector<529x121xbf16>, vector<8x121xf32> -> vector<8x121xf32>
    %c7_61 = arith.constant 7 : index
    %c0_62 = arith.constant 0 : index
    %c0_63 = arith.constant 0 : index
    %70 = vector.load %arg5[%c7_61, %c0_62, %c0_63] : memref<9x16x8xbf16, #tpu.memory_space<vmem>>, vector<1x16x8xbf16>
    %71 = vector.shape_cast %70 : vector<1x16x8xbf16> to vector<16x8xbf16>
    %72 = arith.truncf %69 : vector<8x121xf32> to vector<8x121xbf16>
    %cst_64 = arith.constant dense<0.000000e+00> : vector<16x121xf32>
    %73 = tpu.matmul %71, %72, %cst_64 {dimension_numbers = #tpu.dot_dimension_numbers<[1], [0], [0], [1], [0, 0, 1, 1], [], []>} : vector<16x8xbf16>, vector<8x121xbf16>, vector<16x121xf32> -> vector<16x121xf32>
    %74 = arith.addf %66, %73 : vector<16x121xf32>
    %c8 = arith.constant 8 : index
    %c0_65 = arith.constant 0 : index
    %c0_66 = arith.constant 0 : index
    %75 = vector.load %arg4[%c8, %c0_65, %c0_66] : memref<9x529x121xbf16, #tpu.memory_space<vmem>>, vector<1x529x121xbf16>
    %76 = vector.shape_cast %75 : vector<1x529x121xbf16> to vector<529x121xbf16>
    %cst_67 = arith.constant dense<0.000000e+00> : vector<8x121xf32>
    %77 = tpu.matmul %9, %76, %cst_67 {dimension_numbers = #tpu.dot_dimension_numbers<[1], [0], [0], [1], [0, 0, 1, 1], [], []>} : vector<8x529xbf16>, vector<529x121xbf16>, vector<8x121xf32> -> vector<8x121xf32>
    %c8_68 = arith.constant 8 : index
    %c0_69 = arith.constant 0 : index
    %c0_70 = arith.constant 0 : index
    %78 = vector.load %arg5[%c8_68, %c0_69, %c0_70] : memref<9x16x8xbf16, #tpu.memory_space<vmem>>, vector<1x16x8xbf16>
    %79 = vector.shape_cast %78 : vector<1x16x8xbf16> to vector<16x8xbf16>
    %80 = arith.truncf %77 : vector<8x121xf32> to vector<8x121xbf16>
    %cst_71 = arith.constant dense<0.000000e+00> : vector<16x121xf32>
    %81 = tpu.matmul %79, %80, %cst_71 {dimension_numbers = #tpu.dot_dimension_numbers<[1], [0], [0], [1], [0, 0, 1, 1], [], []>} : vector<16x8xbf16>, vector<8x121xbf16>, vector<16x121xf32> -> vector<16x121xf32>
    %82 = arith.addf %74, %81 : vector<16x121xf32>
    %c0_72 = arith.constant 0 : index
    %c0_73 = arith.constant 0 : index
    %83 = vector.load %arg6[%c0_72, %c0_73] : memref<16x1xf32, #tpu.memory_space<vmem>>, vector<16x1xf32>
    %84 = vector.broadcast %83 : vector<16x1xf32> to vector<16x121xf32>
    %85 = arith.addf %82, %84 : vector<16x121xf32>
    %cst_74 = arith.constant 0.000000e+00 : f32
    %86 = vector.broadcast %cst_74 : f32 to vector<16x121xf32>
    %87 = arith.maximumf %85, %86 : vector<16x121xf32>
    %88 = arith.truncf %87 : vector<16x121xf32> to vector<16x121xbf16>
    %cst_75 = arith.constant 0.000000e+00 : f32
    %89 = vector.broadcast %cst_75 : f32 to vector<32x25xf32>
    %c0_76 = arith.constant 0 : index
    %c0_77 = arith.constant 0 : index
    %c0_78 = arith.constant 0 : index
    %90 = vector.load %arg7[%c0_76, %c0_77, %c0_78] : memref<9x121x25xbf16, #tpu.memory_space<vmem>>, vector<1x121x25xbf16>
    %91 = vector.shape_cast %90 : vector<1x121x25xbf16> to vector<121x25xbf16>
    %cst_79 = arith.constant dense<0.000000e+00> : vector<16x25xf32>
    %92 = tpu.matmul %88, %91, %cst_79 {dimension_numbers = #tpu.dot_dimension_numbers<[1], [0], [0], [1], [0, 0, 1, 1], [], []>} : vector<16x121xbf16>, vector<121x25xbf16>, vector<16x25xf32> -> vector<16x25xf32>
    %c0_80 = arith.constant 0 : index
    %c0_81 = arith.constant 0 : index
    %c0_82 = arith.constant 0 : index
    %93 = vector.load %arg8[%c0_80, %c0_81, %c0_82] : memref<9x32x16xbf16, #tpu.memory_space<vmem>>, vector<1x32x16xbf16>
    %94 = vector.shape_cast %93 : vector<1x32x16xbf16> to vector<32x16xbf16>
    %95 = arith.truncf %92 : vector<16x25xf32> to vector<16x25xbf16>
    %cst_83 = arith.constant dense<0.000000e+00> : vector<32x25xf32>
    %96 = tpu.matmul %94, %95, %cst_83 {dimension_numbers = #tpu.dot_dimension_numbers<[1], [0], [0], [1], [0, 0, 1, 1], [], []>} : vector<32x16xbf16>, vector<16x25xbf16>, vector<32x25xf32> -> vector<32x25xf32>
    %97 = arith.addf %89, %96 : vector<32x25xf32>
    %c1_84 = arith.constant 1 : index
    %c0_85 = arith.constant 0 : index
    %c0_86 = arith.constant 0 : index
    %98 = vector.load %arg7[%c1_84, %c0_85, %c0_86] : memref<9x121x25xbf16, #tpu.memory_space<vmem>>, vector<1x121x25xbf16>
    %99 = vector.shape_cast %98 : vector<1x121x25xbf16> to vector<121x25xbf16>
    %cst_87 = arith.constant dense<0.000000e+00> : vector<16x25xf32>
    %100 = tpu.matmul %88, %99, %cst_87 {dimension_numbers = #tpu.dot_dimension_numbers<[1], [0], [0], [1], [0, 0, 1, 1], [], []>} : vector<16x121xbf16>, vector<121x25xbf16>, vector<16x25xf32> -> vector<16x25xf32>
    %c1_88 = arith.constant 1 : index
    %c0_89 = arith.constant 0 : index
    %c0_90 = arith.constant 0 : index
    %101 = vector.load %arg8[%c1_88, %c0_89, %c0_90] : memref<9x32x16xbf16, #tpu.memory_space<vmem>>, vector<1x32x16xbf16>
    %102 = vector.shape_cast %101 : vector<1x32x16xbf16> to vector<32x16xbf16>
    %103 = arith.truncf %100 : vector<16x25xf32> to vector<16x25xbf16>
    %cst_91 = arith.constant dense<0.000000e+00> : vector<32x25xf32>
    %104 = tpu.matmul %102, %103, %cst_91 {dimension_numbers = #tpu.dot_dimension_numbers<[1], [0], [0], [1], [0, 0, 1, 1], [], []>} : vector<32x16xbf16>, vector<16x25xbf16>, vector<32x25xf32> -> vector<32x25xf32>
    %105 = arith.addf %97, %104 : vector<32x25xf32>
    %c2_92 = arith.constant 2 : index
    %c0_93 = arith.constant 0 : index
    %c0_94 = arith.constant 0 : index
    %106 = vector.load %arg7[%c2_92, %c0_93, %c0_94] : memref<9x121x25xbf16, #tpu.memory_space<vmem>>, vector<1x121x25xbf16>
    %107 = vector.shape_cast %106 : vector<1x121x25xbf16> to vector<121x25xbf16>
    %cst_95 = arith.constant dense<0.000000e+00> : vector<16x25xf32>
    %108 = tpu.matmul %88, %107, %cst_95 {dimension_numbers = #tpu.dot_dimension_numbers<[1], [0], [0], [1], [0, 0, 1, 1], [], []>} : vector<16x121xbf16>, vector<121x25xbf16>, vector<16x25xf32> -> vector<16x25xf32>
    %c2_96 = arith.constant 2 : index
    %c0_97 = arith.constant 0 : index
    %c0_98 = arith.constant 0 : index
    %109 = vector.load %arg8[%c2_96, %c0_97, %c0_98] : memref<9x32x16xbf16, #tpu.memory_space<vmem>>, vector<1x32x16xbf16>
    %110 = vector.shape_cast %109 : vector<1x32x16xbf16> to vector<32x16xbf16>
    %111 = arith.truncf %108 : vector<16x25xf32> to vector<16x25xbf16>
    %cst_99 = arith.constant dense<0.000000e+00> : vector<32x25xf32>
    %112 = tpu.matmul %110, %111, %cst_99 {dimension_numbers = #tpu.dot_dimension_numbers<[1], [0], [0], [1], [0, 0, 1, 1], [], []>} : vector<32x16xbf16>, vector<16x25xbf16>, vector<32x25xf32> -> vector<32x25xf32>
    %113 = arith.addf %105, %112 : vector<32x25xf32>
    %c3_100 = arith.constant 3 : index
    %c0_101 = arith.constant 0 : index
    %c0_102 = arith.constant 0 : index
    %114 = vector.load %arg7[%c3_100, %c0_101, %c0_102] : memref<9x121x25xbf16, #tpu.memory_space<vmem>>, vector<1x121x25xbf16>
    %115 = vector.shape_cast %114 : vector<1x121x25xbf16> to vector<121x25xbf16>
    %cst_103 = arith.constant dense<0.000000e+00> : vector<16x25xf32>
    %116 = tpu.matmul %88, %115, %cst_103 {dimension_numbers = #tpu.dot_dimension_numbers<[1], [0], [0], [1], [0, 0, 1, 1], [], []>} : vector<16x121xbf16>, vector<121x25xbf16>, vector<16x25xf32> -> vector<16x25xf32>
    %c3_104 = arith.constant 3 : index
    %c0_105 = arith.constant 0 : index
    %c0_106 = arith.constant 0 : index
    %117 = vector.load %arg8[%c3_104, %c0_105, %c0_106] : memref<9x32x16xbf16, #tpu.memory_space<vmem>>, vector<1x32x16xbf16>
    %118 = vector.shape_cast %117 : vector<1x32x16xbf16> to vector<32x16xbf16>
    %119 = arith.truncf %116 : vector<16x25xf32> to vector<16x25xbf16>
    %cst_107 = arith.constant dense<0.000000e+00> : vector<32x25xf32>
    %120 = tpu.matmul %118, %119, %cst_107 {dimension_numbers = #tpu.dot_dimension_numbers<[1], [0], [0], [1], [0, 0, 1, 1], [], []>} : vector<32x16xbf16>, vector<16x25xbf16>, vector<32x25xf32> -> vector<32x25xf32>
    %121 = arith.addf %113, %120 : vector<32x25xf32>
    %c4_108 = arith.constant 4 : index
    %c0_109 = arith.constant 0 : index
    %c0_110 = arith.constant 0 : index
    %122 = vector.load %arg7[%c4_108, %c0_109, %c0_110] : memref<9x121x25xbf16, #tpu.memory_space<vmem>>, vector<1x121x25xbf16>
    %123 = vector.shape_cast %122 : vector<1x121x25xbf16> to vector<121x25xbf16>
    %cst_111 = arith.constant dense<0.000000e+00> : vector<16x25xf32>
    %124 = tpu.matmul %88, %123, %cst_111 {dimension_numbers = #tpu.dot_dimension_numbers<[1], [0], [0], [1], [0, 0, 1, 1], [], []>} : vector<16x121xbf16>, vector<121x25xbf16>, vector<16x25xf32> -> vector<16x25xf32>
    %c4_112 = arith.constant 4 : index
    %c0_113 = arith.constant 0 : index
    %c0_114 = arith.constant 0 : index
    %125 = vector.load %arg8[%c4_112, %c0_113, %c0_114] : memref<9x32x16xbf16, #tpu.memory_space<vmem>>, vector<1x32x16xbf16>
    %126 = vector.shape_cast %125 : vector<1x32x16xbf16> to vector<32x16xbf16>
    %127 = arith.truncf %124 : vector<16x25xf32> to vector<16x25xbf16>
    %cst_115 = arith.constant dense<0.000000e+00> : vector<32x25xf32>
    %128 = tpu.matmul %126, %127, %cst_115 {dimension_numbers = #tpu.dot_dimension_numbers<[1], [0], [0], [1], [0, 0, 1, 1], [], []>} : vector<32x16xbf16>, vector<16x25xbf16>, vector<32x25xf32> -> vector<32x25xf32>
    %129 = arith.addf %121, %128 : vector<32x25xf32>
    %c5_116 = arith.constant 5 : index
    %c0_117 = arith.constant 0 : index
    %c0_118 = arith.constant 0 : index
    %130 = vector.load %arg7[%c5_116, %c0_117, %c0_118] : memref<9x121x25xbf16, #tpu.memory_space<vmem>>, vector<1x121x25xbf16>
    %131 = vector.shape_cast %130 : vector<1x121x25xbf16> to vector<121x25xbf16>
    %cst_119 = arith.constant dense<0.000000e+00> : vector<16x25xf32>
    %132 = tpu.matmul %88, %131, %cst_119 {dimension_numbers = #tpu.dot_dimension_numbers<[1], [0], [0], [1], [0, 0, 1, 1], [], []>} : vector<16x121xbf16>, vector<121x25xbf16>, vector<16x25xf32> -> vector<16x25xf32>
    %c5_120 = arith.constant 5 : index
    %c0_121 = arith.constant 0 : index
    %c0_122 = arith.constant 0 : index
    %133 = vector.load %arg8[%c5_120, %c0_121, %c0_122] : memref<9x32x16xbf16, #tpu.memory_space<vmem>>, vector<1x32x16xbf16>
    %134 = vector.shape_cast %133 : vector<1x32x16xbf16> to vector<32x16xbf16>
    %135 = arith.truncf %132 : vector<16x25xf32> to vector<16x25xbf16>
    %cst_123 = arith.constant dense<0.000000e+00> : vector<32x25xf32>
    %136 = tpu.matmul %134, %135, %cst_123 {dimension_numbers = #tpu.dot_dimension_numbers<[1], [0], [0], [1], [0, 0, 1, 1], [], []>} : vector<32x16xbf16>, vector<16x25xbf16>, vector<32x25xf32> -> vector<32x25xf32>
    %137 = arith.addf %129, %136 : vector<32x25xf32>
    %c6_124 = arith.constant 6 : index
    %c0_125 = arith.constant 0 : index
    %c0_126 = arith.constant 0 : index
    %138 = vector.load %arg7[%c6_124, %c0_125, %c0_126] : memref<9x121x25xbf16, #tpu.memory_space<vmem>>, vector<1x121x25xbf16>
    %139 = vector.shape_cast %138 : vector<1x121x25xbf16> to vector<121x25xbf16>
    %cst_127 = arith.constant dense<0.000000e+00> : vector<16x25xf32>
    %140 = tpu.matmul %88, %139, %cst_127 {dimension_numbers = #tpu.dot_dimension_numbers<[1], [0], [0], [1], [0, 0, 1, 1], [], []>} : vector<16x121xbf16>, vector<121x25xbf16>, vector<16x25xf32> -> vector<16x25xf32>
    %c6_128 = arith.constant 6 : index
    %c0_129 = arith.constant 0 : index
    %c0_130 = arith.constant 0 : index
    %141 = vector.load %arg8[%c6_128, %c0_129, %c0_130] : memref<9x32x16xbf16, #tpu.memory_space<vmem>>, vector<1x32x16xbf16>
    %142 = vector.shape_cast %141 : vector<1x32x16xbf16> to vector<32x16xbf16>
    %143 = arith.truncf %140 : vector<16x25xf32> to vector<16x25xbf16>
    %cst_131 = arith.constant dense<0.000000e+00> : vector<32x25xf32>
    %144 = tpu.matmul %142, %143, %cst_131 {dimension_numbers = #tpu.dot_dimension_numbers<[1], [0], [0], [1], [0, 0, 1, 1], [], []>} : vector<32x16xbf16>, vector<16x25xbf16>, vector<32x25xf32> -> vector<32x25xf32>
    %145 = arith.addf %137, %144 : vector<32x25xf32>
    %c7_132 = arith.constant 7 : index
    %c0_133 = arith.constant 0 : index
    %c0_134 = arith.constant 0 : index
    %146 = vector.load %arg7[%c7_132, %c0_133, %c0_134] : memref<9x121x25xbf16, #tpu.memory_space<vmem>>, vector<1x121x25xbf16>
    %147 = vector.shape_cast %146 : vector<1x121x25xbf16> to vector<121x25xbf16>
    %cst_135 = arith.constant dense<0.000000e+00> : vector<16x25xf32>
    %148 = tpu.matmul %88, %147, %cst_135 {dimension_numbers = #tpu.dot_dimension_numbers<[1], [0], [0], [1], [0, 0, 1, 1], [], []>} : vector<16x121xbf16>, vector<121x25xbf16>, vector<16x25xf32> -> vector<16x25xf32>
    %c7_136 = arith.constant 7 : index
    %c0_137 = arith.constant 0 : index
    %c0_138 = arith.constant 0 : index
    %149 = vector.load %arg8[%c7_136, %c0_137, %c0_138] : memref<9x32x16xbf16, #tpu.memory_space<vmem>>, vector<1x32x16xbf16>
    %150 = vector.shape_cast %149 : vector<1x32x16xbf16> to vector<32x16xbf16>
    %151 = arith.truncf %148 : vector<16x25xf32> to vector<16x25xbf16>
    %cst_139 = arith.constant dense<0.000000e+00> : vector<32x25xf32>
    %152 = tpu.matmul %150, %151, %cst_139 {dimension_numbers = #tpu.dot_dimension_numbers<[1], [0], [0], [1], [0, 0, 1, 1], [], []>} : vector<32x16xbf16>, vector<16x25xbf16>, vector<32x25xf32> -> vector<32x25xf32>
    %153 = arith.addf %145, %152 : vector<32x25xf32>
    %c8_140 = arith.constant 8 : index
    %c0_141 = arith.constant 0 : index
    %c0_142 = arith.constant 0 : index
    %154 = vector.load %arg7[%c8_140, %c0_141, %c0_142] : memref<9x121x25xbf16, #tpu.memory_space<vmem>>, vector<1x121x25xbf16>
    %155 = vector.shape_cast %154 : vector<1x121x25xbf16> to vector<121x25xbf16>
    %cst_143 = arith.constant dense<0.000000e+00> : vector<16x25xf32>
    %156 = tpu.matmul %88, %155, %cst_143 {dimension_numbers = #tpu.dot_dimension_numbers<[1], [0], [0], [1], [0, 0, 1, 1], [], []>} : vector<16x121xbf16>, vector<121x25xbf16>, vector<16x25xf32> -> vector<16x25xf32>
    %c8_144 = arith.constant 8 : index
    %c0_145 = arith.constant 0 : index
    %c0_146 = arith.constant 0 : index
    %157 = vector.load %arg8[%c8_144, %c0_145, %c0_146] : memref<9x32x16xbf16, #tpu.memory_space<vmem>>, vector<1x32x16xbf16>
    %158 = vector.shape_cast %157 : vector<1x32x16xbf16> to vector<32x16xbf16>
    %159 = arith.truncf %156 : vector<16x25xf32> to vector<16x25xbf16>
    %cst_147 = arith.constant dense<0.000000e+00> : vector<32x25xf32>
    %160 = tpu.matmul %158, %159, %cst_147 {dimension_numbers = #tpu.dot_dimension_numbers<[1], [0], [0], [1], [0, 0, 1, 1], [], []>} : vector<32x16xbf16>, vector<16x25xbf16>, vector<32x25xf32> -> vector<32x25xf32>
    %161 = arith.addf %153, %160 : vector<32x25xf32>
    %c0_148 = arith.constant 0 : index
    %c0_149 = arith.constant 0 : index
    %162 = vector.load %arg9[%c0_148, %c0_149] : memref<32x1xf32, #tpu.memory_space<vmem>>, vector<32x1xf32>
    %163 = vector.broadcast %162 : vector<32x1xf32> to vector<32x25xf32>
    %164 = arith.addf %161, %163 : vector<32x25xf32>
    %cst_150 = arith.constant 0.000000e+00 : f32
    %165 = vector.broadcast %cst_150 : f32 to vector<32x25xf32>
    %166 = arith.maximumf %164, %165 : vector<32x25xf32>
    %167 = arith.truncf %166 : vector<32x25xf32> to vector<32x25xbf16>
    %cst_151 = arith.constant 0.000000e+00 : f32
    %168 = vector.broadcast %cst_151 : f32 to vector<64x9xf32>
    %c0_152 = arith.constant 0 : index
    %c0_153 = arith.constant 0 : index
    %c0_154 = arith.constant 0 : index
    %169 = vector.load %arg10[%c0_152, %c0_153, %c0_154] : memref<9x25x9xbf16, #tpu.memory_space<vmem>>, vector<1x25x9xbf16>
    %170 = vector.shape_cast %169 : vector<1x25x9xbf16> to vector<25x9xbf16>
    %cst_155 = arith.constant dense<0.000000e+00> : vector<32x9xf32>
    %171 = tpu.matmul %167, %170, %cst_155 {dimension_numbers = #tpu.dot_dimension_numbers<[1], [0], [0], [1], [0, 0, 1, 1], [], []>} : vector<32x25xbf16>, vector<25x9xbf16>, vector<32x9xf32> -> vector<32x9xf32>
    %c0_156 = arith.constant 0 : index
    %c0_157 = arith.constant 0 : index
    %c0_158 = arith.constant 0 : index
    %172 = vector.load %arg11[%c0_156, %c0_157, %c0_158] : memref<9x64x32xbf16, #tpu.memory_space<vmem>>, vector<1x64x32xbf16>
    %173 = vector.shape_cast %172 : vector<1x64x32xbf16> to vector<64x32xbf16>
    %174 = arith.truncf %171 : vector<32x9xf32> to vector<32x9xbf16>
    %cst_159 = arith.constant dense<0.000000e+00> : vector<64x9xf32>
    %175 = tpu.matmul %173, %174, %cst_159 {dimension_numbers = #tpu.dot_dimension_numbers<[1], [0], [0], [1], [0, 0, 1, 1], [], []>} : vector<64x32xbf16>, vector<32x9xbf16>, vector<64x9xf32> -> vector<64x9xf32>
    %176 = arith.addf %168, %175 : vector<64x9xf32>
    %c1_160 = arith.constant 1 : index
    %c0_161 = arith.constant 0 : index
    %c0_162 = arith.constant 0 : index
    %177 = vector.load %arg10[%c1_160, %c0_161, %c0_162] : memref<9x25x9xbf16, #tpu.memory_space<vmem>>, vector<1x25x9xbf16>
    %178 = vector.shape_cast %177 : vector<1x25x9xbf16> to vector<25x9xbf16>
    %cst_163 = arith.constant dense<0.000000e+00> : vector<32x9xf32>
    %179 = tpu.matmul %167, %178, %cst_163 {dimension_numbers = #tpu.dot_dimension_numbers<[1], [0], [0], [1], [0, 0, 1, 1], [], []>} : vector<32x25xbf16>, vector<25x9xbf16>, vector<32x9xf32> -> vector<32x9xf32>
    %c1_164 = arith.constant 1 : index
    %c0_165 = arith.constant 0 : index
    %c0_166 = arith.constant 0 : index
    %180 = vector.load %arg11[%c1_164, %c0_165, %c0_166] : memref<9x64x32xbf16, #tpu.memory_space<vmem>>, vector<1x64x32xbf16>
    %181 = vector.shape_cast %180 : vector<1x64x32xbf16> to vector<64x32xbf16>
    %182 = arith.truncf %179 : vector<32x9xf32> to vector<32x9xbf16>
    %cst_167 = arith.constant dense<0.000000e+00> : vector<64x9xf32>
    %183 = tpu.matmul %181, %182, %cst_167 {dimension_numbers = #tpu.dot_dimension_numbers<[1], [0], [0], [1], [0, 0, 1, 1], [], []>} : vector<64x32xbf16>, vector<32x9xbf16>, vector<64x9xf32> -> vector<64x9xf32>
    %184 = arith.addf %176, %183 : vector<64x9xf32>
    %c2_168 = arith.constant 2 : index
    %c0_169 = arith.constant 0 : index
    %c0_170 = arith.constant 0 : index
    %185 = vector.load %arg10[%c2_168, %c0_169, %c0_170] : memref<9x25x9xbf16, #tpu.memory_space<vmem>>, vector<1x25x9xbf16>
    %186 = vector.shape_cast %185 : vector<1x25x9xbf16> to vector<25x9xbf16>
    %cst_171 = arith.constant dense<0.000000e+00> : vector<32x9xf32>
    %187 = tpu.matmul %167, %186, %cst_171 {dimension_numbers = #tpu.dot_dimension_numbers<[1], [0], [0], [1], [0, 0, 1, 1], [], []>} : vector<32x25xbf16>, vector<25x9xbf16>, vector<32x9xf32> -> vector<32x9xf32>
    %c2_172 = arith.constant 2 : index
    %c0_173 = arith.constant 0 : index
    %c0_174 = arith.constant 0 : index
    %188 = vector.load %arg11[%c2_172, %c0_173, %c0_174] : memref<9x64x32xbf16, #tpu.memory_space<vmem>>, vector<1x64x32xbf16>
    %189 = vector.shape_cast %188 : vector<1x64x32xbf16> to vector<64x32xbf16>
    %190 = arith.truncf %187 : vector<32x9xf32> to vector<32x9xbf16>
    %cst_175 = arith.constant dense<0.000000e+00> : vector<64x9xf32>
    %191 = tpu.matmul %189, %190, %cst_175 {dimension_numbers = #tpu.dot_dimension_numbers<[1], [0], [0], [1], [0, 0, 1, 1], [], []>} : vector<64x32xbf16>, vector<32x9xbf16>, vector<64x9xf32> -> vector<64x9xf32>
    %192 = arith.addf %184, %191 : vector<64x9xf32>
    %c3_176 = arith.constant 3 : index
    %c0_177 = arith.constant 0 : index
    %c0_178 = arith.constant 0 : index
    %193 = vector.load %arg10[%c3_176, %c0_177, %c0_178] : memref<9x25x9xbf16, #tpu.memory_space<vmem>>, vector<1x25x9xbf16>
    %194 = vector.shape_cast %193 : vector<1x25x9xbf16> to vector<25x9xbf16>
    %cst_179 = arith.constant dense<0.000000e+00> : vector<32x9xf32>
    %195 = tpu.matmul %167, %194, %cst_179 {dimension_numbers = #tpu.dot_dimension_numbers<[1], [0], [0], [1], [0, 0, 1, 1], [], []>} : vector<32x25xbf16>, vector<25x9xbf16>, vector<32x9xf32> -> vector<32x9xf32>
    %c3_180 = arith.constant 3 : index
    %c0_181 = arith.constant 0 : index
    %c0_182 = arith.constant 0 : index
    %196 = vector.load %arg11[%c3_180, %c0_181, %c0_182] : memref<9x64x32xbf16, #tpu.memory_space<vmem>>, vector<1x64x32xbf16>
    %197 = vector.shape_cast %196 : vector<1x64x32xbf16> to vector<64x32xbf16>
    %198 = arith.truncf %195 : vector<32x9xf32> to vector<32x9xbf16>
    %cst_183 = arith.constant dense<0.000000e+00> : vector<64x9xf32>
    %199 = tpu.matmul %197, %198, %cst_183 {dimension_numbers = #tpu.dot_dimension_numbers<[1], [0], [0], [1], [0, 0, 1, 1], [], []>} : vector<64x32xbf16>, vector<32x9xbf16>, vector<64x9xf32> -> vector<64x9xf32>
    %200 = arith.addf %192, %199 : vector<64x9xf32>
    %c4_184 = arith.constant 4 : index
    %c0_185 = arith.constant 0 : index
    %c0_186 = arith.constant 0 : index
    %201 = vector.load %arg10[%c4_184, %c0_185, %c0_186] : memref<9x25x9xbf16, #tpu.memory_space<vmem>>, vector<1x25x9xbf16>
    %202 = vector.shape_cast %201 : vector<1x25x9xbf16> to vector<25x9xbf16>
    %cst_187 = arith.constant dense<0.000000e+00> : vector<32x9xf32>
    %203 = tpu.matmul %167, %202, %cst_187 {dimension_numbers = #tpu.dot_dimension_numbers<[1], [0], [0], [1], [0, 0, 1, 1], [], []>} : vector<32x25xbf16>, vector<25x9xbf16>, vector<32x9xf32> -> vector<32x9xf32>
    %c4_188 = arith.constant 4 : index
    %c0_189 = arith.constant 0 : index
    %c0_190 = arith.constant 0 : index
    %204 = vector.load %arg11[%c4_188, %c0_189, %c0_190] : memref<9x64x32xbf16, #tpu.memory_space<vmem>>, vector<1x64x32xbf16>
    %205 = vector.shape_cast %204 : vector<1x64x32xbf16> to vector<64x32xbf16>
    %206 = arith.truncf %203 : vector<32x9xf32> to vector<32x9xbf16>
    %cst_191 = arith.constant dense<0.000000e+00> : vector<64x9xf32>
    %207 = tpu.matmul %205, %206, %cst_191 {dimension_numbers = #tpu.dot_dimension_numbers<[1], [0], [0], [1], [0, 0, 1, 1], [], []>} : vector<64x32xbf16>, vector<32x9xbf16>, vector<64x9xf32> -> vector<64x9xf32>
    %208 = arith.addf %200, %207 : vector<64x9xf32>
    %c5_192 = arith.constant 5 : index
    %c0_193 = arith.constant 0 : index
    %c0_194 = arith.constant 0 : index
    %209 = vector.load %arg10[%c5_192, %c0_193, %c0_194] : memref<9x25x9xbf16, #tpu.memory_space<vmem>>, vector<1x25x9xbf16>
    %210 = vector.shape_cast %209 : vector<1x25x9xbf16> to vector<25x9xbf16>
    %cst_195 = arith.constant dense<0.000000e+00> : vector<32x9xf32>
    %211 = tpu.matmul %167, %210, %cst_195 {dimension_numbers = #tpu.dot_dimension_numbers<[1], [0], [0], [1], [0, 0, 1, 1], [], []>} : vector<32x25xbf16>, vector<25x9xbf16>, vector<32x9xf32> -> vector<32x9xf32>
    %c5_196 = arith.constant 5 : index
    %c0_197 = arith.constant 0 : index
    %c0_198 = arith.constant 0 : index
    %212 = vector.load %arg11[%c5_196, %c0_197, %c0_198] : memref<9x64x32xbf16, #tpu.memory_space<vmem>>, vector<1x64x32xbf16>
    %213 = vector.shape_cast %212 : vector<1x64x32xbf16> to vector<64x32xbf16>
    %214 = arith.truncf %211 : vector<32x9xf32> to vector<32x9xbf16>
    %cst_199 = arith.constant dense<0.000000e+00> : vector<64x9xf32>
    %215 = tpu.matmul %213, %214, %cst_199 {dimension_numbers = #tpu.dot_dimension_numbers<[1], [0], [0], [1], [0, 0, 1, 1], [], []>} : vector<64x32xbf16>, vector<32x9xbf16>, vector<64x9xf32> -> vector<64x9xf32>
    %216 = arith.addf %208, %215 : vector<64x9xf32>
    %c6_200 = arith.constant 6 : index
    %c0_201 = arith.constant 0 : index
    %c0_202 = arith.constant 0 : index
    %217 = vector.load %arg10[%c6_200, %c0_201, %c0_202] : memref<9x25x9xbf16, #tpu.memory_space<vmem>>, vector<1x25x9xbf16>
    %218 = vector.shape_cast %217 : vector<1x25x9xbf16> to vector<25x9xbf16>
    %cst_203 = arith.constant dense<0.000000e+00> : vector<32x9xf32>
    %219 = tpu.matmul %167, %218, %cst_203 {dimension_numbers = #tpu.dot_dimension_numbers<[1], [0], [0], [1], [0, 0, 1, 1], [], []>} : vector<32x25xbf16>, vector<25x9xbf16>, vector<32x9xf32> -> vector<32x9xf32>
    %c6_204 = arith.constant 6 : index
    %c0_205 = arith.constant 0 : index
    %c0_206 = arith.constant 0 : index
    %220 = vector.load %arg11[%c6_204, %c0_205, %c0_206] : memref<9x64x32xbf16, #tpu.memory_space<vmem>>, vector<1x64x32xbf16>
    %221 = vector.shape_cast %220 : vector<1x64x32xbf16> to vector<64x32xbf16>
    %222 = arith.truncf %219 : vector<32x9xf32> to vector<32x9xbf16>
    %cst_207 = arith.constant dense<0.000000e+00> : vector<64x9xf32>
    %223 = tpu.matmul %221, %222, %cst_207 {dimension_numbers = #tpu.dot_dimension_numbers<[1], [0], [0], [1], [0, 0, 1, 1], [], []>} : vector<64x32xbf16>, vector<32x9xbf16>, vector<64x9xf32> -> vector<64x9xf32>
    %224 = arith.addf %216, %223 : vector<64x9xf32>
    %c7_208 = arith.constant 7 : index
    %c0_209 = arith.constant 0 : index
    %c0_210 = arith.constant 0 : index
    %225 = vector.load %arg10[%c7_208, %c0_209, %c0_210] : memref<9x25x9xbf16, #tpu.memory_space<vmem>>, vector<1x25x9xbf16>
    %226 = vector.shape_cast %225 : vector<1x25x9xbf16> to vector<25x9xbf16>
    %cst_211 = arith.constant dense<0.000000e+00> : vector<32x9xf32>
    %227 = tpu.matmul %167, %226, %cst_211 {dimension_numbers = #tpu.dot_dimension_numbers<[1], [0], [0], [1], [0, 0, 1, 1], [], []>} : vector<32x25xbf16>, vector<25x9xbf16>, vector<32x9xf32> -> vector<32x9xf32>
    %c7_212 = arith.constant 7 : index
    %c0_213 = arith.constant 0 : index
    %c0_214 = arith.constant 0 : index
    %228 = vector.load %arg11[%c7_212, %c0_213, %c0_214] : memref<9x64x32xbf16, #tpu.memory_space<vmem>>, vector<1x64x32xbf16>
    %229 = vector.shape_cast %228 : vector<1x64x32xbf16> to vector<64x32xbf16>
    %230 = arith.truncf %227 : vector<32x9xf32> to vector<32x9xbf16>
    %cst_215 = arith.constant dense<0.000000e+00> : vector<64x9xf32>
    %231 = tpu.matmul %229, %230, %cst_215 {dimension_numbers = #tpu.dot_dimension_numbers<[1], [0], [0], [1], [0, 0, 1, 1], [], []>} : vector<64x32xbf16>, vector<32x9xbf16>, vector<64x9xf32> -> vector<64x9xf32>
    %232 = arith.addf %224, %231 : vector<64x9xf32>
    %c8_216 = arith.constant 8 : index
    %c0_217 = arith.constant 0 : index
    %c0_218 = arith.constant 0 : index
    %233 = vector.load %arg10[%c8_216, %c0_217, %c0_218] : memref<9x25x9xbf16, #tpu.memory_space<vmem>>, vector<1x25x9xbf16>
    %234 = vector.shape_cast %233 : vector<1x25x9xbf16> to vector<25x9xbf16>
    %cst_219 = arith.constant dense<0.000000e+00> : vector<32x9xf32>
    %235 = tpu.matmul %167, %234, %cst_219 {dimension_numbers = #tpu.dot_dimension_numbers<[1], [0], [0], [1], [0, 0, 1, 1], [], []>} : vector<32x25xbf16>, vector<25x9xbf16>, vector<32x9xf32> -> vector<32x9xf32>
    %c8_220 = arith.constant 8 : index
    %c0_221 = arith.constant 0 : index
    %c0_222 = arith.constant 0 : index
    %236 = vector.load %arg11[%c8_220, %c0_221, %c0_222] : memref<9x64x32xbf16, #tpu.memory_space<vmem>>, vector<1x64x32xbf16>
    %237 = vector.shape_cast %236 : vector<1x64x32xbf16> to vector<64x32xbf16>
    %238 = arith.truncf %235 : vector<32x9xf32> to vector<32x9xbf16>
    %cst_223 = arith.constant dense<0.000000e+00> : vector<64x9xf32>
    %239 = tpu.matmul %237, %238, %cst_223 {dimension_numbers = #tpu.dot_dimension_numbers<[1], [0], [0], [1], [0, 0, 1, 1], [], []>} : vector<64x32xbf16>, vector<32x9xbf16>, vector<64x9xf32> -> vector<64x9xf32>
    %240 = arith.addf %232, %239 : vector<64x9xf32>
    %c0_224 = arith.constant 0 : index
    %c0_225 = arith.constant 0 : index
    %241 = vector.load %arg12[%c0_224, %c0_225] : memref<64x1xf32, #tpu.memory_space<vmem>>, vector<64x1xf32>
    %242 = vector.broadcast %241 : vector<64x1xf32> to vector<64x9xf32>
    %243 = arith.addf %240, %242 : vector<64x9xf32>
    %cst_226 = arith.constant 0.000000e+00 : f32
    %244 = vector.broadcast %cst_226 : f32 to vector<64x9xf32>
    %245 = arith.maximumf %243, %244 : vector<64x9xf32>
    %246 = arith.truncf %245 : vector<64x9xf32> to vector<64x9xbf16>
    %cst_227 = arith.constant 0.000000e+00 : f32
    %247 = vector.broadcast %cst_227 : f32 to vector<128x1xf32>
    %c0_228 = arith.constant 0 : index
    %c0_229 = arith.constant 0 : index
    %c0_230 = arith.constant 0 : index
    %248 = vector.load %arg13[%c0_228, %c0_229, %c0_230] : memref<9x9x1xbf16, #tpu.memory_space<vmem>>, vector<1x9x1xbf16>
    %249 = vector.shape_cast %248 : vector<1x9x1xbf16> to vector<9x1xbf16>
    %cst_231 = arith.constant dense<0.000000e+00> : vector<64x1xf32>
    %250 = tpu.matmul %246, %249, %cst_231 {dimension_numbers = #tpu.dot_dimension_numbers<[1], [0], [0], [1], [0, 0, 1, 1], [], []>} : vector<64x9xbf16>, vector<9x1xbf16>, vector<64x1xf32> -> vector<64x1xf32>
    %c0_232 = arith.constant 0 : index
    %c0_233 = arith.constant 0 : index
    %c0_234 = arith.constant 0 : index
    %251 = vector.load %arg14[%c0_232, %c0_233, %c0_234] : memref<9x128x64xbf16, #tpu.memory_space<vmem>>, vector<1x128x64xbf16>
    %252 = vector.shape_cast %251 : vector<1x128x64xbf16> to vector<128x64xbf16>
    %253 = arith.truncf %250 : vector<64x1xf32> to vector<64x1xbf16>
    %cst_235 = arith.constant dense<0.000000e+00> : vector<128x1xf32>
    %254 = tpu.matmul %252, %253, %cst_235 {dimension_numbers = #tpu.dot_dimension_numbers<[1], [0], [0], [1], [0, 0, 1, 1], [], []>} : vector<128x64xbf16>, vector<64x1xbf16>, vector<128x1xf32> -> vector<128x1xf32>
    %255 = arith.addf %247, %254 : vector<128x1xf32>
    %c1_236 = arith.constant 1 : index
    %c0_237 = arith.constant 0 : index
    %c0_238 = arith.constant 0 : index
    %256 = vector.load %arg13[%c1_236, %c0_237, %c0_238] : memref<9x9x1xbf16, #tpu.memory_space<vmem>>, vector<1x9x1xbf16>
    %257 = vector.shape_cast %256 : vector<1x9x1xbf16> to vector<9x1xbf16>
    %cst_239 = arith.constant dense<0.000000e+00> : vector<64x1xf32>
    %258 = tpu.matmul %246, %257, %cst_239 {dimension_numbers = #tpu.dot_dimension_numbers<[1], [0], [0], [1], [0, 0, 1, 1], [], []>} : vector<64x9xbf16>, vector<9x1xbf16>, vector<64x1xf32> -> vector<64x1xf32>
    %c1_240 = arith.constant 1 : index
    %c0_241 = arith.constant 0 : index
    %c0_242 = arith.constant 0 : index
    %259 = vector.load %arg14[%c1_240, %c0_241, %c0_242] : memref<9x128x64xbf16, #tpu.memory_space<vmem>>, vector<1x128x64xbf16>
    %260 = vector.shape_cast %259 : vector<1x128x64xbf16> to vector<128x64xbf16>
    %261 = arith.truncf %258 : vector<64x1xf32> to vector<64x1xbf16>
    %cst_243 = arith.constant dense<0.000000e+00> : vector<128x1xf32>
    %262 = tpu.matmul %260, %261, %cst_243 {dimension_numbers = #tpu.dot_dimension_numbers<[1], [0], [0], [1], [0, 0, 1, 1], [], []>} : vector<128x64xbf16>, vector<64x1xbf16>, vector<128x1xf32> -> vector<128x1xf32>
    %263 = arith.addf %255, %262 : vector<128x1xf32>
    %c2_244 = arith.constant 2 : index
    %c0_245 = arith.constant 0 : index
    %c0_246 = arith.constant 0 : index
    %264 = vector.load %arg13[%c2_244, %c0_245, %c0_246] : memref<9x9x1xbf16, #tpu.memory_space<vmem>>, vector<1x9x1xbf16>
    %265 = vector.shape_cast %264 : vector<1x9x1xbf16> to vector<9x1xbf16>
    %cst_247 = arith.constant dense<0.000000e+00> : vector<64x1xf32>
    %266 = tpu.matmul %246, %265, %cst_247 {dimension_numbers = #tpu.dot_dimension_numbers<[1], [0], [0], [1], [0, 0, 1, 1], [], []>} : vector<64x9xbf16>, vector<9x1xbf16>, vector<64x1xf32> -> vector<64x1xf32>
    %c2_248 = arith.constant 2 : index
    %c0_249 = arith.constant 0 : index
    %c0_250 = arith.constant 0 : index
    %267 = vector.load %arg14[%c2_248, %c0_249, %c0_250] : memref<9x128x64xbf16, #tpu.memory_space<vmem>>, vector<1x128x64xbf16>
    %268 = vector.shape_cast %267 : vector<1x128x64xbf16> to vector<128x64xbf16>
    %269 = arith.truncf %266 : vector<64x1xf32> to vector<64x1xbf16>
    %cst_251 = arith.constant dense<0.000000e+00> : vector<128x1xf32>
    %270 = tpu.matmul %268, %269, %cst_251 {dimension_numbers = #tpu.dot_dimension_numbers<[1], [0], [0], [1], [0, 0, 1, 1], [], []>} : vector<128x64xbf16>, vector<64x1xbf16>, vector<128x1xf32> -> vector<128x1xf32>
    %271 = arith.addf %263, %270 : vector<128x1xf32>
    %c3_252 = arith.constant 3 : index
    %c0_253 = arith.constant 0 : index
    %c0_254 = arith.constant 0 : index
    %272 = vector.load %arg13[%c3_252, %c0_253, %c0_254] : memref<9x9x1xbf16, #tpu.memory_space<vmem>>, vector<1x9x1xbf16>
    %273 = vector.shape_cast %272 : vector<1x9x1xbf16> to vector<9x1xbf16>
    %cst_255 = arith.constant dense<0.000000e+00> : vector<64x1xf32>
    %274 = tpu.matmul %246, %273, %cst_255 {dimension_numbers = #tpu.dot_dimension_numbers<[1], [0], [0], [1], [0, 0, 1, 1], [], []>} : vector<64x9xbf16>, vector<9x1xbf16>, vector<64x1xf32> -> vector<64x1xf32>
    %c3_256 = arith.constant 3 : index
    %c0_257 = arith.constant 0 : index
    %c0_258 = arith.constant 0 : index
    %275 = vector.load %arg14[%c3_256, %c0_257, %c0_258] : memref<9x128x64xbf16, #tpu.memory_space<vmem>>, vector<1x128x64xbf16>
    %276 = vector.shape_cast %275 : vector<1x128x64xbf16> to vector<128x64xbf16>
    %277 = arith.truncf %274 : vector<64x1xf32> to vector<64x1xbf16>
    %cst_259 = arith.constant dense<0.000000e+00> : vector<128x1xf32>
    %278 = tpu.matmul %276, %277, %cst_259 {dimension_numbers = #tpu.dot_dimension_numbers<[1], [0], [0], [1], [0, 0, 1, 1], [], []>} : vector<128x64xbf16>, vector<64x1xbf16>, vector<128x1xf32> -> vector<128x1xf32>
    %279 = arith.addf %271, %278 : vector<128x1xf32>
    %c4_260 = arith.constant 4 : index
    %c0_261 = arith.constant 0 : index
    %c0_262 = arith.constant 0 : index
    %280 = vector.load %arg13[%c4_260, %c0_261, %c0_262] : memref<9x9x1xbf16, #tpu.memory_space<vmem>>, vector<1x9x1xbf16>
    %281 = vector.shape_cast %280 : vector<1x9x1xbf16> to vector<9x1xbf16>
    %cst_263 = arith.constant dense<0.000000e+00> : vector<64x1xf32>
    %282 = tpu.matmul %246, %281, %cst_263 {dimension_numbers = #tpu.dot_dimension_numbers<[1], [0], [0], [1], [0, 0, 1, 1], [], []>} : vector<64x9xbf16>, vector<9x1xbf16>, vector<64x1xf32> -> vector<64x1xf32>
    %c4_264 = arith.constant 4 : index
    %c0_265 = arith.constant 0 : index
    %c0_266 = arith.constant 0 : index
    %283 = vector.load %arg14[%c4_264, %c0_265, %c0_266] : memref<9x128x64xbf16, #tpu.memory_space<vmem>>, vector<1x128x64xbf16>
    %284 = vector.shape_cast %283 : vector<1x128x64xbf16> to vector<128x64xbf16>
    %285 = arith.truncf %282 : vector<64x1xf32> to vector<64x1xbf16>
    %cst_267 = arith.constant dense<0.000000e+00> : vector<128x1xf32>
    %286 = tpu.matmul %284, %285, %cst_267 {dimension_numbers = #tpu.dot_dimension_numbers<[1], [0], [0], [1], [0, 0, 1, 1], [], []>} : vector<128x64xbf16>, vector<64x1xbf16>, vector<128x1xf32> -> vector<128x1xf32>
    %287 = arith.addf %279, %286 : vector<128x1xf32>
    %c5_268 = arith.constant 5 : index
    %c0_269 = arith.constant 0 : index
    %c0_270 = arith.constant 0 : index
    %288 = vector.load %arg13[%c5_268, %c0_269, %c0_270] : memref<9x9x1xbf16, #tpu.memory_space<vmem>>, vector<1x9x1xbf16>
    %289 = vector.shape_cast %288 : vector<1x9x1xbf16> to vector<9x1xbf16>
    %cst_271 = arith.constant dense<0.000000e+00> : vector<64x1xf32>
    %290 = tpu.matmul %246, %289, %cst_271 {dimension_numbers = #tpu.dot_dimension_numbers<[1], [0], [0], [1], [0, 0, 1, 1], [], []>} : vector<64x9xbf16>, vector<9x1xbf16>, vector<64x1xf32> -> vector<64x1xf32>
    %c5_272 = arith.constant 5 : index
    %c0_273 = arith.constant 0 : index
    %c0_274 = arith.constant 0 : index
    %291 = vector.load %arg14[%c5_272, %c0_273, %c0_274] : memref<9x128x64xbf16, #tpu.memory_space<vmem>>, vector<1x128x64xbf16>
    %292 = vector.shape_cast %291 : vector<1x128x64xbf16> to vector<128x64xbf16>
    %293 = arith.truncf %290 : vector<64x1xf32> to vector<64x1xbf16>
    %cst_275 = arith.constant dense<0.000000e+00> : vector<128x1xf32>
    %294 = tpu.matmul %292, %293, %cst_275 {dimension_numbers = #tpu.dot_dimension_numbers<[1], [0], [0], [1], [0, 0, 1, 1], [], []>} : vector<128x64xbf16>, vector<64x1xbf16>, vector<128x1xf32> -> vector<128x1xf32>
    %295 = arith.addf %287, %294 : vector<128x1xf32>
    %c6_276 = arith.constant 6 : index
    %c0_277 = arith.constant 0 : index
    %c0_278 = arith.constant 0 : index
    %296 = vector.load %arg13[%c6_276, %c0_277, %c0_278] : memref<9x9x1xbf16, #tpu.memory_space<vmem>>, vector<1x9x1xbf16>
    %297 = vector.shape_cast %296 : vector<1x9x1xbf16> to vector<9x1xbf16>
    %cst_279 = arith.constant dense<0.000000e+00> : vector<64x1xf32>
    %298 = tpu.matmul %246, %297, %cst_279 {dimension_numbers = #tpu.dot_dimension_numbers<[1], [0], [0], [1], [0, 0, 1, 1], [], []>} : vector<64x9xbf16>, vector<9x1xbf16>, vector<64x1xf32> -> vector<64x1xf32>
    %c6_280 = arith.constant 6 : index
    %c0_281 = arith.constant 0 : index
    %c0_282 = arith.constant 0 : index
    %299 = vector.load %arg14[%c6_280, %c0_281, %c0_282] : memref<9x128x64xbf16, #tpu.memory_space<vmem>>, vector<1x128x64xbf16>
    %300 = vector.shape_cast %299 : vector<1x128x64xbf16> to vector<128x64xbf16>
    %301 = arith.truncf %298 : vector<64x1xf32> to vector<64x1xbf16>
    %cst_283 = arith.constant dense<0.000000e+00> : vector<128x1xf32>
    %302 = tpu.matmul %300, %301, %cst_283 {dimension_numbers = #tpu.dot_dimension_numbers<[1], [0], [0], [1], [0, 0, 1, 1], [], []>} : vector<128x64xbf16>, vector<64x1xbf16>, vector<128x1xf32> -> vector<128x1xf32>
    %303 = arith.addf %295, %302 : vector<128x1xf32>
    %c7_284 = arith.constant 7 : index
    %c0_285 = arith.constant 0 : index
    %c0_286 = arith.constant 0 : index
    %304 = vector.load %arg13[%c7_284, %c0_285, %c0_286] : memref<9x9x1xbf16, #tpu.memory_space<vmem>>, vector<1x9x1xbf16>
    %305 = vector.shape_cast %304 : vector<1x9x1xbf16> to vector<9x1xbf16>
    %cst_287 = arith.constant dense<0.000000e+00> : vector<64x1xf32>
    %306 = tpu.matmul %246, %305, %cst_287 {dimension_numbers = #tpu.dot_dimension_numbers<[1], [0], [0], [1], [0, 0, 1, 1], [], []>} : vector<64x9xbf16>, vector<9x1xbf16>, vector<64x1xf32> -> vector<64x1xf32>
    %c7_288 = arith.constant 7 : index
    %c0_289 = arith.constant 0 : index
    %c0_290 = arith.constant 0 : index
    %307 = vector.load %arg14[%c7_288, %c0_289, %c0_290] : memref<9x128x64xbf16, #tpu.memory_space<vmem>>, vector<1x128x64xbf16>
    %308 = vector.shape_cast %307 : vector<1x128x64xbf16> to vector<128x64xbf16>
    %309 = arith.truncf %306 : vector<64x1xf32> to vector<64x1xbf16>
    %cst_291 = arith.constant dense<0.000000e+00> : vector<128x1xf32>
    %310 = tpu.matmul %308, %309, %cst_291 {dimension_numbers = #tpu.dot_dimension_numbers<[1], [0], [0], [1], [0, 0, 1, 1], [], []>} : vector<128x64xbf16>, vector<64x1xbf16>, vector<128x1xf32> -> vector<128x1xf32>
    %311 = arith.addf %303, %310 : vector<128x1xf32>
    %c8_292 = arith.constant 8 : index
    %c0_293 = arith.constant 0 : index
    %c0_294 = arith.constant 0 : index
    %312 = vector.load %arg13[%c8_292, %c0_293, %c0_294] : memref<9x9x1xbf16, #tpu.memory_space<vmem>>, vector<1x9x1xbf16>
    %313 = vector.shape_cast %312 : vector<1x9x1xbf16> to vector<9x1xbf16>
    %cst_295 = arith.constant dense<0.000000e+00> : vector<64x1xf32>
    %314 = tpu.matmul %246, %313, %cst_295 {dimension_numbers = #tpu.dot_dimension_numbers<[1], [0], [0], [1], [0, 0, 1, 1], [], []>} : vector<64x9xbf16>, vector<9x1xbf16>, vector<64x1xf32> -> vector<64x1xf32>
    %c8_296 = arith.constant 8 : index
    %c0_297 = arith.constant 0 : index
    %c0_298 = arith.constant 0 : index
    %315 = vector.load %arg14[%c8_296, %c0_297, %c0_298] : memref<9x128x64xbf16, #tpu.memory_space<vmem>>, vector<1x128x64xbf16>
    %316 = vector.shape_cast %315 : vector<1x128x64xbf16> to vector<128x64xbf16>
    %317 = arith.truncf %314 : vector<64x1xf32> to vector<64x1xbf16>
    %cst_299 = arith.constant dense<0.000000e+00> : vector<128x1xf32>
    %318 = tpu.matmul %316, %317, %cst_299 {dimension_numbers = #tpu.dot_dimension_numbers<[1], [0], [0], [1], [0, 0, 1, 1], [], []>} : vector<128x64xbf16>, vector<64x1xbf16>, vector<128x1xf32> -> vector<128x1xf32>
    %319 = arith.addf %311, %318 : vector<128x1xf32>
    %c0_300 = arith.constant 0 : index
    %c0_301 = arith.constant 0 : index
    %320 = vector.load %arg15[%c0_300, %c0_301] : memref<128x1xf32, #tpu.memory_space<vmem>>, vector<128x1xf32>
    %321 = arith.addf %319, %320 : vector<128x1xf32>
    %cst_302 = arith.constant 0.000000e+00 : f32
    %322 = vector.broadcast %cst_302 : f32 to vector<128x1xf32>
    %323 = arith.maximumf %321, %322 : vector<128x1xf32>
    %324 = arith.truncf %323 : vector<128x1xf32> to vector<128x1xbf16>
    %c0_303 = arith.constant 0 : index
    %c0_304 = arith.constant 0 : index
    %325 = vector.load %arg16[%c0_303, %c0_304] : memref<100x128xbf16, #tpu.memory_space<vmem>>, vector<100x128xbf16>
    %cst_305 = arith.constant dense<0.000000e+00> : vector<100x1xf32>
    %326 = tpu.matmul %325, %324, %cst_305 {dimension_numbers = #tpu.dot_dimension_numbers<[1], [0], [0], [1], [0, 0, 1, 1], [], []>} : vector<100x128xbf16>, vector<128x1xbf16>, vector<100x1xf32> -> vector<100x1xf32>
    %c0_306 = arith.constant 0 : index
    %c0_307 = arith.constant 0 : index
    %327 = vector.load %arg17[%c0_306, %c0_307] : memref<100x1xf32, #tpu.memory_space<vmem>>, vector<100x1xf32>
    %328 = arith.addf %326, %327 : vector<100x1xf32>
    %cst_308 = arith.constant 0.000000e+00 : f32
    %329 = vector.broadcast %cst_308 : f32 to vector<100x1xf32>
    %330 = arith.maximumf %328, %329 : vector<100x1xf32>
    %331 = arith.truncf %330 : vector<100x1xf32> to vector<100x1xbf16>
    %c0_309 = arith.constant 0 : index
    %c0_310 = arith.constant 0 : index
    %332 = vector.load %arg18[%c0_309, %c0_310] : memref<1x100xbf16, #tpu.memory_space<vmem>>, vector<1x100xbf16>
    %cst_311 = arith.constant dense<0.000000e+00> : vector<1x1xf32>
    %333 = tpu.matmul %332, %331, %cst_311 {dimension_numbers = #tpu.dot_dimension_numbers<[1], [0], [0], [1], [0, 0, 1, 1], [], []>} : vector<1x100xbf16>, vector<100x1xbf16>, vector<1x1xf32> -> vector<1x1xf32>
    %c0_312 = arith.constant 0 : index
    %c0_313 = arith.constant 0 : index
    %334 = vector.load %arg19[%c0_312, %c0_313] : memref<1x1xf32, #tpu.memory_space<vmem>>, vector<1x1xf32>
    %335 = arith.addf %333, %334 : vector<1x1xf32>
    %c0_314 = arith.constant 0 : index
    %c0_315 = arith.constant 0 : index
    %c0_316 = arith.constant 0 : index
    %336 = vector.load %arg20[%c0_314, %c0_315, %c0_316] : memref<1x1x1xf32, #tpu.memory_space<vmem>>, vector<1x1x1xf32>
    %337 = vector.shape_cast %336 : vector<1x1x1xf32> to vector<1x1xf32>
    %338 = vector.shape_cast %335 : vector<1x1xf32> to vector<1x1x1xf32>
    tpu.vector_store %arg20[%c0_314, %c0_315, %c0_316], %338 {strides = array<i32>} : memref<1x1x1xf32, #tpu.memory_space<vmem>>, vector<1x1x1xf32>,
    return
  }
  func.func @transform_0(%arg0: i32) -> (i32, i32, i32) {
    %c0_i32 = arith.constant 0 : i32
    %c0_i32_0 = arith.constant 0 : i32
    %c0_i32_1 = arith.constant 0 : i32
    return %arg0, %c0_i32, %c0_i32_0 : i32, i32, i32
  }
  func.func @transform_1(%arg0: i32) -> (i32, i32) {
    %c0_i32 = arith.constant 0 : i32
    %c0_i32_0 = arith.constant 0 : i32
    %c0_i32_1 = arith.constant 0 : i32
    return %c0_i32, %c0_i32_0 : i32, i32
  }
  func.func @transform_2(%arg0: i32) -> (i32, i32) {
    %c0_i32 = arith.constant 0 : i32
    %c0_i32_0 = arith.constant 0 : i32
    %c0_i32_1 = arith.constant 0 : i32
    return %c0_i32, %c0_i32_0 : i32, i32
  }
  func.func @transform_3(%arg0: i32) -> (i32, i32, i32) {
    %c0_i32 = arith.constant 0 : i32
    %c0_i32_0 = arith.constant 0 : i32
    %c0_i32_1 = arith.constant 0 : i32
    %c0_i32_2 = arith.constant 0 : i32
    return %c0_i32, %c0_i32_0, %c0_i32_1 : i32, i32, i32
  }
  func.func @transform_4(%arg0: i32) -> (i32, i32, i32) {
    %c0_i32 = arith.constant 0 : i32
    %c0_i32_0 = arith.constant 0 : i32
    %c0_i32_1 = arith.constant 0 : i32
    %c0_i32_2 = arith.constant 0 : i32
    return %c0_i32, %c0_i32_0, %c0_i32_1 : i32, i32, i32
  }
  func.func @transform_5(%arg0: i32) -> (i32, i32) {
    %c0_i32 = arith.constant 0 : i32
    %c0_i32_0 = arith.constant 0 : i32
    %c0_i32_1 = arith.constant 0 : i32
    return %c0_i32, %c0_i32_0 : i32, i32
  }
  func.func @transform_6(%arg0: i32) -> (i32, i32, i32) {
    %c0_i32 = arith.constant 0 : i32
    %c0_i32_0 = arith.constant 0 : i32
    %c0_i32_1 = arith.constant 0 : i32
    %c0_i32_2 = arith.constant 0 : i32
    return %c0_i32, %c0_i32_0, %c0_i32_1 : i32, i32, i32
  }
  func.func @transform_7(%arg0: i32) -> (i32, i32, i32) {
    %c0_i32 = arith.constant 0 : i32
    %c0_i32_0 = arith.constant 0 : i32
    %c0_i32_1 = arith.constant 0 : i32
    %c0_i32_2 = arith.constant 0 : i32
    return %c0_i32, %c0_i32_0, %c0_i32_1 : i32, i32, i32
  }
  func.func @transform_8(%arg0: i32) -> (i32, i32) {
    %c0_i32 = arith.constant 0 : i32
    %c0_i32_0 = arith.constant 0 : i32
    %c0_i32_1 = arith.constant 0 : i32
    return %c0_i32, %c0_i32_0 : i32, i32
  }
  func.func @transform_9(%arg0: i32) -> (i32, i32, i32) {
    %c0_i32 = arith.constant 0 : i32
    %c0_i32_0 = arith.constant 0 : i32
    %c0_i32_1 = arith.constant 0 : i32
    %c0_i32_2 = arith.constant 0 : i32
    return %c0_i32, %c0_i32_0, %c0_i32_1 : i32, i32, i32
  }
  func.func @transform_10(%arg0: i32) -> (i32, i32, i32) {
    %c0_i32 = arith.constant 0 : i32
    %c0_i32_0 = arith.constant 0 : i32
    %c0_i32_1 = arith.constant 0 : i32
    %c0_i32_2 = arith.constant 0 : i32
    return %c0_i32, %c0_i32_0, %c0_i32_1 : i32, i32, i32
  }
  func.func @transform_11(%arg0: i32) -> (i32, i32) {
    %c0_i32 = arith.constant 0 : i32
    %c0_i32_0 = arith.constant 0 : i32
    %c0_i32_1 = arith.constant 0 : i32
    return %c0_i32, %c0_i32_0 : i32, i32
  }
  func.func @transform_12(%arg0: i32) -> (i32, i32, i32) {
    %c0_i32 = arith.constant 0 : i32
    %c0_i32_0 = arith.constant 0 : i32
    %c0_i32_1 = arith.constant 0 : i32
    %c0_i32_2 = arith.constant 0 : i32
    return %c0_i32, %c0_i32_0, %c0_i32_1 : i32, i32, i32
  }
  func.func @transform_13(%arg0: i32) -> (i32, i32, i32) {
    %c0_i32 = arith.constant 0 : i32
    %c0_i32_0 = arith.constant 0 : i32
    %c0_i32_1 = arith.constant 0 : i32
    %c0_i32_2 = arith.constant 0 : i32
    return %c0_i32, %c0_i32_0, %c0_i32_1 : i32, i32, i32
  }
  func.func @transform_14(%arg0: i32) -> (i32, i32) {
    %c0_i32 = arith.constant 0 : i32
    %c0_i32_0 = arith.constant 0 : i32
    %c0_i32_1 = arith.constant 0 : i32
    return %c0_i32, %c0_i32_0 : i32, i32
  }
  func.func @transform_15(%arg0: i32) -> (i32, i32) {
    %c0_i32 = arith.constant 0 : i32
    %c0_i32_0 = arith.constant 0 : i32
    %c0_i32_1 = arith.constant 0 : i32
    return %c0_i32, %c0_i32_0 : i32, i32
  }
  func.func @transform_16(%arg0: i32) -> (i32, i32) {
    %c0_i32 = arith.constant 0 : i32
    %c0_i32_0 = arith.constant 0 : i32
    %c0_i32_1 = arith.constant 0 : i32
    return %c0_i32, %c0_i32_0 : i32, i32
  }
  func.func @transform_17(%arg0: i32) -> (i32, i32) {
    %c0_i32 = arith.constant 0 : i32
    %c0_i32_0 = arith.constant 0 : i32
    %c0_i32_1 = arith.constant 0 : i32
    return %c0_i32, %c0_i32_0 : i32, i32
  }
  func.func @transform_18(%arg0: i32) -> (i32, i32) {
    %c0_i32 = arith.constant 0 : i32
    %c0_i32_0 = arith.constant 0 : i32
    %c0_i32_1 = arith.constant 0 : i32
    return %c0_i32, %c0_i32_0 : i32, i32
  }
  func.func @transform_19(%arg0: i32) -> (i32, i32, i32) {
    %c0_i32 = arith.constant 0 : i32
    %c0_i32_0 = arith.constant 0 : i32
    %c0_i32_1 = arith.constant 0 : i32
    return %arg0, %c0_i32, %c0_i32_0 : i32, i32, i32
  }
}

</mosaic_0001>

<llo_original>
// kernel: pallas_forward.2
$region0: #{pallas_forward.2}
  #allocation0 [shape = 'u32[]', space=smem, size = 0x4, offset = 0x4, fixed_abs, tag = 'smem constant byte address 0x4 - core index']
  #allocation1 [shape = 'u32[144,128]{1,0:T(1,128)}', space=vmem, size = 0x12000, scoped, tag = 'internal scratch']
  %s0 = inlined_call_operand.vmem [shape: bf16[2,32,2209], index: 0, kind: input, shape index: {}]
  %s1 = inlined_call_operand.vmem [shape: bf16[4,32], index: 1, kind: input, shape index: {}]
  %s2 = inlined_call_operand.vmem [shape: f32[4,1], index: 2, kind: input, shape index: {}]
  %s3 = inlined_call_operand.vmem [shape: bf16[2,4,2209], index: 3, kind: output, shape index: {}]
  %s4 = sld [smem:[#allocation0]]
  $region45: #{pallas_forward.2} parent=0
    _
  %s6 = ssub.s32 1, %s4
  %s7 = scalar_select 0, %s6, %s4
  loop: start=0, step=1, limit=4
  $region2: #{pallas_forward.2} parent=0 // loop_pre_header
    _
  $region3: #{pallas_forward.2} parent=0 // loop_header
    %s9 = sphi 0, %s13
    %p10 = scmp.ge.s32.totalorder %s9, 4
    %s19 = sphi 0, %s21
    %s22 = sphi 0, %s19
    %s23 = sphi 0, %s22
    %s39 = sphi 0, %s23
    %s43 = sphi 0, %s43
    %s45 = sphi 0, %s43
    %s46 = sphi 0, %s45
    %s60 = sphi 0, %s46
    %s64 = sphi 0, %s64
    %s66 = sphi 0, %s64
    %s67 = sphi 0, %s66
    %s81 = sphi 0, %s67
    %s87 = sphi 0, %s89
    %s90 = sphi 0, %s87
    %s91 = sphi 0, %s90
    %s107 = sphi 0, %s91
  $region4: #{pallas_forward.2} parent=0 // loop_header_branch
    %12 = sbr.rel (%p10) target = $region8
  $region5: #{pallas_forward.2} parent=0 // loop_body
    %s14 = ssub.s32 %s9, 1
    %s15 = ssub.s32 %s9, 2
    %s16 = sadd.s32 %s9, 1
    %s17 = ssub.s32 %s9, %s16
    %p18 = scmp.eq.s32.totalorder %s17, 0
    %s20 = sadd.s32 %s19, 1
    %s21 = scalar_select %p18, %s19, %s20
    %p24 = pneg %p18
    %p25 = scmp.eq.s32.totalorder %s9, 1
    %p26 = por %p24, %p25
    %p27 = scmp.ne.s32.totalorder %s19, %s22
    %p28 = scmp.eq.s32.totalorder %s9, 0
    %p29 = por %p27, %p28
    %p30 = scmp.ne.s32.totalorder %s19, %s22
    %p31 = scmp.eq.s32.totalorder %s14, 1
    %p32 = por %p30, %p31
    %p33 = scmp.ne.s32.totalorder %s22, %s23
    %p34 = scmp.eq.s32.totalorder %s14, 0
    %p35 = por %p33, %p34
    %p36 = scmp.ne.s32.totalorder %s22, %s23
    %p37 = scmp.eq.s32.totalorder %s15, 1
    %p38 = por %p36, %p37
    %p40 = scmp.ne.s32.totalorder %s23, %s39
    %p41 = scmp.eq.s32.totalorder %s15, 0
    %p42 = por %p40, %p41
    %s44 = sadd.s32 %s43, 1
    %p47 = scmp.eq.s32.totalorder %s9, 1
    %p48 = scmp.ne.s32.totalorder %s43, %s45
    %p49 = scmp.eq.s32.totalorder %s9, 0
    %p50 = por %p48, %p49
    %p51 = scmp.ne.s32.totalorder %s43, %s45
    %p52 = scmp.eq.s32.totalorder %s14, 1
    %p53 = por %p51, %p52
    %p54 = scmp.ne.s32.totalorder %s45, %s46
    %p55 = scmp.eq.s32.totalorder %s14, 0
    %p56 = por %p54, %p55
    %p57 = scmp.ne.s32.totalorder %s45, %s46
    %p58 = scmp.eq.s32.totalorder %s15, 1
    %p59 = por %p57, %p58
    %p61 = scmp.ne.s32.totalorder %s46, %s60
    %p62 = scmp.eq.s32.totalorder %s15, 0
    %p63 = por %p61, %p62
    %s65 = sadd.s32 %s64, 1
    %p68 = scmp.eq.s32.totalorder %s9, 1
    %p69 = scmp.ne.s32.totalorder %s64, %s66
    %p70 = scmp.eq.s32.totalorder %s9, 0
    %p71 = por %p69, %p70
    %p72 = scmp.ne.s32.totalorder %s64, %s66
    %p73 = scmp.eq.s32.totalorder %s14, 1
    %p74 = por %p72, %p73
    %p75 = scmp.ne.s32.totalorder %s66, %s67
    %p76 = scmp.eq.s32.totalorder %s14, 0
    %p77 = por %p75, %p76
    %p78 = scmp.ne.s32.totalorder %s66, %s67
    %p79 = scmp.eq.s32.totalorder %s15, 1
    %p80 = por %p78, %p79
    %p82 = scmp.ne.s32.totalorder %s67, %s81
    %p83 = scmp.eq.s32.totalorder %s15, 0
    %p84 = por %p82, %p83
    %s85 = ssub.s32 %s9, %s16
    %p86 = scmp.eq.s32.totalorder %s85, 0
    %s88 = sadd.s32 %s87, 1
    %s89 = scalar_select %p86, %s87, %s88
    %p92 = pneg %p86
    %p93 = scmp.eq.s32.totalorder %s9, 1
    %p94 = por %p92, %p93
    %p95 = scmp.ne.s32.totalorder %s87, %s90
    %p96 = scmp.eq.s32.totalorder %s9, 0
    %p97 = por %p95, %p96
    %p98 = scmp.ne.s32.totalorder %s87, %s90
    %p99 = scmp.eq.s32.totalorder %s14, 1
    %p100 = por %p98, %p99
    %p101 = scmp.ne.s32.totalorder %s90, %s91
    %p102 = scmp.eq.s32.totalorder %s14, 0
    %p103 = por %p101, %p102
    %p104 = scmp.ne.s32.totalorder %s90, %s91
    %p105 = scmp.eq.s32.totalorder %s15, 1
    %p106 = por %p104, %p105
    %p108 = scmp.ne.s32.totalorder %s91, %s107
    %p109 = scmp.eq.s32.totalorder %s15, 0
    %p110 = por %p108, %p109
    %p111 = scmp.le.s32.totalorder 1, %s9
    %p112 = scmp.lt.s32.totalorder %s9, 3
    %p113 = pnand %p111, %p112
    %p114 = pneg %p113
    // Predicated region
    $region9: #{pallas_forward.2} parent=5 // pred_check
      _
    $region10: #{pallas_forward.2} parent=5 // pred_check_branch
      %116 = sbr.rel (%p113) target = $region12
    $region11: #{pallas_forward.2} parent=5 // pred_region
      %s117 = ssub.s32 %s9, 1
      // Predicated region
      $region13: #{pallas_forward.2} parent=11 // pred_check
        %p118 = pneg %p56
      $region14: #{pallas_forward.2} parent=11 // pred_check_branch
        %120 = sbr.rel (%p118) target = $region16
      $region15: #{pallas_forward.2} parent=11 // pred_region
        _
      $region16: #{pallas_forward.2} parent=11 // pred_fallthru
        _
      // Predicated region
      $region17: #{pallas_forward.2} parent=11 // pred_check
        %p121 = pneg %p77
      $region18: #{pallas_forward.2} parent=11 // pred_check_branch
        %123 = sbr.rel (%p121) target = $region20
      $region19: #{pallas_forward.2} parent=11 // pred_region
        _
      $region20: #{pallas_forward.2} parent=11 // pred_fallthru
        _
    $region12: #{pallas_forward.2} parent=5 // pred_fallthru
      _
    %p124 = scmp.lt.s32.totalorder %s9, 2
    // Predicated region
    $region21: #{pallas_forward.2} parent=5 // pred_check
      %p125 = pneg %p124
    $region22: #{pallas_forward.2} parent=5 // pred_check_branch
      %127 = sbr.rel (%p125) target = $region24
    $region23: #{pallas_forward.2} parent=5 // pred_region
      // Predicated region
      $region25: #{pallas_forward.2} parent=23 // pred_check
        %p128 = pneg %p29
      $region26: #{pallas_forward.2} parent=23 // pred_check_branch
        %130 = sbr.rel (%p128) target = $region28
      $region27: #{pallas_forward.2} parent=23 // pred_region
        %p131 = scmp.lt.s32.totalorder %s9, 1
        %s132 = scalar_select %p131, %s9, 1
        %s133 = smul.addr %s132, 72
        %s134 = smul.addr %s133, 4
        %s135 = scalar_lea.vmem %s0, %s134
      $region28: #{pallas_forward.2} parent=23 // pred_fallthru
        _
    $region24: #{pallas_forward.2} parent=5 // pred_fallthru
      _
    %p136 = scmp.le.s32.totalorder 1, %s9
    %p137 = scmp.lt.s32.totalorder %s9, 3
    %p138 = pnand %p136, %p137
    %p139 = pneg %p138
    // Predicated region
    $region29: #{pallas_forward.2} parent=5 // pred_check
      _
    $region30: #{pallas_forward.2} parent=5 // pred_check_branch
      %141 = sbr.rel (%p138) target = $region32
    $region31: #{pallas_forward.2} parent=5 // pred_region
      %s142 = ssub.s32 %s9, 1
      %p143 = scmp.lt.s32.totalorder %s14, 1
      %s144 = scalar_select %p143, %s14, 1
      %s145 = smul.addr %s144, 72
      %s146 = smul.addr %s145, 4
      %s147 = scalar_lea.vmem %s0, %s146
      %p148 = pneg %p35
      %p149 = pneg %p32
      %p150 = pneg %p56
      %p151 = pneg %p53
      %p152 = pneg %p77
      %p153 = pneg %p74
      %p154 = pneg %p103
      %p155 = pneg %p100
      %p156 = scmp.lt.s32.totalorder %s14, 1
      %s157 = scalar_select %p156, %s14, 1
      %s158 = smul.addr %s157, 18
      %s159 = smul.addr %s158, 2
      %s160 = scalar_lea.vmem %s3, %s159
      %p161 = scmp.lt.s32.totalorder %s14, 1
      %s162 = scalar_select %p161, %s14, 1
      %s163 = smul.addr %s162, 72
      %s164 = smul.addr %s163, 4
      %s165 = scalar_lea.vmem %s0, %s164
      %p166 = scmp.lt.s32.totalorder %s14, 1
      %s167 = scalar_select %p166, %s14, 1
      %s168 = smul.addr %s167, 18
      %s169 = smul.addr %s168, 2
      %s170 = scalar_lea.vmem %s3, %s169
      %v172 = vld [vmem:[%s1] sm:$0x3]
      %v173 = vld [vmem:[%s165] sm:$0xff]
      %v174 = vld [vmem:[%s165 + $0x8] sm:$0xff]
      %v175 = vld [vmem:[%s165 + $0x10] sm:$0xff]
      %v176 = vld [vmem:[%s165 + $0x18] sm:$0xff]
      %v177 = vld [vmem:[%s165 + $0x20] sm:$0xff]
      %v178 = vld [vmem:[%s165 + $0x28] sm:$0xff]
      %v179 = vld [vmem:[%s165 + $0x30] sm:$0xff]
      %v180 = vld [vmem:[%s165 + $0x38] sm:$0xff]
      %v181 = vld [vmem:[%s165 + $0x40] sm:$0xff]
      %v182 = vld [vmem:[%s165 + $0x48] sm:$0xff]
      %v183 = vld [vmem:[%s165 + $0x50] sm:$0xff]
      %v184 = vld [vmem:[%s165 + $0x58] sm:$0xff]
      %v185 = vld [vmem:[%s165 + $0x60] sm:$0xff]
      %v186 = vld [vmem:[%s165 + $0x68] sm:$0xff]
      %v187 = vld [vmem:[%s165 + $0x70] sm:$0xff]
      %v188 = vld [vmem:[%s165 + $0x78] sm:$0xff]
      %v189 = vld [vmem:[%s165 + $0x80] sm:$0xff]
      %v190 = vld [vmem:[%s165 + $0x88] sm:$0xff]
      %v191 = vld [vmem:[%s165 + $0x90] sm:$0xff]
      %v192 = vld [vmem:[%s165 + $0x98] sm:$0xff]
      %v193 = vld [vmem:[%s165 + $0xa0] sm:$0xff]
      %v194 = vld [vmem:[%s165 + $0xa8] sm:$0xff]
      %v195 = vld [vmem:[%s165 + $0xb0] sm:$0xff]
      %v196 = vld [vmem:[%s165 + $0xb8] sm:$0xff]
      %v197 = vld [vmem:[%s165 + $0xc0] sm:$0xff]
      %v198 = vld [vmem:[%s165 + $0xc8] sm:$0xff]
      %v199 = vld [vmem:[%s165 + $0xd0] sm:$0xff]
      %v200 = vld [vmem:[%s165 + $0xd8] sm:$0xff]
      %v201 = vld [vmem:[%s165 + $0xe0] sm:$0xff]
      %v202 = vld [vmem:[%s165 + $0xe8] sm:$0xff]
      %v203 = vld [vmem:[%s165 + $0xf0] sm:$0xff]
      %v204 = vld [vmem:[%s165 + $0xf8] sm:$0xff]
      %v205 = vld [vmem:[%s165 + $0x100] sm:$0xff]
      %v206 = vld [vmem:[%s165 + $0x108] sm:$0xff]
      %v207 = vld [vmem:[%s165 + $0x110] sm:$0xff]
      %v208 = vld [vmem:[%s165 + $0x118] sm:$0xff]
      %v209 = vld [vmem:[%s2] sm:$0xf]
      %211 = vset.pattern.permute.xlu0 0
      %212 = vperm.xlu0 %211, %v209
      %v213 = vpop.permute.xlu0 %212
      %v251 = vunpack.c.l.b16 %v173
      %v252 = vunpack.c.h.b16 %v173
      %v253 = vunpack.c.l.b16 %v174
      %v254 = vunpack.c.h.b16 %v174
      %v255 = vunpack.c.l.b16 %v175
      %v256 = vunpack.c.h.b16 %v175
      %v257 = vunpack.c.l.b16 %v176
      %v258 = vunpack.c.h.b16 %v176
      %v259 = vunpack.c.l.b16 %v177
      %v260 = vunpack.c.h.b16 %v177
      %v261 = vunpack.c.l.b16 %v178
      %v262 = vunpack.c.h.b16 %v178
      %v263 = vunpack.c.l.b16 %v179
      %v264 = vunpack.c.h.b16 %v179
      %v265 = vunpack.c.l.b16 %v180
      %v266 = vunpack.c.h.b16 %v180
      %v267 = vunpack.c.l.b16 %v181
      %v268 = vunpack.c.h.b16 %v181
      %v269 = vunpack.c.l.b16 %v182
      %v270 = vunpack.c.h.b16 %v182
      %v271 = vunpack.c.l.b16 %v183
      %v272 = vunpack.c.h.b16 %v183
      %v273 = vunpack.c.l.b16 %v184
      %v274 = vunpack.c.h.b16 %v184
      %v275 = vunpack.c.l.b16 %v185
      %v276 = vunpack.c.h.b16 %v185
      %v277 = vunpack.c.l.b16 %v186
      %v278 = vunpack.c.h.b16 %v186
      %v279 = vunpack.c.l.b16 %v187
      %v280 = vunpack.c.h.b16 %v187
      %v281 = vunpack.c.l.b16 %v188
      %v282 = vunpack.c.h.b16 %v188
      %v283 = vunpack.c.l.b16 %v189
      %v284 = vunpack.c.h.b16 %v189
      %v285 = vunpack.c.l.b16 %v190
      %v286 = vunpack.c.h.b16 %v190
      %v287 = vunpack.c.l.b16 %v191
      %v288 = vunpack.c.h.b16 %v191
      %v289 = vunpack.c.l.b16 %v192
      %v290 = vunpack.c.h.b16 %v192
      %v291 = vunpack.c.l.b16 %v193
      %v292 = vunpack.c.h.b16 %v193
      %v293 = vunpack.c.l.b16 %v194
      %v294 = vunpack.c.h.b16 %v194
      %v295 = vunpack.c.l.b16 %v195
      %v296 = vunpack.c.h.b16 %v195
      %v297 = vunpack.c.l.b16 %v196
      %v298 = vunpack.c.h.b16 %v196
      %v299 = vunpack.c.l.b16 %v197
      %v300 = vunpack.c.h.b16 %v197
      %v301 = vunpack.c.l.b16 %v198
      %v302 = vunpack.c.h.b16 %v198
      %v303 = vunpack.c.l.b16 %v199
      %v304 = vunpack.c.h.b16 %v199
      %v305 = vunpack.c.l.b16 %v200
      %v306 = vunpack.c.h.b16 %v200
      %v307 = vunpack.c.l.b16 %v201
      %v308 = vunpack.c.h.b16 %v201
      %v309 = vunpack.c.l.b16 %v202
      %v310 = vunpack.c.h.b16 %v202
      %v311 = vunpack.c.l.b16 %v203
      %v312 = vunpack.c.h.b16 %v203
      %v313 = vunpack.c.l.b16 %v204
      %v314 = vunpack.c.h.b16 %v204
      %v315 = vunpack.c.l.b16 %v205
      %v316 = vunpack.c.h.b16 %v205
      %v317 = vunpack.c.l.b16 %v206
      %v318 = vunpack.c.h.b16 %v206
      %v319 = vunpack.c.l.b16 %v207
      %v320 = vunpack.c.h.b16 %v207
      %v321 = vunpack.c.l.b16 %v208
      %v322 = vunpack.c.h.b16 %v208
      %v323 = vpack.c.b16 %v269, %v251
      %v324 = vpack.c.b16 %v270, %v252
      %v325 = vpack.c.b16 %v271, %v253
      %v326 = vpack.c.b16 %v272, %v254
      %v327 = vpack.c.b16 %v273, %v255
      %v328 = vpack.c.b16 %v274, %v256
      %v329 = vpack.c.b16 %v275, %v257
      %v330 = vpack.c.b16 %v276, %v258
      %v331 = vpack.c.b16 %v277, %v259
      %v332 = vpack.c.b16 %v278, %v260
      %v333 = vpack.c.b16 %v279, %v261
      %v334 = vpack.c.b16 %v280, %v262
      %v335 = vpack.c.b16 %v281, %v263
      %v336 = vpack.c.b16 %v282, %v264
      %v337 = vpack.c.b16 %v283, %v265
      %v338 = vpack.c.b16 %v284, %v266
      %v339 = vpack.c.b16 %v285, %v267
      %v340 = vpack.c.b16 %v286, %v268
      %v341 = vpack.c.b16 %v305, %v287
      %v342 = vpack.c.b16 %v306, %v288
      %v343 = vpack.c.b16 %v307, %v289
      %v344 = vpack.c.b16 %v308, %v290
      %v345 = vpack.c.b16 %v309, %v291
      %v346 = vpack.c.b16 %v310, %v292
      %v347 = vpack.c.b16 %v311, %v293
      %v348 = vpack.c.b16 %v312, %v294
      %v349 = vpack.c.b16 %v313, %v295
      %v350 = vpack.c.b16 %v314, %v296
      %v351 = vpack.c.b16 %v315, %v297
      %v352 = vpack.c.b16 %v316, %v298
      %v353 = vpack.c.b16 %v317, %v299
      %v354 = vpack.c.b16 %v318, %v300
      %v355 = vpack.c.b16 %v319, %v301
      %v356 = vpack.c.b16 %v320, %v302
      %v357 = vpack.c.b16 %v321, %v303
      %v358 = vpack.c.b16 %v322, %v304
      %vm395 = vcmask 261120
      %v397 = vsel %vm395, %v172, 0
      %399 = vmatprep.subr.bf16.mxu0 0
      %400 = vmatpush1.bf16.msra.mxu0 0
      %401 = vmatprep.subr.bf16.mxu0 0
      %402 = vmatpush1.bf16.msra.mxu0 0
      %403 = vmatprep.subr.bf16.mxu0 0
      %404 = vmatpush1.bf16.msra.mxu0 0
      %405 = vmatprep.subr.bf16.mxu0 0
      %406 = vmatpush1.bf16.msra.mxu0 0
      %407 = vmatprep.subr.bf16.mxu0 0
      %408 = vmatpush1.bf16.msra.mxu0 0
      %409 = vmatprep.subr.bf16.mxu0 0
      %410 = vmatpush1.bf16.msra.mxu0 0
      %411 = vmatprep.subr.bf16.mxu0 %v342
      %412 = vmatpush1.bf16.msra.mxu0 %v341
      %413 = vmatprep.subr.bf16.mxu0 %v324
      %414 = vmatpush1.bf16.msra.mxu0 %v323
      %415 = vmatprep.subr.bf16.mxu0 0
      %416 = vmatpush2.bf16.msra.mxu0 0
      %417 = vmatprep.subr.bf16.mxu0 0
      %418 = vmatpush2.bf16.msra.mxu0 0
      %419 = vmatprep.subr.bf16.mxu0 0
      %420 = vmatpush2.bf16.msra.mxu0 0
      %421 = vmatprep.subr.bf16.mxu0 0
      %422 = vmatpush2.bf16.msra.mxu0 0
      %423 = vmatprep.subr.bf16.mxu0 0
      %424 = vmatpush2.bf16.msra.mxu0 0
      %425 = vmatprep.subr.bf16.mxu0 0
      %426 = vmatpush2.bf16.msra.mxu0 0
      %427 = vmatprep.subr.bf16.mxu0 0
      %428 = vmatpush2.bf16.msra.mxu0 0
      %429 = vmatprep.subr.bf16.mxu0 0
      %430 = vmatpush2.bf16.msra.mxu0 0
      %431 = vmatprep.mubr.bf16.mxu0 0
      %432 = vmatmul.mubr.bf16.gmra.mxu0 %v397
      %v433 = vpop.f32.mrf.mxu0
      %v434 = vadd.f32 %v213, %v433
      %v435 = vpop.f32.mrf.mxu0
      %v436 = vadd.f32 %v213, %v435
      %v437 = vpop.f32.mrf.mxu0
      %v438 = vpop.f32.mrf.mxu0
      %439 = vdwg.mxu0
      %440 = vmatprep.subr.bf16.mxu0 0
      %441 = vmatpush1.bf16.msra.mxu0 0
      %442 = vmatprep.subr.bf16.mxu0 0
      %443 = vmatpush1.bf16.msra.mxu0 0
      %444 = vmatprep.subr.bf16.mxu0 0
      %445 = vmatpush1.bf16.msra.mxu0 0
      %446 = vmatprep.subr.bf16.mxu0 0
      %447 = vmatpush1.bf16.msra.mxu0 0
      %448 = vmatprep.subr.bf16.mxu0 0
      %449 = vmatpush1.bf16.msra.mxu0 0
      %450 = vmatprep.subr.bf16.mxu0 0
      %451 = vmatpush1.bf16.msra.mxu0 0
      %452 = vmatprep.subr.bf16.mxu0 %v344
      %453 = vmatpush1.bf16.msra.mxu0 %v343
      %454 = vmatprep.subr.bf16.mxu0 %v326
      %455 = vmatpush1.bf16.msra.mxu0 %v325
      %456 = vmatprep.subr.bf16.mxu0 0
      %457 = vmatpush2.bf16.msra.mxu0 0
      %458 = vmatprep.subr.bf16.mxu0 0
      %459 = vmatpush2.bf16.msra.mxu0 0
      %460 = vmatprep.subr.bf16.mxu0 0
      %461 = vmatpush2.bf16.msra.mxu0 0
      %462 = vmatprep.subr.bf16.mxu0 0
      %463 = vmatpush2.bf16.msra.mxu0 0
      %464 = vmatprep.subr.bf16.mxu0 0
      %465 = vmatpush2.bf16.msra.mxu0 0
      %466 = vmatprep.subr.bf16.mxu0 0
      %467 = vmatpush2.bf16.msra.mxu0 0
      %468 = vmatprep.subr.bf16.mxu0 0
      %469 = vmatpush2.bf16.msra.mxu0 0
      %470 = vmatprep.subr.bf16.mxu0 0
      %471 = vmatpush2.bf16.msra.mxu0 0
      %472 = vmatprep.mubr.bf16.mxu0 0
      %473 = vmatmul.mubr.bf16.gmra.mxu0 %v397
      %v474 = vpop.f32.mrf.mxu0
      %v475 = vadd.f32 %v213, %v474
      %v476 = vpop.f32.mrf.mxu0
      %v477 = vadd.f32 %v213, %v476
      %v478 = vpop.f32.mrf.mxu0
      %v479 = vpop.f32.mrf.mxu0
      %480 = vdwg.mxu0
      %481 = vmatprep.subr.bf16.mxu0 0
      %482 = vmatpush1.bf16.msra.mxu0 0
      %483 = vmatprep.subr.bf16.mxu0 0
      %484 = vmatpush1.bf16.msra.mxu0 0
      %485 = vmatprep.subr.bf16.mxu0 0
      %486 = vmatpush1.bf16.msra.mxu0 0
      %487 = vmatprep.subr.bf16.mxu0 0
      %488 = vmatpush1.bf16.msra.mxu0 0
      %489 = vmatprep.subr.bf16.mxu0 0
      %490 = vmatpush1.bf16.msra.mxu0 0
      %491 = vmatprep.subr.bf16.mxu0 0
      %492 = vmatpush1.bf16.msra.mxu0 0
      %493 = vmatprep.subr.bf16.mxu0 %v346
      %494 = vmatpush1.bf16.msra.mxu0 %v345
      %495 = vmatprep.subr.bf16.mxu0 %v328
      %496 = vmatpush1.bf16.msra.mxu0 %v327
      %497 = vmatprep.subr.bf16.mxu0 0
      %498 = vmatpush2.bf16.msra.mxu0 0
      %499 = vmatprep.subr.bf16.mxu0 0
      %500 = vmatpush2.bf16.msra.mxu0 0
      %501 = vmatprep.subr.bf16.mxu0 0
      %502 = vmatpush2.bf16.msra.mxu0 0
      %503 = vmatprep.subr.bf16.mxu0 0
      %504 = vmatpush2.bf16.msra.mxu0 0
      %505 = vmatprep.subr.bf16.mxu0 0
      %506 = vmatpush2.bf16.msra.mxu0 0
      %507 = vmatprep.subr.bf16.mxu0 0
      %508 = vmatpush2.bf16.msra.mxu0 0
      %509 = vmatprep.subr.bf16.mxu0 0
      %510 = vmatpush2.bf16.msra.mxu0 0
      %511 = vmatprep.subr.bf16.mxu0 0
      %512 = vmatpush2.bf16.msra.mxu0 0
      %513 = vmatprep.mubr.bf16.mxu0 0
      %514 = vmatmul.mubr.bf16.gmra.mxu0 %v397
      %v515 = vpop.f32.mrf.mxu0
      %v516 = vadd.f32 %v213, %v515
      %v517 = vpop.f32.mrf.mxu0
      %v518 = vadd.f32 %v213, %v517
      %v519 = vpop.f32.mrf.mxu0
      %v520 = vpop.f32.mrf.mxu0
      %521 = vdwg.mxu0
      %522 = vmatprep.subr.bf16.mxu0 0
      %523 = vmatpush1.bf16.msra.mxu0 0
      %524 = vmatprep.subr.bf16.mxu0 0
      %525 = vmatpush1.bf16.msra.mxu0 0
      %526 = vmatprep.subr.bf16.mxu0 0
      %527 = vmatpush1.bf16.msra.mxu0 0
      %528 = vmatprep.subr.bf16.mxu0 0
      %529 = vmatpush1.bf16.msra.mxu0 0
      %530 = vmatprep.subr.bf16.mxu0 0
      %531 = vmatpush1.bf16.msra.mxu0 0
      %532 = vmatprep.subr.bf16.mxu0 0
      %533 = vmatpush1.bf16.msra.mxu0 0
      %534 = vmatprep.subr.bf16.mxu0 %v348
      %535 = vmatpush1.bf16.msra.mxu0 %v347
      %536 = vmatprep.subr.bf16.mxu0 %v330
      %537 = vmatpush1.bf16.msra.mxu0 %v329
      %538 = vmatprep.subr.bf16.mxu0 0
      %539 = vmatpush2.bf16.msra.mxu0 0
      %540 = vmatprep.subr.bf16.mxu0 0
      %541 = vmatpush2.bf16.msra.mxu0 0
      %542 = vmatprep.subr.bf16.mxu0 0
      %543 = vmatpush2.bf16.msra.mxu0 0
      %544 = vmatprep.subr.bf16.mxu0 0
      %545 = vmatpush2.bf16.msra.mxu0 0
      %546 = vmatprep.subr.bf16.mxu0 0
      %547 = vmatpush2.bf16.msra.mxu0 0
      %548 = vmatprep.subr.bf16.mxu0 0
      %549 = vmatpush2.bf16.msra.mxu0 0
      %550 = vmatprep.subr.bf16.mxu0 0
      %551 = vmatpush2.bf16.msra.mxu0 0
      %552 = vmatprep.subr.bf16.mxu0 0
      %553 = vmatpush2.bf16.msra.mxu0 0
      %554 = vmatprep.mubr.bf16.mxu0 0
      %555 = vmatmul.mubr.bf16.gmra.mxu0 %v397
      %v556 = vpop.f32.mrf.mxu0
      %v557 = vadd.f32 %v213, %v556
      %v558 = vpop.f32.mrf.mxu0
      %v559 = vadd.f32 %v213, %v558
      %v560 = vpop.f32.mrf.mxu0
      %v561 = vpop.f32.mrf.mxu0
      %562 = vdwg.mxu0
      %563 = vmatprep.subr.bf16.mxu0 0
      %564 = vmatpush1.bf16.msra.mxu0 0
      %565 = vmatprep.subr.bf16.mxu0 0
      %566 = vmatpush1.bf16.msra.mxu0 0
      %567 = vmatprep.subr.bf16.mxu0 0
      %568 = vmatpush1.bf16.msra.mxu0 0
      %569 = vmatprep.subr.bf16.mxu0 0
      %570 = vmatpush1.bf16.msra.mxu0 0
      %571 = vmatprep.subr.bf16.mxu0 0
      %572 = vmatpush1.bf16.msra.mxu0 0
      %573 = vmatprep.subr.bf16.mxu0 0
      %574 = vmatpush1.bf16.msra.mxu0 0
      %575 = vmatprep.subr.bf16.mxu0 %v350
      %576 = vmatpush1.bf16.msra.mxu0 %v349
      %577 = vmatprep.subr.bf16.mxu0 %v332
      %578 = vmatpush1.bf16.msra.mxu0 %v331
      %579 = vmatprep.subr.bf16.mxu0 0
      %580 = vmatpush2.bf16.msra.mxu0 0
      %581 = vmatprep.subr.bf16.mxu0 0
      %582 = vmatpush2.bf16.msra.mxu0 0
      %583 = vmatprep.subr.bf16.mxu0 0
      %584 = vmatpush2.bf16.msra.mxu0 0
      %585 = vmatprep.subr.bf16.mxu0 0
      %586 = vmatpush2.bf16.msra.mxu0 0
      %587 = vmatprep.subr.bf16.mxu0 0
      %588 = vmatpush2.bf16.msra.mxu0 0
      %589 = vmatprep.subr.bf16.mxu0 0
      %590 = vmatpush2.bf16.msra.mxu0 0
      %591 = vmatprep.subr.bf16.mxu0 0
      %592 = vmatpush2.bf16.msra.mxu0 0
      %593 = vmatprep.subr.bf16.mxu0 0
      %594 = vmatpush2.bf16.msra.mxu0 0
      %595 = vmatprep.mubr.bf16.mxu0 0
      %596 = vmatmul.mubr.bf16.gmra.mxu0 %v397
      %v597 = vpop.f32.mrf.mxu0
      %v598 = vadd.f32 %v213, %v597
      %v599 = vpop.f32.mrf.mxu0
      %v600 = vadd.f32 %v213, %v599
      %v601 = vpop.f32.mrf.mxu0
      %v602 = vpop.f32.mrf.mxu0
      %603 = vdwg.mxu0
      %604 = vmatprep.subr.bf16.mxu0 0
      %605 = vmatpush1.bf16.msra.mxu0 0
      %606 = vmatprep.subr.bf16.mxu0 0
      %607 = vmatpush1.bf16.msra.mxu0 0
      %608 = vmatprep.subr.bf16.mxu0 0
      %609 = vmatpush1.bf16.msra.mxu0 0
      %610 = vmatprep.subr.bf16.mxu0 0
      %611 = vmatpush1.bf16.msra.mxu0 0
      %612 = vmatprep.subr.bf16.mxu0 0
      %613 = vmatpush1.bf16.msra.mxu0 0
      %614 = vmatprep.subr.bf16.mxu0 0
      %615 = vmatpush1.bf16.msra.mxu0 0
      %616 = vmatprep.subr.bf16.mxu0 %v352
      %617 = vmatpush1.bf16.msra.mxu0 %v351
      %618 = vmatprep.subr.bf16.mxu0 %v334
      %619 = vmatpush1.bf16.msra.mxu0 %v333
      %620 = vmatprep.subr.bf16.mxu0 0
      %621 = vmatpush2.bf16.msra.mxu0 0
      %622 = vmatprep.subr.bf16.mxu0 0
      %623 = vmatpush2.bf16.msra.mxu0 0
      %624 = vmatprep.subr.bf16.mxu0 0
      %625 = vmatpush2.bf16.msra.mxu0 0
      %626 = vmatprep.subr.bf16.mxu0 0
      %627 = vmatpush2.bf16.msra.mxu0 0
      %628 = vmatprep.subr.bf16.mxu0 0
      %629 = vmatpush2.bf16.msra.mxu0 0
      %630 = vmatprep.subr.bf16.mxu0 0
      %631 = vmatpush2.bf16.msra.mxu0 0
      %632 = vmatprep.subr.bf16.mxu0 0
      %633 = vmatpush2.bf16.msra.mxu0 0
      %634 = vmatprep.subr.bf16.mxu0 0
      %635 = vmatpush2.bf16.msra.mxu0 0
      %636 = vmatprep.mubr.bf16.mxu0 0
      %637 = vmatmul.mubr.bf16.gmra.mxu0 %v397
      %v638 = vpop.f32.mrf.mxu0
      %v639 = vadd.f32 %v213, %v638
      %v640 = vpop.f32.mrf.mxu0
      %v641 = vadd.f32 %v213, %v640
      %v642 = vpop.f32.mrf.mxu0
      %v643 = vpop.f32.mrf.mxu0
      %644 = vdwg.mxu0
      %645 = vmatprep.subr.bf16.mxu0 0
      %646 = vmatpush1.bf16.msra.mxu0 0
      %647 = vmatprep.subr.bf16.mxu0 0
      %648 = vmatpush1.bf16.msra.mxu0 0
      %649 = vmatprep.subr.bf16.mxu0 0
      %650 = vmatpush1.bf16.msra.mxu0 0
      %651 = vmatprep.subr.bf16.mxu0 0
      %652 = vmatpush1.bf16.msra.mxu0 0
      %653 = vmatprep.subr.bf16.mxu0 0
      %654 = vmatpush1.bf16.msra.mxu0 0
      %655 = vmatprep.subr.bf16.mxu0 0
      %656 = vmatpush1.bf16.msra.mxu0 0
      %657 = vmatprep.subr.bf16.mxu0 %v354
      %658 = vmatpush1.bf16.msra.mxu0 %v353
      %659 = vmatprep.subr.bf16.mxu0 %v336
      %660 = vmatpush1.bf16.msra.mxu0 %v335
      %661 = vmatprep.subr.bf16.mxu0 0
      %662 = vmatpush2.bf16.msra.mxu0 0
      %663 = vmatprep.subr.bf16.mxu0 0
      %664 = vmatpush2.bf16.msra.mxu0 0
      %665 = vmatprep.subr.bf16.mxu0 0
      %666 = vmatpush2.bf16.msra.mxu0 0
      %667 = vmatprep.subr.bf16.mxu0 0
      %668 = vmatpush2.bf16.msra.mxu0 0
      %669 = vmatprep.subr.bf16.mxu0 0
      %670 = vmatpush2.bf16.msra.mxu0 0
      %671 = vmatprep.subr.bf16.mxu0 0
      %672 = vmatpush2.bf16.msra.mxu0 0
      %673 = vmatprep.subr.bf16.mxu0 0
      %674 = vmatpush2.bf16.msra.mxu0 0
      %675 = vmatprep.subr.bf16.mxu0 0
      %676 = vmatpush2.bf16.msra.mxu0 0
      %677 = vmatprep.mubr.bf16.mxu0 0
      %678 = vmatmul.mubr.bf16.gmra.mxu0 %v397
      %v679 = vpop.f32.mrf.mxu0
      %v680 = vadd.f32 %v213, %v679
      %v681 = vpop.f32.mrf.mxu0
      %v682 = vadd.f32 %v213, %v681
      %v683 = vpop.f32.mrf.mxu0
      %v684 = vpop.f32.mrf.mxu0
      %685 = vdwg.mxu0
      %686 = vmatprep.subr.bf16.mxu0 0
      %687 = vmatpush1.bf16.msra.mxu0 0
      %688 = vmatprep.subr.bf16.mxu0 0
      %689 = vmatpush1.bf16.msra.mxu0 0
      %690 = vmatprep.subr.bf16.mxu0 0
      %691 = vmatpush1.bf16.msra.mxu0 0
      %692 = vmatprep.subr.bf16.mxu0 0
      %693 = vmatpush1.bf16.msra.mxu0 0
      %694 = vmatprep.subr.bf16.mxu0 0
      %695 = vmatpush1.bf16.msra.mxu0 0
      %696 = vmatprep.subr.bf16.mxu0 0
      %697 = vmatpush1.bf16.msra.mxu0 0
      %698 = vmatprep.subr.bf16.mxu0 %v356
      %699 = vmatpush1.bf16.msra.mxu0 %v355
      %700 = vmatprep.subr.bf16.mxu0 %v338
      %701 = vmatpush1.bf16.msra.mxu0 %v337
      %702 = vmatprep.subr.bf16.mxu0 0
      %703 = vmatpush2.bf16.msra.mxu0 0
      %704 = vmatprep.subr.bf16.mxu0 0
      %705 = vmatpush2.bf16.msra.mxu0 0
      %706 = vmatprep.subr.bf16.mxu0 0
      %707 = vmatpush2.bf16.msra.mxu0 0
      %708 = vmatprep.subr.bf16.mxu0 0
      %709 = vmatpush2.bf16.msra.mxu0 0
      %710 = vmatprep.subr.bf16.mxu0 0
      %711 = vmatpush2.bf16.msra.mxu0 0
      %712 = vmatprep.subr.bf16.mxu0 0
      %713 = vmatpush2.bf16.msra.mxu0 0
      %714 = vmatprep.subr.bf16.mxu0 0
      %715 = vmatpush2.bf16.msra.mxu0 0
      %716 = vmatprep.subr.bf16.mxu0 0
      %717 = vmatpush2.bf16.msra.mxu0 0
      %718 = vmatprep.mubr.bf16.mxu0 0
      %719 = vmatmul.mubr.bf16.gmra.mxu0 %v397
      %v720 = vpop.f32.mrf.mxu0
      %v721 = vadd.f32 %v213, %v720
      %v722 = vpop.f32.mrf.mxu0
      %v723 = vadd.f32 %v213, %v722
      %v724 = vpop.f32.mrf.mxu0
      %v725 = vpop.f32.mrf.mxu0
      %726 = vdwg.mxu0
      %727 = vmatprep.subr.bf16.mxu0 0
      %728 = vmatpush1.bf16.msra.mxu0 0
      %729 = vmatprep.subr.bf16.mxu0 0
      %730 = vmatpush1.bf16.msra.mxu0 0
      %731 = vmatprep.subr.bf16.mxu0 0
      %732 = vmatpush1.bf16.msra.mxu0 0
      %733 = vmatprep.subr.bf16.mxu0 0
      %734 = vmatpush1.bf16.msra.mxu0 0
      %735 = vmatprep.subr.bf16.mxu0 0
      %736 = vmatpush1.bf16.msra.mxu0 0
      %737 = vmatprep.subr.bf16.mxu0 0
      %738 = vmatpush1.bf16.msra.mxu0 0
      %739 = vmatprep.subr.bf16.mxu0 %v358
      %740 = vmatpush1.bf16.msra.mxu0 %v357
      %741 = vmatprep.subr.bf16.mxu0 %v340
      %742 = vmatpush1.bf16.msra.mxu0 %v339
      %743 = vmatprep.subr.bf16.mxu0 0
      %744 = vmatpush2.bf16.msra.mxu0 0
      %745 = vmatprep.subr.bf16.mxu0 0
      %746 = vmatpush2.bf16.msra.mxu0 0
      %747 = vmatprep.subr.bf16.mxu0 0
      %748 = vmatpush2.bf16.msra.mxu0 0
      %749 = vmatprep.subr.bf16.mxu0 0
      %750 = vmatpush2.bf16.msra.mxu0 0
      %751 = vmatprep.subr.bf16.mxu0 0
      %752 = vmatpush2.bf16.msra.mxu0 0
      %753 = vmatprep.subr.bf16.mxu0 0
      %754 = vmatpush2.bf16.msra.mxu0 0
      %755 = vmatprep.subr.bf16.mxu0 0
      %756 = vmatpush2.bf16.msra.mxu0 0
      %757 = vmatprep.subr.bf16.mxu0 0
      %758 = vmatpush2.bf16.msra.mxu0 0
      %759 = vmatprep.mubr.bf16.mxu0 0
      %760 = vmatmul.mubr.bf16.gmra.mxu0 %v397
      %v761 = vpop.f32.mrf.mxu0
      %v762 = vadd.f32 %v213, %v761
      %v763 = vpop.f32.mrf.mxu0
      %v764 = vadd.f32 %v213, %v763
      %v765 = vpop.f32.mrf.mxu0
      %v766 = vpop.f32.mrf.mxu0
      %767 = vdwg.mxu0
      %v768 = vmax.f32 %v434, 0.0
      %v769 = vmax.f32 %v436, 0.0
      %v770 = vmax.f32 %v475, 0.0
      %v771 = vmax.f32 %v477, 0.0
      %v772 = vmax.f32 %v516, 0.0
      %v773 = vmax.f32 %v518, 0.0
      %v774 = vmax.f32 %v557, 0.0
      %v775 = vmax.f32 %v559, 0.0
      %v776 = vmax.f32 %v598, 0.0
      %v777 = vmax.f32 %v600, 0.0
      %v778 = vmax.f32 %v639, 0.0
      %v779 = vmax.f32 %v641, 0.0
      %v780 = vmax.f32 %v680, 0.0
      %v781 = vmax.f32 %v682, 0.0
      %v782 = vmax.f32 %v721, 0.0
      %v783 = vmax.f32 %v723, 0.0
      %v784 = vmax.f32 %v762, 0.0
      %v785 = vmax.f32 %v764, 0.0
      %v786 = vpack.c.bf16 %v768, %v768
      %v787 = vpack.c.bf16 %v769, %v769
      %v788 = vpack.c.bf16 %v770, %v770
      %v789 = vpack.c.bf16 %v771, %v771
      %v790 = vpack.c.bf16 %v772, %v772
      %v791 = vpack.c.bf16 %v773, %v773
      %v792 = vpack.c.bf16 %v774, %v774
      %v793 = vpack.c.bf16 %v775, %v775
      %v794 = vpack.c.bf16 %v776, %v776
      %v795 = vpack.c.bf16 %v777, %v777
      %v796 = vpack.c.bf16 %v778, %v778
      %v797 = vpack.c.bf16 %v779, %v779
      %v798 = vpack.c.bf16 %v780, %v780
      %v799 = vpack.c.bf16 %v781, %v781
      %v800 = vpack.c.bf16 %v782, %v782
      %v801 = vpack.c.bf16 %v783, %v783
      %v802 = vpack.c.bf16 %v784, %v784
      %v803 = vpack.c.bf16 %v785, %v785
      %v822 = vcombine.low %v786, %v787
      %v823 = vcombine.low %v788, %v789
      %v825 = vunpack.c.l.s4 1983009808
      %v826 = vunpack.c.0.s8 %v825
      %v827 = vlaneseq
      %v828 = vshrl.u32 %v827, 7
      %v829 = vsub.s32 %v826, %v828
      %v830 = vrot.slane %v822, %v829
      %v832 = vunpack.c.l.s4 1983009808
      %v833 = vunpack.c.0.s8 %v832
      %v834 = vlaneseq
      %v835 = vshrl.u32 %v834, 7
      %v836 = vsub.s32 %v833, %v835
      %v837 = vrot.slane %v823, %v836
      %v838 = vcombine.low %v830, %v837
      %v839 = vcombine.low %v790, %v791
      %v840 = vcombine.low %v792, %v793
      %v842 = vunpack.c.l.s4 1983009808
      %v843 = vunpack.c.0.s8 %v842
      %v844 = vlaneseq
      %v845 = vshrl.u32 %v844, 7
      %v846 = vsub.s32 %v843, %v845
      %v847 = vrot.slane %v839, %v846
      %v849 = vunpack.c.l.s4 1983009808
      %v850 = vunpack.c.0.s8 %v849
      %v851 = vlaneseq
      %v852 = vshrl.u32 %v851, 7
      %v853 = vsub.s32 %v850, %v852
      %v854 = vrot.slane %v840, %v853
      %v855 = vcombine.low %v847, %v854
      %v856 = vcombine.low %v794, %v795
      %v857 = vcombine.low %v796, %v797
      %v859 = vunpack.c.l.s4 1983009808
      %v860 = vunpack.c.0.s8 %v859
      %v861 = vlaneseq
      %v862 = vshrl.u32 %v861, 7
      %v863 = vsub.s32 %v860, %v862
      %v864 = vrot.slane %v856, %v863
      %v866 = vunpack.c.l.s4 1983009808
      %v867 = vunpack.c.0.s8 %v866
      %v868 = vlaneseq
      %v869 = vshrl.u32 %v868, 7
      %v870 = vsub.s32 %v867, %v869
      %v871 = vrot.slane %v857, %v870
      %v872 = vcombine.low %v864, %v871
      %v873 = vcombine.low %v798, %v799
      %v874 = vcombine.low %v800, %v801
      %v876 = vunpack.c.l.s4 1983009808
      %v877 = vunpack.c.0.s8 %v876
      %v878 = vlaneseq
      %v879 = vshrl.u32 %v878, 7
      %v880 = vsub.s32 %v877, %v879
      %v881 = vrot.slane %v873, %v880
      %v883 = vunpack.c.l.s4 1983009808
      %v884 = vunpack.c.0.s8 %v883
      %v885 = vlaneseq
      %v886 = vshrl.u32 %v885, 7
      %v887 = vsub.s32 %v884, %v886
      %v888 = vrot.slane %v874, %v887
      %v889 = vcombine.low %v881, %v888
      %v890 = vcombine.low %v802, %v803
      %v892 = vunpack.c.l.s4 1983009808
      %v893 = vunpack.c.0.s8 %v892
      %v894 = vlaneseq
      %v895 = vshrl.u32 %v894, 7
      %v896 = vsub.s32 %v893, %v895
      %v897 = vrot.slane %v890, %v896
      %903 = vst [vmem:[%s170] sm:$0xff] %v838
      %904 = vst [vmem:[%s170 + $0x8] sm:$0xff] %v855
      %905 = vst [vmem:[%s170 + $0x10] sm:$0xff] %v872
      %906 = vst [vmem:[%s170 + $0x18] sm:$0xff] %v889
      %vm907 = vcmask 1041408
      %vm908 = vcmask 265218
      %vm909 = vmor %vm908, %vm907
      %910 = vst.msk [vmem:[%s170 + $0x20] sm:$0xf] %vm909, %v897
      %p911 = scmp.lt.s32.totalorder %s14, 1
      %s912 = scalar_select %p911, %s14, 1
      %s913 = smul.addr %s912, 18
      %s914 = smul.addr %s913, 2
      %s915 = scalar_lea.vmem %s3, %s914
      // Predicated region
      $region33: #{pallas_forward.2} parent=31 // pred_check
        %p916 = pneg %p100
      $region34: #{pallas_forward.2} parent=31 // pred_check_branch
        %918 = sbr.rel (%p916) target = $region36
      $region35: #{pallas_forward.2} parent=31 // pred_region
        _
      $region36: #{pallas_forward.2} parent=31 // pred_fallthru
        _
    $region32: #{pallas_forward.2} parent=5 // pred_fallthru
      _
    %p919 = scmp.le.s32.totalorder 2, %s9
    // Predicated region
    $region37: #{pallas_forward.2} parent=5 // pred_check
      %p920 = pneg %p919
    $region38: #{pallas_forward.2} parent=5 // pred_check_branch
      %922 = sbr.rel (%p920) target = $region40
    $region39: #{pallas_forward.2} parent=5 // pred_region
      %s923 = ssub.s32 %s9, 2
      // Predicated region
      $region41: #{pallas_forward.2} parent=39 // pred_check
        %p924 = pneg %p106
      $region42: #{pallas_forward.2} parent=39 // pred_check_branch
        %926 = sbr.rel (%p924) target = $region44
      $region43: #{pallas_forward.2} parent=39 // pred_region
        %p927 = scmp.lt.s32.totalorder %s15, 1
        %s928 = scalar_select %p927, %s15, 1
        %s929 = smul.addr %s928, 18
        %s930 = smul.addr %s929, 2
        %s931 = scalar_lea.vmem %s3, %s930
      $region44: #{pallas_forward.2} parent=39 // pred_fallthru
        _
    $region40: #{pallas_forward.2} parent=5 // pred_fallthru
      _
  $region6: #{pallas_forward.2} parent=0 // loop_footer
    %s13 = sadd.s32 1, %s9
  $region7: #{pallas_forward.2} parent=0 // loop_footer_branch
    %8 = sbr.rel target = $region3
  $region8: #{pallas_forward.2} parent=0 // loop_exit
    _

// kernel: pallas_forward.3
$region0: #{pallas_forward.3}
  #allocation0 [shape = 'u32[]', space=smem, size = 0x4, offset = 0x4, fixed_abs, tag = 'smem constant byte address 0x4 - core index']
  #allocation1 [shape = 'u32[144,128]{1,0:T(1,128)}', space=vmem, size = 0x12000, scoped, tag = 'internal scratch']
  #allocation2 [shape = 'f32[1,1]{1,0:T(1,128)S(1)}', space=vmem, size = 0x200, scoped, tag = 'scoped memory for pallas_forward.3']
  %s0 = inlined_call_operand.vmem [shape: bf16[2,36,529], index: 0, kind: input, shape index: {}]
  %s1 = inlined_call_operand.vmem [shape: bf16[8,36], index: 1, kind: input, shape index: {}]
  %s2 = inlined_call_operand.vmem [shape: f32[8,1], index: 2, kind: input, shape index: {}]
  %s3 = inlined_call_operand.vmem [shape: bf16[9,529,121], index: 3, kind: input, shape index: {}]
  %s4 = inlined_call_operand.vmem [shape: bf16[9,16,8], index: 4, kind: input, shape index: {}]
  %s5 = inlined_call_operand.vmem [shape: f32[16,1], index: 5, kind: input, shape index: {}]
  %s6 = inlined_call_operand.vmem [shape: bf16[9,121,25], index: 6, kind: input, shape index: {}]
  %s7 = inlined_call_operand.vmem [shape: bf16[9,32,16], index: 7, kind: input, shape index: {}]
  %s8 = inlined_call_operand.vmem [shape: f32[32,1], index: 8, kind: input, shape index: {}]
  %s9 = inlined_call_operand.vmem [shape: bf16[9,25,9], index: 9, kind: input, shape index: {}]
  %s10 = inlined_call_operand.vmem [shape: bf16[9,64,32], index: 10, kind: input, shape index: {}]
  %s11 = inlined_call_operand.vmem [shape: f32[64,1], index: 11, kind: input, shape index: {}]
  %s12 = inlined_call_operand.vmem [shape: bf16[9,9,1], index: 12, kind: input, shape index: {}]
  %s13 = inlined_call_operand.vmem [shape: bf16[9,128,64], index: 13, kind: input, shape index: {}]
  %s14 = inlined_call_operand.vmem [shape: f32[128,1], index: 14, kind: input, shape index: {}]
  %s15 = inlined_call_operand.vmem [shape: bf16[100,128], index: 15, kind: input, shape index: {}]
  %s16 = inlined_call_operand.vmem [shape: f32[100,1], index: 16, kind: input, shape index: {}]
  %s17 = inlined_call_operand.vmem [shape: bf16[1,100], index: 17, kind: input, shape index: {}]
  %s18 = inlined_call_operand.<no memory space> [shape: f32[1,1], index: 18, kind: input, shape index: {}]
  %s19 = inlined_call_operand.vmem [shape: f32[2,1,1], index: 19, kind: output, shape index: {}]
  %s20 = sld [smem:[#allocation0]]
  $region109: #{pallas_forward.3} parent=0
    _
  %s22 = ssub.s32 1, %s20
  %s23 = scalar_select 0, %s22, %s20
  %v24 = vstv %s18
  %25 = vst [vmem:[#allocation2] sm:$0x1] %v24
  loop: start=0, step=1, limit=4
  $region2: #{pallas_forward.3} parent=0 // loop_pre_header
    _
  $region3: #{pallas_forward.3} parent=0 // loop_header
    %s27 = sphi 0, %s31
    %p28 = scmp.ge.s32.totalorder %s27, 4
    %s37 = sphi 0, %s39
    %s40 = sphi 0, %s37
    %s41 = sphi 0, %s40
    %s57 = sphi 0, %s41
    %s61 = sphi 0, %s61
    %s63 = sphi 0, %s61
    %s64 = sphi 0, %s63
    %s78 = sphi 0, %s64
    %s82 = sphi 0, %s82
    %s84 = sphi 0, %s82
    %s85 = sphi 0, %s84
    %s99 = sphi 0, %s85
    %s103 = sphi 0, %s103
    %s105 = sphi 0, %s103
    %s106 = sphi 0, %s105
    %s120 = sphi 0, %s106
    %s124 = sphi 0, %s124
    %s126 = sphi 0, %s124
    %s127 = sphi 0, %s126
    %s141 = sphi 0, %s127
    %s145 = sphi 0, %s145
    %s147 = sphi 0, %s145
    %s148 = sphi 0, %s147
    %s162 = sphi 0, %s148
    %s166 = sphi 0, %s166
    %s168 = sphi 0, %s166
    %s169 = sphi 0, %s168
    %s183 = sphi 0, %s169
    %s187 = sphi 0, %s187
    %s189 = sphi 0, %s187
    %s190 = sphi 0, %s189
    %s204 = sphi 0, %s190
    %s208 = sphi 0, %s208
    %s210 = sphi 0, %s208
    %s211 = sphi 0, %s210
    %s225 = sphi 0, %s211
    %s229 = sphi 0, %s229
    %s231 = sphi 0, %s229
    %s232 = sphi 0, %s231
    %s246 = sphi 0, %s232
    %s250 = sphi 0, %s250
    %s252 = sphi 0, %s250
    %s253 = sphi 0, %s252
    %s267 = sphi 0, %s253
    %s271 = sphi 0, %s271
    %s273 = sphi 0, %s271
    %s274 = sphi 0, %s273
    %s288 = sphi 0, %s274
    %s292 = sphi 0, %s292
    %s294 = sphi 0, %s292
    %s295 = sphi 0, %s294
    %s309 = sphi 0, %s295
    %s313 = sphi 0, %s313
    %s315 = sphi 0, %s313
    %s316 = sphi 0, %s315
    %s330 = sphi 0, %s316
    %s334 = sphi 0, %s334
    %s336 = sphi 0, %s334
    %s337 = sphi 0, %s336
    %s351 = sphi 0, %s337
    %s355 = sphi 0, %s355
    %s357 = sphi 0, %s355
    %s358 = sphi 0, %s357
    %s372 = sphi 0, %s358
    %s376 = sphi 0, %s376
    %s378 = sphi 0, %s376
    %s379 = sphi 0, %s378
    %s393 = sphi 0, %s379
    %s397 = sphi 0, %s397
    %s399 = sphi 0, %s397
    %s400 = sphi 0, %s399
    %s414 = sphi 0, %s400
    %s418 = sphi 0, %s418
    %s420 = sphi 0, %s418
    %s421 = sphi 0, %s420
    %s435 = sphi 0, %s421
    %s441 = sphi 0, %s443
    %s444 = sphi 0, %s441
    %s445 = sphi 0, %s444
    %s461 = sphi 0, %s445
  $region4: #{pallas_forward.3} parent=0 // loop_header_branch
    %30 = sbr.rel (%p28) target = $region8
  $region5: #{pallas_forward.3} parent=0 // loop_body
    %s32 = ssub.s32 %s27, 1
    %s33 = ssub.s32 %s27, 2
    %s34 = sadd.s32 %s27, 1
    %s35 = ssub.s32 %s27, %s34
    %p36 = scmp.eq.s32.totalorder %s35, 0
    %s38 = sadd.s32 %s37, 1
    %s39 = scalar_select %p36, %s37, %s38
    %p42 = pneg %p36
    %p43 = scmp.eq.s32.totalorder %s27, 1
    %p44 = por %p42, %p43
    %p45 = scmp.ne.s32.totalorder %s37, %s40
    %p46 = scmp.eq.s32.totalorder %s27, 0
    %p47 = por %p45, %p46
    %p48 = scmp.ne.s32.totalorder %s37, %s40
    %p49 = scmp.eq.s32.totalorder %s32, 1
    %p50 = por %p48, %p49
    %p51 = scmp.ne.s32.totalorder %s40, %s41
    %p52 = scmp.eq.s32.totalorder %s32, 0
    %p53 = por %p51, %p52
    %p54 = scmp.ne.s32.totalorder %s40, %s41
    %p55 = scmp.eq.s32.totalorder %s33, 1
    %p56 = por %p54, %p55
    %p58 = scmp.ne.s32.totalorder %s41, %s57
    %p59 = scmp.eq.s32.totalorder %s33, 0
    %p60 = por %p58, %p59
    %s62 = sadd.s32 %s61, 1
    %p65 = scmp.eq.s32.totalorder %s27, 1
    %p66 = scmp.ne.s32.totalorder %s61, %s63
    %p67 = scmp.eq.s32.totalorder %s27, 0
    %p68 = por %p66, %p67
    %p69 = scmp.ne.s32.totalorder %s61, %s63
    %p70 = scmp.eq.s32.totalorder %s32, 1
    %p71 = por %p69, %p70
    %p72 = scmp.ne.s32.totalorder %s63, %s64
    %p73 = scmp.eq.s32.totalorder %s32, 0
    %p74 = por %p72, %p73
    %p75 = scmp.ne.s32.totalorder %s63, %s64
    %p76 = scmp.eq.s32.totalorder %s33, 1
    %p77 = por %p75, %p76
    %p79 = scmp.ne.s32.totalorder %s64, %s78
    %p80 = scmp.eq.s32.totalorder %s33, 0
    %p81 = por %p79, %p80
    %s83 = sadd.s32 %s82, 1
    %p86 = scmp.eq.s32.totalorder %s27, 1
    %p87 = scmp.ne.s32.totalorder %s82, %s84
    %p88 = scmp.eq.s32.totalorder %s27, 0
    %p89 = por %p87, %p88
    %p90 = scmp.ne.s32.totalorder %s82, %s84
    %p91 = scmp.eq.s32.totalorder %s32, 1
    %p92 = por %p90, %p91
    %p93 = scmp.ne.s32.totalorder %s84, %s85
    %p94 = scmp.eq.s32.totalorder %s32, 0
    %p95 = por %p93, %p94
    %p96 = scmp.ne.s32.totalorder %s84, %s85
    %p97 = scmp.eq.s32.totalorder %s33, 1
    %p98 = por %p96, %p97
    %p100 = scmp.ne.s32.totalorder %s85, %s99
    %p101 = scmp.eq.s32.totalorder %s33, 0
    %p102 = por %p100, %p101
    %s104 = sadd.s32 %s103, 1
    %p107 = scmp.eq.s32.totalorder %s27, 1
    %p108 = scmp.ne.s32.totalorder %s103, %s105
    %p109 = scmp.eq.s32.totalorder %s27, 0
    %p110 = por %p108, %p109
    %p111 = scmp.ne.s32.totalorder %s103, %s105
    %p112 = scmp.eq.s32.totalorder %s32, 1
    %p113 = por %p111, %p112
    %p114 = scmp.ne.s32.totalorder %s105, %s106
    %p115 = scmp.eq.s32.totalorder %s32, 0
    %p116 = por %p114, %p115
    %p117 = scmp.ne.s32.totalorder %s105, %s106
    %p118 = scmp.eq.s32.totalorder %s33, 1
    %p119 = por %p117, %p118
    %p121 = scmp.ne.s32.totalorder %s106, %s120
    %p122 = scmp.eq.s32.totalorder %s33, 0
    %p123 = por %p121, %p122
    %s125 = sadd.s32 %s124, 1
    %p128 = scmp.eq.s32.totalorder %s27, 1
    %p129 = scmp.ne.s32.totalorder %s124, %s126
    %p130 = scmp.eq.s32.totalorder %s27, 0
    %p131 = por %p129, %p130
    %p132 = scmp.ne.s32.totalorder %s124, %s126
    %p133 = scmp.eq.s32.totalorder %s32, 1
    %p134 = por %p132, %p133
    %p135 = scmp.ne.s32.totalorder %s126, %s127
    %p136 = scmp.eq.s32.totalorder %s32, 0
    %p137 = por %p135, %p136
    %p138 = scmp.ne.s32.totalorder %s126, %s127
    %p139 = scmp.eq.s32.totalorder %s33, 1
    %p140 = por %p138, %p139
    %p142 = scmp.ne.s32.totalorder %s127, %s141
    %p143 = scmp.eq.s32.totalorder %s33, 0
    %p144 = por %p142, %p143
    %s146 = sadd.s32 %s145, 1
    %p149 = scmp.eq.s32.totalorder %s27, 1
    %p150 = scmp.ne.s32.totalorder %s145, %s147
    %p151 = scmp.eq.s32.totalorder %s27, 0
    %p152 = por %p150, %p151
    %p153 = scmp.ne.s32.totalorder %s145, %s147
    %p154 = scmp.eq.s32.totalorder %s32, 1
    %p155 = por %p153, %p154
    %p156 = scmp.ne.s32.totalorder %s147, %s148
    %p157 = scmp.eq.s32.totalorder %s32, 0
    %p158 = por %p156, %p157
    %p159 = scmp.ne.s32.totalorder %s147, %s148
    %p160 = scmp.eq.s32.totalorder %s33, 1
    %p161 = por %p159, %p160
    %p163 = scmp.ne.s32.totalorder %s148, %s162
    %p164 = scmp.eq.s32.totalorder %s33, 0
    %p165 = por %p163, %p164
    %s167 = sadd.s32 %s166, 1
    %p170 = scmp.eq.s32.totalorder %s27, 1
    %p171 = scmp.ne.s32.totalorder %s166, %s168
    %p172 = scmp.eq.s32.totalorder %s27, 0
    %p173 = por %p171, %p172
    %p174 = scmp.ne.s32.totalorder %s166, %s168
    %p175 = scmp.eq.s32.totalorder %s32, 1
    %p176 = por %p174, %p175
    %p177 = scmp.ne.s32.totalorder %s168, %s169
    %p178 = scmp.eq.s32.totalorder %s32, 0
    %p179 = por %p177, %p178
    %p180 = scmp.ne.s32.totalorder %s168, %s169
    %p181 = scmp.eq.s32.totalorder %s33, 1
    %p182 = por %p180, %p181
    %p184 = scmp.ne.s32.totalorder %s169, %s183
    %p185 = scmp.eq.s32.totalorder %s33, 0
    %p186 = por %p184, %p185
    %s188 = sadd.s32 %s187, 1
    %p191 = scmp.eq.s32.totalorder %s27, 1
    %p192 = scmp.ne.s32.totalorder %s187, %s189
    %p193 = scmp.eq.s32.totalorder %s27, 0
    %p194 = por %p192, %p193
    %p195 = scmp.ne.s32.totalorder %s187, %s189
    %p196 = scmp.eq.s32.totalorder %s32, 1
    %p197 = por %p195, %p196
    %p198 = scmp.ne.s32.totalorder %s189, %s190
    %p199 = scmp.eq.s32.totalorder %s32, 0
    %p200 = por %p198, %p199
    %p201 = scmp.ne.s32.totalorder %s189, %s190
    %p202 = scmp.eq.s32.totalorder %s33, 1
    %p203 = por %p201, %p202
    %p205 = scmp.ne.s32.totalorder %s190, %s204
    %p206 = scmp.eq.s32.totalorder %s33, 0
    %p207 = por %p205, %p206
    %s209 = sadd.s32 %s208, 1
    %p212 = scmp.eq.s32.totalorder %s27, 1
    %p213 = scmp.ne.s32.totalorder %s208, %s210
    %p214 = scmp.eq.s32.totalorder %s27, 0
    %p215 = por %p213, %p214
    %p216 = scmp.ne.s32.totalorder %s208, %s210
    %p217 = scmp.eq.s32.totalorder %s32, 1
    %p218 = por %p216, %p217
    %p219 = scmp.ne.s32.totalorder %s210, %s211
    %p220 = scmp.eq.s32.totalorder %s32, 0
    %p221 = por %p219, %p220
    %p222 = scmp.ne.s32.totalorder %s210, %s211
    %p223 = scmp.eq.s32.totalorder %s33, 1
    %p224 = por %p222, %p223
    %p226 = scmp.ne.s32.totalorder %s211, %s225
    %p227 = scmp.eq.s32.totalorder %s33, 0
    %p228 = por %p226, %p227
    %s230 = sadd.s32 %s229, 1
    %p233 = scmp.eq.s32.totalorder %s27, 1
    %p234 = scmp.ne.s32.totalorder %s229, %s231
    %p235 = scmp.eq.s32.totalorder %s27, 0
    %p236 = por %p234, %p235
    %p237 = scmp.ne.s32.totalorder %s229, %s231
    %p238 = scmp.eq.s32.totalorder %s32, 1
    %p239 = por %p237, %p238
    %p240 = scmp.ne.s32.totalorder %s231, %s232
    %p241 = scmp.eq.s32.totalorder %s32, 0
    %p242 = por %p240, %p241
    %p243 = scmp.ne.s32.totalorder %s231, %s232
    %p244 = scmp.eq.s32.totalorder %s33, 1
    %p245 = por %p243, %p244
    %p247 = scmp.ne.s32.totalorder %s232, %s246
    %p248 = scmp.eq.s32.totalorder %s33, 0
    %p249 = por %p247, %p248
    %s251 = sadd.s32 %s250, 1
    %p254 = scmp.eq.s32.totalorder %s27, 1
    %p255 = scmp.ne.s32.totalorder %s250, %s252
    %p256 = scmp.eq.s32.totalorder %s27, 0
    %p257 = por %p255, %p256
    %p258 = scmp.ne.s32.totalorder %s250, %s252
    %p259 = scmp.eq.s32.totalorder %s32, 1
    %p260 = por %p258, %p259
    %p261 = scmp.ne.s32.totalorder %s252, %s253
    %p262 = scmp.eq.s32.totalorder %s32, 0
    %p263 = por %p261, %p262
    %p264 = scmp.ne.s32.totalorder %s252, %s253
    %p265 = scmp.eq.s32.totalorder %s33, 1
    %p266 = por %p264, %p265
    %p268 = scmp.ne.s32.totalorder %s253, %s267
    %p269 = scmp.eq.s32.totalorder %s33, 0
    %p270 = por %p268, %p269
    %s272 = sadd.s32 %s271, 1
    %p275 = scmp.eq.s32.totalorder %s27, 1
    %p276 = scmp.ne.s32.totalorder %s271, %s273
    %p277 = scmp.eq.s32.totalorder %s27, 0
    %p278 = por %p276, %p277
    %p279 = scmp.ne.s32.totalorder %s271, %s273
    %p280 = scmp.eq.s32.totalorder %s32, 1
    %p281 = por %p279, %p280
    %p282 = scmp.ne.s32.totalorder %s273, %s274
    %p283 = scmp.eq.s32.totalorder %s32, 0
    %p284 = por %p282, %p283
    %p285 = scmp.ne.s32.totalorder %s273, %s274
    %p286 = scmp.eq.s32.totalorder %s33, 1
    %p287 = por %p285, %p286
    %p289 = scmp.ne.s32.totalorder %s274, %s288
    %p290 = scmp.eq.s32.totalorder %s33, 0
    %p291 = por %p289, %p290
    %s293 = sadd.s32 %s292, 1
    %p296 = scmp.eq.s32.totalorder %s27, 1
    %p297 = scmp.ne.s32.totalorder %s292, %s294
    %p298 = scmp.eq.s32.totalorder %s27, 0
    %p299 = por %p297, %p298
    %p300 = scmp.ne.s32.totalorder %s292, %s294
    %p301 = scmp.eq.s32.totalorder %s32, 1
    %p302 = por %p300, %p301
    %p303 = scmp.ne.s32.totalorder %s294, %s295
    %p304 = scmp.eq.s32.totalorder %s32, 0
    %p305 = por %p303, %p304
    %p306 = scmp.ne.s32.totalorder %s294, %s295
    %p307 = scmp.eq.s32.totalorder %s33, 1
    %p308 = por %p306, %p307
    %p310 = scmp.ne.s32.totalorder %s295, %s309
    %p311 = scmp.eq.s32.totalorder %s33, 0
    %p312 = por %p310, %p311
    %s314 = sadd.s32 %s313, 1
    %p317 = scmp.eq.s32.totalorder %s27, 1
    %p318 = scmp.ne.s32.totalorder %s313, %s315
    %p319 = scmp.eq.s32.totalorder %s27, 0
    %p320 = por %p318, %p319
    %p321 = scmp.ne.s32.totalorder %s313, %s315
    %p322 = scmp.eq.s32.totalorder %s32, 1
    %p323 = por %p321, %p322
    %p324 = scmp.ne.s32.totalorder %s315, %s316
    %p325 = scmp.eq.s32.totalorder %s32, 0
    %p326 = por %p324, %p325
    %p327 = scmp.ne.s32.totalorder %s315, %s316
    %p328 = scmp.eq.s32.totalorder %s33, 1
    %p329 = por %p327, %p328
    %p331 = scmp.ne.s32.totalorder %s316, %s330
    %p332 = scmp.eq.s32.totalorder %s33, 0
    %p333 = por %p331, %p332
    %s335 = sadd.s32 %s334, 1
    %p338 = scmp.eq.s32.totalorder %s27, 1
    %p339 = scmp.ne.s32.totalorder %s334, %s336
    %p340 = scmp.eq.s32.totalorder %s27, 0
    %p341 = por %p339, %p340
    %p342 = scmp.ne.s32.totalorder %s334, %s336
    %p343 = scmp.eq.s32.totalorder %s32, 1
    %p344 = por %p342, %p343
    %p345 = scmp.ne.s32.totalorder %s336, %s337
    %p346 = scmp.eq.s32.totalorder %s32, 0
    %p347 = por %p345, %p346
    %p348 = scmp.ne.s32.totalorder %s336, %s337
    %p349 = scmp.eq.s32.totalorder %s33, 1
    %p350 = por %p348, %p349
    %p352 = scmp.ne.s32.totalorder %s337, %s351
    %p353 = scmp.eq.s32.totalorder %s33, 0
    %p354 = por %p352, %p353
    %s356 = sadd.s32 %s355, 1
    %p359 = scmp.eq.s32.totalorder %s27, 1
    %p360 = scmp.ne.s32.totalorder %s355, %s357
    %p361 = scmp.eq.s32.totalorder %s27, 0
    %p362 = por %p360, %p361
    %p363 = scmp.ne.s32.totalorder %s355, %s357
    %p364 = scmp.eq.s32.totalorder %s32, 1
    %p365 = por %p363, %p364
    %p366 = scmp.ne.s32.totalorder %s357, %s358
    %p367 = scmp.eq.s32.totalorder %s32, 0
    %p368 = por %p366, %p367
    %p369 = scmp.ne.s32.totalorder %s357, %s358
    %p370 = scmp.eq.s32.totalorder %s33, 1
    %p371 = por %p369, %p370
    %p373 = scmp.ne.s32.totalorder %s358, %s372
    %p374 = scmp.eq.s32.totalorder %s33, 0
    %p375 = por %p373, %p374
    %s377 = sadd.s32 %s376, 1
    %p380 = scmp.eq.s32.totalorder %s27, 1
    %p381 = scmp.ne.s32.totalorder %s376, %s378
    %p382 = scmp.eq.s32.totalorder %s27, 0
    %p383 = por %p381, %p382
    %p384 = scmp.ne.s32.totalorder %s376, %s378
    %p385 = scmp.eq.s32.totalorder %s32, 1
    %p386 = por %p384, %p385
    %p387 = scmp.ne.s32.totalorder %s378, %s379
    %p388 = scmp.eq.s32.totalorder %s32, 0
    %p389 = por %p387, %p388
    %p390 = scmp.ne.s32.totalorder %s378, %s379
    %p391 = scmp.eq.s32.totalorder %s33, 1
    %p392 = por %p390, %p391
    %p394 = scmp.ne.s32.totalorder %s379, %s393
    %p395 = scmp.eq.s32.totalorder %s33, 0
    %p396 = por %p394, %p395
    %s398 = sadd.s32 %s397, 1
    %p401 = scmp.eq.s32.totalorder %s27, 1
    %p402 = scmp.ne.s32.totalorder %s397, %s399
    %p403 = scmp.eq.s32.totalorder %s27, 0
    %p404 = por %p402, %p403
    %p405 = scmp.ne.s32.totalorder %s397, %s399
    %p406 = scmp.eq.s32.totalorder %s32, 1
    %p407 = por %p405, %p406
    %p408 = scmp.ne.s32.totalorder %s399, %s400
    %p409 = scmp.eq.s32.totalorder %s32, 0
    %p410 = por %p408, %p409
    %p411 = scmp.ne.s32.totalorder %s399, %s400
    %p412 = scmp.eq.s32.totalorder %s33, 1
    %p413 = por %p411, %p412
    %p415 = scmp.ne.s32.totalorder %s400, %s414
    %p416 = scmp.eq.s32.totalorder %s33, 0
    %p417 = por %p415, %p416
    %s419 = sadd.s32 %s418, 1
    %p422 = scmp.eq.s32.totalorder %s27, 1
    %p423 = scmp.ne.s32.totalorder %s418, %s420
    %p424 = scmp.eq.s32.totalorder %s27, 0
    %p425 = por %p423, %p424
    %p426 = scmp.ne.s32.totalorder %s418, %s420
    %p427 = scmp.eq.s32.totalorder %s32, 1
    %p428 = por %p426, %p427
    %p429 = scmp.ne.s32.totalorder %s420, %s421
    %p430 = scmp.eq.s32.totalorder %s32, 0
    %p431 = por %p429, %p430
    %p432 = scmp.ne.s32.totalorder %s420, %s421
    %p433 = scmp.eq.s32.totalorder %s33, 1
    %p434 = por %p432, %p433
    %p436 = scmp.ne.s32.totalorder %s421, %s435
    %p437 = scmp.eq.s32.totalorder %s33, 0
    %p438 = por %p436, %p437
    %s439 = ssub.s32 %s27, %s34
    %p440 = scmp.eq.s32.totalorder %s439, 0
    %s442 = sadd.s32 %s441, 1
    %s443 = scalar_select %p440, %s441, %s442
    %p446 = pneg %p440
    %p447 = scmp.eq.s32.totalorder %s27, 1
    %p448 = por %p446, %p447
    %p449 = scmp.ne.s32.totalorder %s441, %s444
    %p450 = scmp.eq.s32.totalorder %s27, 0
    %p451 = por %p449, %p450
    %p452 = scmp.ne.s32.totalorder %s441, %s444
    %p453 = scmp.eq.s32.totalorder %s32, 1
    %p454 = por %p452, %p453
    %p455 = scmp.ne.s32.totalorder %s444, %s445
    %p456 = scmp.eq.s32.totalorder %s32, 0
    %p457 = por %p455, %p456
    %p458 = scmp.ne.s32.totalorder %s444, %s445
    %p459 = scmp.eq.s32.totalorder %s33, 1
    %p460 = por %p458, %p459
    %p462 = scmp.ne.s32.totalorder %s445, %s461
    %p463 = scmp.eq.s32.totalorder %s33, 0
    %p464 = por %p462, %p463
    %p465 = scmp.le.s32.totalorder 1, %s27
    %p466 = scmp.lt.s32.totalorder %s27, 3
    %p467 = pnand %p465, %p466
    %p468 = pneg %p467
    // Predicated region
    $region9: #{pallas_forward.3} parent=5 // pred_check
      _
    $region10: #{pallas_forward.3} parent=5 // pred_check_branch
      %470 = sbr.rel (%p467) target = $region12
    $region11: #{pallas_forward.3} parent=5 // pred_region
      %s471 = ssub.s32 %s27, 1
      // Predicated region
      $region13: #{pallas_forward.3} parent=11 // pred_check
        %p472 = pneg %p74
      $region14: #{pallas_forward.3} parent=11 // pred_check_branch
        %474 = sbr.rel (%p472) target = $region16
      $region15: #{pallas_forward.3} parent=11 // pred_region
        _
      $region16: #{pallas_forward.3} parent=11 // pred_fallthru
        _
      // Predicated region
      $region17: #{pallas_forward.3} parent=11 // pred_check
        %p475 = pneg %p95
      $region18: #{pallas_forward.3} parent=11 // pred_check_branch
        %477 = sbr.rel (%p475) target = $region20
      $region19: #{pallas_forward.3} parent=11 // pred_region
        _
      $region20: #{pallas_forward.3} parent=11 // pred_fallthru
        _
      // Predicated region
      $region21: #{pallas_forward.3} parent=11 // pred_check
        %p478 = pneg %p116
      $region22: #{pallas_forward.3} parent=11 // pred_check_branch
        %480 = sbr.rel (%p478) target = $region24
      $region23: #{pallas_forward.3} parent=11 // pred_region
        _
      $region24: #{pallas_forward.3} parent=11 // pred_fallthru
        _
      // Predicated region
      $region25: #{pallas_forward.3} parent=11 // pred_check
        %p481 = pneg %p137
      $region26: #{pallas_forward.3} parent=11 // pred_check_branch
        %483 = sbr.rel (%p481) target = $region28
      $region27: #{pallas_forward.3} parent=11 // pred_region
        _
      $region28: #{pallas_forward.3} parent=11 // pred_fallthru
        _
      // Predicated region
      $region29: #{pallas_forward.3} parent=11 // pred_check
        %p484 = pneg %p158
      $region30: #{pallas_forward.3} parent=11 // pred_check_branch
        %486 = sbr.rel (%p484) target = $region32
      $region31: #{pallas_forward.3} parent=11 // pred_region
        _
      $region32: #{pallas_forward.3} parent=11 // pred_fallthru
        _
      // Predicated region
      $region33: #{pallas_forward.3} parent=11 // pred_check
        %p487 = pneg %p179
      $region34: #{pallas_forward.3} parent=11 // pred_check_branch
        %489 = sbr.rel (%p487) target = $region36
      $region35: #{pallas_forward.3} parent=11 // pred_region
        _
      $region36: #{pallas_forward.3} parent=11 // pred_fallthru
        _
      // Predicated region
      $region37: #{pallas_forward.3} parent=11 // pred_check
        %p490 = pneg %p200
      $region38: #{pallas_forward.3} parent=11 // pred_check_branch
        %492 = sbr.rel (%p490) target = $region40
      $region39: #{pallas_forward.3} parent=11 // pred_region
        _
      $region40: #{pallas_forward.3} parent=11 // pred_fallthru
        _
      // Predicated region
      $region41: #{pallas_forward.3} parent=11 // pred_check
        %p493 = pneg %p221
      $region42: #{pallas_forward.3} parent=11 // pred_check_branch
        %495 = sbr.rel (%p493) target = $region44
      $region43: #{pallas_forward.3} parent=11 // pred_region
        _
      $region44: #{pallas_forward.3} parent=11 // pred_fallthru
        _
      // Predicated region
      $region45: #{pallas_forward.3} parent=11 // pred_check
        %p496 = pneg %p242
      $region46: #{pallas_forward.3} parent=11 // pred_check_branch
        %498 = sbr.rel (%p496) target = $region48
      $region47: #{pallas_forward.3} parent=11 // pred_region
        _
      $region48: #{pallas_forward.3} parent=11 // pred_fallthru
        _
      // Predicated region
      $region49: #{pallas_forward.3} parent=11 // pred_check
        %p499 = pneg %p263
      $region50: #{pallas_forward.3} parent=11 // pred_check_branch
        %501 = sbr.rel (%p499) target = $region52
      $region51: #{pallas_forward.3} parent=11 // pred_region
        _
      $region52: #{pallas_forward.3} parent=11 // pred_fallthru
        _
      // Predicated region
      $region53: #{pallas_forward.3} parent=11 // pred_check
        %p502 = pneg %p284
      $region54: #{pallas_forward.3} parent=11 // pred_check_branch
        %504 = sbr.rel (%p502) target = $region56
      $region55: #{pallas_forward.3} parent=11 // pred_region
        _
      $region56: #{pallas_forward.3} parent=11 // pred_fallthru
        _
      // Predicated region
      $region57: #{pallas_forward.3} parent=11 // pred_check
        %p505 = pneg %p305
      $region58: #{pallas_forward.3} parent=11 // pred_check_branch
        %507 = sbr.rel (%p505) target = $region60
      $region59: #{pallas_forward.3} parent=11 // pred_region
        _
      $region60: #{pallas_forward.3} parent=11 // pred_fallthru
        _
      // Predicated region
      $region61: #{pallas_forward.3} parent=11 // pred_check
        %p508 = pneg %p326
      $region62: #{pallas_forward.3} parent=11 // pred_check_branch
        %510 = sbr.rel (%p508) target = $region64
      $region63: #{pallas_forward.3} parent=11 // pred_region
        _
      $region64: #{pallas_forward.3} parent=11 // pred_fallthru
        _
      // Predicated region
      $region65: #{pallas_forward.3} parent=11 // pred_check
        %p511 = pneg %p347
      $region66: #{pallas_forward.3} parent=11 // pred_check_branch
        %513 = sbr.rel (%p511) target = $region68
      $region67: #{pallas_forward.3} parent=11 // pred_region
        _
      $region68: #{pallas_forward.3} parent=11 // pred_fallthru
        _
      // Predicated region
      $region69: #{pallas_forward.3} parent=11 // pred_check
        %p514 = pneg %p368
      $region70: #{pallas_forward.3} parent=11 // pred_check_branch
        %516 = sbr.rel (%p514) target = $region72
      $region71: #{pallas_forward.3} parent=11 // pred_region
        _
      $region72: #{pallas_forward.3} parent=11 // pred_fallthru
        _
      // Predicated region
      $region73: #{pallas_forward.3} parent=11 // pred_check
        %p517 = pneg %p389
      $region74: #{pallas_forward.3} parent=11 // pred_check_branch
        %519 = sbr.rel (%p517) target = $region76
      $region75: #{pallas_forward.3} parent=11 // pred_region
        _
      $region76: #{pallas_forward.3} parent=11 // pred_fallthru
        _
      // Predicated region
      $region77: #{pallas_forward.3} parent=11 // pred_check
        %p520 = pneg %p410
      $region78: #{pallas_forward.3} parent=11 // pred_check_branch
        %522 = sbr.rel (%p520) target = $region80
      $region79: #{pallas_forward.3} parent=11 // pred_region
        _
      $region80: #{pallas_forward.3} parent=11 // pred_fallthru
        _
      // Predicated region
      $region81: #{pallas_forward.3} parent=11 // pred_check
        %p523 = pneg %p431
      $region82: #{pallas_forward.3} parent=11 // pred_check_branch
        %525 = sbr.rel (%p523) target = $region84
      $region83: #{pallas_forward.3} parent=11 // pred_region
        _
      $region84: #{pallas_forward.3} parent=11 // pred_fallthru
        _
    $region12: #{pallas_forward.3} parent=5 // pred_fallthru
      _
    %p526 = scmp.lt.s32.totalorder %s27, 2
    // Predicated region
    $region85: #{pallas_forward.3} parent=5 // pred_check
      %p527 = pneg %p526
    $region86: #{pallas_forward.3} parent=5 // pred_check_branch
      %529 = sbr.rel (%p527) target = $region88
    $region87: #{pallas_forward.3} parent=5 // pred_region
      // Predicated region
      $region89: #{pallas_forward.3} parent=87 // pred_check
        %p530 = pneg %p47
      $region90: #{pallas_forward.3} parent=87 // pred_check_branch
        %532 = sbr.rel (%p530) target = $region92
      $region91: #{pallas_forward.3} parent=87 // pred_region
        %p533 = scmp.lt.s32.totalorder %s27, 1
        %s534 = scalar_select %p533, %s27, 1
        %s535 = smul.addr %s534, 25
        %s536 = smul.addr %s535, 4
        %s537 = scalar_lea.vmem %s0, %s536
      $region92: #{pallas_forward.3} parent=87 // pred_fallthru
        _
    $region88: #{pallas_forward.3} parent=5 // pred_fallthru
      _
    %p538 = scmp.le.s32.totalorder 1, %s27
    %p539 = scmp.lt.s32.totalorder %s27, 3
    %p540 = pnand %p538, %p539
    %p541 = pneg %p540
    // Predicated region
    $region93: #{pallas_forward.3} parent=5 // pred_check
      _
    $region94: #{pallas_forward.3} parent=5 // pred_check_branch
      %543 = sbr.rel (%p540) target = $region96
    $region95: #{pallas_forward.3} parent=5 // pred_region
      %s544 = ssub.s32 %s27, 1
      %p545 = scmp.lt.s32.totalorder %s32, 1
      %s546 = scalar_select %p545, %s32, 1
      %s547 = smul.addr %s546, 25
      %s548 = smul.addr %s547, 4
      %s549 = scalar_lea.vmem %s0, %s548
      %p550 = pneg %p53
      %p551 = pneg %p50
      %p552 = pneg %p74
      %p553 = pneg %p71
      %p554 = pneg %p95
      %p555 = pneg %p92
      %p556 = pneg %p116
      %p557 = pneg %p113
      %p558 = pneg %p137
      %p559 = pneg %p134
      %p560 = pneg %p158
      %p561 = pneg %p155
      %p562 = pneg %p179
      %p563 = pneg %p176
      %p564 = pneg %p200
      %p565 = pneg %p197
      %p566 = pneg %p221
      %p567 = pneg %p218
      %p568 = pneg %p242
      %p569 = pneg %p239
      %p570 = pneg %p263
      %p571 = pneg %p260
      %p572 = pneg %p284
      %p573 = pneg %p281
      %p574 = pneg %p305
      %p575 = pneg %p302
      %p576 = pneg %p326
      %p577 = pneg %p323
      %p578 = pneg %p347
      %p579 = pneg %p344
      %p580 = pneg %p368
      %p581 = pneg %p365
      %p582 = pneg %p389
      %p583 = pneg %p386
      %p584 = pneg %p410
      %p585 = pneg %p407
      %p586 = pneg %p431
      %p587 = pneg %p428
      %p588 = pneg %p457
      %p589 = pneg %p454
      %p590 = scmp.lt.s32.totalorder %s32, 1
      %s591 = scalar_select %p590, %s32, 1
      %s592 = scalar_lea.vmem %s19, %s591
      %p593 = scmp.lt.s32.totalorder %s32, 1
      %s594 = scalar_select %p593, %s32, 1
      %s595 = smul.addr %s594, 25
      %s596 = smul.addr %s595, 4
      %s597 = scalar_lea.vmem %s0, %s596
      %p598 = scmp.lt.s32.totalorder %s32, 1
      %s599 = scalar_select %p598, %s32, 1
      %s600 = scalar_lea.vmem %s19, %s599
      %v602 = vld [vmem:[%s1] sm:$0xf]
      %v603 = vld [vmem:[%s597] sm:$0xff]
      %v604 = vld [vmem:[%s597 + $0x8] sm:$0xff]
      %v605 = vld [vmem:[%s597 + $0x10] sm:$0xf]
      %v606 = vld [vmem:[%s597 + $0x14] sm:$0xff]
      %v607 = vld [vmem:[%s597 + $0x1c] sm:$0xff]
      %v608 = vld [vmem:[%s597 + $0x24] sm:$0xf]
      %v609 = vld [vmem:[%s597 + $0x28] sm:$0xff]
      %v610 = vld [vmem:[%s597 + $0x30] sm:$0xff]
      %v611 = vld [vmem:[%s597 + $0x38] sm:$0xf]
      %v612 = vld [vmem:[%s597 + $0x3c] sm:$0xff]
      %v613 = vld [vmem:[%s597 + $0x44] sm:$0xff]
      %v614 = vld [vmem:[%s597 + $0x4c] sm:$0xf]
      %v615 = vld [vmem:[%s597 + $0x50] sm:$0x33]
      %v616 = vld [vmem:[%s597 + $0x58] sm:$0x33]
      %v617 = vld [vmem:[%s597 + $0x60] sm:$0x3]
      %v618 = vld [vmem:[%s2] sm:$0xff]
      %620 = vset.pattern.permute.xlu0 0
      %621 = vperm.xlu0 %620, %v618
      %v622 = vpop.permute.xlu0 %621
      %v639 = vunpack.c.l.b16 %v603
      %v640 = vunpack.c.h.b16 %v603
      %v641 = vunpack.c.l.b16 %v604
      %v642 = vunpack.c.h.b16 %v604
      %v643 = vunpack.c.l.b16 %v605
      %v644 = vunpack.c.l.b16 %v606
      %v645 = vunpack.c.h.b16 %v606
      %v646 = vunpack.c.l.b16 %v607
      %v647 = vunpack.c.h.b16 %v607
      %v648 = vunpack.c.l.b16 %v608
      %v649 = vunpack.c.l.b16 %v609
      %v650 = vunpack.c.h.b16 %v609
      %v651 = vunpack.c.l.b16 %v610
      %v652 = vunpack.c.h.b16 %v610
      %v653 = vunpack.c.l.b16 %v611
      %v654 = vunpack.c.l.b16 %v612
      %v655 = vunpack.c.h.b16 %v612
      %v656 = vunpack.c.l.b16 %v613
      %v657 = vunpack.c.h.b16 %v613
      %v658 = vunpack.c.l.b16 %v614
      %v659 = vunpack.c.l.b16 %v615
      %v660 = vunpack.c.h.b16 %v615
      %v661 = vunpack.c.l.b16 %v616
      %v662 = vunpack.c.h.b16 %v616
      %v663 = vunpack.c.l.b16 %v617
      %v664 = vpack.c.b16 %v644, %v639
      %v665 = vpack.c.b16 %v645, %v640
      %v666 = vpack.c.b16 %v646, %v641
      %v667 = vpack.c.b16 %v647, %v642
      %v668 = vpack.c.b16 %v648, %v643
      %v669 = vpack.c.b16 %v654, %v649
      %v670 = vpack.c.b16 %v655, %v650
      %v671 = vpack.c.b16 %v656, %v651
      %v672 = vpack.c.b16 %v657, %v652
      %v673 = vpack.c.b16 %v658, %v653
      %v674 = vpack.c.b16 %v659, %v659
      %v675 = vpack.c.b16 %v660, %v660
      %v676 = vpack.c.b16 %v661, %v661
      %v677 = vpack.c.b16 %v662, %v662
      %v678 = vpack.c.b16 %v663, %v663
      %vm689 = vcmask 293888
      %v691 = vsel %vm689, %v602, 0
      %vm693 = vcmask 1041408
      %v695 = vsel %vm693, %v674, 0
      %v698 = vsel %vm693, %v675, 0
      %v701 = vsel %vm693, %v676, 0
      %v704 = vsel %vm693, %v677, 0
      %v707 = vsel %vm693, %v678, 0
      %709 = vmatprep.subr.bf16.mxu0 0
      %710 = vmatpush1.bf16.msra.mxu0 0
      %711 = vmatprep.subr.bf16.mxu0 0
      %712 = vmatpush1.bf16.msra.mxu0 0
      %713 = vmatprep.subr.bf16.mxu0 0
      %714 = vmatpush1.bf16.msra.mxu0 0
      %715 = vmatprep.subr.bf16.mxu0 0
      %716 = vmatpush1.bf16.msra.mxu0 0
      %717 = vmatprep.subr.bf16.mxu0 0
      %718 = vmatpush1.bf16.msra.mxu0 0
      %719 = vmatprep.subr.bf16.mxu0 %v698
      %720 = vmatpush1.bf16.msra.mxu0 %v695
      %721 = vmatprep.subr.bf16.mxu0 %v670
      %722 = vmatpush1.bf16.msra.mxu0 %v669
      %723 = vmatprep.subr.bf16.mxu0 %v665
      %724 = vmatpush1.bf16.msra.mxu0 %v664
      %725 = vmatprep.subr.bf16.mxu0 0
      %726 = vmatpush2.bf16.msra.mxu0 0
      %727 = vmatprep.subr.bf16.mxu0 0
      %728 = vmatpush2.bf16.msra.mxu0 0
      %729 = vmatprep.subr.bf16.mxu0 0
      %730 = vmatpush2.bf16.msra.mxu0 0
      %731 = vmatprep.subr.bf16.mxu0 0
      %732 = vmatpush2.bf16.msra.mxu0 0
      %733 = vmatprep.subr.bf16.mxu0 0
      %734 = vmatpush2.bf16.msra.mxu0 0
      %735 = vmatprep.subr.bf16.mxu0 0
      %736 = vmatpush2.bf16.msra.mxu0 0
      %737 = vmatprep.subr.bf16.mxu0 0
      %738 = vmatpush2.bf16.msra.mxu0 0
      %739 = vmatprep.subr.bf16.mxu0 0
      %740 = vmatpush2.bf16.msra.mxu0 0
      %741 = vmatprep.mubr.bf16.mxu0 0
      %742 = vmatmul.mubr.bf16.gmra.mxu0 %v691
      %v743 = vpop.f32.mrf.mxu0
      %v744 = vadd.f32 %v622, %v743
      %v745 = vpop.f32.mrf.mxu0
      %v746 = vadd.f32 %v622, %v745
      %v747 = vpop.f32.mrf.mxu0
      %v748 = vpop.f32.mrf.mxu0
      %749 = vdwg.mxu0
      %750 = vmatprep.subr.bf16.mxu0 0
      %751 = vmatpush1.bf16.msra.mxu0 0
      %752 = vmatprep.subr.bf16.mxu0 0
      %753 = vmatpush1.bf16.msra.mxu0 0
      %754 = vmatprep.subr.bf16.mxu0 0
      %755 = vmatpush1.bf16.msra.mxu0 0
      %756 = vmatprep.subr.bf16.mxu0 0
      %757 = vmatpush1.bf16.msra.mxu0 0
      %758 = vmatprep.subr.bf16.mxu0 0
      %759 = vmatpush1.bf16.msra.mxu0 0
      %760 = vmatprep.subr.bf16.mxu0 %v704
      %761 = vmatpush1.bf16.msra.mxu0 %v701
      %762 = vmatprep.subr.bf16.mxu0 %v672
      %763 = vmatpush1.bf16.msra.mxu0 %v671
      %764 = vmatprep.subr.bf16.mxu0 %v667
      %765 = vmatpush1.bf16.msra.mxu0 %v666
      %766 = vmatprep.subr.bf16.mxu0 0
      %767 = vmatpush2.bf16.msra.mxu0 0
      %768 = vmatprep.subr.bf16.mxu0 0
      %769 = vmatpush2.bf16.msra.mxu0 0
      %770 = vmatprep.subr.bf16.mxu0 0
      %771 = vmatpush2.bf16.msra.mxu0 0
      %772 = vmatprep.subr.bf16.mxu0 0
      %773 = vmatpush2.bf16.msra.mxu0 0
      %774 = vmatprep.subr.bf16.mxu0 0
      %775 = vmatpush2.bf16.msra.mxu0 0
      %776 = vmatprep.subr.bf16.mxu0 0
      %777 = vmatpush2.bf16.msra.mxu0 0
      %778 = vmatprep.subr.bf16.mxu0 0
      %779 = vmatpush2.bf16.msra.mxu0 0
      %780 = vmatprep.subr.bf16.mxu0 0
      %781 = vmatpush2.bf16.msra.mxu0 0
      %782 = vmatprep.mubr.bf16.mxu0 0
      %783 = vmatmul.mubr.bf16.gmra.mxu0 %v691
      %v784 = vpop.f32.mrf.mxu0
      %v785 = vadd.f32 %v622, %v784
      %v786 = vpop.f32.mrf.mxu0
      %v787 = vadd.f32 %v622, %v786
      %v788 = vpop.f32.mrf.mxu0
      %v789 = vpop.f32.mrf.mxu0
      %790 = vdwg.mxu0
      %791 = vmatprep.subr.bf16.mxu0 0
      %792 = vmatpush1.bf16.msra.mxu0 0
      %793 = vmatprep.subr.bf16.mxu0 0
      %794 = vmatpush1.bf16.msra.mxu0 0
      %795 = vmatprep.subr.bf16.mxu0 0
      %796 = vmatpush1.bf16.msra.mxu0 0
      %797 = vmatprep.subr.bf16.mxu0 0
      %798 = vmatpush1.bf16.msra.mxu0 0
      %799 = vmatprep.subr.bf16.mxu0 0
      %800 = vmatpush1.bf16.msra.mxu0 0
      %801 = vmatprep.subr.bf16.mxu0 0
      %802 = vmatpush1.bf16.msra.mxu0 %v707
      %803 = vmatprep.subr.bf16.mxu0 0
      %804 = vmatpush1.bf16.msra.mxu0 %v673
      %805 = vmatprep.subr.bf16.mxu0 0
      %806 = vmatpush1.bf16.msra.mxu0 %v668
      %807 = vmatprep.subr.bf16.mxu0 0
      %808 = vmatpush2.bf16.msra.mxu0 0
      %809 = vmatprep.subr.bf16.mxu0 0
      %810 = vmatpush2.bf16.msra.mxu0 0
      %811 = vmatprep.subr.bf16.mxu0 0
      %812 = vmatpush2.bf16.msra.mxu0 0
      %813 = vmatprep.subr.bf16.mxu0 0
      %814 = vmatpush2.bf16.msra.mxu0 0
      %815 = vmatprep.subr.bf16.mxu0 0
      %816 = vmatpush2.bf16.msra.mxu0 0
      %817 = vmatprep.subr.bf16.mxu0 0
      %818 = vmatpush2.bf16.msra.mxu0 0
      %819 = vmatprep.subr.bf16.mxu0 0
      %820 = vmatpush2.bf16.msra.mxu0 0
      %821 = vmatprep.subr.bf16.mxu0 0
      %822 = vmatpush2.bf16.msra.mxu0 0
      %823 = vmatprep.mubr.bf16.mxu0 0
      %824 = vmatmul.mubr.bf16.gmra.mxu0 %v691
      %v825 = vpop.f32.mrf.mxu0
      %v826 = vadd.f32 %v622, %v825
      %v827 = vpop.f32.mrf.mxu0
      %v828 = vpop.f32.mrf.mxu0
      %v829 = vpop.f32.mrf.mxu0
      %830 = vdwg.mxu0
      %v831 = vmax.f32 %v744, 0.0
      %v832 = vmax.f32 %v746, 0.0
      %v833 = vmax.f32 %v785, 0.0
      %v834 = vmax.f32 %v787, 0.0
      %v835 = vmax.f32 %v826, 0.0
      %v836 = vpack.c.bf16 %v831, %v831
      %v837 = vpack.c.bf16 %v832, %v832
      %v838 = vpack.c.bf16 %v833, %v833
      %v839 = vpack.c.bf16 %v834, %v834
      %v840 = vpack.c.bf16 %v835, %v835
      %v841 = vld [vmem:[%s3] sm:$0xf]
      %v842 = vld [vmem:[%s3 + $0x4] sm:$0xf]
      %v843 = vld [vmem:[%s3 + $0x8] sm:$0xf]
      %v844 = vld [vmem:[%s3 + $0xc] sm:$0xf]
      %v845 = vld [vmem:[%s3 + $0x10] sm:$0xf]
      %v846 = vld [vmem:[%s3 + $0x14] sm:$0xf]
      %v847 = vld [vmem:[%s3 + $0x18] sm:$0xf]
      %v848 = vld [vmem:[%s3 + $0x1c] sm:$0xf]
      %v849 = vld [vmem:[%s3 + $0x20] sm:$0xf]
      %v850 = vld [vmem:[%s3 + $0x24] sm:$0xf]
      %v851 = vld [vmem:[%s3 + $0x28] sm:$0xf]
      %v852 = vld [vmem:[%s3 + $0x2c] sm:$0xf]
      %v853 = vld [vmem:[%s3 + $0x30] sm:$0xf]
      %v854 = vld [vmem:[%s3 + $0x34] sm:$0xf]
      %v855 = vld [vmem:[%s3 + $0x38] sm:$0xf]
      %v856 = vld [vmem:[%s3 + $0x3c] sm:$0xf]
      %v857 = vld [vmem:[%s3 + $0x40] sm:$0xf]
      %v858 = vld [vmem:[%s3 + $0x44] sm:$0xf]
      %v859 = vld [vmem:[%s3 + $0x48] sm:$0xf]
      %v860 = vld [vmem:[%s3 + $0x4c] sm:$0xf]
      %v861 = vld [vmem:[%s3 + $0x50] sm:$0xf]
      %v862 = vld [vmem:[%s3 + $0x54] sm:$0xf]
      %v863 = vld [vmem:[%s3 + $0x58] sm:$0xf]
      %v864 = vld [vmem:[%s3 + $0x5c] sm:$0xf]
      %v865 = vld [vmem:[%s3 + $0x60] sm:$0xf]
      %v866 = vld [vmem:[%s3 + $0x64] sm:$0xf]
      %v867 = vld [vmem:[%s3 + $0x68] sm:$0xf]
      %v868 = vld [vmem:[%s3 + $0x6c] sm:$0xf]
      %v869 = vld [vmem:[%s3 + $0x70] sm:$0xf]
      %v870 = vld [vmem:[%s3 + $0x74] sm:$0xf]
      %v871 = vld [vmem:[%s3 + $0x78] sm:$0xf]
      %v872 = vld [vmem:[%s3 + $0x7c] sm:$0xf]
      %v873 = vld [vmem:[%s3 + $0x80] sm:$0xf]
      %v874 = vld [vmem:[%s3 + $0x84] sm:$0xf]
      %v875 = vld [vmem:[%s3 + $0x88] sm:$0xf]
      %v876 = vld [vmem:[%s3 + $0x8c] sm:$0xf]
      %v877 = vld [vmem:[%s3 + $0x90] sm:$0xf]
      %v878 = vld [vmem:[%s3 + $0x94] sm:$0xf]
      %v879 = vld [vmem:[%s3 + $0x98] sm:$0xf]
      %v880 = vld [vmem:[%s3 + $0x9c] sm:$0xf]
      %v881 = vld [vmem:[%s3 + $0xa0] sm:$0xf]
      %v882 = vld [vmem:[%s3 + $0xa4] sm:$0xf]
      %v883 = vld [vmem:[%s3 + $0xa8] sm:$0xf]
      %v884 = vld [vmem:[%s3 + $0xac] sm:$0xf]
      %v885 = vld [vmem:[%s3 + $0xb0] sm:$0xf]
      %v886 = vld [vmem:[%s3 + $0xb4] sm:$0xf]
      %v887 = vld [vmem:[%s3 + $0xb8] sm:$0xf]
      %v888 = vld [vmem:[%s3 + $0xbc] sm:$0xf]
      %v889 = vld [vmem:[%s3 + $0xc0] sm:$0xf]
      %v890 = vld [vmem:[%s3 + $0xc4] sm:$0xf]
      %v891 = vld [vmem:[%s3 + $0xc8] sm:$0xf]
      %v892 = vld [vmem:[%s3 + $0xcc] sm:$0xf]
      %v893 = vld [vmem:[%s3 + $0xd0] sm:$0xf]
      %v894 = vld [vmem:[%s3 + $0xd4] sm:$0xf]
      %v895 = vld [vmem:[%s3 + $0xd8] sm:$0xf]
      %v896 = vld [vmem:[%s3 + $0xdc] sm:$0xf]
      %v897 = vld [vmem:[%s3 + $0xe0] sm:$0xf]
      %v898 = vld [vmem:[%s3 + $0xe4] sm:$0xf]
      %v899 = vld [vmem:[%s3 + $0xe8] sm:$0xf]
      %v900 = vld [vmem:[%s3 + $0xec] sm:$0xf]
      %v901 = vld [vmem:[%s3 + $0xf0] sm:$0xf]
      %v902 = vld [vmem:[%s3 + $0xf4] sm:$0xf]
      %v903 = vld [vmem:[%s3 + $0xf8] sm:$0xf]
      %v904 = vld [vmem:[%s3 + $0xfc] sm:$0xf]
      %v905 = vld [vmem:[%s3 + $0x100] sm:$0xf]
      %v906 = vld [vmem:[%s3 + $0x104] sm:$0xf]
      %v907 = vld [vmem:[%s3 + $0x108] sm:$0x1]
      %v975 = vunpack.c.l.b16 %v841
      %v976 = vunpack.c.l.b16 %v842
      %v977 = vunpack.c.l.b16 %v843
      %v978 = vunpack.c.l.b16 %v844
      %v979 = vunpack.c.l.b16 %v845
      %v980 = vunpack.c.l.b16 %v846
      %v981 = vunpack.c.l.b16 %v847
      %v982 = vunpack.c.l.b16 %v848
      %v983 = vunpack.c.l.b16 %v849
      %v984 = vunpack.c.l.b16 %v850
      %v985 = vunpack.c.l.b16 %v851
      %v986 = vunpack.c.l.b16 %v852
      %v987 = vunpack.c.l.b16 %v853
      %v988 = vunpack.c.l.b16 %v854
      %v989 = vunpack.c.l.b16 %v855
      %v990 = vunpack.c.l.b16 %v856
      %v991 = vunpack.c.l.b16 %v857
      %v992 = vunpack.c.l.b16 %v858
      %v993 = vunpack.c.l.b16 %v859
      %v994 = vunpack.c.l.b16 %v860
      %v995 = vunpack.c.l.b16 %v861
      %v996 = vunpack.c.l.b16 %v862
      %v997 = vunpack.c.l.b16 %v863
      %v998 = vunpack.c.l.b16 %v864
      %v999 = vunpack.c.l.b16 %v865
      %v1000 = vunpack.c.l.b16 %v866
      %v1001 = vunpack.c.l.b16 %v867
      %v1002 = vunpack.c.l.b16 %v868
      %v1003 = vunpack.c.l.b16 %v869
      %v1004 = vunpack.c.l.b16 %v870
      %v1005 = vunpack.c.l.b16 %v871
      %v1006 = vunpack.c.l.b16 %v872
      %v1007 = vunpack.c.l.b16 %v873
      %v1008 = vunpack.c.l.b16 %v874
      %v1009 = vunpack.c.l.b16 %v875
      %v1010 = vunpack.c.l.b16 %v876
      %v1011 = vunpack.c.l.b16 %v877
      %v1012 = vunpack.c.l.b16 %v878
      %v1013 = vunpack.c.l.b16 %v879
      %v1014 = vunpack.c.l.b16 %v880
      %v1015 = vunpack.c.l.b16 %v881
      %v1016 = vunpack.c.l.b16 %v882
      %v1017 = vunpack.c.l.b16 %v883
      %v1018 = vunpack.c.l.b16 %v884
      %v1019 = vunpack.c.l.b16 %v885
      %v1020 = vunpack.c.l.b16 %v886
      %v1021 = vunpack.c.l.b16 %v887
      %v1022 = vunpack.c.l.b16 %v888
      %v1023 = vunpack.c.l.b16 %v889
      %v1024 = vunpack.c.l.b16 %v890
      %v1025 = vunpack.c.l.b16 %v891
      %v1026 = vunpack.c.l.b16 %v892
      %v1027 = vunpack.c.l.b16 %v893
      %v1028 = vunpack.c.l.b16 %v894
      %v1029 = vunpack.c.l.b16 %v895
      %v1030 = vunpack.c.l.b16 %v896
      %v1031 = vunpack.c.l.b16 %v897
      %v1032 = vunpack.c.l.b16 %v898
      %v1033 = vunpack.c.l.b16 %v899
      %v1034 = vunpack.c.l.b16 %v900
      %v1035 = vunpack.c.l.b16 %v901
      %v1036 = vunpack.c.l.b16 %v902
      %v1037 = vunpack.c.l.b16 %v903
      %v1038 = vunpack.c.l.b16 %v904
      %v1039 = vunpack.c.l.b16 %v905
      %v1040 = vunpack.c.l.b16 %v906
      %v1041 = vunpack.c.l.b16 %v907
      %v1042 = vpack.c.b16 %v976, %v975
      %v1043 = vpack.c.b16 %v978, %v977
      %v1044 = vpack.c.b16 %v980, %v979
      %v1045 = vpack.c.b16 %v982, %v981
      %v1046 = vpack.c.b16 %v984, %v983
      %v1047 = vpack.c.b16 %v986, %v985
      %v1048 = vpack.c.b16 %v988, %v987
      %v1049 = vpack.c.b16 %v990, %v989
      %v1050 = vpack.c.b16 %v992, %v991
      %v1051 = vpack.c.b16 %v994, %v993
      %v1052 = vpack.c.b16 %v996, %v995
      %v1053 = vpack.c.b16 %v998, %v997
      %v1054 = vpack.c.b16 %v1000, %v999
      %v1055 = vpack.c.b16 %v1002, %v1001
      %v1056 = vpack.c.b16 %v1004, %v1003
      %v1057 = vpack.c.b16 %v1006, %v1005
      %v1058 = vpack.c.b16 %v1008, %v1007
      %v1059 = vpack.c.b16 %v1010, %v1009
      %v1060 = vpack.c.b16 %v1012, %v1011
      %v1061 = vpack.c.b16 %v1014, %v1013
      %v1062 = vpack.c.b16 %v1016, %v1015
      %v1063 = vpack.c.b16 %v1018, %v1017
      %v1064 = vpack.c.b16 %v1020, %v1019
      %v1065 = vpack.c.b16 %v1022, %v1021
      %v1066 = vpack.c.b16 %v1024, %v1023
      %v1067 = vpack.c.b16 %v1026, %v1025
      %v1068 = vpack.c.b16 %v1028, %v1027
      %v1069 = vpack.c.b16 %v1030, %v1029
      %v1070 = vpack.c.b16 %v1032, %v1031
      %v1071 = vpack.c.b16 %v1034, %v1033
      %v1072 = vpack.c.b16 %v1036, %v1035
      %v1073 = vpack.c.b16 %v1038, %v1037
      %v1074 = vpack.c.b16 %v1040, %v1039
      %v1075 = vpack.c.b16 %v1041, %v1041
      %vm1109 = vcmask 138240
      %v1111 = vsel %vm1109, %v840, 0
      %vm1113 = vcmask 1040384
      %v1114 = vsel 0, 4294967295, 65535
      %v1115 = vsel %vm1113, %v1114, 0
      %v1117 = vand.u32 %v1075, %v1115
      %1119 = vmatprep.subr.bf16.mxu0 0
      %1120 = vmatpush1.bf16.msra.mxu0 %v1049
      %1121 = vmatprep.subr.bf16.mxu0 0
      %1122 = vmatpush1.bf16.msra.mxu0 %v1048
      %1123 = vmatprep.subr.bf16.mxu0 0
      %1124 = vmatpush1.bf16.msra.mxu0 %v1047
      %1125 = vmatprep.subr.bf16.mxu0 0
      %1126 = vmatpush1.bf16.msra.mxu0 %v1046
      %1127 = vmatprep.subr.bf16.mxu0 0
      %1128 = vmatpush1.bf16.msra.mxu0 %v1045
      %1129 = vmatprep.subr.bf16.mxu0 0
      %1130 = vmatpush1.bf16.msra.mxu0 %v1044
      %1131 = vmatprep.subr.bf16.mxu0 0
      %1132 = vmatpush1.bf16.msra.mxu0 %v1043
      %1133 = vmatprep.subr.bf16.mxu0 0
      %1134 = vmatpush1.bf16.msra.mxu0 %v1042
      %1135 = vmatprep.subr.bf16.mxu0 0
      %1136 = vmatpush2.bf16.msra.mxu0 %v1057
      %1137 = vmatprep.subr.bf16.mxu0 0
      %1138 = vmatpush2.bf16.msra.mxu0 %v1056
      %1139 = vmatprep.subr.bf16.mxu0 0
      %1140 = vmatpush2.bf16.msra.mxu0 %v1055
      %1141 = vmatprep.subr.bf16.mxu0 0
      %1142 = vmatpush2.bf16.msra.mxu0 %v1054
      %1143 = vmatprep.subr.bf16.mxu0 0
      %1144 = vmatpush2.bf16.msra.mxu0 %v1053
      %1145 = vmatprep.subr.bf16.mxu0 0
      %1146 = vmatpush2.bf16.msra.mxu0 %v1052
      %1147 = vmatprep.subr.bf16.mxu0 0
      %1148 = vmatpush2.bf16.msra.mxu0 %v1051
      %1149 = vmatprep.subr.bf16.mxu0 0
      %1150 = vmatpush2.bf16.msra.mxu0 %v1050
      %1151 = vmatprep.mubr.bf16.mxu0 %v837
      %1152 = vmatmul.mubr.bf16.gmra.mxu0 %v836
      %v1153 = vpop.f32.mrf.mxu0
      %v1154 = vadd.f32 0.0, %v1153
      %v1155 = vpop.f32.mrf.mxu0
      %v1156 = vpop.f32.mrf.mxu0
      %v1157 = vpop.f32.mrf.mxu0
      %1158 = vdwg.mxu0
      %1159 = vmatprep.subr.bf16.mxu0 0
      %1160 = vmatpush1.bf16.msra.mxu0 %v1065
      %1161 = vmatprep.subr.bf16.mxu0 0
      %1162 = vmatpush1.bf16.msra.mxu0 %v1064
      %1163 = vmatprep.subr.bf16.mxu0 0
      %1164 = vmatpush1.bf16.msra.mxu0 %v1063
      %1165 = vmatprep.subr.bf16.mxu0 0
      %1166 = vmatpush1.bf16.msra.mxu0 %v1062
      %1167 = vmatprep.subr.bf16.mxu0 0
      %1168 = vmatpush1.bf16.msra.mxu0 %v1061
      %1169 = vmatprep.subr.bf16.mxu0 0
      %1170 = vmatpush1.bf16.msra.mxu0 %v1060
      %1171 = vmatprep.subr.bf16.mxu0 0
      %1172 = vmatpush1.bf16.msra.mxu0 %v1059
      %1173 = vmatprep.subr.bf16.mxu0 0
      %1174 = vmatpush1.bf16.msra.mxu0 %v1058
      %1175 = vmatprep.subr.bf16.mxu0 0
      %1176 = vmatpush2.bf16.msra.mxu0 %v1073
      %1177 = vmatprep.subr.bf16.mxu0 0
      %1178 = vmatpush2.bf16.msra.mxu0 %v1072
      %1179 = vmatprep.subr.bf16.mxu0 0
      %1180 = vmatpush2.bf16.msra.mxu0 %v1071
      %1181 = vmatprep.subr.bf16.mxu0 0
      %1182 = vmatpush2.bf16.msra.mxu0 %v1070
      %1183 = vmatprep.subr.bf16.mxu0 0
      %1184 = vmatpush2.bf16.msra.mxu0 %v1069
      %1185 = vmatprep.subr.bf16.mxu0 0
      %1186 = vmatpush2.bf16.msra.mxu0 %v1068
      %1187 = vmatprep.subr.bf16.mxu0 0
      %1188 = vmatpush2.bf16.msra.mxu0 %v1067
      %1189 = vmatprep.subr.bf16.mxu0 0
      %1190 = vmatpush2.bf16.msra.mxu0 %v1066
      %1191 = vmatprep.mubr.bf16.mxu0 %v839
      %1192 = vmatmul.mubr.bf16.gmra.mxu0 %v838
      %v1193 = vpop.f32.mrf.mxu0
      %v1194 = vadd.f32 %v1154, %v1193
      %v1195 = vpop.f32.mrf.mxu0
      %v1196 = vpop.f32.mrf.mxu0
      %v1197 = vpop.f32.mrf.mxu0
      %1198 = vdwg.mxu0
      %1199 = vmatprep.subr.bf16.mxu0 0
      %1200 = vmatpush1.bf16.msra.mxu0 0
      %1201 = vmatprep.subr.bf16.mxu0 0
      %1202 = vmatpush1.bf16.msra.mxu0 0
      %1203 = vmatprep.subr.bf16.mxu0 0
      %1204 = vmatpush1.bf16.msra.mxu0 0
      %1205 = vmatprep.subr.bf16.mxu0 0
      %1206 = vmatpush1.bf16.msra.mxu0 0
      %1207 = vmatprep.subr.bf16.mxu0 0
      %1208 = vmatpush1.bf16.msra.mxu0 0
      %1209 = vmatprep.subr.bf16.mxu0 0
      %1210 = vmatpush1.bf16.msra.mxu0 0
      %1211 = vmatprep.subr.bf16.mxu0 0
      %1212 = vmatpush1.bf16.msra.mxu0 %v1117
      %1213 = vmatprep.subr.bf16.mxu0 0
      %1214 = vmatpush1.bf16.msra.mxu0 %v1074
      %1215 = vmatprep.subr.bf16.mxu0 0
      %1216 = vmatpush2.bf16.msra.mxu0 0
      %1217 = vmatprep.subr.bf16.mxu0 0
      %1218 = vmatpush2.bf16.msra.mxu0 0
      %1219 = vmatprep.subr.bf16.mxu0 0
      %1220 = vmatpush2.bf16.msra.mxu0 0
      %1221 = vmatprep.subr.bf16.mxu0 0
      %1222 = vmatpush2.bf16.msra.mxu0 0
      %1223 = vmatprep.subr.bf16.mxu0 0
      %1224 = vmatpush2.bf16.msra.mxu0 0
      %1225 = vmatprep.subr.bf16.mxu0 0
      %1226 = vmatpush2.bf16.msra.mxu0 0
      %1227 = vmatprep.subr.bf16.mxu0 0
      %1228 = vmatpush2.bf16.msra.mxu0 0
      %1229 = vmatprep.subr.bf16.mxu0 0
      %1230 = vmatpush2.bf16.msra.mxu0 0
      %1231 = vmatprep.mubr.bf16.mxu0 0
      %1232 = vmatmul.mubr.bf16.gmra.mxu0 %v1111
      %v1233 = vpop.f32.mrf.mxu0
      %v1234 = vadd.f32 %v1194, %v1233
      %v1235 = vpop.f32.mrf.mxu0
      %v1236 = vpop.f32.mrf.mxu0
      %v1237 = vpop.f32.mrf.mxu0
      %1238 = vdwg.mxu0
      %v1239 = vld [vmem:[%s4] sm:$0xf]
      %v1240 = vld [vmem:[%s4 + $0x4] sm:$0xf]
      %v1241 = vpack.c.bf16 %v1234, %v1234
      %s1242 = scalar_lea.vmem %s3, 268
      %v1243 = vld [vmem:[%s1242] sm:$0xf]
      %v1244 = vld [vmem:[%s1242 + $0x4] sm:$0xf]
      %v1245 = vld [vmem:[%s1242 + $0x8] sm:$0xf]
      %v1246 = vld [vmem:[%s1242 + $0xc] sm:$0xf]
      %v1247 = vld [vmem:[%s1242 + $0x10] sm:$0xf]
      %v1248 = vld [vmem:[%s1242 + $0x14] sm:$0xf]
      %v1249 = vld [vmem:[%s1242 + $0x18] sm:$0xf]
      %v1250 = vld [vmem:[%s1242 + $0x1c] sm:$0xf]
      %v1251 = vld [vmem:[%s1242 + $0x20] sm:$0xf]
      %v1252 = vld [vmem:[%s1242 + $0x24] sm:$0xf]
      %v1253 = vld [vmem:[%s1242 + $0x28] sm:$0xf]
      %v1254 = vld [vmem:[%s1242 + $0x2c] sm:$0xf]
      %v1255 = vld [vmem:[%s1242 + $0x30] sm:$0xf]
      %v1256 = vld [vmem:[%s1242 + $0x34] sm:$0xf]
      %v1257 = vld [vmem:[%s1242 + $0x38] sm:$0xf]
      %v1258 = vld [vmem:[%s1242 + $0x3c] sm:$0xf]
      %v1259 = vld [vmem:[%s1242 + $0x40] sm:$0xf]
      %v1260 = vld [vmem:[%s1242 + $0x44] sm:$0xf]
      %v1261 = vld [vmem:[%s1242 + $0x48] sm:$0xf]
      %v1262 = vld [vmem:[%s1242 + $0x4c] sm:$0xf]
      %v1263 = vld [vmem:[%s1242 + $0x50] sm:$0xf]
      %v1264 = vld [vmem:[%s1242 + $0x54] sm:$0xf]
      %v1265 = vld [vmem:[%s1242 + $0x58] sm:$0xf]
      %v1266 = vld [vmem:[%s1242 + $0x5c] sm:$0xf]
      %v1267 = vld [vmem:[%s1242 + $0x60] sm:$0xf]
      %v1268 = vld [vmem:[%s1242 + $0x64] sm:$0xf]
      %v1269 = vld [vmem:[%s1242 + $0x68] sm:$0xf]
      %v1270 = vld [vmem:[%s1242 + $0x6c] sm:$0xf]
      %v1271 = vld [vmem:[%s1242 + $0x70] sm:$0xf]
      %v1272 = vld [vmem:[%s1242 + $0x74] sm:$0xf]
      %v1273 = vld [vmem:[%s1242 + $0x78] sm:$0xf]
      %v1274 = vld [vmem:[%s1242 + $0x7c] sm:$0xf]
      %v1275 = vld [vmem:[%s1242 + $0x80] sm:$0xf]
      %v1276 = vld [vmem:[%s1242 + $0x84] sm:$0xf]
      %v1277 = vld [vmem:[%s1242 + $0x88] sm:$0xf]
      %v1278 = vld [vmem:[%s1242 + $0x8c] sm:$0xf]
      %v1279 = vld [vmem:[%s1242 + $0x90] sm:$0xf]
      %v1280 = vld [vmem:[%s1242 + $0x94] sm:$0xf]
      %v1281 = vld [vmem:[%s1242 + $0x98] sm:$0xf]
      %v1282 = vld [vmem:[%s1242 + $0x9c] sm:$0xf]
      %v1283 = vld [vmem:[%s1242 + $0xa0] sm:$0xf]
      %v1284 = vld [vmem:[%s1242 + $0xa4] sm:$0xf]
      %v1285 = vld [vmem:[%s1242 + $0xa8] sm:$0xf]
      %v1286 = vld [vmem:[%s1242 + $0xac] sm:$0xf]
      %v1287 = vld [vmem:[%s1242 + $0xb0] sm:$0xf]
      %v1288 = vld [vmem:[%s1242 + $0xb4] sm:$0xf]
      %v1289 = vld [vmem:[%s1242 + $0xb8] sm:$0xf]
      %v1290 = vld [vmem:[%s1242 + $0xbc] sm:$0xf]
      %v1291 = vld [vmem:[%s1242 + $0xc0] sm:$0xf]
      %v1292 = vld [vmem:[%s1242 + $0xc4] sm:$0xf]
      %v1293 = vld [vmem:[%s1242 + $0xc8] sm:$0xf]
      %v1294 = vld [vmem:[%s1242 + $0xcc] sm:$0xf]
      %v1295 = vld [vmem:[%s1242 + $0xd0] sm:$0xf]
      %v1296 = vld [vmem:[%s1242 + $0xd4] sm:$0xf]
      %v1297 = vld [vmem:[%s1242 + $0xd8] sm:$0xf]
      %v1298 = vld [vmem:[%s1242 + $0xdc] sm:$0xf]
      %v1299 = vld [vmem:[%s1242 + $0xe0] sm:$0xf]
      %v1300 = vld [vmem:[%s1242 + $0xe4] sm:$0xf]
      %v1301 = vld [vmem:[%s1242 + $0xe8] sm:$0xf]
      %v1302 = vld [vmem:[%s1242 + $0xec] sm:$0xf]
      %v1303 = vld [vmem:[%s1242 + $0xf0] sm:$0xf]
      %v1304 = vld [vmem:[%s1242 + $0xf4] sm:$0xf]
      %v1305 = vld [vmem:[%s1242 + $0xf8] sm:$0xf]
      %v1306 = vld [vmem:[%s1242 + $0xfc] sm:$0xf]
      %v1307 = vld [vmem:[%s1242 + $0x100] sm:$0xf]
      %v1308 = vld [vmem:[%s1242 + $0x104] sm:$0xf]
      %v1309 = vld [vmem:[%s1242 + $0x108] sm:$0x1]
      %v1377 = vunpack.c.l.b16 %v1243
      %v1378 = vunpack.c.l.b16 %v1244
      %v1379 = vunpack.c.l.b16 %v1245
      %v1380 = vunpack.c.l.b16 %v1246
      %v1381 = vunpack.c.l.b16 %v1247
      %v1382 = vunpack.c.l.b16 %v1248
      %v1383 = vunpack.c.l.b16 %v1249
      %v1384 = vunpack.c.l.b16 %v1250
      %v1385 = vunpack.c.l.b16 %v1251
      %v1386 = vunpack.c.l.b16 %v1252
      %v1387 = vunpack.c.l.b16 %v1253
      %v1388 = vunpack.c.l.b16 %v1254
      %v1389 = vunpack.c.l.b16 %v1255
      %v1390 = vunpack.c.l.b16 %v1256
      %v1391 = vunpack.c.l.b16 %v1257
      %v1392 = vunpack.c.l.b16 %v1258
      %v1393 = vunpack.c.l.b16 %v1259
      %v1394 = vunpack.c.l.b16 %v1260
      %v1395 = vunpack.c.l.b16 %v1261
      %v1396 = vunpack.c.l.b16 %v1262
      %v1397 = vunpack.c.l.b16 %v1263
      %v1398 = vunpack.c.l.b16 %v1264
      %v1399 = vunpack.c.l.b16 %v1265
      %v1400 = vunpack.c.l.b16 %v1266
      %v1401 = vunpack.c.l.b16 %v1267
      %v1402 = vunpack.c.l.b16 %v1268
      %v1403 = vunpack.c.l.b16 %v1269
      %v1404 = vunpack.c.l.b16 %v1270
      %v1405 = vunpack.c.l.b16 %v1271
      %v1406 = vunpack.c.l.b16 %v1272
      %v1407 = vunpack.c.l.b16 %v1273
      %v1408 = vunpack.c.l.b16 %v1274
      %v1409 = vunpack.c.l.b16 %v1275
      %v1410 = vunpack.c.l.b16 %v1276
      %v1411 = vunpack.c.l.b16 %v1277
      %v1412 = vunpack.c.l.b16 %v1278
      %v1413 = vunpack.c.l.b16 %v1279
      %v1414 = vunpack.c.l.b16 %v1280
      %v1415 = vunpack.c.l.b16 %v1281
      %v1416 = vunpack.c.l.b16 %v1282
      %v1417 = vunpack.c.l.b16 %v1283
      %v1418 = vunpack.c.l.b16 %v1284
      %v1419 = vunpack.c.l.b16 %v1285
      %v1420 = vunpack.c.l.b16 %v1286
      %v1421 = vunpack.c.l.b16 %v1287
      %v1422 = vunpack.c.l.b16 %v1288
      %v1423 = vunpack.c.l.b16 %v1289
      %v1424 = vunpack.c.l.b16 %v1290
      %v1425 = vunpack.c.l.b16 %v1291
      %v1426 = vunpack.c.l.b16 %v1292
      %v1427 = vunpack.c.l.b16 %v1293
      %v1428 = vunpack.c.l.b16 %v1294
      %v1429 = vunpack.c.l.b16 %v1295
      %v1430 = vunpack.c.l.b16 %v1296
      %v1431 = vunpack.c.l.b16 %v1297
      %v1432 = vunpack.c.l.b16 %v1298
      %v1433 = vunpack.c.l.b16 %v1299
      %v1434 = vunpack.c.l.b16 %v1300
      %v1435 = vunpack.c.l.b16 %v1301
      %v1436 = vunpack.c.l.b16 %v1302
      %v1437 = vunpack.c.l.b16 %v1303
      %v1438 = vunpack.c.l.b16 %v1304
      %v1439 = vunpack.c.l.b16 %v1305
      %v1440 = vunpack.c.l.b16 %v1306
      %v1441 = vunpack.c.l.b16 %v1307
      %v1442 = vunpack.c.l.b16 %v1308
      %v1443 = vunpack.c.l.b16 %v1309
      %v1444 = vpack.c.b16 %v1378, %v1377
      %v1445 = vpack.c.b16 %v1380, %v1379
      %v1446 = vpack.c.b16 %v1382, %v1381
      %v1447 = vpack.c.b16 %v1384, %v1383
      %v1448 = vpack.c.b16 %v1386, %v1385
      %v1449 = vpack.c.b16 %v1388, %v1387
      %v1450 = vpack.c.b16 %v1390, %v1389
      %v1451 = vpack.c.b16 %v1392, %v1391
      %v1452 = vpack.c.b16 %v1394, %v1393
      %v1453 = vpack.c.b16 %v1396, %v1395
      %v1454 = vpack.c.b16 %v1398, %v1397
      %v1455 = vpack.c.b16 %v1400, %v1399
      %v1456 = vpack.c.b16 %v1402, %v1401
      %v1457 = vpack.c.b16 %v1404, %v1403
      %v1458 = vpack.c.b16 %v1406, %v1405
      %v1459 = vpack.c.b16 %v1408, %v1407
      %v1460 = vpack.c.b16 %v1410, %v1409
      %v1461 = vpack.c.b16 %v1412, %v1411
      %v1462 = vpack.c.b16 %v1414, %v1413
      %v1463 = vpack.c.b16 %v1416, %v1415
      %v1464 = vpack.c.b16 %v1418, %v1417
      %v1465 = vpack.c.b16 %v1420, %v1419
      %v1466 = vpack.c.b16 %v1422, %v1421
      %v1467 = vpack.c.b16 %v1424, %v1423
      %v1468 = vpack.c.b16 %v1426, %v1425
      %v1469 = vpack.c.b16 %v1428, %v1427
      %v1470 = vpack.c.b16 %v1430, %v1429
      %v1471 = vpack.c.b16 %v1432, %v1431
      %v1472 = vpack.c.b16 %v1434, %v1433
      %v1473 = vpack.c.b16 %v1436, %v1435
      %v1474 = vpack.c.b16 %v1438, %v1437
      %v1475 = vpack.c.b16 %v1440, %v1439
      %v1476 = vpack.c.b16 %v1442, %v1441
      %v1477 = vpack.c.b16 %v1443, %v1443
      %v1512 = vand.u32 %v1477, %v1115
      %1514 = vmatprep.subr.bf16.mxu0 0
      %1515 = vmatpush1.bf16.msra.mxu0 %v1451
      %1516 = vmatprep.subr.bf16.mxu0 0
      %1517 = vmatpush1.bf16.msra.mxu0 %v1450
      %1518 = vmatprep.subr.bf16.mxu0 0
      %1519 = vmatpush1.bf16.msra.mxu0 %v1449
      %1520 = vmatprep.subr.bf16.mxu0 0
      %1521 = vmatpush1.bf16.msra.mxu0 %v1448
      %1522 = vmatprep.subr.bf16.mxu0 0
      %1523 = vmatpush1.bf16.msra.mxu0 %v1447
      %1524 = vmatprep.subr.bf16.mxu0 0
      %1525 = vmatpush1.bf16.msra.mxu0 %v1446
      %1526 = vmatprep.subr.bf16.mxu0 0
      %1527 = vmatpush1.bf16.msra.mxu0 %v1445
      %1528 = vmatprep.subr.bf16.mxu0 0
      %1529 = vmatpush1.bf16.msra.mxu0 %v1444
      %1530 = vmatprep.subr.bf16.mxu0 0
      %1531 = vmatpush2.bf16.msra.mxu0 %v1459
      %1532 = vmatprep.subr.bf16.mxu0 0
      %1533 = vmatpush2.bf16.msra.mxu0 %v1458
      %1534 = vmatprep.subr.bf16.mxu0 0
      %1535 = vmatpush2.bf16.msra.mxu0 %v1457
      %1536 = vmatprep.subr.bf16.mxu0 0
      %1537 = vmatpush2.bf16.msra.mxu0 %v1456
      %1538 = vmatprep.subr.bf16.mxu0 0
      %1539 = vmatpush2.bf16.msra.mxu0 %v1455
      %1540 = vmatprep.subr.bf16.mxu0 0
      %1541 = vmatpush2.bf16.msra.mxu0 %v1454
      %1542 = vmatprep.subr.bf16.mxu0 0
      %1543 = vmatpush2.bf16.msra.mxu0 %v1453
      %1544 = vmatprep.subr.bf16.mxu0 0
      %1545 = vmatpush2.bf16.msra.mxu0 %v1452
      %1546 = vmatprep.mubr.bf16.mxu0 %v837
      %1547 = vmatmul.mubr.bf16.gmra.mxu0 %v836
      %v1548 = vpop.f32.mrf.mxu0
      %v1549 = vadd.f32 0.0, %v1548
      %v1550 = vpop.f32.mrf.mxu0
      %v1551 = vpop.f32.mrf.mxu0
      %v1552 = vpop.f32.mrf.mxu0
      %1553 = vdwg.mxu0
      %1554 = vmatprep.subr.bf16.mxu0 0
      %1555 = vmatpush1.bf16.msra.mxu0 %v1467
      %1556 = vmatprep.subr.bf16.mxu0 0
      %1557 = vmatpush1.bf16.msra.mxu0 %v1466
      %1558 = vmatprep.subr.bf16.mxu0 0
      %1559 = vmatpush1.bf16.msra.mxu0 %v1465
      %1560 = vmatprep.subr.bf16.mxu0 0
      %1561 = vmatpush1.bf16.msra.mxu0 %v1464
      %1562 = vmatprep.subr.bf16.mxu0 0
      %1563 = vmatpush1.bf16.msra.mxu0 %v1463
      %1564 = vmatprep.subr.bf16.mxu0 0
      %1565 = vmatpush1.bf16.msra.mxu0 %v1462
      %1566 = vmatprep.subr.bf16.mxu0 0
      %1567 = vmatpush1.bf16.msra.mxu0 %v1461
      %1568 = vmatprep.subr.bf16.mxu0 0
      %1569 = vmatpush1.bf16.msra.mxu0 %v1460
      %1570 = vmatprep.subr.bf16.mxu0 0
      %1571 = vmatpush2.bf16.msra.mxu0 %v1475
      %1572 = vmatprep.subr.bf16.mxu0 0
      %1573 = vmatpush2.bf16.msra.mxu0 %v1474
      %1574 = vmatprep.subr.bf16.mxu0 0
      %1575 = vmatpush2.bf16.msra.mxu0 %v1473
      %1576 = vmatprep.subr.bf16.mxu0 0
      %1577 = vmatpush2.bf16.msra.mxu0 %v1472
      %1578 = vmatprep.subr.bf16.mxu0 0
      %1579 = vmatpush2.bf16.msra.mxu0 %v1471
      %1580 = vmatprep.subr.bf16.mxu0 0
      %1581 = vmatpush2.bf16.msra.mxu0 %v1470
      %1582 = vmatprep.subr.bf16.mxu0 0
      %1583 = vmatpush2.bf16.msra.mxu0 %v1469
      %1584 = vmatprep.subr.bf16.mxu0 0
      %1585 = vmatpush2.bf16.msra.mxu0 %v1468
      %1586 = vmatprep.mubr.bf16.mxu0 %v839
      %1587 = vmatmul.mubr.bf16.gmra.mxu0 %v838
      %v1588 = vpop.f32.mrf.mxu0
      %v1589 = vadd.f32 %v1549, %v1588
      %v1590 = vpop.f32.mrf.mxu0
      %v1591 = vpop.f32.mrf.mxu0
      %v1592 = vpop.f32.mrf.mxu0
      %1593 = vdwg.mxu0
      %1594 = vmatprep.subr.bf16.mxu0 0
      %1595 = vmatpush1.bf16.msra.mxu0 0
      %1596 = vmatprep.subr.bf16.mxu0 0
      %1597 = vmatpush1.bf16.msra.mxu0 0
      %1598 = vmatprep.subr.bf16.mxu0 0
      %1599 = vmatpush1.bf16.msra.mxu0 0
      %1600 = vmatprep.subr.bf16.mxu0 0
      %1601 = vmatpush1.bf16.msra.mxu0 0
      %1602 = vmatprep.subr.bf16.mxu0 0
      %1603 = vmatpush1.bf16.msra.mxu0 0
      %1604 = vmatprep.subr.bf16.mxu0 0
      %1605 = vmatpush1.bf16.msra.mxu0 0
      %1606 = vmatprep.subr.bf16.mxu0 0
      %1607 = vmatpush1.bf16.msra.mxu0 %v1512
      %1608 = vmatprep.subr.bf16.mxu0 0
      %1609 = vmatpush1.bf16.msra.mxu0 %v1476
      %1610 = vmatprep.subr.bf16.mxu0 0
      %1611 = vmatpush2.bf16.msra.mxu0 0
      %1612 = vmatprep.subr.bf16.mxu0 0
      %1613 = vmatpush2.bf16.msra.mxu0 0
      %1614 = vmatprep.subr.bf16.mxu0 0
      %1615 = vmatpush2.bf16.msra.mxu0 0
      %1616 = vmatprep.subr.bf16.mxu0 0
      %1617 = vmatpush2.bf16.msra.mxu0 0
      %1618 = vmatprep.subr.bf16.mxu0 0
      %1619 = vmatpush2.bf16.msra.mxu0 0
      %1620 = vmatprep.subr.bf16.mxu0 0
      %1621 = vmatpush2.bf16.msra.mxu0 0
      %1622 = vmatprep.subr.bf16.mxu0 0
      %1623 = vmatpush2.bf16.msra.mxu0 0
      %1624 = vmatprep.subr.bf16.mxu0 0
      %1625 = vmatpush2.bf16.msra.mxu0 0
      %1626 = vmatprep.mubr.bf16.mxu0 0
      %1627 = vmatmul.mubr.bf16.gmra.mxu0 %v1111
      %v1628 = vpop.f32.mrf.mxu0
      %v1629 = vadd.f32 %v1589, %v1628
      %v1630 = vpop.f32.mrf.mxu0
      %v1631 = vpop.f32.mrf.mxu0
      %v1632 = vpop.f32.mrf.mxu0
      %1633 = vdwg.mxu0
      %s1634 = scalar_lea.vmem %s4, 8
      %v1635 = vld [vmem:[%s1634] sm:$0xf]
      %v1636 = vld [vmem:[%s1634 + $0x4] sm:$0xf]
      %v1637 = vpack.c.bf16 %v1629, %v1629
      %v1640 = vunpack.c.l.b16 %v1635
      %v1641 = vunpack.c.l.b16 %v1636
      %v1642 = vpack.c.b16 %v1641, %v1640
      %vm1643 = vcmask 64512
      %v1645 = vsel %vm1643, %v1642, 0
      %vm1647 = vcmask 1043456
      %v1649 = vsel %vm1647, %v1637, 0
      %1651 = vmatprep.subr.bf16.mxu0 0
      %1652 = vmatpush1.bf16.msra.mxu0 0
      %1653 = vmatprep.subr.bf16.mxu0 0
      %1654 = vmatpush1.bf16.msra.mxu0 0
      %1655 = vmatprep.subr.bf16.mxu0 0
      %1656 = vmatpush1.bf16.msra.mxu0 0
      %1657 = vmatprep.subr.bf16.mxu0 0
      %1658 = vmatpush1.bf16.msra.mxu0 0
      %1659 = vmatprep.subr.bf16.mxu0 0
      %1660 = vmatpush1.bf16.msra.mxu0 0
      %1661 = vmatprep.subr.bf16.mxu0 0
      %1662 = vmatpush1.bf16.msra.mxu0 0
      %1663 = vmatprep.subr.bf16.mxu0 0
      %1664 = vmatpush1.bf16.msra.mxu0 0
      %1665 = vmatprep.subr.bf16.mxu0 0
      %1666 = vmatpush1.bf16.msra.mxu0 %v1649
      %1667 = vmatprep.subr.bf16.mxu0 0
      %1668 = vmatpush2.bf16.msra.mxu0 0
      %1669 = vmatprep.subr.bf16.mxu0 0
      %1670 = vmatpush2.bf16.msra.mxu0 0
      %1671 = vmatprep.subr.bf16.mxu0 0
      %1672 = vmatpush2.bf16.msra.mxu0 0
      %1673 = vmatprep.subr.bf16.mxu0 0
      %1674 = vmatpush2.bf16.msra.mxu0 0
      %1675 = vmatprep.subr.bf16.mxu0 0
      %1676 = vmatpush2.bf16.msra.mxu0 0
      %1677 = vmatprep.subr.bf16.mxu0 0
      %1678 = vmatpush2.bf16.msra.mxu0 0
      %1679 = vmatprep.subr.bf16.mxu0 0
      %1680 = vmatpush2.bf16.msra.mxu0 0
      %1681 = vmatprep.subr.bf16.mxu0 0
      %1682 = vmatpush2.bf16.msra.mxu0 0
      %1683 = vmatprep.mubr.bf16.mxu0 0
      %1684 = vmatmul.mubr.bf16.gmra.mxu0 %v1645
      %v1685 = vpop.f32.mrf.mxu0
      %v1686 = vadd.f32 0.0, %v1685
      %v1687 = vpop.f32.mrf.mxu0
      %v1688 = vpop.f32.mrf.mxu0
      %v1689 = vadd.f32 0.0, %v1688
      %v1690 = vpop.f32.mrf.mxu0
      %1691 = vdwg.mxu0
      %v1694 = vunpack.c.l.b16 %v1239
      %v1695 = vunpack.c.l.b16 %v1240
      %v1696 = vpack.c.b16 %v1695, %v1694
      %v1698 = vsel %vm1643, %v1696, 0
      %v1701 = vsel %vm1647, %v1241, 0
      %1703 = vmatprep.subr.bf16.mxu0 0
      %1704 = vmatpush1.bf16.msra.mxu0 0
      %1705 = vmatprep.subr.bf16.mxu0 0
      %1706 = vmatpush1.bf16.msra.mxu0 0
      %1707 = vmatprep.subr.bf16.mxu0 0
      %1708 = vmatpush1.bf16.msra.mxu0 0
      %1709 = vmatprep.subr.bf16.mxu0 0
      %1710 = vmatpush1.bf16.msra.mxu0 0
      %1711 = vmatprep.subr.bf16.mxu0 0
      %1712 = vmatpush1.bf16.msra.mxu0 0
      %1713 = vmatprep.subr.bf16.mxu0 0
      %1714 = vmatpush1.bf16.msra.mxu0 0
      %1715 = vmatprep.subr.bf16.mxu0 0
      %1716 = vmatpush1.bf16.msra.mxu0 0
      %1717 = vmatprep.subr.bf16.mxu0 0
      %1718 = vmatpush1.bf16.msra.mxu0 %v1701
      %1719 = vmatprep.subr.bf16.mxu0 0
      %1720 = vmatpush2.bf16.msra.mxu0 0
      %1721 = vmatprep.subr.bf16.mxu0 0
      %1722 = vmatpush2.bf16.msra.mxu0 0
      %1723 = vmatprep.subr.bf16.mxu0 0
      %1724 = vmatpush2.bf16.msra.mxu0 0
      %1725 = vmatprep.subr.bf16.mxu0 0
      %1726 = vmatpush2.bf16.msra.mxu0 0
      %1727 = vmatprep.subr.bf16.mxu0 0
      %1728 = vmatpush2.bf16.msra.mxu0 0
      %1729 = vmatprep.subr.bf16.mxu0 0
      %1730 = vmatpush2.bf16.msra.mxu0 0
      %1731 = vmatprep.subr.bf16.mxu0 0
      %1732 = vmatpush2.bf16.msra.mxu0 0
      %1733 = vmatprep.subr.bf16.mxu0 0
      %1734 = vmatpush2.bf16.msra.mxu0 0
      %1735 = vmatprep.mubr.bf16.mxu0 0
      %1736 = vmatmul.mubr.bf16.gmra.mxu0 %v1698
      %v1737 = vpop.f32.mrf.mxu0
      %v1738 = vadd.f32 %v1686, %v1737
      %v1739 = vpop.f32.mrf.mxu0
      %v1740 = vpop.f32.mrf.mxu0
      %v1741 = vadd.f32 %v1689, %v1740
      %v1742 = vpop.f32.mrf.mxu0
      %1743 = vdwg.mxu0
      %s1744 = scalar_lea.vmem %s3, 536
      %v1745 = vld [vmem:[%s1744] sm:$0xf]
      %v1746 = vld [vmem:[%s1744 + $0x4] sm:$0xf]
      %v1747 = vld [vmem:[%s1744 + $0x8] sm:$0xf]
      %v1748 = vld [vmem:[%s1744 + $0xc] sm:$0xf]
      %v1749 = vld [vmem:[%s1744 + $0x10] sm:$0xf]
      %v1750 = vld [vmem:[%s1744 + $0x14] sm:$0xf]
      %v1751 = vld [vmem:[%s1744 + $0x18] sm:$0xf]
      %v1752 = vld [vmem:[%s1744 + $0x1c] sm:$0xf]
      %v1753 = vld [vmem:[%s1744 + $0x20] sm:$0xf]
      %v1754 = vld [vmem:[%s1744 + $0x24] sm:$0xf]
      %v1755 = vld [vmem:[%s1744 + $0x28] sm:$0xf]
      %v1756 = vld [vmem:[%s1744 + $0x2c] sm:$0xf]
      %v1757 = vld [vmem:[%s1744 + $0x30] sm:$0xf]
      %v1758 = vld [vmem:[%s1744 + $0x34] sm:$0xf]
      %v1759 = vld [vmem:[%s1744 + $0x38] sm:$0xf]
      %v1760 = vld [vmem:[%s1744 + $0x3c] sm:$0xf]
      %v1761 = vld [vmem:[%s1744 + $0x40] sm:$0xf]
      %v1762 = vld [vmem:[%s1744 + $0x44] sm:$0xf]
      %v1763 = vld [vmem:[%s1744 + $0x48] sm:$0xf]
      %v1764 = vld [vmem:[%s1744 + $0x4c] sm:$0xf]
      %v1765 = vld [vmem:[%s1744 + $0x50] sm:$0xf]
      %v1766 = vld [vmem:[%s1744 + $0x54] sm:$0xf]
      %v1767 = vld [vmem:[%s1744 + $0x58] sm:$0xf]
      %v1768 = vld [vmem:[%s1744 + $0x5c] sm:$0xf]
      %v1769 = vld [vmem:[%s1744 + $0x60] sm:$0xf]
      %v1770 = vld [vmem:[%s1744 + $0x64] sm:$0xf]
      %v1771 = vld [vmem:[%s1744 + $0x68] sm:$0xf]
      %v1772 = vld [vmem:[%s1744 + $0x6c] sm:$0xf]
      %v1773 = vld [vmem:[%s1744 + $0x70] sm:$0xf]
      %v1774 = vld [vmem:[%s1744 + $0x74] sm:$0xf]
      %v1775 = vld [vmem:[%s1744 + $0x78] sm:$0xf]
      %v1776 = vld [vmem:[%s1744 + $0x7c] sm:$0xf]
      %v1777 = vld [vmem:[%s1744 + $0x80] sm:$0xf]
      %v1778 = vld [vmem:[%s1744 + $0x84] sm:$0xf]
      %v1779 = vld [vmem:[%s1744 + $0x88] sm:$0xf]
      %v1780 = vld [vmem:[%s1744 + $0x8c] sm:$0xf]
      %v1781 = vld [vmem:[%s1744 + $0x90] sm:$0xf]
      %v1782 = vld [vmem:[%s1744 + $0x94] sm:$0xf]
      %v1783 = vld [vmem:[%s1744 + $0x98] sm:$0xf]
      %v1784 = vld [vmem:[%s1744 + $0x9c] sm:$0xf]
      %v1785 = vld [vmem:[%s1744 + $0xa0] sm:$0xf]
      %v1786 = vld [vmem:[%s1744 + $0xa4] sm:$0xf]
      %v1787 = vld [vmem:[%s1744 + $0xa8] sm:$0xf]
      %v1788 = vld [vmem:[%s1744 + $0xac] sm:$0xf]
      %v1789 = vld [vmem:[%s1744 + $0xb0] sm:$0xf]
      %v1790 = vld [vmem:[%s1744 + $0xb4] sm:$0xf]
      %v1791 = vld [vmem:[%s1744 + $0xb8] sm:$0xf]
      %v1792 = vld [vmem:[%s1744 + $0xbc] sm:$0xf]
      %v1793 = vld [vmem:[%s1744 + $0xc0] sm:$0xf]
      %v1794 = vld [vmem:[%s1744 + $0xc4] sm:$0xf]
      %v1795 = vld [vmem:[%s1744 + $0xc8] sm:$0xf]
      %v1796 = vld [vmem:[%s1744 + $0xcc] sm:$0xf]
      %v1797 = vld [vmem:[%s1744 + $0xd0] sm:$0xf]
      %v1798 = vld [vmem:[%s1744 + $0xd4] sm:$0xf]
      %v1799 = vld [vmem:[%s1744 + $0xd8] sm:$0xf]
      %v1800 = vld [vmem:[%s1744 + $0xdc] sm:$0xf]
      %v1801 = vld [vmem:[%s1744 + $0xe0] sm:$0xf]
      %v1802 = vld [vmem:[%s1744 + $0xe4] sm:$0xf]
      %v1803 = vld [vmem:[%s1744 + $0xe8] sm:$0xf]
      %v1804 = vld [vmem:[%s1744 + $0xec] sm:$0xf]
      %v1805 = vld [vmem:[%s1744 + $0xf0] sm:$0xf]
      %v1806 = vld [vmem:[%s1744 + $0xf4] sm:$0xf]
      %v1807 = vld [vmem:[%s1744 + $0xf8] sm:$0xf]
      %v1808 = vld [vmem:[%s1744 + $0xfc] sm:$0xf]
      %v1809 = vld [vmem:[%s1744 + $0x100] sm:$0xf]
      %v1810 = vld [vmem:[%s1744 + $0x104] sm:$0xf]
      %v1811 = vld [vmem:[%s1744 + $0x108] sm:$0x1]
      %v1879 = vunpack.c.l.b16 %v1745
      %v1880 = vunpack.c.l.b16 %v1746
      %v1881 = vunpack.c.l.b16 %v1747
      %v1882 = vunpack.c.l.b16 %v1748
      %v1883 = vunpack.c.l.b16 %v1749
      %v1884 = vunpack.c.l.b16 %v1750
      %v1885 = vunpack.c.l.b16 %v1751
      %v1886 = vunpack.c.l.b16 %v1752
      %v1887 = vunpack.c.l.b16 %v1753
      %v1888 = vunpack.c.l.b16 %v1754
      %v1889 = vunpack.c.l.b16 %v1755
      %v1890 = vunpack.c.l.b16 %v1756
      %v1891 = vunpack.c.l.b16 %v1757
      %v1892 = vunpack.c.l.b16 %v1758
      %v1893 = vunpack.c.l.b16 %v1759
      %v1894 = vunpack.c.l.b16 %v1760
      %v1895 = vunpack.c.l.b16 %v1761
      %v1896 = vunpack.c.l.b16 %v1762
      %v1897 = vunpack.c.l.b16 %v1763
      %v1898 = vunpack.c.l.b16 %v1764
      %v1899 = vunpack.c.l.b16 %v1765
      %v1900 = vunpack.c.l.b16 %v1766
      %v1901 = vunpack.c.l.b16 %v1767
      %v1902 = vunpack.c.l.b16 %v1768
      %v1903 = vunpack.c.l.b16 %v1769
      %v1904 = vunpack.c.l.b16 %v1770
      %v1905 = vunpack.c.l.b16 %v1771
      %v1906 = vunpack.c.l.b16 %v1772
      %v1907 = vunpack.c.l.b16 %v1773
      %v1908 = vunpack.c.l.b16 %v1774
      %v1909 = vunpack.c.l.b16 %v1775
      %v1910 = vunpack.c.l.b16 %v1776
      %v1911 = vunpack.c.l.b16 %v1777
      %v1912 = vunpack.c.l.b16 %v1778
      %v1913 = vunpack.c.l.b16 %v1779
      %v1914 = vunpack.c.l.b16 %v1780
      %v1915 = vunpack.c.l.b16 %v1781
      %v1916 = vunpack.c.l.b16 %v1782
      %v1917 = vunpack.c.l.b16 %v1783
      %v1918 = vunpack.c.l.b16 %v1784
      %v1919 = vunpack.c.l.b16 %v1785
      %v1920 = vunpack.c.l.b16 %v1786
      %v1921 = vunpack.c.l.b16 %v1787
      %v1922 = vunpack.c.l.b16 %v1788
      %v1923 = vunpack.c.l.b16 %v1789
      %v1924 = vunpack.c.l.b16 %v1790
      %v1925 = vunpack.c.l.b16 %v1791
      %v1926 = vunpack.c.l.b16 %v1792
      %v1927 = vunpack.c.l.b16 %v1793
      %v1928 = vunpack.c.l.b16 %v1794
      %v1929 = vunpack.c.l.b16 %v1795
      %v1930 = vunpack.c.l.b16 %v1796
      %v1931 = vunpack.c.l.b16 %v1797
      %v1932 = vunpack.c.l.b16 %v1798
      %v1933 = vunpack.c.l.b16 %v1799
      %v1934 = vunpack.c.l.b16 %v1800
      %v1935 = vunpack.c.l.b16 %v1801
      %v1936 = vunpack.c.l.b16 %v1802
      %v1937 = vunpack.c.l.b16 %v1803
      %v1938 = vunpack.c.l.b16 %v1804
      %v1939 = vunpack.c.l.b16 %v1805
      %v1940 = vunpack.c.l.b16 %v1806
      %v1941 = vunpack.c.l.b16 %v1807
      %v1942 = vunpack.c.l.b16 %v1808
      %v1943 = vunpack.c.l.b16 %v1809
      %v1944 = vunpack.c.l.b16 %v1810
      %v1945 = vunpack.c.l.b16 %v1811
      %v1946 = vpack.c.b16 %v1880, %v1879
      %v1947 = vpack.c.b16 %v1882, %v1881
      %v1948 = vpack.c.b16 %v1884, %v1883
      %v1949 = vpack.c.b16 %v1886, %v1885
      %v1950 = vpack.c.b16 %v1888, %v1887
      %v1951 = vpack.c.b16 %v1890, %v1889
      %v1952 = vpack.c.b16 %v1892, %v1891
      %v1953 = vpack.c.b16 %v1894, %v1893
      %v1954 = vpack.c.b16 %v1896, %v1895
      %v1955 = vpack.c.b16 %v1898, %v1897
      %v1956 = vpack.c.b16 %v1900, %v1899
      %v1957 = vpack.c.b16 %v1902, %v1901
      %v1958 = vpack.c.b16 %v1904, %v1903
      %v1959 = vpack.c.b16 %v1906, %v1905
      %v1960 = vpack.c.b16 %v1908, %v1907
      %v1961 = vpack.c.b16 %v1910, %v1909
      %v1962 = vpack.c.b16 %v1912, %v1911
      %v1963 = vpack.c.b16 %v1914, %v1913
      %v1964 = vpack.c.b16 %v1916, %v1915
      %v1965 = vpack.c.b16 %v1918, %v1917
      %v1966 = vpack.c.b16 %v1920, %v1919
      %v1967 = vpack.c.b16 %v1922, %v1921
      %v1968 = vpack.c.b16 %v1924, %v1923
      %v1969 = vpack.c.b16 %v1926, %v1925
      %v1970 = vpack.c.b16 %v1928, %v1927
      %v1971 = vpack.c.b16 %v1930, %v1929
      %v1972 = vpack.c.b16 %v1932, %v1931
      %v1973 = vpack.c.b16 %v1934, %v1933
      %v1974 = vpack.c.b16 %v1936, %v1935
      %v1975 = vpack.c.b16 %v1938, %v1937
      %v1976 = vpack.c.b16 %v1940, %v1939
      %v1977 = vpack.c.b16 %v1942, %v1941
      %v1978 = vpack.c.b16 %v1944, %v1943
      %v1979 = vpack.c.b16 %v1945, %v1945
      %v2014 = vand.u32 %v1979, %v1115
      %2016 = vmatprep.subr.bf16.mxu0 0
      %2017 = vmatpush1.bf16.msra.mxu0 %v1953
      %2018 = vmatprep.subr.bf16.mxu0 0
      %2019 = vmatpush1.bf16.msra.mxu0 %v1952
      %2020 = vmatprep.subr.bf16.mxu0 0
      %2021 = vmatpush1.bf16.msra.mxu0 %v1951
      %2022 = vmatprep.subr.bf16.mxu0 0
      %2023 = vmatpush1.bf16.msra.mxu0 %v1950
      %2024 = vmatprep.subr.bf16.mxu0 0
      %2025 = vmatpush1.bf16.msra.mxu0 %v1949
      %2026 = vmatprep.subr.bf16.mxu0 0
      %2027 = vmatpush1.bf16.msra.mxu0 %v1948
      %2028 = vmatprep.subr.bf16.mxu0 0
      %2029 = vmatpush1.bf16.msra.mxu0 %v1947
      %2030 = vmatprep.subr.bf16.mxu0 0
      %2031 = vmatpush1.bf16.msra.mxu0 %v1946
      %2032 = vmatprep.subr.bf16.mxu0 0
      %2033 = vmatpush2.bf16.msra.mxu0 %v1961
      %2034 = vmatprep.subr.bf16.mxu0 0
      %2035 = vmatpush2.bf16.msra.mxu0 %v1960
      %2036 = vmatprep.subr.bf16.mxu0 0
      %2037 = vmatpush2.bf16.msra.mxu0 %v1959
      %2038 = vmatprep.subr.bf16.mxu0 0
      %2039 = vmatpush2.bf16.msra.mxu0 %v1958
      %2040 = vmatprep.subr.bf16.mxu0 0
      %2041 = vmatpush2.bf16.msra.mxu0 %v1957
      %2042 = vmatprep.subr.bf16.mxu0 0
      %2043 = vmatpush2.bf16.msra.mxu0 %v1956
      %2044 = vmatprep.subr.bf16.mxu0 0
      %2045 = vmatpush2.bf16.msra.mxu0 %v1955
      %2046 = vmatprep.subr.bf16.mxu0 0
      %2047 = vmatpush2.bf16.msra.mxu0 %v1954
      %2048 = vmatprep.mubr.bf16.mxu0 %v837
      %2049 = vmatmul.mubr.bf16.gmra.mxu0 %v836
      %v2050 = vpop.f32.mrf.mxu0
      %v2051 = vadd.f32 0.0, %v2050
      %v2052 = vpop.f32.mrf.mxu0
      %v2053 = vpop.f32.mrf.mxu0
      %v2054 = vpop.f32.mrf.mxu0
      %2055 = vdwg.mxu0
      %2056 = vmatprep.subr.bf16.mxu0 0
      %2057 = vmatpush1.bf16.msra.mxu0 %v1969
      %2058 = vmatprep.subr.bf16.mxu0 0
      %2059 = vmatpush1.bf16.msra.mxu0 %v1968
      %2060 = vmatprep.subr.bf16.mxu0 0
      %2061 = vmatpush1.bf16.msra.mxu0 %v1967
      %2062 = vmatprep.subr.bf16.mxu0 0
      %2063 = vmatpush1.bf16.msra.mxu0 %v1966
      %2064 = vmatprep.subr.bf16.mxu0 0
      %2065 = vmatpush1.bf16.msra.mxu0 %v1965
      %2066 = vmatprep.subr.bf16.mxu0 0
      %2067 = vmatpush1.bf16.msra.mxu0 %v1964
      %2068 = vmatprep.subr.bf16.mxu0 0
      %2069 = vmatpush1.bf16.msra.mxu0 %v1963
      %2070 = vmatprep.subr.bf16.mxu0 0
      %2071 = vmatpush1.bf16.msra.mxu0 %v1962
      %2072 = vmatprep.subr.bf16.mxu0 0
      %2073 = vmatpush2.bf16.msra.mxu0 %v1977
      %2074 = vmatprep.subr.bf16.mxu0 0
      %2075 = vmatpush2.bf16.msra.mxu0 %v1976
      %2076 = vmatprep.subr.bf16.mxu0 0
      %2077 = vmatpush2.bf16.msra.mxu0 %v1975
      %2078 = vmatprep.subr.bf16.mxu0 0
      %2079 = vmatpush2.bf16.msra.mxu0 %v1974
      %2080 = vmatprep.subr.bf16.mxu0 0
      %2081 = vmatpush2.bf16.msra.mxu0 %v1973
      %2082 = vmatprep.subr.bf16.mxu0 0
      %2083 = vmatpush2.bf16.msra.mxu0 %v1972
      %2084 = vmatprep.subr.bf16.mxu0 0
      %2085 = vmatpush2.bf16.msra.mxu0 %v1971
      %2086 = vmatprep.subr.bf16.mxu0 0
      %2087 = vmatpush2.bf16.msra.mxu0 %v1970
      %2088 = vmatprep.mubr.bf16.mxu0 %v839
      %2089 = vmatmul.mubr.bf16.gmra.mxu0 %v838
      %v2090 = vpop.f32.mrf.mxu0
      %v2091 = vadd.f32 %v2051, %v2090
      %v2092 = vpop.f32.mrf.mxu0
      %v2093 = vpop.f32.mrf.mxu0
      %v2094 = vpop.f32.mrf.mxu0
      %2095 = vdwg.mxu0
      %2096 = vmatprep.subr.bf16.mxu0 0
      %2097 = vmatpush1.bf16.msra.mxu0 0
      %2098 = vmatprep.subr.bf16.mxu0 0
      %2099 = vmatpush1.bf16.msra.mxu0 0
      %2100 = vmatprep.subr.bf16.mxu0 0
      %2101 = vmatpush1.bf16.msra.mxu0 0
      %2102 = vmatprep.subr.bf16.mxu0 0
      %2103 = vmatpush1.bf16.msra.mxu0 0
      %2104 = vmatprep.subr.bf16.mxu0 0
      %2105 = vmatpush1.bf16.msra.mxu0 0
      %2106 = vmatprep.subr.bf16.mxu0 0
      %2107 = vmatpush1.bf16.msra.mxu0 0
      %2108 = vmatprep.subr.bf16.mxu0 0
      %2109 = vmatpush1.bf16.msra.mxu0 %v2014
      %2110 = vmatprep.subr.bf16.mxu0 0
      %2111 = vmatpush1.bf16.msra.mxu0 %v1978
      %2112 = vmatprep.subr.bf16.mxu0 0
      %2113 = vmatpush2.bf16.msra.mxu0 0
      %2114 = vmatprep.subr.bf16.mxu0 0
      %2115 = vmatpush2.bf16.msra.mxu0 0
      %2116 = vmatprep.subr.bf16.mxu0 0
      %2117 = vmatpush2.bf16.msra.mxu0 0
      %2118 = vmatprep.subr.bf16.mxu0 0
      %2119 = vmatpush2.bf16.msra.mxu0 0
      %2120 = vmatprep.subr.bf16.mxu0 0
      %2121 = vmatpush2.bf16.msra.mxu0 0
      %2122 = vmatprep.subr.bf16.mxu0 0
      %2123 = vmatpush2.bf16.msra.mxu0 0
      %2124 = vmatprep.subr.bf16.mxu0 0
      %2125 = vmatpush2.bf16.msra.mxu0 0
      %2126 = vmatprep.subr.bf16.mxu0 0
      %2127 = vmatpush2.bf16.msra.mxu0 0
      %2128 = vmatprep.mubr.bf16.mxu0 0
      %2129 = vmatmul.mubr.bf16.gmra.mxu0 %v1111
      %v2130 = vpop.f32.mrf.mxu0
      %v2131 = vadd.f32 %v2091, %v2130
      %v2132 = vpop.f32.mrf.mxu0
      %v2133 = vpop.f32.mrf.mxu0
      %v2134 = vpop.f32.mrf.mxu0
      %2135 = vdwg.mxu0
      %s2136 = scalar_lea.vmem %s4, 16
      %v2137 = vld [vmem:[%s2136] sm:$0xf]
      %v2138 = vld [vmem:[%s2136 + $0x4] sm:$0xf]
      %v2139 = vpack.c.bf16 %v2131, %v2131
      %v2142 = vunpack.c.l.b16 %v2137
      %v2143 = vunpack.c.l.b16 %v2138
      %v2144 = vpack.c.b16 %v2143, %v2142
      %v2146 = vsel %vm1643, %v2144, 0
      %v2149 = vsel %vm1647, %v2139, 0
      %2151 = vmatprep.subr.bf16.mxu0 0
      %2152 = vmatpush1.bf16.msra.mxu0 0
      %2153 = vmatprep.subr.bf16.mxu0 0
      %2154 = vmatpush1.bf16.msra.mxu0 0
      %2155 = vmatprep.subr.bf16.mxu0 0
      %2156 = vmatpush1.bf16.msra.mxu0 0
      %2157 = vmatprep.subr.bf16.mxu0 0
      %2158 = vmatpush1.bf16.msra.mxu0 0
      %2159 = vmatprep.subr.bf16.mxu0 0
      %2160 = vmatpush1.bf16.msra.mxu0 0
      %2161 = vmatprep.subr.bf16.mxu0 0
      %2162 = vmatpush1.bf16.msra.mxu0 0
      %2163 = vmatprep.subr.bf16.mxu0 0
      %2164 = vmatpush1.bf16.msra.mxu0 0
      %2165 = vmatprep.subr.bf16.mxu0 0
      %2166 = vmatpush1.bf16.msra.mxu0 %v2149
      %2167 = vmatprep.subr.bf16.mxu0 0
      %2168 = vmatpush2.bf16.msra.mxu0 0
      %2169 = vmatprep.subr.bf16.mxu0 0
      %2170 = vmatpush2.bf16.msra.mxu0 0
      %2171 = vmatprep.subr.bf16.mxu0 0
      %2172 = vmatpush2.bf16.msra.mxu0 0
      %2173 = vmatprep.subr.bf16.mxu0 0
      %2174 = vmatpush2.bf16.msra.mxu0 0
      %2175 = vmatprep.subr.bf16.mxu0 0
      %2176 = vmatpush2.bf16.msra.mxu0 0
      %2177 = vmatprep.subr.bf16.mxu0 0
      %2178 = vmatpush2.bf16.msra.mxu0 0
      %2179 = vmatprep.subr.bf16.mxu0 0
      %2180 = vmatpush2.bf16.msra.mxu0 0
      %2181 = vmatprep.subr.bf16.mxu0 0
      %2182 = vmatpush2.bf16.msra.mxu0 0
      %2183 = vmatprep.mubr.bf16.mxu0 0
      %2184 = vmatmul.mubr.bf16.gmra.mxu0 %v2146
      %v2185 = vpop.f32.mrf.mxu0
      %v2186 = vadd.f32 0.0, %v2185
      %v2187 = vpop.f32.mrf.mxu0
      %v2188 = vpop.f32.mrf.mxu0
      %v2189 = vadd.f32 0.0, %v2188
      %v2190 = vpop.f32.mrf.mxu0
      %2191 = vdwg.mxu0
      %v2192 = vadd.f32 %v1738, %v2186
      %v2193 = vadd.f32 %v1741, %v2189
      %s2194 = scalar_lea.vmem %s3, 804
      %v2195 = vld [vmem:[%s2194] sm:$0xf]
      %v2196 = vld [vmem:[%s2194 + $0x4] sm:$0xf]
      %v2197 = vld [vmem:[%s2194 + $0x8] sm:$0xf]
      %v2198 = vld [vmem:[%s2194 + $0xc] sm:$0xf]
      %v2199 = vld [vmem:[%s2194 + $0x10] sm:$0xf]
      %v2200 = vld [vmem:[%s2194 + $0x14] sm:$0xf]
      %v2201 = vld [vmem:[%s2194 + $0x18] sm:$0xf]
      %v2202 = vld [vmem:[%s2194 + $0x1c] sm:$0xf]
      %v2203 = vld [vmem:[%s2194 + $0x20] sm:$0xf]
      %v2204 = vld [vmem:[%s2194 + $0x24] sm:$0xf]
      %v2205 = vld [vmem:[%s2194 + $0x28] sm:$0xf]
      %v2206 = vld [vmem:[%s2194 + $0x2c] sm:$0xf]
      %v2207 = vld [vmem:[%s2194 + $0x30] sm:$0xf]
      %v2208 = vld [vmem:[%s2194 + $0x34] sm:$0xf]
      %v2209 = vld [vmem:[%s2194 + $0x38] sm:$0xf]
      %v2210 = vld [vmem:[%s2194 + $0x3c] sm:$0xf]
      %v2211 = vld [vmem:[%s2194 + $0x40] sm:$0xf]
      %v2212 = vld [vmem:[%s2194 + $0x44] sm:$0xf]
      %v2213 = vld [vmem:[%s2194 + $0x48] sm:$0xf]
      %v2214 = vld [vmem:[%s2194 + $0x4c] sm:$0xf]
      %v2215 = vld [vmem:[%s2194 + $0x50] sm:$0xf]
      %v2216 = vld [vmem:[%s2194 + $0x54] sm:$0xf]
      %v2217 = vld [vmem:[%s2194 + $0x58] sm:$0xf]
      %v2218 = vld [vmem:[%s2194 + $0x5c] sm:$0xf]
      %v2219 = vld [vmem:[%s2194 + $0x60] sm:$0xf]
      %v2220 = vld [vmem:[%s2194 + $0x64] sm:$0xf]
      %v2221 = vld [vmem:[%s2194 + $0x68] sm:$0xf]
      %v2222 = vld [vmem:[%s2194 + $0x6c] sm:$0xf]
      %v2223 = vld [vmem:[%s2194 + $0x70] sm:$0xf]
      %v2224 = vld [vmem:[%s2194 + $0x74] sm:$0xf]
      %v2225 = vld [vmem:[%s2194 + $0x78] sm:$0xf]
      %v2226 = vld [vmem:[%s2194 + $0x7c] sm:$0xf]
      %v2227 = vld [vmem:[%s2194 + $0x80] sm:$0xf]
      %v2228 = vld [vmem:[%s2194 + $0x84] sm:$0xf]
      %v2229 = vld [vmem:[%s2194 + $0x88] sm:$0xf]
      %v2230 = vld [vmem:[%s2194 + $0x8c] sm:$0xf]
      %v2231 = vld [vmem:[%s2194 + $0x90] sm:$0xf]
      %v2232 = vld [vmem:[%s2194 + $0x94] sm:$0xf]
      %v2233 = vld [vmem:[%s2194 + $0x98] sm:$0xf]
      %v2234 = vld [vmem:[%s2194 + $0x9c] sm:$0xf]
      %v2235 = vld [vmem:[%s2194 + $0xa0] sm:$0xf]
      %v2236 = vld [vmem:[%s2194 + $0xa4] sm:$0xf]
      %v2237 = vld [vmem:[%s2194 + $0xa8] sm:$0xf]
      %v2238 = vld [vmem:[%s2194 + $0xac] sm:$0xf]
      %v2239 = vld [vmem:[%s2194 + $0xb0] sm:$0xf]
      %v2240 = vld [vmem:[%s2194 + $0xb4] sm:$0xf]
      %v2241 = vld [vmem:[%s2194 + $0xb8] sm:$0xf]
      %v2242 = vld [vmem:[%s2194 + $0xbc] sm:$0xf]
      %v2243 = vld [vmem:[%s2194 + $0xc0] sm:$0xf]
      %v2244 = vld [vmem:[%s2194 + $0xc4] sm:$0xf]
      %v2245 = vld [vmem:[%s2194 + $0xc8] sm:$0xf]
      %v2246 = vld [vmem:[%s2194 + $0xcc] sm:$0xf]
      %v2247 = vld [vmem:[%s2194 + $0xd0] sm:$0xf]
      %v2248 = vld [vmem:[%s2194 + $0xd4] sm:$0xf]
      %v2249 = vld [vmem:[%s2194 + $0xd8] sm:$0xf]
      %v2250 = vld [vmem:[%s2194 + $0xdc] sm:$0xf]
      %v2251 = vld [vmem:[%s2194 + $0xe0] sm:$0xf]
      %v2252 = vld [vmem:[%s2194 + $0xe4] sm:$0xf]
      %v2253 = vld [vmem:[%s2194 + $0xe8] sm:$0xf]
      %v2254 = vld [vmem:[%s2194 + $0xec] sm:$0xf]
      %v2255 = vld [vmem:[%s2194 + $0xf0] sm:$0xf]
      %v2256 = vld [vmem:[%s2194 + $0xf4] sm:$0xf]
      %v2257 = vld [vmem:[%s2194 + $0xf8] sm:$0xf]
      %v2258 = vld [vmem:[%s2194 + $0xfc] sm:$0xf]
      %v2259 = vld [vmem:[%s2194 + $0x100] sm:$0xf]
      %v2260 = vld [vmem:[%s2194 + $0x104] sm:$0xf]
      %v2261 = vld [vmem:[%s2194 + $0x108] sm:$0x1]
      %v2329 = vunpack.c.l.b16 %v2195
      %v2330 = vunpack.c.l.b16 %v2196
      %v2331 = vunpack.c.l.b16 %v2197
      %v2332 = vunpack.c.l.b16 %v2198
      %v2333 = vunpack.c.l.b16 %v2199
      %v2334 = vunpack.c.l.b16 %v2200
      %v2335 = vunpack.c.l.b16 %v2201
      %v2336 = vunpack.c.l.b16 %v2202
      %v2337 = vunpack.c.l.b16 %v2203
      %v2338 = vunpack.c.l.b16 %v2204
      %v2339 = vunpack.c.l.b16 %v2205
      %v2340 = vunpack.c.l.b16 %v2206
      %v2341 = vunpack.c.l.b16 %v2207
      %v2342 = vunpack.c.l.b16 %v2208
      %v2343 = vunpack.c.l.b16 %v2209
      %v2344 = vunpack.c.l.b16 %v2210
      %v2345 = vunpack.c.l.b16 %v2211
      %v2346 = vunpack.c.l.b16 %v2212
      %v2347 = vunpack.c.l.b16 %v2213
      %v2348 = vunpack.c.l.b16 %v2214
      %v2349 = vunpack.c.l.b16 %v2215
      %v2350 = vunpack.c.l.b16 %v2216
      %v2351 = vunpack.c.l.b16 %v2217
      %v2352 = vunpack.c.l.b16 %v2218
      %v2353 = vunpack.c.l.b16 %v2219
      %v2354 = vunpack.c.l.b16 %v2220
      %v2355 = vunpack.c.l.b16 %v2221
      %v2356 = vunpack.c.l.b16 %v2222
      %v2357 = vunpack.c.l.b16 %v2223
      %v2358 = vunpack.c.l.b16 %v2224
      %v2359 = vunpack.c.l.b16 %v2225
      %v2360 = vunpack.c.l.b16 %v2226
      %v2361 = vunpack.c.l.b16 %v2227
      %v2362 = vunpack.c.l.b16 %v2228
      %v2363 = vunpack.c.l.b16 %v2229
      %v2364 = vunpack.c.l.b16 %v2230
      %v2365 = vunpack.c.l.b16 %v2231
      %v2366 = vunpack.c.l.b16 %v2232
      %v2367 = vunpack.c.l.b16 %v2233
      %v2368 = vunpack.c.l.b16 %v2234
      %v2369 = vunpack.c.l.b16 %v2235
      %v2370 = vunpack.c.l.b16 %v2236
      %v2371 = vunpack.c.l.b16 %v2237
      %v2372 = vunpack.c.l.b16 %v2238
      %v2373 = vunpack.c.l.b16 %v2239
      %v2374 = vunpack.c.l.b16 %v2240
      %v2375 = vunpack.c.l.b16 %v2241
      %v2376 = vunpack.c.l.b16 %v2242
      %v2377 = vunpack.c.l.b16 %v2243
      %v2378 = vunpack.c.l.b16 %v2244
      %v2379 = vunpack.c.l.b16 %v2245
      %v2380 = vunpack.c.l.b16 %v2246
      %v2381 = vunpack.c.l.b16 %v2247
      %v2382 = vunpack.c.l.b16 %v2248
      %v2383 = vunpack.c.l.b16 %v2249
      %v2384 = vunpack.c.l.b16 %v2250
      %v2385 = vunpack.c.l.b16 %v2251
      %v2386 = vunpack.c.l.b16 %v2252
      %v2387 = vunpack.c.l.b16 %v2253
      %v2388 = vunpack.c.l.b16 %v2254
      %v2389 = vunpack.c.l.b16 %v2255
      %v2390 = vunpack.c.l.b16 %v2256
      %v2391 = vunpack.c.l.b16 %v2257
      %v2392 = vunpack.c.l.b16 %v2258
      %v2393 = vunpack.c.l.b16 %v2259
      %v2394 = vunpack.c.l.b16 %v2260
      %v2395 = vunpack.c.l.b16 %v2261
      %v2396 = vpack.c.b16 %v2330, %v2329
      %v2397 = vpack.c.b16 %v2332, %v2331
      %v2398 = vpack.c.b16 %v2334, %v2333
      %v2399 = vpack.c.b16 %v2336, %v2335
      %v2400 = vpack.c.b16 %v2338, %v2337
      %v2401 = vpack.c.b16 %v2340, %v2339
      %v2402 = vpack.c.b16 %v2342, %v2341
      %v2403 = vpack.c.b16 %v2344, %v2343
      %v2404 = vpack.c.b16 %v2346, %v2345
      %v2405 = vpack.c.b16 %v2348, %v2347
      %v2406 = vpack.c.b16 %v2350, %v2349
      %v2407 = vpack.c.b16 %v2352, %v2351
      %v2408 = vpack.c.b16 %v2354, %v2353
      %v2409 = vpack.c.b16 %v2356, %v2355
      %v2410 = vpack.c.b16 %v2358, %v2357
      %v2411 = vpack.c.b16 %v2360, %v2359
      %v2412 = vpack.c.b16 %v2362, %v2361
      %v2413 = vpack.c.b16 %v2364, %v2363
      %v2414 = vpack.c.b16 %v2366, %v2365
      %v2415 = vpack.c.b16 %v2368, %v2367
      %v2416 = vpack.c.b16 %v2370, %v2369
      %v2417 = vpack.c.b16 %v2372, %v2371
      %v2418 = vpack.c.b16 %v2374, %v2373
      %v2419 = vpack.c.b16 %v2376, %v2375
      %v2420 = vpack.c.b16 %v2378, %v2377
      %v2421 = vpack.c.b16 %v2380, %v2379
      %v2422 = vpack.c.b16 %v2382, %v2381
      %v2423 = vpack.c.b16 %v2384, %v2383
      %v2424 = vpack.c.b16 %v2386, %v2385
      %v2425 = vpack.c.b16 %v2388, %v2387
      %v2426 = vpack.c.b16 %v2390, %v2389
      %v2427 = vpack.c.b16 %v2392, %v2391
      %v2428 = vpack.c.b16 %v2394, %v2393
      %v2429 = vpack.c.b16 %v2395, %v2395
      %v2464 = vand.u32 %v2429, %v1115
      %2466 = vmatprep.subr.bf16.mxu0 0
      %2467 = vmatpush1.bf16.msra.mxu0 %v2403
      %2468 = vmatprep.subr.bf16.mxu0 0
      %2469 = vmatpush1.bf16.msra.mxu0 %v2402
      %2470 = vmatprep.subr.bf16.mxu0 0
      %2471 = vmatpush1.bf16.msra.mxu0 %v2401
      %2472 = vmatprep.subr.bf16.mxu0 0
      %2473 = vmatpush1.bf16.msra.mxu0 %v2400
      %2474 = vmatprep.subr.bf16.mxu0 0
      %2475 = vmatpush1.bf16.msra.mxu0 %v2399
      %2476 = vmatprep.subr.bf16.mxu0 0
      %2477 = vmatpush1.bf16.msra.mxu0 %v2398
      %2478 = vmatprep.subr.bf16.mxu0 0
      %2479 = vmatpush1.bf16.msra.mxu0 %v2397
      %2480 = vmatprep.subr.bf16.mxu0 0
      %2481 = vmatpush1.bf16.msra.mxu0 %v2396
      %2482 = vmatprep.subr.bf16.mxu0 0
      %2483 = vmatpush2.bf16.msra.mxu0 %v2411
      %2484 = vmatprep.subr.bf16.mxu0 0
      %2485 = vmatpush2.bf16.msra.mxu0 %v2410
      %2486 = vmatprep.subr.bf16.mxu0 0
      %2487 = vmatpush2.bf16.msra.mxu0 %v2409
      %2488 = vmatprep.subr.bf16.mxu0 0
      %2489 = vmatpush2.bf16.msra.mxu0 %v2408
      %2490 = vmatprep.subr.bf16.mxu0 0
      %2491 = vmatpush2.bf16.msra.mxu0 %v2407
      %2492 = vmatprep.subr.bf16.mxu0 0
      %2493 = vmatpush2.bf16.msra.mxu0 %v2406
      %2494 = vmatprep.subr.bf16.mxu0 0
      %2495 = vmatpush2.bf16.msra.mxu0 %v2405
      %2496 = vmatprep.subr.bf16.mxu0 0
      %2497 = vmatpush2.bf16.msra.mxu0 %v2404
      %2498 = vmatprep.mubr.bf16.mxu0 %v837
      %2499 = vmatmul.mubr.bf16.gmra.mxu0 %v836
      %v2500 = vpop.f32.mrf.mxu0
      %v2501 = vadd.f32 0.0, %v2500
      %v2502 = vpop.f32.mrf.mxu0
      %v2503 = vpop.f32.mrf.mxu0
      %v2504 = vpop.f32.mrf.mxu0
      %2505 = vdwg.mxu0
      %2506 = vmatprep.subr.bf16.mxu0 0
      %2507 = vmatpush1.bf16.msra.mxu0 %v2419
      %2508 = vmatprep.subr.bf16.mxu0 0
      %2509 = vmatpush1.bf16.msra.mxu0 %v2418
      %2510 = vmatprep.subr.bf16.mxu0 0
      %2511 = vmatpush1.bf16.msra.mxu0 %v2417
      %2512 = vmatprep.subr.bf16.mxu0 0
      %2513 = vmatpush1.bf16.msra.mxu0 %v2416
      %2514 = vmatprep.subr.bf16.mxu0 0
      %2515 = vmatpush1.bf16.msra.mxu0 %v2415
      %2516 = vmatprep.subr.bf16.mxu0 0
      %2517 = vmatpush1.bf16.msra.mxu0 %v2414
      %2518 = vmatprep.subr.bf16.mxu0 0
      %2519 = vmatpush1.bf16.msra.mxu0 %v2413
      %2520 = vmatprep.subr.bf16.mxu0 0
      %2521 = vmatpush1.bf16.msra.mxu0 %v2412
      %2522 = vmatprep.subr.bf16.mxu0 0
      %2523 = vmatpush2.bf16.msra.mxu0 %v2427
      %2524 = vmatprep.subr.bf16.mxu0 0
      %2525 = vmatpush2.bf16.msra.mxu0 %v2426
      %2526 = vmatprep.subr.bf16.mxu0 0
      %2527 = vmatpush2.bf16.msra.mxu0 %v2425
      %2528 = vmatprep.subr.bf16.mxu0 0
      %2529 = vmatpush2.bf16.msra.mxu0 %v2424
      %2530 = vmatprep.subr.bf16.mxu0 0
      %2531 = vmatpush2.bf16.msra.mxu0 %v2423
      %2532 = vmatprep.subr.bf16.mxu0 0
      %2533 = vmatpush2.bf16.msra.mxu0 %v2422
      %2534 = vmatprep.subr.bf16.mxu0 0
      %2535 = vmatpush2.bf16.msra.mxu0 %v2421
      %2536 = vmatprep.subr.bf16.mxu0 0
      %2537 = vmatpush2.bf16.msra.mxu0 %v2420
      %2538 = vmatprep.mubr.bf16.mxu0 %v839
      %2539 = vmatmul.mubr.bf16.gmra.mxu0 %v838
      %v2540 = vpop.f32.mrf.mxu0
      %v2541 = vadd.f32 %v2501, %v2540
      %v2542 = vpop.f32.mrf.mxu0
      %v2543 = vpop.f32.mrf.mxu0
      %v2544 = vpop.f32.mrf.mxu0
      %2545 = vdwg.mxu0
      %2546 = vmatprep.subr.bf16.mxu0 0
      %2547 = vmatpush1.bf16.msra.mxu0 0
      %2548 = vmatprep.subr.bf16.mxu0 0
      %2549 = vmatpush1.bf16.msra.mxu0 0
      %2550 = vmatprep.subr.bf16.mxu0 0
      %2551 = vmatpush1.bf16.msra.mxu0 0
      %2552 = vmatprep.subr.bf16.mxu0 0
      %2553 = vmatpush1.bf16.msra.mxu0 0
      %2554 = vmatprep.subr.bf16.mxu0 0
      %2555 = vmatpush1.bf16.msra.mxu0 0
      %2556 = vmatprep.subr.bf16.mxu0 0
      %2557 = vmatpush1.bf16.msra.mxu0 0
      %2558 = vmatprep.subr.bf16.mxu0 0
      %2559 = vmatpush1.bf16.msra.mxu0 %v2464
      %2560 = vmatprep.subr.bf16.mxu0 0
      %2561 = vmatpush1.bf16.msra.mxu0 %v2428
      %2562 = vmatprep.subr.bf16.mxu0 0
      %2563 = vmatpush2.bf16.msra.mxu0 0
      %2564 = vmatprep.subr.bf16.mxu0 0
      %2565 = vmatpush2.bf16.msra.mxu0 0
      %2566 = vmatprep.subr.bf16.mxu0 0
      %2567 = vmatpush2.bf16.msra.mxu0 0
      %2568 = vmatprep.subr.bf16.mxu0 0
      %2569 = vmatpush2.bf16.msra.mxu0 0
      %2570 = vmatprep.subr.bf16.mxu0 0
      %2571 = vmatpush2.bf16.msra.mxu0 0
      %2572 = vmatprep.subr.bf16.mxu0 0
      %2573 = vmatpush2.bf16.msra.mxu0 0
      %2574 = vmatprep.subr.bf16.mxu0 0
      %2575 = vmatpush2.bf16.msra.mxu0 0
      %2576 = vmatprep.subr.bf16.mxu0 0
      %2577 = vmatpush2.bf16.msra.mxu0 0
      %2578 = vmatprep.mubr.bf16.mxu0 0
      %2579 = vmatmul.mubr.bf16.gmra.mxu0 %v1111
      %v2580 = vpop.f32.mrf.mxu0
      %v2581 = vadd.f32 %v2541, %v2580
      %v2582 = vpop.f32.mrf.mxu0
      %v2583 = vpop.f32.mrf.mxu0
      %v2584 = vpop.f32.mrf.mxu0
      %2585 = vdwg.mxu0
      %s2586 = scalar_lea.vmem %s4, 24
      %v2587 = vld [vmem:[%s2586] sm:$0xf]
      %v2588 = vld [vmem:[%s2586 + $0x4] sm:$0xf]
      %v2589 = vpack.c.bf16 %v2581, %v2581
      %v2592 = vunpack.c.l.b16 %v2587
      %v2593 = vunpack.c.l.b16 %v2588
      %v2594 = vpack.c.b16 %v2593, %v2592
      %v2596 = vsel %vm1643, %v2594, 0
      %v2599 = vsel %vm1647, %v2589, 0
      %2601 = vmatprep.subr.bf16.mxu0 0
      %2602 = vmatpush1.bf16.msra.mxu0 0
      %2603 = vmatprep.subr.bf16.mxu0 0
      %2604 = vmatpush1.bf16.msra.mxu0 0
      %2605 = vmatprep.subr.bf16.mxu0 0
      %2606 = vmatpush1.bf16.msra.mxu0 0
      %2607 = vmatprep.subr.bf16.mxu0 0
      %2608 = vmatpush1.bf16.msra.mxu0 0
      %2609 = vmatprep.subr.bf16.mxu0 0
      %2610 = vmatpush1.bf16.msra.mxu0 0
      %2611 = vmatprep.subr.bf16.mxu0 0
      %2612 = vmatpush1.bf16.msra.mxu0 0
      %2613 = vmatprep.subr.bf16.mxu0 0
      %2614 = vmatpush1.bf16.msra.mxu0 0
      %2615 = vmatprep.subr.bf16.mxu0 0
      %2616 = vmatpush1.bf16.msra.mxu0 %v2599
      %2617 = vmatprep.subr.bf16.mxu0 0
      %2618 = vmatpush2.bf16.msra.mxu0 0
      %2619 = vmatprep.subr.bf16.mxu0 0
      %2620 = vmatpush2.bf16.msra.mxu0 0
      %2621 = vmatprep.subr.bf16.mxu0 0
      %2622 = vmatpush2.bf16.msra.mxu0 0
      %2623 = vmatprep.subr.bf16.mxu0 0
      %2624 = vmatpush2.bf16.msra.mxu0 0
      %2625 = vmatprep.subr.bf16.mxu0 0
      %2626 = vmatpush2.bf16.msra.mxu0 0
      %2627 = vmatprep.subr.bf16.mxu0 0
      %2628 = vmatpush2.bf16.msra.mxu0 0
      %2629 = vmatprep.subr.bf16.mxu0 0
      %2630 = vmatpush2.bf16.msra.mxu0 0
      %2631 = vmatprep.subr.bf16.mxu0 0
      %2632 = vmatpush2.bf16.msra.mxu0 0
      %2633 = vmatprep.mubr.bf16.mxu0 0
      %2634 = vmatmul.mubr.bf16.gmra.mxu0 %v2596
      %v2635 = vpop.f32.mrf.mxu0
      %v2636 = vadd.f32 0.0, %v2635
      %v2637 = vpop.f32.mrf.mxu0
      %v2638 = vpop.f32.mrf.mxu0
      %v2639 = vadd.f32 0.0, %v2638
      %v2640 = vpop.f32.mrf.mxu0
      %2641 = vdwg.mxu0
      %v2642 = vadd.f32 %v2192, %v2636
      %v2643 = vadd.f32 %v2193, %v2639
      %s2644 = scalar_lea.vmem %s3, 1072
      %v2645 = vld [vmem:[%s2644] sm:$0xf]
      %v2646 = vld [vmem:[%s2644 + $0x4] sm:$0xf]
      %v2647 = vld [vmem:[%s2644 + $0x8] sm:$0xf]
      %v2648 = vld [vmem:[%s2644 + $0xc] sm:$0xf]
      %v2649 = vld [vmem:[%s2644 + $0x10] sm:$0xf]
      %v2650 = vld [vmem:[%s2644 + $0x14] sm:$0xf]
      %v2651 = vld [vmem:[%s2644 + $0x18] sm:$0xf]
      %v2652 = vld [vmem:[%s2644 + $0x1c] sm:$0xf]
      %v2653 = vld [vmem:[%s2644 + $0x20] sm:$0xf]
      %v2654 = vld [vmem:[%s2644 + $0x24] sm:$0xf]
      %v2655 = vld [vmem:[%s2644 + $0x28] sm:$0xf]
      %v2656 = vld [vmem:[%s2644 + $0x2c] sm:$0xf]
      %v2657 = vld [vmem:[%s2644 + $0x30] sm:$0xf]
      %v2658 = vld [vmem:[%s2644 + $0x34] sm:$0xf]
      %v2659 = vld [vmem:[%s2644 + $0x38] sm:$0xf]
      %v2660 = vld [vmem:[%s2644 + $0x3c] sm:$0xf]
      %v2661 = vld [vmem:[%s2644 + $0x40] sm:$0xf]
      %v2662 = vld [vmem:[%s2644 + $0x44] sm:$0xf]
      %v2663 = vld [vmem:[%s2644 + $0x48] sm:$0xf]
      %v2664 = vld [vmem:[%s2644 + $0x4c] sm:$0xf]
      %v2665 = vld [vmem:[%s2644 + $0x50] sm:$0xf]
      %v2666 = vld [vmem:[%s2644 + $0x54] sm:$0xf]
      %v2667 = vld [vmem:[%s2644 + $0x58] sm:$0xf]
      %v2668 = vld [vmem:[%s2644 + $0x5c] sm:$0xf]
      %v2669 = vld [vmem:[%s2644 + $0x60] sm:$0xf]
      %v2670 = vld [vmem:[%s2644 + $0x64] sm:$0xf]
      %v2671 = vld [vmem:[%s2644 + $0x68] sm:$0xf]
      %v2672 = vld [vmem:[%s2644 + $0x6c] sm:$0xf]
      %v2673 = vld [vmem:[%s2644 + $0x70] sm:$0xf]
      %v2674 = vld [vmem:[%s2644 + $0x74] sm:$0xf]
      %v2675 = vld [vmem:[%s2644 + $0x78] sm:$0xf]
      %v2676 = vld [vmem:[%s2644 + $0x7c] sm:$0xf]
      %v2677 = vld [vmem:[%s2644 + $0x80] sm:$0xf]
      %v2678 = vld [vmem:[%s2644 + $0x84] sm:$0xf]
      %v2679 = vld [vmem:[%s2644 + $0x88] sm:$0xf]
      %v2680 = vld [vmem:[%s2644 + $0x8c] sm:$0xf]
      %v2681 = vld [vmem:[%s2644 + $0x90] sm:$0xf]
      %v2682 = vld [vmem:[%s2644 + $0x94] sm:$0xf]
      %v2683 = vld [vmem:[%s2644 + $0x98] sm:$0xf]
      %v2684 = vld [vmem:[%s2644 + $0x9c] sm:$0xf]
      %v2685 = vld [vmem:[%s2644 + $0xa0] sm:$0xf]
      %v2686 = vld [vmem:[%s2644 + $0xa4] sm:$0xf]
      %v2687 = vld [vmem:[%s2644 + $0xa8] sm:$0xf]
      %v2688 = vld [vmem:[%s2644 + $0xac] sm:$0xf]
      %v2689 = vld [vmem:[%s2644 + $0xb0] sm:$0xf]
      %v2690 = vld [vmem:[%s2644 + $0xb4] sm:$0xf]
      %v2691 = vld [vmem:[%s2644 + $0xb8] sm:$0xf]
      %v2692 = vld [vmem:[%s2644 + $0xbc] sm:$0xf]
      %v2693 = vld [vmem:[%s2644 + $0xc0] sm:$0xf]
      %v2694 = vld [vmem:[%s2644 + $0xc4] sm:$0xf]
      %v2695 = vld [vmem:[%s2644 + $0xc8] sm:$0xf]
      %v2696 = vld [vmem:[%s2644 + $0xcc] sm:$0xf]
      %v2697 = vld [vmem:[%s2644 + $0xd0] sm:$0xf]
      %v2698 = vld [vmem:[%s2644 + $0xd4] sm:$0xf]
      %v2699 = vld [vmem:[%s2644 + $0xd8] sm:$0xf]
      %v2700 = vld [vmem:[%s2644 + $0xdc] sm:$0xf]
      %v2701 = vld [vmem:[%s2644 + $0xe0] sm:$0xf]
      %v2702 = vld [vmem:[%s2644 + $0xe4] sm:$0xf]
      %v2703 = vld [vmem:[%s2644 + $0xe8] sm:$0xf]
      %v2704 = vld [vmem:[%s2644 + $0xec] sm:$0xf]
      %v2705 = vld [vmem:[%s2644 + $0xf0] sm:$0xf]
      %v2706 = vld [vmem:[%s2644 + $0xf4] sm:$0xf]
      %v2707 = vld [vmem:[%s2644 + $0xf8] sm:$0xf]
      %v2708 = vld [vmem:[%s2644 + $0xfc] sm:$0xf]
      %v2709 = vld [vmem:[%s2644 + $0x100] sm:$0xf]
      %v2710 = vld [vmem:[%s2644 + $0x104] sm:$0xf]
      %v2711 = vld [vmem:[%s2644 + $0x108] sm:$0x1]
      %v2779 = vunpack.c.l.b16 %v2645
      %v2780 = vunpack.c.l.b16 %v2646
      %v2781 = vunpack.c.l.b16 %v2647
      %v2782 = vunpack.c.l.b16 %v2648
      %v2783 = vunpack.c.l.b16 %v2649
      %v2784 = vunpack.c.l.b16 %v2650
      %v2785 = vunpack.c.l.b16 %v2651
      %v2786 = vunpack.c.l.b16 %v2652
      %v2787 = vunpack.c.l.b16 %v2653
      %v2788 = vunpack.c.l.b16 %v2654
      %v2789 = vunpack.c.l.b16 %v2655
      %v2790 = vunpack.c.l.b16 %v2656
      %v2791 = vunpack.c.l.b16 %v2657
      %v2792 = vunpack.c.l.b16 %v2658
      %v2793 = vunpack.c.l.b16 %v2659
      %v2794 = vunpack.c.l.b16 %v2660
      %v2795 = vunpack.c.l.b16 %v2661
      %v2796 = vunpack.c.l.b16 %v2662
      %v2797 = vunpack.c.l.b16 %v2663
      %v2798 = vunpack.c.l.b16 %v2664
      %v2799 = vunpack.c.l.b16 %v2665
      %v2800 = vunpack.c.l.b16 %v2666
      %v2801 = vunpack.c.l.b16 %v2667
      %v2802 = vunpack.c.l.b16 %v2668
      %v2803 = vunpack.c.l.b16 %v2669
      %v2804 = vunpack.c.l.b16 %v2670
      %v2805 = vunpack.c.l.b16 %v2671
      %v2806 = vunpack.c.l.b16 %v2672
      %v2807 = vunpack.c.l.b16 %v2673
      %v2808 = vunpack.c.l.b16 %v2674
      %v2809 = vunpack.c.l.b16 %v2675
      %v2810 = vunpack.c.l.b16 %v2676
      %v2811 = vunpack.c.l.b16 %v2677
      %v2812 = vunpack.c.l.b16 %v2678
      %v2813 = vunpack.c.l.b16 %v2679
      %v2814 = vunpack.c.l.b16 %v2680
      %v2815 = vunpack.c.l.b16 %v2681
      %v2816 = vunpack.c.l.b16 %v2682
      %v2817 = vunpack.c.l.b16 %v2683
      %v2818 = vunpack.c.l.b16 %v2684
      %v2819 = vunpack.c.l.b16 %v2685
      %v2820 = vunpack.c.l.b16 %v2686
      %v2821 = vunpack.c.l.b16 %v2687
      %v2822 = vunpack.c.l.b16 %v2688
      %v2823 = vunpack.c.l.b16 %v2689
      %v2824 = vunpack.c.l.b16 %v2690
      %v2825 = vunpack.c.l.b16 %v2691
      %v2826 = vunpack.c.l.b16 %v2692
      %v2827 = vunpack.c.l.b16 %v2693
      %v2828 = vunpack.c.l.b16 %v2694
      %v2829 = vunpack.c.l.b16 %v2695
      %v2830 = vunpack.c.l.b16 %v2696
      %v2831 = vunpack.c.l.b16 %v2697
      %v2832 = vunpack.c.l.b16 %v2698
      %v2833 = vunpack.c.l.b16 %v2699
      %v2834 = vunpack.c.l.b16 %v2700
      %v2835 = vunpack.c.l.b16 %v2701
      %v2836 = vunpack.c.l.b16 %v2702
      %v2837 = vunpack.c.l.b16 %v2703
      %v2838 = vunpack.c.l.b16 %v2704
      %v2839 = vunpack.c.l.b16 %v2705
      %v2840 = vunpack.c.l.b16 %v2706
      %v2841 = vunpack.c.l.b16 %v2707
      %v2842 = vunpack.c.l.b16 %v2708
      %v2843 = vunpack.c.l.b16 %v2709
      %v2844 = vunpack.c.l.b16 %v2710
      %v2845 = vunpack.c.l.b16 %v2711
      %v2846 = vpack.c.b16 %v2780, %v2779
      %v2847 = vpack.c.b16 %v2782, %v2781
      %v2848 = vpack.c.b16 %v2784, %v2783
      %v2849 = vpack.c.b16 %v2786, %v2785
      %v2850 = vpack.c.b16 %v2788, %v2787
      %v2851 = vpack.c.b16 %v2790, %v2789
      %v2852 = vpack.c.b16 %v2792, %v2791
      %v2853 = vpack.c.b16 %v2794, %v2793
      %v2854 = vpack.c.b16 %v2796, %v2795
      %v2855 = vpack.c.b16 %v2798, %v2797
      %v2856 = vpack.c.b16 %v2800, %v2799
      %v2857 = vpack.c.b16 %v2802, %v2801
      %v2858 = vpack.c.b16 %v2804, %v2803
      %v2859 = vpack.c.b16 %v2806, %v2805
      %v2860 = vpack.c.b16 %v2808, %v2807
      %v2861 = vpack.c.b16 %v2810, %v2809
      %v2862 = vpack.c.b16 %v2812, %v2811
      %v2863 = vpack.c.b16 %v2814, %v2813
      %v2864 = vpack.c.b16 %v2816, %v2815
      %v2865 = vpack.c.b16 %v2818, %v2817
      %v2866 = vpack.c.b16 %v2820, %v2819
      %v2867 = vpack.c.b16 %v2822, %v2821
      %v2868 = vpack.c.b16 %v2824, %v2823
      %v2869 = vpack.c.b16 %v2826, %v2825
      %v2870 = vpack.c.b16 %v2828, %v2827
      %v2871 = vpack.c.b16 %v2830, %v2829
      %v2872 = vpack.c.b16 %v2832, %v2831
      %v2873 = vpack.c.b16 %v2834, %v2833
      %v2874 = vpack.c.b16 %v2836, %v2835
      %v2875 = vpack.c.b16 %v2838, %v2837
      %v2876 = vpack.c.b16 %v2840, %v2839
      %v2877 = vpack.c.b16 %v2842, %v2841
      %v2878 = vpack.c.b16 %v2844, %v2843
      %v2879 = vpack.c.b16 %v2845, %v2845
      %v2914 = vand.u32 %v2879, %v1115
      %2916 = vmatprep.subr.bf16.mxu0 0
      %2917 = vmatpush1.bf16.msra.mxu0 %v2853
      %2918 = vmatprep.subr.bf16.mxu0 0
      %2919 = vmatpush1.bf16.msra.mxu0 %v2852
      %2920 = vmatprep.subr.bf16.mxu0 0
      %2921 = vmatpush1.bf16.msra.mxu0 %v2851
      %2922 = vmatprep.subr.bf16.mxu0 0
      %2923 = vmatpush1.bf16.msra.mxu0 %v2850
      %2924 = vmatprep.subr.bf16.mxu0 0
      %2925 = vmatpush1.bf16.msra.mxu0 %v2849
      %2926 = vmatprep.subr.bf16.mxu0 0
      %2927 = vmatpush1.bf16.msra.mxu0 %v2848
      %2928 = vmatprep.subr.bf16.mxu0 0
      %2929 = vmatpush1.bf16.msra.mxu0 %v2847
      %2930 = vmatprep.subr.bf16.mxu0 0
      %2931 = vmatpush1.bf16.msra.mxu0 %v2846
      %2932 = vmatprep.subr.bf16.mxu0 0
      %2933 = vmatpush2.bf16.msra.mxu0 %v2861
      %2934 = vmatprep.subr.bf16.mxu0 0
      %2935 = vmatpush2.bf16.msra.mxu0 %v2860
      %2936 = vmatprep.subr.bf16.mxu0 0
      %2937 = vmatpush2.bf16.msra.mxu0 %v2859
      %2938 = vmatprep.subr.bf16.mxu0 0
      %2939 = vmatpush2.bf16.msra.mxu0 %v2858
      %2940 = vmatprep.subr.bf16.mxu0 0
      %2941 = vmatpush2.bf16.msra.mxu0 %v2857
      %2942 = vmatprep.subr.bf16.mxu0 0
      %2943 = vmatpush2.bf16.msra.mxu0 %v2856
      %2944 = vmatprep.subr.bf16.mxu0 0
      %2945 = vmatpush2.bf16.msra.mxu0 %v2855
      %2946 = vmatprep.subr.bf16.mxu0 0
      %2947 = vmatpush2.bf16.msra.mxu0 %v2854
      %2948 = vmatprep.mubr.bf16.mxu0 %v837
      %2949 = vmatmul.mubr.bf16.gmra.mxu0 %v836
      %v2950 = vpop.f32.mrf.mxu0
      %v2951 = vadd.f32 0.0, %v2950
      %v2952 = vpop.f32.mrf.mxu0
      %v2953 = vpop.f32.mrf.mxu0
      %v2954 = vpop.f32.mrf.mxu0
      %2955 = vdwg.mxu0
      %2956 = vmatprep.subr.bf16.mxu0 0
      %2957 = vmatpush1.bf16.msra.mxu0 %v2869
      %2958 = vmatprep.subr.bf16.mxu0 0
      %2959 = vmatpush1.bf16.msra.mxu0 %v2868
      %2960 = vmatprep.subr.bf16.mxu0 0
      %2961 = vmatpush1.bf16.msra.mxu0 %v2867
      %2962 = vmatprep.subr.bf16.mxu0 0
      %2963 = vmatpush1.bf16.msra.mxu0 %v2866
      %2964 = vmatprep.subr.bf16.mxu0 0
      %2965 = vmatpush1.bf16.msra.mxu0 %v2865
      %2966 = vmatprep.subr.bf16.mxu0 0
      %2967 = vmatpush1.bf16.msra.mxu0 %v2864
      %2968 = vmatprep.subr.bf16.mxu0 0
      %2969 = vmatpush1.bf16.msra.mxu0 %v2863
      %2970 = vmatprep.subr.bf16.mxu0 0
      %2971 = vmatpush1.bf16.msra.mxu0 %v2862
      %2972 = vmatprep.subr.bf16.mxu0 0
      %2973 = vmatpush2.bf16.msra.mxu0 %v2877
      %2974 = vmatprep.subr.bf16.mxu0 0
      %2975 = vmatpush2.bf16.msra.mxu0 %v2876
      %2976 = vmatprep.subr.bf16.mxu0 0
      %2977 = vmatpush2.bf16.msra.mxu0 %v2875
      %2978 = vmatprep.subr.bf16.mxu0 0
      %2979 = vmatpush2.bf16.msra.mxu0 %v2874
      %2980 = vmatprep.subr.bf16.mxu0 0
      %2981 = vmatpush2.bf16.msra.mxu0 %v2873
      %2982 = vmatprep.subr.bf16.mxu0 0
      %2983 = vmatpush2.bf16.msra.mxu0 %v2872
      %2984 = vmatprep.subr.bf16.mxu0 0
      %2985 = vmatpush2.bf16.msra.mxu0 %v2871
      %2986 = vmatprep.subr.bf16.mxu0 0
      %2987 = vmatpush2.bf16.msra.mxu0 %v2870
      %2988 = vmatprep.mubr.bf16.mxu0 %v839
      %2989 = vmatmul.mubr.bf16.gmra.mxu0 %v838
      %v2990 = vpop.f32.mrf.mxu0
      %v2991 = vadd.f32 %v2951, %v2990
      %v2992 = vpop.f32.mrf.mxu0
      %v2993 = vpop.f32.mrf.mxu0
      %v2994 = vpop.f32.mrf.mxu0
      %2995 = vdwg.mxu0
      %2996 = vmatprep.subr.bf16.mxu0 0
      %2997 = vmatpush1.bf16.msra.mxu0 0
      %2998 = vmatprep.subr.bf16.mxu0 0
      %2999 = vmatpush1.bf16.msra.mxu0 0
      %3000 = vmatprep.subr.bf16.mxu0 0
      %3001 = vmatpush1.bf16.msra.mxu0 0
      %3002 = vmatprep.subr.bf16.mxu0 0
      %3003 = vmatpush1.bf16.msra.mxu0 0
      %3004 = vmatprep.subr.bf16.mxu0 0
      %3005 = vmatpush1.bf16.msra.mxu0 0
      %3006 = vmatprep.subr.bf16.mxu0 0
      %3007 = vmatpush1.bf16.msra.mxu0 0
      %3008 = vmatprep.subr.bf16.mxu0 0
      %3009 = vmatpush1.bf16.msra.mxu0 %v2914
      %3010 = vmatprep.subr.bf16.mxu0 0
      %3011 = vmatpush1.bf16.msra.mxu0 %v2878
      %3012 = vmatprep.subr.bf16.mxu0 0
      %3013 = vmatpush2.bf16.msra.mxu0 0
      %3014 = vmatprep.subr.bf16.mxu0 0
      %3015 = vmatpush2.bf16.msra.mxu0 0
      %3016 = vmatprep.subr.bf16.mxu0 0
      %3017 = vmatpush2.bf16.msra.mxu0 0
      %3018 = vmatprep.subr.bf16.mxu0 0
      %3019 = vmatpush2.bf16.msra.mxu0 0
      %3020 = vmatprep.subr.bf16.mxu0 0
      %3021 = vmatpush2.bf16.msra.mxu0 0
      %3022 = vmatprep.subr.bf16.mxu0 0
      %3023 = vmatpush2.bf16.msra.mxu0 0
      %3024 = vmatprep.subr.bf16.mxu0 0
      %3025 = vmatpush2.bf16.msra.mxu0 0
      %3026 = vmatprep.subr.bf16.mxu0 0
      %3027 = vmatpush2.bf16.msra.mxu0 0
      %3028 = vmatprep.mubr.bf16.mxu0 0
      %3029 = vmatmul.mubr.bf16.gmra.mxu0 %v1111
      %v3030 = vpop.f32.mrf.mxu0
      %v3031 = vadd.f32 %v2991, %v3030
      %v3032 = vpop.f32.mrf.mxu0
      %v3033 = vpop.f32.mrf.mxu0
      %v3034 = vpop.f32.mrf.mxu0
      %3035 = vdwg.mxu0
      %s3036 = scalar_lea.vmem %s4, 32
      %v3037 = vld [vmem:[%s3036] sm:$0xf]
      %v3038 = vld [vmem:[%s3036 + $0x4] sm:$0xf]
      %v3039 = vpack.c.bf16 %v3031, %v3031
      %v3042 = vunpack.c.l.b16 %v3037
      %v3043 = vunpack.c.l.b16 %v3038
      %v3044 = vpack.c.b16 %v3043, %v3042
      %v3046 = vsel %vm1643, %v3044, 0
      %v3049 = vsel %vm1647, %v3039, 0
      %3051 = vmatprep.subr.bf16.mxu0 0
      %3052 = vmatpush1.bf16.msra.mxu0 0
      %3053 = vmatprep.subr.bf16.mxu0 0
      %3054 = vmatpush1.bf16.msra.mxu0 0
      %3055 = vmatprep.subr.bf16.mxu0 0
      %3056 = vmatpush1.bf16.msra.mxu0 0
      %3057 = vmatprep.subr.bf16.mxu0 0
      %3058 = vmatpush1.bf16.msra.mxu0 0
      %3059 = vmatprep.subr.bf16.mxu0 0
      %3060 = vmatpush1.bf16.msra.mxu0 0
      %3061 = vmatprep.subr.bf16.mxu0 0
      %3062 = vmatpush1.bf16.msra.mxu0 0
      %3063 = vmatprep.subr.bf16.mxu0 0
      %3064 = vmatpush1.bf16.msra.mxu0 0
      %3065 = vmatprep.subr.bf16.mxu0 0
      %3066 = vmatpush1.bf16.msra.mxu0 %v3049
      %3067 = vmatprep.subr.bf16.mxu0 0
      %3068 = vmatpush2.bf16.msra.mxu0 0
      %3069 = vmatprep.subr.bf16.mxu0 0
      %3070 = vmatpush2.bf16.msra.mxu0 0
      %3071 = vmatprep.subr.bf16.mxu0 0
      %3072 = vmatpush2.bf16.msra.mxu0 0
      %3073 = vmatprep.subr.bf16.mxu0 0
      %3074 = vmatpush2.bf16.msra.mxu0 0
      %3075 = vmatprep.subr.bf16.mxu0 0
      %3076 = vmatpush2.bf16.msra.mxu0 0
      %3077 = vmatprep.subr.bf16.mxu0 0
      %3078 = vmatpush2.bf16.msra.mxu0 0
      %3079 = vmatprep.subr.bf16.mxu0 0
      %3080 = vmatpush2.bf16.msra.mxu0 0
      %3081 = vmatprep.subr.bf16.mxu0 0
      %3082 = vmatpush2.bf16.msra.mxu0 0
      %3083 = vmatprep.mubr.bf16.mxu0 0
      %3084 = vmatmul.mubr.bf16.gmra.mxu0 %v3046
      %v3085 = vpop.f32.mrf.mxu0
      %v3086 = vadd.f32 0.0, %v3085
      %v3087 = vpop.f32.mrf.mxu0
      %v3088 = vpop.f32.mrf.mxu0
      %v3089 = vadd.f32 0.0, %v3088
      %v3090 = vpop.f32.mrf.mxu0
      %3091 = vdwg.mxu0
      %v3092 = vadd.f32 %v2642, %v3086
      %v3093 = vadd.f32 %v2643, %v3089
      %s3094 = scalar_lea.vmem %s3, 1340
      %v3095 = vld [vmem:[%s3094] sm:$0xf]
      %v3096 = vld [vmem:[%s3094 + $0x4] sm:$0xf]
      %v3097 = vld [vmem:[%s3094 + $0x8] sm:$0xf]
      %v3098 = vld [vmem:[%s3094 + $0xc] sm:$0xf]
      %v3099 = vld [vmem:[%s3094 + $0x10] sm:$0xf]
      %v3100 = vld [vmem:[%s3094 + $0x14] sm:$0xf]
      %v3101 = vld [vmem:[%s3094 + $0x18] sm:$0xf]
      %v3102 = vld [vmem:[%s3094 + $0x1c] sm:$0xf]
      %v3103 = vld [vmem:[%s3094 + $0x20] sm:$0xf]
      %v3104 = vld [vmem:[%s3094 + $0x24] sm:$0xf]
      %v3105 = vld [vmem:[%s3094 + $0x28] sm:$0xf]
      %v3106 = vld [vmem:[%s3094 + $0x2c] sm:$0xf]
      %v3107 = vld [vmem:[%s3094 + $0x30] sm:$0xf]
      %v3108 = vld [vmem:[%s3094 + $0x34] sm:$0xf]
      %v3109 = vld [vmem:[%s3094 + $0x38] sm:$0xf]
      %v3110 = vld [vmem:[%s3094 + $0x3c] sm:$0xf]
      %v3111 = vld [vmem:[%s3094 + $0x40] sm:$0xf]
      %v3112 = vld [vmem:[%s3094 + $0x44] sm:$0xf]
      %v3113 = vld [vmem:[%s3094 + $0x48] sm:$0xf]
      %v3114 = vld [vmem:[%s3094 + $0x4c] sm:$0xf]
      %v3115 = vld [vmem:[%s3094 + $0x50] sm:$0xf]
      %v3116 = vld [vmem:[%s3094 + $0x54] sm:$0xf]
      %v3117 = vld [vmem:[%s3094 + $0x58] sm:$0xf]
      %v3118 = vld [vmem:[%s3094 + $0x5c] sm:$0xf]
      %v3119 = vld [vmem:[%s3094 + $0x60] sm:$0xf]
      %v3120 = vld [vmem:[%s3094 + $0x64] sm:$0xf]
      %v3121 = vld [vmem:[%s3094 + $0x68] sm:$0xf]
      %v3122 = vld [vmem:[%s3094 + $0x6c] sm:$0xf]
      %v3123 = vld [vmem:[%s3094 + $0x70] sm:$0xf]
      %v3124 = vld [vmem:[%s3094 + $0x74] sm:$0xf]
      %v3125 = vld [vmem:[%s3094 + $0x78] sm:$0xf]
      %v3126 = vld [vmem:[%s3094 + $0x7c] sm:$0xf]
      %v3127 = vld [vmem:[%s3094 + $0x80] sm:$0xf]
      %v3128 = vld [vmem:[%s3094 + $0x84] sm:$0xf]
      %v3129 = vld [vmem:[%s3094 + $0x88] sm:$0xf]
      %v3130 = vld [vmem:[%s3094 + $0x8c] sm:$0xf]
      %v3131 = vld [vmem:[%s3094 + $0x90] sm:$0xf]
      %v3132 = vld [vmem:[%s3094 + $0x94] sm:$0xf]
      %v3133 = vld [vmem:[%s3094 + $0x98] sm:$0xf]
      %v3134 = vld [vmem:[%s3094 + $0x9c] sm:$0xf]
      %v3135 = vld [vmem:[%s3094 + $0xa0] sm:$0xf]
      %v3136 = vld [vmem:[%s3094 + $0xa4] sm:$0xf]
      %v3137 = vld [vmem:[%s3094 + $0xa8] sm:$0xf]
      %v3138 = vld [vmem:[%s3094 + $0xac] sm:$0xf]
      %v3139 = vld [vmem:[%s3094 + $0xb0] sm:$0xf]
      %v3140 = vld [vmem:[%s3094 + $0xb4] sm:$0xf]
      %v3141 = vld [vmem:[%s3094 + $0xb8] sm:$0xf]
      %v3142 = vld [vmem:[%s3094 + $0xbc] sm:$0xf]
      %v3143 = vld [vmem:[%s3094 + $0xc0] sm:$0xf]
      %v3144 = vld [vmem:[%s3094 + $0xc4] sm:$0xf]
      %v3145 = vld [vmem:[%s3094 + $0xc8] sm:$0xf]
      %v3146 = vld [vmem:[%s3094 + $0xcc] sm:$0xf]
      %v3147 = vld [vmem:[%s3094 + $0xd0] sm:$0xf]
      %v3148 = vld [vmem:[%s3094 + $0xd4] sm:$0xf]
      %v3149 = vld [vmem:[%s3094 + $0xd8] sm:$0xf]
      %v3150 = vld [vmem:[%s3094 + $0xdc] sm:$0xf]
      %v3151 = vld [vmem:[%s3094 + $0xe0] sm:$0xf]
      %v3152 = vld [vmem:[%s3094 + $0xe4] sm:$0xf]
      %v3153 = vld [vmem:[%s3094 + $0xe8] sm:$0xf]
      %v3154 = vld [vmem:[%s3094 + $0xec] sm:$0xf]
      %v3155 = vld [vmem:[%s3094 + $0xf0] sm:$0xf]
      %v3156 = vld [vmem:[%s3094 + $0xf4] sm:$0xf]
      %v3157 = vld [vmem:[%s3094 + $0xf8] sm:$0xf]
      %v3158 = vld [vmem:[%s3094 + $0xfc] sm:$0xf]
      %v3159 = vld [vmem:[%s3094 + $0x100] sm:$0xf]
      %v3160 = vld [vmem:[%s3094 + $0x104] sm:$0xf]
      %v3161 = vld [vmem:[%s3094 + $0x108] sm:$0x1]
      %v3229 = vunpack.c.l.b16 %v3095
      %v3230 = vunpack.c.l.b16 %v3096
      %v3231 = vunpack.c.l.b16 %v3097
      %v3232 = vunpack.c.l.b16 %v3098
      %v3233 = vunpack.c.l.b16 %v3099
      %v3234 = vunpack.c.l.b16 %v3100
      %v3235 = vunpack.c.l.b16 %v3101
      %v3236 = vunpack.c.l.b16 %v3102
      %v3237 = vunpack.c.l.b16 %v3103
      %v3238 = vunpack.c.l.b16 %v3104
      %v3239 = vunpack.c.l.b16 %v3105
      %v3240 = vunpack.c.l.b16 %v3106
      %v3241 = vunpack.c.l.b16 %v3107
      %v3242 = vunpack.c.l.b16 %v3108
      %v3243 = vunpack.c.l.b16 %v3109
      %v3244 = vunpack.c.l.b16 %v3110
      %v3245 = vunpack.c.l.b16 %v3111
      %v3246 = vunpack.c.l.b16 %v3112
      %v3247 = vunpack.c.l.b16 %v3113
      %v3248 = vunpack.c.l.b16 %v3114
      %v3249 = vunpack.c.l.b16 %v3115
      %v3250 = vunpack.c.l.b16 %v3116
      %v3251 = vunpack.c.l.b16 %v3117
      %v3252 = vunpack.c.l.b16 %v3118
      %v3253 = vunpack.c.l.b16 %v3119
      %v3254 = vunpack.c.l.b16 %v3120
      %v3255 = vunpack.c.l.b16 %v3121
      %v3256 = vunpack.c.l.b16 %v3122
      %v3257 = vunpack.c.l.b16 %v3123
      %v3258 = vunpack.c.l.b16 %v3124
      %v3259 = vunpack.c.l.b16 %v3125
      %v3260 = vunpack.c.l.b16 %v3126
      %v3261 = vunpack.c.l.b16 %v3127
      %v3262 = vunpack.c.l.b16 %v3128
      %v3263 = vunpack.c.l.b16 %v3129
      %v3264 = vunpack.c.l.b16 %v3130
      %v3265 = vunpack.c.l.b16 %v3131
      %v3266 = vunpack.c.l.b16 %v3132
      %v3267 = vunpack.c.l.b16 %v3133
      %v3268 = vunpack.c.l.b16 %v3134
      %v3269 = vunpack.c.l.b16 %v3135
      %v3270 = vunpack.c.l.b16 %v3136
      %v3271 = vunpack.c.l.b16 %v3137
      %v3272 = vunpack.c.l.b16 %v3138
      %v3273 = vunpack.c.l.b16 %v3139
      %v3274 = vunpack.c.l.b16 %v3140
      %v3275 = vunpack.c.l.b16 %v3141
      %v3276 = vunpack.c.l.b16 %v3142
      %v3277 = vunpack.c.l.b16 %v3143
      %v3278 = vunpack.c.l.b16 %v3144
      %v3279 = vunpack.c.l.b16 %v3145
      %v3280 = vunpack.c.l.b16 %v3146
      %v3281 = vunpack.c.l.b16 %v3147
      %v3282 = vunpack.c.l.b16 %v3148
      %v3283 = vunpack.c.l.b16 %v3149
      %v3284 = vunpack.c.l.b16 %v3150
      %v3285 = vunpack.c.l.b16 %v3151
      %v3286 = vunpack.c.l.b16 %v3152
      %v3287 = vunpack.c.l.b16 %v3153
      %v3288 = vunpack.c.l.b16 %v3154
      %v3289 = vunpack.c.l.b16 %v3155
      %v3290 = vunpack.c.l.b16 %v3156
      %v3291 = vunpack.c.l.b16 %v3157
      %v3292 = vunpack.c.l.b16 %v3158
      %v3293 = vunpack.c.l.b16 %v3159
      %v3294 = vunpack.c.l.b16 %v3160
      %v3295 = vunpack.c.l.b16 %v3161
      %v3296 = vpack.c.b16 %v3230, %v3229
      %v3297 = vpack.c.b16 %v3232, %v3231
      %v3298 = vpack.c.b16 %v3234, %v3233
      %v3299 = vpack.c.b16 %v3236, %v3235
      %v3300 = vpack.c.b16 %v3238, %v3237
      %v3301 = vpack.c.b16 %v3240, %v3239
      %v3302 = vpack.c.b16 %v3242, %v3241
      %v3303 = vpack.c.b16 %v3244, %v3243
      %v3304 = vpack.c.b16 %v3246, %v3245
      %v3305 = vpack.c.b16 %v3248, %v3247
      %v3306 = vpack.c.b16 %v3250, %v3249
      %v3307 = vpack.c.b16 %v3252, %v3251
      %v3308 = vpack.c.b16 %v3254, %v3253
      %v3309 = vpack.c.b16 %v3256, %v3255
      %v3310 = vpack.c.b16 %v3258, %v3257
      %v3311 = vpack.c.b16 %v3260, %v3259
      %v3312 = vpack.c.b16 %v3262, %v3261
      %v3313 = vpack.c.b16 %v3264, %v3263
      %v3314 = vpack.c.b16 %v3266, %v3265
      %v3315 = vpack.c.b16 %v3268, %v3267
      %v3316 = vpack.c.b16 %v3270, %v3269
      %v3317 = vpack.c.b16 %v3272, %v3271
      %v3318 = vpack.c.b16 %v3274, %v3273
      %v3319 = vpack.c.b16 %v3276, %v3275
      %v3320 = vpack.c.b16 %v3278, %v3277
      %v3321 = vpack.c.b16 %v3280, %v3279
      %v3322 = vpack.c.b16 %v3282, %v3281
      %v3323 = vpack.c.b16 %v3284, %v3283
      %v3324 = vpack.c.b16 %v3286, %v3285
      %v3325 = vpack.c.b16 %v3288, %v3287
      %v3326 = vpack.c.b16 %v3290, %v3289
      %v3327 = vpack.c.b16 %v3292, %v3291
      %v3328 = vpack.c.b16 %v3294, %v3293
      %v3329 = vpack.c.b16 %v3295, %v3295
      %v3364 = vand.u32 %v3329, %v1115
      %3366 = vmatprep.subr.bf16.mxu0 0
      %3367 = vmatpush1.bf16.msra.mxu0 %v3303
      %3368 = vmatprep.subr.bf16.mxu0 0
      %3369 = vmatpush1.bf16.msra.mxu0 %v3302
      %3370 = vmatprep.subr.bf16.mxu0 0
      %3371 = vmatpush1.bf16.msra.mxu0 %v3301
      %3372 = vmatprep.subr.bf16.mxu0 0
      %3373 = vmatpush1.bf16.msra.mxu0 %v3300
      %3374 = vmatprep.subr.bf16.mxu0 0
      %3375 = vmatpush1.bf16.msra.mxu0 %v3299
      %3376 = vmatprep.subr.bf16.mxu0 0
      %3377 = vmatpush1.bf16.msra.mxu0 %v3298
      %3378 = vmatprep.subr.bf16.mxu0 0
      %3379 = vmatpush1.bf16.msra.mxu0 %v3297
      %3380 = vmatprep.subr.bf16.mxu0 0
      %3381 = vmatpush1.bf16.msra.mxu0 %v3296
      %3382 = vmatprep.subr.bf16.mxu0 0
      %3383 = vmatpush2.bf16.msra.mxu0 %v3311
      %3384 = vmatprep.subr.bf16.mxu0 0
      %3385 = vmatpush2.bf16.msra.mxu0 %v3310
      %3386 = vmatprep.subr.bf16.mxu0 0
      %3387 = vmatpush2.bf16.msra.mxu0 %v3309
      %3388 = vmatprep.subr.bf16.mxu0 0
      %3389 = vmatpush2.bf16.msra.mxu0 %v3308
      %3390 = vmatprep.subr.bf16.mxu0 0
      %3391 = vmatpush2.bf16.msra.mxu0 %v3307
      %3392 = vmatprep.subr.bf16.mxu0 0
      %3393 = vmatpush2.bf16.msra.mxu0 %v3306
      %3394 = vmatprep.subr.bf16.mxu0 0
      %3395 = vmatpush2.bf16.msra.mxu0 %v3305
      %3396 = vmatprep.subr.bf16.mxu0 0
      %3397 = vmatpush2.bf16.msra.mxu0 %v3304
      %3398 = vmatprep.mubr.bf16.mxu0 %v837
      %3399 = vmatmul.mubr.bf16.gmra.mxu0 %v836
      %v3400 = vpop.f32.mrf.mxu0
      %v3401 = vadd.f32 0.0, %v3400
      %v3402 = vpop.f32.mrf.mxu0
      %v3403 = vpop.f32.mrf.mxu0
      %v3404 = vpop.f32.mrf.mxu0
      %3405 = vdwg.mxu0
      %3406 = vmatprep.subr.bf16.mxu0 0
      %3407 = vmatpush1.bf16.msra.mxu0 %v3319
      %3408 = vmatprep.subr.bf16.mxu0 0
      %3409 = vmatpush1.bf16.msra.mxu0 %v3318
      %3410 = vmatprep.subr.bf16.mxu0 0
      %3411 = vmatpush1.bf16.msra.mxu0 %v3317
      %3412 = vmatprep.subr.bf16.mxu0 0
      %3413 = vmatpush1.bf16.msra.mxu0 %v3316
      %3414 = vmatprep.subr.bf16.mxu0 0
      %3415 = vmatpush1.bf16.msra.mxu0 %v3315
      %3416 = vmatprep.subr.bf16.mxu0 0
      %3417 = vmatpush1.bf16.msra.mxu0 %v3314
      %3418 = vmatprep.subr.bf16.mxu0 0
      %3419 = vmatpush1.bf16.msra.mxu0 %v3313
      %3420 = vmatprep.subr.bf16.mxu0 0
      %3421 = vmatpush1.bf16.msra.mxu0 %v3312
      %3422 = vmatprep.subr.bf16.mxu0 0
      %3423 = vmatpush2.bf16.msra.mxu0 %v3327
      %3424 = vmatprep.subr.bf16.mxu0 0
      %3425 = vmatpush2.bf16.msra.mxu0 %v3326
      %3426 = vmatprep.subr.bf16.mxu0 0
      %3427 = vmatpush2.bf16.msra.mxu0 %v3325
      %3428 = vmatprep.subr.bf16.mxu0 0
      %3429 = vmatpush2.bf16.msra.mxu0 %v3324
      %3430 = vmatprep.subr.bf16.mxu0 0
      %3431 = vmatpush2.bf16.msra.mxu0 %v3323
      %3432 = vmatprep.subr.bf16.mxu0 0
      %3433 = vmatpush2.bf16.msra.mxu0 %v3322
      %3434 = vmatprep.subr.bf16.mxu0 0
      %3435 = vmatpush2.bf16.msra.mxu0 %v3321
      %3436 = vmatprep.subr.bf16.mxu0 0
      %3437 = vmatpush2.bf16.msra.mxu0 %v3320
      %3438 = vmatprep.mubr.bf16.mxu0 %v839
      %3439 = vmatmul.mubr.bf16.gmra.mxu0 %v838
      %v3440 = vpop.f32.mrf.mxu0
      %v3441 = vadd.f32 %v3401, %v3440
      %v3442 = vpop.f32.mrf.mxu0
      %v3443 = vpop.f32.mrf.mxu0
      %v3444 = vpop.f32.mrf.mxu0
      %3445 = vdwg.mxu0
      %3446 = vmatprep.subr.bf16.mxu0 0
      %3447 = vmatpush1.bf16.msra.mxu0 0
      %3448 = vmatprep.subr.bf16.mxu0 0
      %3449 = vmatpush1.bf16.msra.mxu0 0
      %3450 = vmatprep.subr.bf16.mxu0 0
      %3451 = vmatpush1.bf16.msra.mxu0 0
      %3452 = vmatprep.subr.bf16.mxu0 0
      %3453 = vmatpush1.bf16.msra.mxu0 0
      %3454 = vmatprep.subr.bf16.mxu0 0
      %3455 = vmatpush1.bf16.msra.mxu0 0
      %3456 = vmatprep.subr.bf16.mxu0 0
      %3457 = vmatpush1.bf16.msra.mxu0 0
      %3458 = vmatprep.subr.bf16.mxu0 0
      %3459 = vmatpush1.bf16.msra.mxu0 %v3364
      %3460 = vmatprep.subr.bf16.mxu0 0
      %3461 = vmatpush1.bf16.msra.mxu0 %v3328
      %3462 = vmatprep.subr.bf16.mxu0 0
      %3463 = vmatpush2.bf16.msra.mxu0 0
      %3464 = vmatprep.subr.bf16.mxu0 0
      %3465 = vmatpush2.bf16.msra.mxu0 0
      %3466 = vmatprep.subr.bf16.mxu0 0
      %3467 = vmatpush2.bf16.msra.mxu0 0
      %3468 = vmatprep.subr.bf16.mxu0 0
      %3469 = vmatpush2.bf16.msra.mxu0 0
      %3470 = vmatprep.subr.bf16.mxu0 0
      %3471 = vmatpush2.bf16.msra.mxu0 0
      %3472 = vmatprep.subr.bf16.mxu0 0
      %3473 = vmatpush2.bf16.msra.mxu0 0
      %3474 = vmatprep.subr.bf16.mxu0 0
      %3475 = vmatpush2.bf16.msra.mxu0 0
      %3476 = vmatprep.subr.bf16.mxu0 0
      %3477 = vmatpush2.bf16.msra.mxu0 0
      %3478 = vmatprep.mubr.bf16.mxu0 0
      %3479 = vmatmul.mubr.bf16.gmra.mxu0 %v1111
      %v3480 = vpop.f32.mrf.mxu0
      %v3481 = vadd.f32 %v3441, %v3480
      %v3482 = vpop.f32.mrf.mxu0
      %v3483 = vpop.f32.mrf.mxu0
      %v3484 = vpop.f32.mrf.mxu0
      %3485 = vdwg.mxu0
      %s3486 = scalar_lea.vmem %s4, 40
      %v3487 = vld [vmem:[%s3486] sm:$0xf]
      %v3488 = vld [vmem:[%s3486 + $0x4] sm:$0xf]
      %v3489 = vpack.c.bf16 %v3481, %v3481
      %v3492 = vunpack.c.l.b16 %v3487
      %v3493 = vunpack.c.l.b16 %v3488
      %v3494 = vpack.c.b16 %v3493, %v3492
      %v3496 = vsel %vm1643, %v3494, 0
      %v3499 = vsel %vm1647, %v3489, 0
      %3501 = vmatprep.subr.bf16.mxu0 0
      %3502 = vmatpush1.bf16.msra.mxu0 0
      %3503 = vmatprep.subr.bf16.mxu0 0
      %3504 = vmatpush1.bf16.msra.mxu0 0
      %3505 = vmatprep.subr.bf16.mxu0 0
      %3506 = vmatpush1.bf16.msra.mxu0 0
      %3507 = vmatprep.subr.bf16.mxu0 0
      %3508 = vmatpush1.bf16.msra.mxu0 0
      %3509 = vmatprep.subr.bf16.mxu0 0
      %3510 = vmatpush1.bf16.msra.mxu0 0
      %3511 = vmatprep.subr.bf16.mxu0 0
      %3512 = vmatpush1.bf16.msra.mxu0 0
      %3513 = vmatprep.subr.bf16.mxu0 0
      %3514 = vmatpush1.bf16.msra.mxu0 0
      %3515 = vmatprep.subr.bf16.mxu0 0
      %3516 = vmatpush1.bf16.msra.mxu0 %v3499
      %3517 = vmatprep.subr.bf16.mxu0 0
      %3518 = vmatpush2.bf16.msra.mxu0 0
      %3519 = vmatprep.subr.bf16.mxu0 0
      %3520 = vmatpush2.bf16.msra.mxu0 0
      %3521 = vmatprep.subr.bf16.mxu0 0
      %3522 = vmatpush2.bf16.msra.mxu0 0
      %3523 = vmatprep.subr.bf16.mxu0 0
      %3524 = vmatpush2.bf16.msra.mxu0 0
      %3525 = vmatprep.subr.bf16.mxu0 0
      %3526 = vmatpush2.bf16.msra.mxu0 0
      %3527 = vmatprep.subr.bf16.mxu0 0
      %3528 = vmatpush2.bf16.msra.mxu0 0
      %3529 = vmatprep.subr.bf16.mxu0 0
      %3530 = vmatpush2.bf16.msra.mxu0 0
      %3531 = vmatprep.subr.bf16.mxu0 0
      %3532 = vmatpush2.bf16.msra.mxu0 0
      %3533 = vmatprep.mubr.bf16.mxu0 0
      %3534 = vmatmul.mubr.bf16.gmra.mxu0 %v3496
      %v3535 = vpop.f32.mrf.mxu0
      %v3536 = vadd.f32 0.0, %v3535
      %v3537 = vpop.f32.mrf.mxu0
      %v3538 = vpop.f32.mrf.mxu0
      %v3539 = vadd.f32 0.0, %v3538
      %v3540 = vpop.f32.mrf.mxu0
      %3541 = vdwg.mxu0
      %v3542 = vadd.f32 %v3092, %v3536
      %v3543 = vadd.f32 %v3093, %v3539
      %s3544 = scalar_lea.vmem %s3, 1608
      %v3545 = vld [vmem:[%s3544] sm:$0xf]
      %v3546 = vld [vmem:[%s3544 + $0x4] sm:$0xf]
      %v3547 = vld [vmem:[%s3544 + $0x8] sm:$0xf]
      %v3548 = vld [vmem:[%s3544 + $0xc] sm:$0xf]
      %v3549 = vld [vmem:[%s3544 + $0x10] sm:$0xf]
      %v3550 = vld [vmem:[%s3544 + $0x14] sm:$0xf]
      %v3551 = vld [vmem:[%s3544 + $0x18] sm:$0xf]
      %v3552 = vld [vmem:[%s3544 + $0x1c] sm:$0xf]
      %v3553 = vld [vmem:[%s3544 + $0x20] sm:$0xf]
      %v3554 = vld [vmem:[%s3544 + $0x24] sm:$0xf]
      %v3555 = vld [vmem:[%s3544 + $0x28] sm:$0xf]
      %v3556 = vld [vmem:[%s3544 + $0x2c] sm:$0xf]
      %v3557 = vld [vmem:[%s3544 + $0x30] sm:$0xf]
      %v3558 = vld [vmem:[%s3544 + $0x34] sm:$0xf]
      %v3559 = vld [vmem:[%s3544 + $0x38] sm:$0xf]
      %v3560 = vld [vmem:[%s3544 + $0x3c] sm:$0xf]
      %v3561 = vld [vmem:[%s3544 + $0x40] sm:$0xf]
      %v3562 = vld [vmem:[%s3544 + $0x44] sm:$0xf]
      %v3563 = vld [vmem:[%s3544 + $0x48] sm:$0xf]
      %v3564 = vld [vmem:[%s3544 + $0x4c] sm:$0xf]
      %v3565 = vld [vmem:[%s3544 + $0x50] sm:$0xf]
      %v3566 = vld [vmem:[%s3544 + $0x54] sm:$0xf]
      %v3567 = vld [vmem:[%s3544 + $0x58] sm:$0xf]
      %v3568 = vld [vmem:[%s3544 + $0x5c] sm:$0xf]
      %v3569 = vld [vmem:[%s3544 + $0x60] sm:$0xf]
      %v3570 = vld [vmem:[%s3544 + $0x64] sm:$0xf]
      %v3571 = vld [vmem:[%s3544 + $0x68] sm:$0xf]
      %v3572 = vld [vmem:[%s3544 + $0x6c] sm:$0xf]
      %v3573 = vld [vmem:[%s3544 + $0x70] sm:$0xf]
      %v3574 = vld [vmem:[%s3544 + $0x74] sm:$0xf]
      %v3575 = vld [vmem:[%s3544 + $0x78] sm:$0xf]
      %v3576 = vld [vmem:[%s3544 + $0x7c] sm:$0xf]
      %v3577 = vld [vmem:[%s3544 + $0x80] sm:$0xf]
      %v3578 = vld [vmem:[%s3544 + $0x84] sm:$0xf]
      %v3579 = vld [vmem:[%s3544 + $0x88] sm:$0xf]
      %v3580 = vld [vmem:[%s3544 + $0x8c] sm:$0xf]
      %v3581 = vld [vmem:[%s3544 + $0x90] sm:$0xf]
      %v3582 = vld [vmem:[%s3544 + $0x94] sm:$0xf]
      %v3583 = vld [vmem:[%s3544 + $0x98] sm:$0xf]
      %v3584 = vld [vmem:[%s3544 + $0x9c] sm:$0xf]
      %v3585 = vld [vmem:[%s3544 + $0xa0] sm:$0xf]
      %v3586 = vld [vmem:[%s3544 + $0xa4] sm:$0xf]
      %v3587 = vld [vmem:[%s3544 + $0xa8] sm:$0xf]
      %v3588 = vld [vmem:[%s3544 + $0xac] sm:$0xf]
      %v3589 = vld [vmem:[%s3544 + $0xb0] sm:$0xf]
      %v3590 = vld [vmem:[%s3544 + $0xb4] sm:$0xf]
      %v3591 = vld [vmem:[%s3544 + $0xb8] sm:$0xf]
      %v3592 = vld [vmem:[%s3544 + $0xbc] sm:$0xf]
      %v3593 = vld [vmem:[%s3544 + $0xc0] sm:$0xf]
      %v3594 = vld [vmem:[%s3544 + $0xc4] sm:$0xf]
      %v3595 = vld [vmem:[%s3544 + $0xc8] sm:$0xf]
      %v3596 = vld [vmem:[%s3544 + $0xcc] sm:$0xf]
      %v3597 = vld [vmem:[%s3544 + $0xd0] sm:$0xf]
      %v3598 = vld [vmem:[%s3544 + $0xd4] sm:$0xf]
      %v3599 = vld [vmem:[%s3544 + $0xd8] sm:$0xf]
      %v3600 = vld [vmem:[%s3544 + $0xdc] sm:$0xf]
      %v3601 = vld [vmem:[%s3544 + $0xe0] sm:$0xf]
      %v3602 = vld [vmem:[%s3544 + $0xe4] sm:$0xf]
      %v3603 = vld [vmem:[%s3544 + $0xe8] sm:$0xf]
      %v3604 = vld [vmem:[%s3544 + $0xec] sm:$0xf]
      %v3605 = vld [vmem:[%s3544 + $0xf0] sm:$0xf]
      %v3606 = vld [vmem:[%s3544 + $0xf4] sm:$0xf]
      %v3607 = vld [vmem:[%s3544 + $0xf8] sm:$0xf]
      %v3608 = vld [vmem:[%s3544 + $0xfc] sm:$0xf]
      %v3609 = vld [vmem:[%s3544 + $0x100] sm:$0xf]
      %v3610 = vld [vmem:[%s3544 + $0x104] sm:$0xf]
      %v3611 = vld [vmem:[%s3544 + $0x108] sm:$0x1]
      %v3679 = vunpack.c.l.b16 %v3545
      %v3680 = vunpack.c.l.b16 %v3546
      %v3681 = vunpack.c.l.b16 %v3547
      %v3682 = vunpack.c.l.b16 %v3548
      %v3683 = vunpack.c.l.b16 %v3549
      %v3684 = vunpack.c.l.b16 %v3550
      %v3685 = vunpack.c.l.b16 %v3551
      %v3686 = vunpack.c.l.b16 %v3552
      %v3687 = vunpack.c.l.b16 %v3553
      %v3688 = vunpack.c.l.b16 %v3554
      %v3689 = vunpack.c.l.b16 %v3555
      %v3690 = vunpack.c.l.b16 %v3556
      %v3691 = vunpack.c.l.b16 %v3557
      %v3692 = vunpack.c.l.b16 %v3558
      %v3693 = vunpack.c.l.b16 %v3559
      %v3694 = vunpack.c.l.b16 %v3560
      %v3695 = vunpack.c.l.b16 %v3561
      %v3696 = vunpack.c.l.b16 %v3562
      %v3697 = vunpack.c.l.b16 %v3563
      %v3698 = vunpack.c.l.b16 %v3564
      %v3699 = vunpack.c.l.b16 %v3565
      %v3700 = vunpack.c.l.b16 %v3566
      %v3701 = vunpack.c.l.b16 %v3567
      %v3702 = vunpack.c.l.b16 %v3568
      %v3703 = vunpack.c.l.b16 %v3569
      %v3704 = vunpack.c.l.b16 %v3570
      %v3705 = vunpack.c.l.b16 %v3571
      %v3706 = vunpack.c.l.b16 %v3572
      %v3707 = vunpack.c.l.b16 %v3573
      %v3708 = vunpack.c.l.b16 %v3574
      %v3709 = vunpack.c.l.b16 %v3575
      %v3710 = vunpack.c.l.b16 %v3576
      %v3711 = vunpack.c.l.b16 %v3577
      %v3712 = vunpack.c.l.b16 %v3578
      %v3713 = vunpack.c.l.b16 %v3579
      %v3714 = vunpack.c.l.b16 %v3580
      %v3715 = vunpack.c.l.b16 %v3581
      %v3716 = vunpack.c.l.b16 %v3582
      %v3717 = vunpack.c.l.b16 %v3583
      %v3718 = vunpack.c.l.b16 %v3584
      %v3719 = vunpack.c.l.b16 %v3585
      %v3720 = vunpack.c.l.b16 %v3586
      %v3721 = vunpack.c.l.b16 %v3587
      %v3722 = vunpack.c.l.b16 %v3588
      %v3723 = vunpack.c.l.b16 %v3589
      %v3724 = vunpack.c.l.b16 %v3590
      %v3725 = vunpack.c.l.b16 %v3591
      %v3726 = vunpack.c.l.b16 %v3592
      %v3727 = vunpack.c.l.b16 %v3593
      %v3728 = vunpack.c.l.b16 %v3594
      %v3729 = vunpack.c.l.b16 %v3595
      %v3730 = vunpack.c.l.b16 %v3596
      %v3731 = vunpack.c.l.b16 %v3597
      %v3732 = vunpack.c.l.b16 %v3598
      %v3733 = vunpack.c.l.b16 %v3599
      %v3734 = vunpack.c.l.b16 %v3600
      %v3735 = vunpack.c.l.b16 %v3601
      %v3736 = vunpack.c.l.b16 %v3602
      %v3737 = vunpack.c.l.b16 %v3603
      %v3738 = vunpack.c.l.b16 %v3604
      %v3739 = vunpack.c.l.b16 %v3605
      %v3740 = vunpack.c.l.b16 %v3606
      %v3741 = vunpack.c.l.b16 %v3607
      %v3742 = vunpack.c.l.b16 %v3608
      %v3743 = vunpack.c.l.b16 %v3609
      %v3744 = vunpack.c.l.b16 %v3610
      %v3745 = vunpack.c.l.b16 %v3611
      %v3746 = vpack.c.b16 %v3680, %v3679
      %v3747 = vpack.c.b16 %v3682, %v3681
      %v3748 = vpack.c.b16 %v3684, %v3683
      %v3749 = vpack.c.b16 %v3686, %v3685
      %v3750 = vpack.c.b16 %v3688, %v3687
      %v3751 = vpack.c.b16 %v3690, %v3689
      %v3752 = vpack.c.b16 %v3692, %v3691
      %v3753 = vpack.c.b16 %v3694, %v3693
      %v3754 = vpack.c.b16 %v3696, %v3695
      %v3755 = vpack.c.b16 %v3698, %v3697
      %v3756 = vpack.c.b16 %v3700, %v3699
      %v3757 = vpack.c.b16 %v3702, %v3701
      %v3758 = vpack.c.b16 %v3704, %v3703
      %v3759 = vpack.c.b16 %v3706, %v3705
      %v3760 = vpack.c.b16 %v3708, %v3707
      %v3761 = vpack.c.b16 %v3710, %v3709
      %v3762 = vpack.c.b16 %v3712, %v3711
      %v3763 = vpack.c.b16 %v3714, %v3713
      %v3764 = vpack.c.b16 %v3716, %v3715
      %v3765 = vpack.c.b16 %v3718, %v3717
      %v3766 = vpack.c.b16 %v3720, %v3719
      %v3767 = vpack.c.b16 %v3722, %v3721
      %v3768 = vpack.c.b16 %v3724, %v3723
      %v3769 = vpack.c.b16 %v3726, %v3725
      %v3770 = vpack.c.b16 %v3728, %v3727
      %v3771 = vpack.c.b16 %v3730, %v3729
      %v3772 = vpack.c.b16 %v3732, %v3731
      %v3773 = vpack.c.b16 %v3734, %v3733
      %v3774 = vpack.c.b16 %v3736, %v3735
      %v3775 = vpack.c.b16 %v3738, %v3737
      %v3776 = vpack.c.b16 %v3740, %v3739
      %v3777 = vpack.c.b16 %v3742, %v3741
      %v3778 = vpack.c.b16 %v3744, %v3743
      %v3779 = vpack.c.b16 %v3745, %v3745
      %v3814 = vand.u32 %v3779, %v1115
      %3816 = vmatprep.subr.bf16.mxu0 0
      %3817 = vmatpush1.bf16.msra.mxu0 %v3753
      %3818 = vmatprep.subr.bf16.mxu0 0
      %3819 = vmatpush1.bf16.msra.mxu0 %v3752
      %3820 = vmatprep.subr.bf16.mxu0 0
      %3821 = vmatpush1.bf16.msra.mxu0 %v3751
      %3822 = vmatprep.subr.bf16.mxu0 0
      %3823 = vmatpush1.bf16.msra.mxu0 %v3750
      %3824 = vmatprep.subr.bf16.mxu0 0
      %3825 = vmatpush1.bf16.msra.mxu0 %v3749
      %3826 = vmatprep.subr.bf16.mxu0 0
      %3827 = vmatpush1.bf16.msra.mxu0 %v3748
      %3828 = vmatprep.subr.bf16.mxu0 0
      %3829 = vmatpush1.bf16.msra.mxu0 %v3747
      %3830 = vmatprep.subr.bf16.mxu0 0
      %3831 = vmatpush1.bf16.msra.mxu0 %v3746
      %3832 = vmatprep.subr.bf16.mxu0 0
      %3833 = vmatpush2.bf16.msra.mxu0 %v3761
      %3834 = vmatprep.subr.bf16.mxu0 0
      %3835 = vmatpush2.bf16.msra.mxu0 %v3760
      %3836 = vmatprep.subr.bf16.mxu0 0
      %3837 = vmatpush2.bf16.msra.mxu0 %v3759
      %3838 = vmatprep.subr.bf16.mxu0 0
      %3839 = vmatpush2.bf16.msra.mxu0 %v3758
      %3840 = vmatprep.subr.bf16.mxu0 0
      %3841 = vmatpush2.bf16.msra.mxu0 %v3757
      %3842 = vmatprep.subr.bf16.mxu0 0
      %3843 = vmatpush2.bf16.msra.mxu0 %v3756
      %3844 = vmatprep.subr.bf16.mxu0 0
      %3845 = vmatpush2.bf16.msra.mxu0 %v3755
      %3846 = vmatprep.subr.bf16.mxu0 0
      %3847 = vmatpush2.bf16.msra.mxu0 %v3754
      %3848 = vmatprep.mubr.bf16.mxu0 %v837
      %3849 = vmatmul.mubr.bf16.gmra.mxu0 %v836
      %v3850 = vpop.f32.mrf.mxu0
      %v3851 = vadd.f32 0.0, %v3850
      %v3852 = vpop.f32.mrf.mxu0
      %v3853 = vpop.f32.mrf.mxu0
      %v3854 = vpop.f32.mrf.mxu0
      %3855 = vdwg.mxu0
      %3856 = vmatprep.subr.bf16.mxu0 0
      %3857 = vmatpush1.bf16.msra.mxu0 %v3769
      %3858 = vmatprep.subr.bf16.mxu0 0
      %3859 = vmatpush1.bf16.msra.mxu0 %v3768
      %3860 = vmatprep.subr.bf16.mxu0 0
      %3861 = vmatpush1.bf16.msra.mxu0 %v3767
      %3862 = vmatprep.subr.bf16.mxu0 0
      %3863 = vmatpush1.bf16.msra.mxu0 %v3766
      %3864 = vmatprep.subr.bf16.mxu0 0
      %3865 = vmatpush1.bf16.msra.mxu0 %v3765
      %3866 = vmatprep.subr.bf16.mxu0 0
      %3867 = vmatpush1.bf16.msra.mxu0 %v3764
      %3868 = vmatprep.subr.bf16.mxu0 0
      %3869 = vmatpush1.bf16.msra.mxu0 %v3763
      %3870 = vmatprep.subr.bf16.mxu0 0
      %3871 = vmatpush1.bf16.msra.mxu0 %v3762
      %3872 = vmatprep.subr.bf16.mxu0 0
      %3873 = vmatpush2.bf16.msra.mxu0 %v3777
      %3874 = vmatprep.subr.bf16.mxu0 0
      %3875 = vmatpush2.bf16.msra.mxu0 %v3776
      %3876 = vmatprep.subr.bf16.mxu0 0
      %3877 = vmatpush2.bf16.msra.mxu0 %v3775
      %3878 = vmatprep.subr.bf16.mxu0 0
      %3879 = vmatpush2.bf16.msra.mxu0 %v3774
      %3880 = vmatprep.subr.bf16.mxu0 0
      %3881 = vmatpush2.bf16.msra.mxu0 %v3773
      %3882 = vmatprep.subr.bf16.mxu0 0
      %3883 = vmatpush2.bf16.msra.mxu0 %v3772
      %3884 = vmatprep.subr.bf16.mxu0 0
      %3885 = vmatpush2.bf16.msra.mxu0 %v3771
      %3886 = vmatprep.subr.bf16.mxu0 0
      %3887 = vmatpush2.bf16.msra.mxu0 %v3770
      %3888 = vmatprep.mubr.bf16.mxu0 %v839
      %3889 = vmatmul.mubr.bf16.gmra.mxu0 %v838
      %v3890 = vpop.f32.mrf.mxu0
      %v3891 = vadd.f32 %v3851, %v3890
      %v3892 = vpop.f32.mrf.mxu0
      %v3893 = vpop.f32.mrf.mxu0
      %v3894 = vpop.f32.mrf.mxu0
      %3895 = vdwg.mxu0
      %3896 = vmatprep.subr.bf16.mxu0 0
      %3897 = vmatpush1.bf16.msra.mxu0 0
      %3898 = vmatprep.subr.bf16.mxu0 0
      %3899 = vmatpush1.bf16.msra.mxu0 0
      %3900 = vmatprep.subr.bf16.mxu0 0
      %3901 = vmatpush1.bf16.msra.mxu0 0
      %3902 = vmatprep.subr.bf16.mxu0 0
      %3903 = vmatpush1.bf16.msra.mxu0 0
      %3904 = vmatprep.subr.bf16.mxu0 0
      %3905 = vmatpush1.bf16.msra.mxu0 0
      %3906 = vmatprep.subr.bf16.mxu0 0
      %3907 = vmatpush1.bf16.msra.mxu0 0
      %3908 = vmatprep.subr.bf16.mxu0 0
      %3909 = vmatpush1.bf16.msra.mxu0 %v3814
      %3910 = vmatprep.subr.bf16.mxu0 0
      %3911 = vmatpush1.bf16.msra.mxu0 %v3778
      %3912 = vmatprep.subr.bf16.mxu0 0
      %3913 = vmatpush2.bf16.msra.mxu0 0
      %3914 = vmatprep.subr.bf16.mxu0 0
      %3915 = vmatpush2.bf16.msra.mxu0 0
      %3916 = vmatprep.subr.bf16.mxu0 0
      %3917 = vmatpush2.bf16.msra.mxu0 0
      %3918 = vmatprep.subr.bf16.mxu0 0
      %3919 = vmatpush2.bf16.msra.mxu0 0
      %3920 = vmatprep.subr.bf16.mxu0 0
      %3921 = vmatpush2.bf16.msra.mxu0 0
      %3922 = vmatprep.subr.bf16.mxu0 0
      %3923 = vmatpush2.bf16.msra.mxu0 0
      %3924 = vmatprep.subr.bf16.mxu0 0
      %3925 = vmatpush2.bf16.msra.mxu0 0
      %3926 = vmatprep.subr.bf16.mxu0 0
      %3927 = vmatpush2.bf16.msra.mxu0 0
      %3928 = vmatprep.mubr.bf16.mxu0 0
      %3929 = vmatmul.mubr.bf16.gmra.mxu0 %v1111
      %v3930 = vpop.f32.mrf.mxu0
      %v3931 = vadd.f32 %v3891, %v3930
      %v3932 = vpop.f32.mrf.mxu0
      %v3933 = vpop.f32.mrf.mxu0
      %v3934 = vpop.f32.mrf.mxu0
      %3935 = vdwg.mxu0
      %s3936 = scalar_lea.vmem %s4, 48
      %v3937 = vld [vmem:[%s3936] sm:$0xf]
      %v3938 = vld [vmem:[%s3936 + $0x4] sm:$0xf]
      %v3939 = vpack.c.bf16 %v3931, %v3931
      %v3942 = vunpack.c.l.b16 %v3937
      %v3943 = vunpack.c.l.b16 %v3938
      %v3944 = vpack.c.b16 %v3943, %v3942
      %v3946 = vsel %vm1643, %v3944, 0
      %v3949 = vsel %vm1647, %v3939, 0
      %3951 = vmatprep.subr.bf16.mxu0 0
      %3952 = vmatpush1.bf16.msra.mxu0 0
      %3953 = vmatprep.subr.bf16.mxu0 0
      %3954 = vmatpush1.bf16.msra.mxu0 0
      %3955 = vmatprep.subr.bf16.mxu0 0
      %3956 = vmatpush1.bf16.msra.mxu0 0
      %3957 = vmatprep.subr.bf16.mxu0 0
      %3958 = vmatpush1.bf16.msra.mxu0 0
      %3959 = vmatprep.subr.bf16.mxu0 0
      %3960 = vmatpush1.bf16.msra.mxu0 0
      %3961 = vmatprep.subr.bf16.mxu0 0
      %3962 = vmatpush1.bf16.msra.mxu0 0
      %3963 = vmatprep.subr.bf16.mxu0 0
      %3964 = vmatpush1.bf16.msra.mxu0 0
      %3965 = vmatprep.subr.bf16.mxu0 0
      %3966 = vmatpush1.bf16.msra.mxu0 %v3949
      %3967 = vmatprep.subr.bf16.mxu0 0
      %3968 = vmatpush2.bf16.msra.mxu0 0
      %3969 = vmatprep.subr.bf16.mxu0 0
      %3970 = vmatpush2.bf16.msra.mxu0 0
      %3971 = vmatprep.subr.bf16.mxu0 0
      %3972 = vmatpush2.bf16.msra.mxu0 0
      %3973 = vmatprep.subr.bf16.mxu0 0
      %3974 = vmatpush2.bf16.msra.mxu0 0
      %3975 = vmatprep.subr.bf16.mxu0 0
      %3976 = vmatpush2.bf16.msra.mxu0 0
      %3977 = vmatprep.subr.bf16.mxu0 0
      %3978 = vmatpush2.bf16.msra.mxu0 0
      %3979 = vmatprep.subr.bf16.mxu0 0
      %3980 = vmatpush2.bf16.msra.mxu0 0
      %3981 = vmatprep.subr.bf16.mxu0 0
      %3982 = vmatpush2.bf16.msra.mxu0 0
      %3983 = vmatprep.mubr.bf16.mxu0 0
      %3984 = vmatmul.mubr.bf16.gmra.mxu0 %v3946
      %v3985 = vpop.f32.mrf.mxu0
      %v3986 = vadd.f32 0.0, %v3985
      %v3987 = vpop.f32.mrf.mxu0
      %v3988 = vpop.f32.mrf.mxu0
      %v3989 = vadd.f32 0.0, %v3988
      %v3990 = vpop.f32.mrf.mxu0
      %3991 = vdwg.mxu0
      %v3992 = vadd.f32 %v3542, %v3986
      %v3993 = vadd.f32 %v3543, %v3989
      %s3994 = scalar_lea.vmem %s3, 1876
      %v3995 = vld [vmem:[%s3994] sm:$0xf]
      %v3996 = vld [vmem:[%s3994 + $0x4] sm:$0xf]
      %v3997 = vld [vmem:[%s3994 + $0x8] sm:$0xf]
      %v3998 = vld [vmem:[%s3994 + $0xc] sm:$0xf]
      %v3999 = vld [vmem:[%s3994 + $0x10] sm:$0xf]
      %v4000 = vld [vmem:[%s3994 + $0x14] sm:$0xf]
      %v4001 = vld [vmem:[%s3994 + $0x18] sm:$0xf]
      %v4002 = vld [vmem:[%s3994 + $0x1c] sm:$0xf]
      %v4003 = vld [vmem:[%s3994 + $0x20] sm:$0xf]
      %v4004 = vld [vmem:[%s3994 + $0x24] sm:$0xf]
      %v4005 = vld [vmem:[%s3994 + $0x28] sm:$0xf]
      %v4006 = vld [vmem:[%s3994 + $0x2c] sm:$0xf]
      %v4007 = vld [vmem:[%s3994 + $0x30] sm:$0xf]
      %v4008 = vld [vmem:[%s3994 + $0x34] sm:$0xf]
      %v4009 = vld [vmem:[%s3994 + $0x38] sm:$0xf]
      %v4010 = vld [vmem:[%s3994 + $0x3c] sm:$0xf]
      %v4011 = vld [vmem:[%s3994 + $0x40] sm:$0xf]
      %v4012 = vld [vmem:[%s3994 + $0x44] sm:$0xf]
      %v4013 = vld [vmem:[%s3994 + $0x48] sm:$0xf]
      %v4014 = vld [vmem:[%s3994 + $0x4c] sm:$0xf]
      %v4015 = vld [vmem:[%s3994 + $0x50] sm:$0xf]
      %v4016 = vld [vmem:[%s3994 + $0x54] sm:$0xf]
      %v4017 = vld [vmem:[%s3994 + $0x58] sm:$0xf]
      %v4018 = vld [vmem:[%s3994 + $0x5c] sm:$0xf]
      %v4019 = vld [vmem:[%s3994 + $0x60] sm:$0xf]
      %v4020 = vld [vmem:[%s3994 + $0x64] sm:$0xf]
      %v4021 = vld [vmem:[%s3994 + $0x68] sm:$0xf]
      %v4022 = vld [vmem:[%s3994 + $0x6c] sm:$0xf]
      %v4023 = vld [vmem:[%s3994 + $0x70] sm:$0xf]
      %v4024 = vld [vmem:[%s3994 + $0x74] sm:$0xf]
      %v4025 = vld [vmem:[%s3994 + $0x78] sm:$0xf]
      %v4026 = vld [vmem:[%s3994 + $0x7c] sm:$0xf]
      %v4027 = vld [vmem:[%s3994 + $0x80] sm:$0xf]
      %v4028 = vld [vmem:[%s3994 + $0x84] sm:$0xf]
      %v4029 = vld [vmem:[%s3994 + $0x88] sm:$0xf]
      %v4030 = vld [vmem:[%s3994 + $0x8c] sm:$0xf]
      %v4031 = vld [vmem:[%s3994 + $0x90] sm:$0xf]
      %v4032 = vld [vmem:[%s3994 + $0x94] sm:$0xf]
      %v4033 = vld [vmem:[%s3994 + $0x98] sm:$0xf]
      %v4034 = vld [vmem:[%s3994 + $0x9c] sm:$0xf]
      %v4035 = vld [vmem:[%s3994 + $0xa0] sm:$0xf]
      %v4036 = vld [vmem:[%s3994 + $0xa4] sm:$0xf]
      %v4037 = vld [vmem:[%s3994 + $0xa8] sm:$0xf]
      %v4038 = vld [vmem:[%s3994 + $0xac] sm:$0xf]
      %v4039 = vld [vmem:[%s3994 + $0xb0] sm:$0xf]
      %v4040 = vld [vmem:[%s3994 + $0xb4] sm:$0xf]
      %v4041 = vld [vmem:[%s3994 + $0xb8] sm:$0xf]
      %v4042 = vld [vmem:[%s3994 + $0xbc] sm:$0xf]
      %v4043 = vld [vmem:[%s3994 + $0xc0] sm:$0xf]
      %v4044 = vld [vmem:[%s3994 + $0xc4] sm:$0xf]
      %v4045 = vld [vmem:[%s3994 + $0xc8] sm:$0xf]
      %v4046 = vld [vmem:[%s3994 + $0xcc] sm:$0xf]
      %v4047 = vld [vmem:[%s3994 + $0xd0] sm:$0xf]
      %v4048 = vld [vmem:[%s3994 + $0xd4] sm:$0xf]
      %v4049 = vld [vmem:[%s3994 + $0xd8] sm:$0xf]
      %v4050 = vld [vmem:[%s3994 + $0xdc] sm:$0xf]
      %v4051 = vld [vmem:[%s3994 + $0xe0] sm:$0xf]
      %v4052 = vld [vmem:[%s3994 + $0xe4] sm:$0xf]
      %v4053 = vld [vmem:[%s3994 + $0xe8] sm:$0xf]
      %v4054 = vld [vmem:[%s3994 + $0xec] sm:$0xf]
      %v4055 = vld [vmem:[%s3994 + $0xf0] sm:$0xf]
      %v4056 = vld [vmem:[%s3994 + $0xf4] sm:$0xf]
      %v4057 = vld [vmem:[%s3994 + $0xf8] sm:$0xf]
      %v4058 = vld [vmem:[%s3994 + $0xfc] sm:$0xf]
      %v4059 = vld [vmem:[%s3994 + $0x100] sm:$0xf]
      %v4060 = vld [vmem:[%s3994 + $0x104] sm:$0xf]
      %v4061 = vld [vmem:[%s3994 + $0x108] sm:$0x1]
      %v4129 = vunpack.c.l.b16 %v3995
      %v4130 = vunpack.c.l.b16 %v3996
      %v4131 = vunpack.c.l.b16 %v3997
      %v4132 = vunpack.c.l.b16 %v3998
      %v4133 = vunpack.c.l.b16 %v3999
      %v4134 = vunpack.c.l.b16 %v4000
      %v4135 = vunpack.c.l.b16 %v4001
      %v4136 = vunpack.c.l.b16 %v4002
      %v4137 = vunpack.c.l.b16 %v4003
      %v4138 = vunpack.c.l.b16 %v4004
      %v4139 = vunpack.c.l.b16 %v4005
      %v4140 = vunpack.c.l.b16 %v4006
      %v4141 = vunpack.c.l.b16 %v4007
      %v4142 = vunpack.c.l.b16 %v4008
      %v4143 = vunpack.c.l.b16 %v4009
      %v4144 = vunpack.c.l.b16 %v4010
      %v4145 = vunpack.c.l.b16 %v4011
      %v4146 = vunpack.c.l.b16 %v4012
      %v4147 = vunpack.c.l.b16 %v4013
      %v4148 = vunpack.c.l.b16 %v4014
      %v4149 = vunpack.c.l.b16 %v4015
      %v4150 = vunpack.c.l.b16 %v4016
      %v4151 = vunpack.c.l.b16 %v4017
      %v4152 = vunpack.c.l.b16 %v4018
      %v4153 = vunpack.c.l.b16 %v4019
      %v4154 = vunpack.c.l.b16 %v4020
      %v4155 = vunpack.c.l.b16 %v4021
      %v4156 = vunpack.c.l.b16 %v4022
      %v4157 = vunpack.c.l.b16 %v4023
      %v4158 = vunpack.c.l.b16 %v4024
      %v4159 = vunpack.c.l.b16 %v4025
      %v4160 = vunpack.c.l.b16 %v4026
      %v4161 = vunpack.c.l.b16 %v4027
      %v4162 = vunpack.c.l.b16 %v4028
      %v4163 = vunpack.c.l.b16 %v4029
      %v4164 = vunpack.c.l.b16 %v4030
      %v4165 = vunpack.c.l.b16 %v4031
      %v4166 = vunpack.c.l.b16 %v4032
      %v4167 = vunpack.c.l.b16 %v4033
      %v4168 = vunpack.c.l.b16 %v4034
      %v4169 = vunpack.c.l.b16 %v4035
      %v4170 = vunpack.c.l.b16 %v4036
      %v4171 = vunpack.c.l.b16 %v4037
      %v4172 = vunpack.c.l.b16 %v4038
      %v4173 = vunpack.c.l.b16 %v4039
      %v4174 = vunpack.c.l.b16 %v4040
      %v4175 = vunpack.c.l.b16 %v4041
      %v4176 = vunpack.c.l.b16 %v4042
      %v4177 = vunpack.c.l.b16 %v4043
      %v4178 = vunpack.c.l.b16 %v4044
      %v4179 = vunpack.c.l.b16 %v4045
      %v4180 = vunpack.c.l.b16 %v4046
      %v4181 = vunpack.c.l.b16 %v4047
      %v4182 = vunpack.c.l.b16 %v4048
      %v4183 = vunpack.c.l.b16 %v4049
      %v4184 = vunpack.c.l.b16 %v4050
      %v4185 = vunpack.c.l.b16 %v4051
      %v4186 = vunpack.c.l.b16 %v4052
      %v4187 = vunpack.c.l.b16 %v4053
      %v4188 = vunpack.c.l.b16 %v4054
      %v4189 = vunpack.c.l.b16 %v4055
      %v4190 = vunpack.c.l.b16 %v4056
      %v4191 = vunpack.c.l.b16 %v4057
      %v4192 = vunpack.c.l.b16 %v4058
      %v4193 = vunpack.c.l.b16 %v4059
      %v4194 = vunpack.c.l.b16 %v4060
      %v4195 = vunpack.c.l.b16 %v4061
      %v4196 = vpack.c.b16 %v4130, %v4129
      %v4197 = vpack.c.b16 %v4132, %v4131
      %v4198 = vpack.c.b16 %v4134, %v4133
      %v4199 = vpack.c.b16 %v4136, %v4135
      %v4200 = vpack.c.b16 %v4138, %v4137
      %v4201 = vpack.c.b16 %v4140, %v4139
      %v4202 = vpack.c.b16 %v4142, %v4141
      %v4203 = vpack.c.b16 %v4144, %v4143
      %v4204 = vpack.c.b16 %v4146, %v4145
      %v4205 = vpack.c.b16 %v4148, %v4147
      %v4206 = vpack.c.b16 %v4150, %v4149
      %v4207 = vpack.c.b16 %v4152, %v4151
      %v4208 = vpack.c.b16 %v4154, %v4153
      %v4209 = vpack.c.b16 %v4156, %v4155
      %v4210 = vpack.c.b16 %v4158, %v4157
      %v4211 = vpack.c.b16 %v4160, %v4159
      %v4212 = vpack.c.b16 %v4162, %v4161
      %v4213 = vpack.c.b16 %v4164, %v4163
      %v4214 = vpack.c.b16 %v4166, %v4165
      %v4215 = vpack.c.b16 %v4168, %v4167
      %v4216 = vpack.c.b16 %v4170, %v4169
      %v4217 = vpack.c.b16 %v4172, %v4171
      %v4218 = vpack.c.b16 %v4174, %v4173
      %v4219 = vpack.c.b16 %v4176, %v4175
      %v4220 = vpack.c.b16 %v4178, %v4177
      %v4221 = vpack.c.b16 %v4180, %v4179
      %v4222 = vpack.c.b16 %v4182, %v4181
      %v4223 = vpack.c.b16 %v4184, %v4183
      %v4224 = vpack.c.b16 %v4186, %v4185
      %v4225 = vpack.c.b16 %v4188, %v4187
      %v4226 = vpack.c.b16 %v4190, %v4189
      %v4227 = vpack.c.b16 %v4192, %v4191
      %v4228 = vpack.c.b16 %v4194, %v4193
      %v4229 = vpack.c.b16 %v4195, %v4195
      %v4264 = vand.u32 %v4229, %v1115
      %4266 = vmatprep.subr.bf16.mxu0 0
      %4267 = vmatpush1.bf16.msra.mxu0 %v4203
      %4268 = vmatprep.subr.bf16.mxu0 0
      %4269 = vmatpush1.bf16.msra.mxu0 %v4202
      %4270 = vmatprep.subr.bf16.mxu0 0
      %4271 = vmatpush1.bf16.msra.mxu0 %v4201
      %4272 = vmatprep.subr.bf16.mxu0 0
      %4273 = vmatpush1.bf16.msra.mxu0 %v4200
      %4274 = vmatprep.subr.bf16.mxu0 0
      %4275 = vmatpush1.bf16.msra.mxu0 %v4199
      %4276 = vmatprep.subr.bf16.mxu0 0
      %4277 = vmatpush1.bf16.msra.mxu0 %v4198
      %4278 = vmatprep.subr.bf16.mxu0 0
      %4279 = vmatpush1.bf16.msra.mxu0 %v4197
      %4280 = vmatprep.subr.bf16.mxu0 0
      %4281 = vmatpush1.bf16.msra.mxu0 %v4196
      %4282 = vmatprep.subr.bf16.mxu0 0
      %4283 = vmatpush2.bf16.msra.mxu0 %v4211
      %4284 = vmatprep.subr.bf16.mxu0 0
      %4285 = vmatpush2.bf16.msra.mxu0 %v4210
      %4286 = vmatprep.subr.bf16.mxu0 0
      %4287 = vmatpush2.bf16.msra.mxu0 %v4209
      %4288 = vmatprep.subr.bf16.mxu0 0
      %4289 = vmatpush2.bf16.msra.mxu0 %v4208
      %4290 = vmatprep.subr.bf16.mxu0 0
      %4291 = vmatpush2.bf16.msra.mxu0 %v4207
      %4292 = vmatprep.subr.bf16.mxu0 0
      %4293 = vmatpush2.bf16.msra.mxu0 %v4206
      %4294 = vmatprep.subr.bf16.mxu0 0
      %4295 = vmatpush2.bf16.msra.mxu0 %v4205
      %4296 = vmatprep.subr.bf16.mxu0 0
      %4297 = vmatpush2.bf16.msra.mxu0 %v4204
      %4298 = vmatprep.mubr.bf16.mxu0 %v837
      %4299 = vmatmul.mubr.bf16.gmra.mxu0 %v836
      %v4300 = vpop.f32.mrf.mxu0
      %v4301 = vadd.f32 0.0, %v4300
      %v4302 = vpop.f32.mrf.mxu0
      %v4303 = vpop.f32.mrf.mxu0
      %v4304 = vpop.f32.mrf.mxu0
      %4305 = vdwg.mxu0
      %4306 = vmatprep.subr.bf16.mxu0 0
      %4307 = vmatpush1.bf16.msra.mxu0 %v4219
      %4308 = vmatprep.subr.bf16.mxu0 0
      %4309 = vmatpush1.bf16.msra.mxu0 %v4218
      %4310 = vmatprep.subr.bf16.mxu0 0
      %4311 = vmatpush1.bf16.msra.mxu0 %v4217
      %4312 = vmatprep.subr.bf16.mxu0 0
      %4313 = vmatpush1.bf16.msra.mxu0 %v4216
      %4314 = vmatprep.subr.bf16.mxu0 0
      %4315 = vmatpush1.bf16.msra.mxu0 %v4215
      %4316 = vmatprep.subr.bf16.mxu0 0
      %4317 = vmatpush1.bf16.msra.mxu0 %v4214
      %4318 = vmatprep.subr.bf16.mxu0 0
      %4319 = vmatpush1.bf16.msra.mxu0 %v4213
      %4320 = vmatprep.subr.bf16.mxu0 0
      %4321 = vmatpush1.bf16.msra.mxu0 %v4212
      %4322 = vmatprep.subr.bf16.mxu0 0
      %4323 = vmatpush2.bf16.msra.mxu0 %v4227
      %4324 = vmatprep.subr.bf16.mxu0 0
      %4325 = vmatpush2.bf16.msra.mxu0 %v4226
      %4326 = vmatprep.subr.bf16.mxu0 0
      %4327 = vmatpush2.bf16.msra.mxu0 %v4225
      %4328 = vmatprep.subr.bf16.mxu0 0
      %4329 = vmatpush2.bf16.msra.mxu0 %v4224
      %4330 = vmatprep.subr.bf16.mxu0 0
      %4331 = vmatpush2.bf16.msra.mxu0 %v4223
      %4332 = vmatprep.subr.bf16.mxu0 0
      %4333 = vmatpush2.bf16.msra.mxu0 %v4222
      %4334 = vmatprep.subr.bf16.mxu0 0
      %4335 = vmatpush2.bf16.msra.mxu0 %v4221
      %4336 = vmatprep.subr.bf16.mxu0 0
      %4337 = vmatpush2.bf16.msra.mxu0 %v4220
      %4338 = vmatprep.mubr.bf16.mxu0 %v839
      %4339 = vmatmul.mubr.bf16.gmra.mxu0 %v838
      %v4340 = vpop.f32.mrf.mxu0
      %v4341 = vadd.f32 %v4301, %v4340
      %v4342 = vpop.f32.mrf.mxu0
      %v4343 = vpop.f32.mrf.mxu0
      %v4344 = vpop.f32.mrf.mxu0
      %4345 = vdwg.mxu0
      %4346 = vmatprep.subr.bf16.mxu0 0
      %4347 = vmatpush1.bf16.msra.mxu0 0
      %4348 = vmatprep.subr.bf16.mxu0 0
      %4349 = vmatpush1.bf16.msra.mxu0 0
      %4350 = vmatprep.subr.bf16.mxu0 0
      %4351 = vmatpush1.bf16.msra.mxu0 0
      %4352 = vmatprep.subr.bf16.mxu0 0
      %4353 = vmatpush1.bf16.msra.mxu0 0
      %4354 = vmatprep.subr.bf16.mxu0 0
      %4355 = vmatpush1.bf16.msra.mxu0 0
      %4356 = vmatprep.subr.bf16.mxu0 0
      %4357 = vmatpush1.bf16.msra.mxu0 0
      %4358 = vmatprep.subr.bf16.mxu0 0
      %4359 = vmatpush1.bf16.msra.mxu0 %v4264
      %4360 = vmatprep.subr.bf16.mxu0 0
      %4361 = vmatpush1.bf16.msra.mxu0 %v4228
      %4362 = vmatprep.subr.bf16.mxu0 0
      %4363 = vmatpush2.bf16.msra.mxu0 0
      %4364 = vmatprep.subr.bf16.mxu0 0
      %4365 = vmatpush2.bf16.msra.mxu0 0
      %4366 = vmatprep.subr.bf16.mxu0 0
      %4367 = vmatpush2.bf16.msra.mxu0 0
      %4368 = vmatprep.subr.bf16.mxu0 0
      %4369 = vmatpush2.bf16.msra.mxu0 0
      %4370 = vmatprep.subr.bf16.mxu0 0
      %4371 = vmatpush2.bf16.msra.mxu0 0
      %4372 = vmatprep.subr.bf16.mxu0 0
      %4373 = vmatpush2.bf16.msra.mxu0 0
      %4374 = vmatprep.subr.bf16.mxu0 0
      %4375 = vmatpush2.bf16.msra.mxu0 0
      %4376 = vmatprep.subr.bf16.mxu0 0
      %4377 = vmatpush2.bf16.msra.mxu0 0
      %4378 = vmatprep.mubr.bf16.mxu0 0
      %4379 = vmatmul.mubr.bf16.gmra.mxu0 %v1111
      %v4380 = vpop.f32.mrf.mxu0
      %v4381 = vadd.f32 %v4341, %v4380
      %v4382 = vpop.f32.mrf.mxu0
      %v4383 = vpop.f32.mrf.mxu0
      %v4384 = vpop.f32.mrf.mxu0
      %4385 = vdwg.mxu0
      %s4386 = scalar_lea.vmem %s4, 56
      %v4387 = vld [vmem:[%s4386] sm:$0xf]
      %v4388 = vld [vmem:[%s4386 + $0x4] sm:$0xf]
      %v4389 = vpack.c.bf16 %v4381, %v4381
      %v4392 = vunpack.c.l.b16 %v4387
      %v4393 = vunpack.c.l.b16 %v4388
      %v4394 = vpack.c.b16 %v4393, %v4392
      %v4396 = vsel %vm1643, %v4394, 0
      %v4399 = vsel %vm1647, %v4389, 0
      %4401 = vmatprep.subr.bf16.mxu0 0
      %4402 = vmatpush1.bf16.msra.mxu0 0
      %4403 = vmatprep.subr.bf16.mxu0 0
      %4404 = vmatpush1.bf16.msra.mxu0 0
      %4405 = vmatprep.subr.bf16.mxu0 0
      %4406 = vmatpush1.bf16.msra.mxu0 0
      %4407 = vmatprep.subr.bf16.mxu0 0
      %4408 = vmatpush1.bf16.msra.mxu0 0
      %4409 = vmatprep.subr.bf16.mxu0 0
      %4410 = vmatpush1.bf16.msra.mxu0 0
      %4411 = vmatprep.subr.bf16.mxu0 0
      %4412 = vmatpush1.bf16.msra.mxu0 0
      %4413 = vmatprep.subr.bf16.mxu0 0
      %4414 = vmatpush1.bf16.msra.mxu0 0
      %4415 = vmatprep.subr.bf16.mxu0 0
      %4416 = vmatpush1.bf16.msra.mxu0 %v4399
      %4417 = vmatprep.subr.bf16.mxu0 0
      %4418 = vmatpush2.bf16.msra.mxu0 0
      %4419 = vmatprep.subr.bf16.mxu0 0
      %4420 = vmatpush2.bf16.msra.mxu0 0
      %4421 = vmatprep.subr.bf16.mxu0 0
      %4422 = vmatpush2.bf16.msra.mxu0 0
      %4423 = vmatprep.subr.bf16.mxu0 0
      %4424 = vmatpush2.bf16.msra.mxu0 0
      %4425 = vmatprep.subr.bf16.mxu0 0
      %4426 = vmatpush2.bf16.msra.mxu0 0
      %4427 = vmatprep.subr.bf16.mxu0 0
      %4428 = vmatpush2.bf16.msra.mxu0 0
      %4429 = vmatprep.subr.bf16.mxu0 0
      %4430 = vmatpush2.bf16.msra.mxu0 0
      %4431 = vmatprep.subr.bf16.mxu0 0
      %4432 = vmatpush2.bf16.msra.mxu0 0
      %4433 = vmatprep.mubr.bf16.mxu0 0
      %4434 = vmatmul.mubr.bf16.gmra.mxu0 %v4396
      %v4435 = vpop.f32.mrf.mxu0
      %v4436 = vadd.f32 0.0, %v4435
      %v4437 = vpop.f32.mrf.mxu0
      %v4438 = vpop.f32.mrf.mxu0
      %v4439 = vadd.f32 0.0, %v4438
      %v4440 = vpop.f32.mrf.mxu0
      %4441 = vdwg.mxu0
      %v4442 = vadd.f32 %v3992, %v4436
      %v4443 = vadd.f32 %v3993, %v4439
      %s4444 = scalar_lea.vmem %s3, 2144
      %v4445 = vld [vmem:[%s4444] sm:$0xf]
      %v4446 = vld [vmem:[%s4444 + $0x4] sm:$0xf]
      %v4447 = vld [vmem:[%s4444 + $0x8] sm:$0xf]
      %v4448 = vld [vmem:[%s4444 + $0xc] sm:$0xf]
      %v4449 = vld [vmem:[%s4444 + $0x10] sm:$0xf]
      %v4450 = vld [vmem:[%s4444 + $0x14] sm:$0xf]
      %v4451 = vld [vmem:[%s4444 + $0x18] sm:$0xf]
      %v4452 = vld [vmem:[%s4444 + $0x1c] sm:$0xf]
      %v4453 = vld [vmem:[%s4444 + $0x20] sm:$0xf]
      %v4454 = vld [vmem:[%s4444 + $0x24] sm:$0xf]
      %v4455 = vld [vmem:[%s4444 + $0x28] sm:$0xf]
      %v4456 = vld [vmem:[%s4444 + $0x2c] sm:$0xf]
      %v4457 = vld [vmem:[%s4444 + $0x30] sm:$0xf]
      %v4458 = vld [vmem:[%s4444 + $0x34] sm:$0xf]
      %v4459 = vld [vmem:[%s4444 + $0x38] sm:$0xf]
      %v4460 = vld [vmem:[%s4444 + $0x3c] sm:$0xf]
      %v4461 = vld [vmem:[%s4444 + $0x40] sm:$0xf]
      %v4462 = vld [vmem:[%s4444 + $0x44] sm:$0xf]
      %v4463 = vld [vmem:[%s4444 + $0x48] sm:$0xf]
      %v4464 = vld [vmem:[%s4444 + $0x4c] sm:$0xf]
      %v4465 = vld [vmem:[%s4444 + $0x50] sm:$0xf]
      %v4466 = vld [vmem:[%s4444 + $0x54] sm:$0xf]
      %v4467 = vld [vmem:[%s4444 + $0x58] sm:$0xf]
      %v4468 = vld [vmem:[%s4444 + $0x5c] sm:$0xf]
      %v4469 = vld [vmem:[%s4444 + $0x60] sm:$0xf]
      %v4470 = vld [vmem:[%s4444 + $0x64] sm:$0xf]
      %v4471 = vld [vmem:[%s4444 + $0x68] sm:$0xf]
      %v4472 = vld [vmem:[%s4444 + $0x6c] sm:$0xf]
      %v4473 = vld [vmem:[%s4444 + $0x70] sm:$0xf]
      %v4474 = vld [vmem:[%s4444 + $0x74] sm:$0xf]
      %v4475 = vld [vmem:[%s4444 + $0x78] sm:$0xf]
      %v4476 = vld [vmem:[%s4444 + $0x7c] sm:$0xf]
      %v4477 = vld [vmem:[%s4444 + $0x80] sm:$0xf]
      %v4478 = vld [vmem:[%s4444 + $0x84] sm:$0xf]
      %v4479 = vld [vmem:[%s4444 + $0x88] sm:$0xf]
      %v4480 = vld [vmem:[%s4444 + $0x8c] sm:$0xf]
      %v4481 = vld [vmem:[%s4444 + $0x90] sm:$0xf]
      %v4482 = vld [vmem:[%s4444 + $0x94] sm:$0xf]
      %v4483 = vld [vmem:[%s4444 + $0x98] sm:$0xf]
      %v4484 = vld [vmem:[%s4444 + $0x9c] sm:$0xf]
      %v4485 = vld [vmem:[%s4444 + $0xa0] sm:$0xf]
      %v4486 = vld [vmem:[%s4444 + $0xa4] sm:$0xf]
      %v4487 = vld [vmem:[%s4444 + $0xa8] sm:$0xf]
      %v4488 = vld [vmem:[%s4444 + $0xac] sm:$0xf]
      %v4489 = vld [vmem:[%s4444 + $0xb0] sm:$0xf]
      %v4490 = vld [vmem:[%s4444 + $0xb4] sm:$0xf]
      %v4491 = vld [vmem:[%s4444 + $0xb8] sm:$0xf]
      %v4492 = vld [vmem:[%s4444 + $0xbc] sm:$0xf]
      %v4493 = vld [vmem:[%s4444 + $0xc0] sm:$0xf]
      %v4494 = vld [vmem:[%s4444 + $0xc4] sm:$0xf]
      %v4495 = vld [vmem:[%s4444 + $0xc8] sm:$0xf]
      %v4496 = vld [vmem:[%s4444 + $0xcc] sm:$0xf]
      %v4497 = vld [vmem:[%s4444 + $0xd0] sm:$0xf]
      %v4498 = vld [vmem:[%s4444 + $0xd4] sm:$0xf]
      %v4499 = vld [vmem:[%s4444 + $0xd8] sm:$0xf]
      %v4500 = vld [vmem:[%s4444 + $0xdc] sm:$0xf]
      %v4501 = vld [vmem:[%s4444 + $0xe0] sm:$0xf]
      %v4502 = vld [vmem:[%s4444 + $0xe4] sm:$0xf]
      %v4503 = vld [vmem:[%s4444 + $0xe8] sm:$0xf]
      %v4504 = vld [vmem:[%s4444 + $0xec] sm:$0xf]
      %v4505 = vld [vmem:[%s4444 + $0xf0] sm:$0xf]
      %v4506 = vld [vmem:[%s4444 + $0xf4] sm:$0xf]
      %v4507 = vld [vmem:[%s4444 + $0xf8] sm:$0xf]
      %v4508 = vld [vmem:[%s4444 + $0xfc] sm:$0xf]
      %v4509 = vld [vmem:[%s4444 + $0x100] sm:$0xf]
      %v4510 = vld [vmem:[%s4444 + $0x104] sm:$0xf]
      %v4511 = vld [vmem:[%s4444 + $0x108] sm:$0x1]
      %v4579 = vunpack.c.l.b16 %v4445
      %v4580 = vunpack.c.l.b16 %v4446
      %v4581 = vunpack.c.l.b16 %v4447
      %v4582 = vunpack.c.l.b16 %v4448
      %v4583 = vunpack.c.l.b16 %v4449
      %v4584 = vunpack.c.l.b16 %v4450
      %v4585 = vunpack.c.l.b16 %v4451
      %v4586 = vunpack.c.l.b16 %v4452
      %v4587 = vunpack.c.l.b16 %v4453
      %v4588 = vunpack.c.l.b16 %v4454
      %v4589 = vunpack.c.l.b16 %v4455
      %v4590 = vunpack.c.l.b16 %v4456
      %v4591 = vunpack.c.l.b16 %v4457
      %v4592 = vunpack.c.l.b16 %v4458
      %v4593 = vunpack.c.l.b16 %v4459
      %v4594 = vunpack.c.l.b16 %v4460
      %v4595 = vunpack.c.l.b16 %v4461
      %v4596 = vunpack.c.l.b16 %v4462
      %v4597 = vunpack.c.l.b16 %v4463
      %v4598 = vunpack.c.l.b16 %v4464
      %v4599 = vunpack.c.l.b16 %v4465
      %v4600 = vunpack.c.l.b16 %v4466
      %v4601 = vunpack.c.l.b16 %v4467
      %v4602 = vunpack.c.l.b16 %v4468
      %v4603 = vunpack.c.l.b16 %v4469
      %v4604 = vunpack.c.l.b16 %v4470
      %v4605 = vunpack.c.l.b16 %v4471
      %v4606 = vunpack.c.l.b16 %v4472
      %v4607 = vunpack.c.l.b16 %v4473
      %v4608 = vunpack.c.l.b16 %v4474
      %v4609 = vunpack.c.l.b16 %v4475
      %v4610 = vunpack.c.l.b16 %v4476
      %v4611 = vunpack.c.l.b16 %v4477
      %v4612 = vunpack.c.l.b16 %v4478
      %v4613 = vunpack.c.l.b16 %v4479
      %v4614 = vunpack.c.l.b16 %v4480
      %v4615 = vunpack.c.l.b16 %v4481
      %v4616 = vunpack.c.l.b16 %v4482
      %v4617 = vunpack.c.l.b16 %v4483
      %v4618 = vunpack.c.l.b16 %v4484
      %v4619 = vunpack.c.l.b16 %v4485
      %v4620 = vunpack.c.l.b16 %v4486
      %v4621 = vunpack.c.l.b16 %v4487
      %v4622 = vunpack.c.l.b16 %v4488
      %v4623 = vunpack.c.l.b16 %v4489
      %v4624 = vunpack.c.l.b16 %v4490
      %v4625 = vunpack.c.l.b16 %v4491
      %v4626 = vunpack.c.l.b16 %v4492
      %v4627 = vunpack.c.l.b16 %v4493
      %v4628 = vunpack.c.l.b16 %v4494
      %v4629 = vunpack.c.l.b16 %v4495
      %v4630 = vunpack.c.l.b16 %v4496
      %v4631 = vunpack.c.l.b16 %v4497
      %v4632 = vunpack.c.l.b16 %v4498
      %v4633 = vunpack.c.l.b16 %v4499
      %v4634 = vunpack.c.l.b16 %v4500
      %v4635 = vunpack.c.l.b16 %v4501
      %v4636 = vunpack.c.l.b16 %v4502
      %v4637 = vunpack.c.l.b16 %v4503
      %v4638 = vunpack.c.l.b16 %v4504
      %v4639 = vunpack.c.l.b16 %v4505
      %v4640 = vunpack.c.l.b16 %v4506
      %v4641 = vunpack.c.l.b16 %v4507
      %v4642 = vunpack.c.l.b16 %v4508
      %v4643 = vunpack.c.l.b16 %v4509
      %v4644 = vunpack.c.l.b16 %v4510
      %v4645 = vunpack.c.l.b16 %v4511
      %v4646 = vpack.c.b16 %v4580, %v4579
      %v4647 = vpack.c.b16 %v4582, %v4581
      %v4648 = vpack.c.b16 %v4584, %v4583
      %v4649 = vpack.c.b16 %v4586, %v4585
      %v4650 = vpack.c.b16 %v4588, %v4587
      %v4651 = vpack.c.b16 %v4590, %v4589
      %v4652 = vpack.c.b16 %v4592, %v4591
      %v4653 = vpack.c.b16 %v4594, %v4593
      %v4654 = vpack.c.b16 %v4596, %v4595
      %v4655 = vpack.c.b16 %v4598, %v4597
      %v4656 = vpack.c.b16 %v4600, %v4599
      %v4657 = vpack.c.b16 %v4602, %v4601
      %v4658 = vpack.c.b16 %v4604, %v4603
      %v4659 = vpack.c.b16 %v4606, %v4605
      %v4660 = vpack.c.b16 %v4608, %v4607
      %v4661 = vpack.c.b16 %v4610, %v4609
      %v4662 = vpack.c.b16 %v4612, %v4611
      %v4663 = vpack.c.b16 %v4614, %v4613
      %v4664 = vpack.c.b16 %v4616, %v4615
      %v4665 = vpack.c.b16 %v4618, %v4617
      %v4666 = vpack.c.b16 %v4620, %v4619
      %v4667 = vpack.c.b16 %v4622, %v4621
      %v4668 = vpack.c.b16 %v4624, %v4623
      %v4669 = vpack.c.b16 %v4626, %v4625
      %v4670 = vpack.c.b16 %v4628, %v4627
      %v4671 = vpack.c.b16 %v4630, %v4629
      %v4672 = vpack.c.b16 %v4632, %v4631
      %v4673 = vpack.c.b16 %v4634, %v4633
      %v4674 = vpack.c.b16 %v4636, %v4635
      %v4675 = vpack.c.b16 %v4638, %v4637
      %v4676 = vpack.c.b16 %v4640, %v4639
      %v4677 = vpack.c.b16 %v4642, %v4641
      %v4678 = vpack.c.b16 %v4644, %v4643
      %v4679 = vpack.c.b16 %v4645, %v4645
      %v4714 = vand.u32 %v4679, %v1115
      %4716 = vmatprep.subr.bf16.mxu0 0
      %4717 = vmatpush1.bf16.msra.mxu0 %v4653
      %4718 = vmatprep.subr.bf16.mxu0 0
      %4719 = vmatpush1.bf16.msra.mxu0 %v4652
      %4720 = vmatprep.subr.bf16.mxu0 0
      %4721 = vmatpush1.bf16.msra.mxu0 %v4651
      %4722 = vmatprep.subr.bf16.mxu0 0
      %4723 = vmatpush1.bf16.msra.mxu0 %v4650
      %4724 = vmatprep.subr.bf16.mxu0 0
      %4725 = vmatpush1.bf16.msra.mxu0 %v4649
      %4726 = vmatprep.subr.bf16.mxu0 0
      %4727 = vmatpush1.bf16.msra.mxu0 %v4648
      %4728 = vmatprep.subr.bf16.mxu0 0
      %4729 = vmatpush1.bf16.msra.mxu0 %v4647
      %4730 = vmatprep.subr.bf16.mxu0 0
      %4731 = vmatpush1.bf16.msra.mxu0 %v4646
      %4732 = vmatprep.subr.bf16.mxu0 0
      %4733 = vmatpush2.bf16.msra.mxu0 %v4661
      %4734 = vmatprep.subr.bf16.mxu0 0
      %4735 = vmatpush2.bf16.msra.mxu0 %v4660
      %4736 = vmatprep.subr.bf16.mxu0 0
      %4737 = vmatpush2.bf16.msra.mxu0 %v4659
      %4738 = vmatprep.subr.bf16.mxu0 0
      %4739 = vmatpush2.bf16.msra.mxu0 %v4658
      %4740 = vmatprep.subr.bf16.mxu0 0
      %4741 = vmatpush2.bf16.msra.mxu0 %v4657
      %4742 = vmatprep.subr.bf16.mxu0 0
      %4743 = vmatpush2.bf16.msra.mxu0 %v4656
      %4744 = vmatprep.subr.bf16.mxu0 0
      %4745 = vmatpush2.bf16.msra.mxu0 %v4655
      %4746 = vmatprep.subr.bf16.mxu0 0
      %4747 = vmatpush2.bf16.msra.mxu0 %v4654
      %4748 = vmatprep.mubr.bf16.mxu0 %v837
      %4749 = vmatmul.mubr.bf16.gmra.mxu0 %v836
      %v4750 = vpop.f32.mrf.mxu0
      %v4751 = vadd.f32 0.0, %v4750
      %v4752 = vpop.f32.mrf.mxu0
      %v4753 = vpop.f32.mrf.mxu0
      %v4754 = vpop.f32.mrf.mxu0
      %4755 = vdwg.mxu0
      %4756 = vmatprep.subr.bf16.mxu0 0
      %4757 = vmatpush1.bf16.msra.mxu0 %v4669
      %4758 = vmatprep.subr.bf16.mxu0 0
      %4759 = vmatpush1.bf16.msra.mxu0 %v4668
      %4760 = vmatprep.subr.bf16.mxu0 0
      %4761 = vmatpush1.bf16.msra.mxu0 %v4667
      %4762 = vmatprep.subr.bf16.mxu0 0
      %4763 = vmatpush1.bf16.msra.mxu0 %v4666
      %4764 = vmatprep.subr.bf16.mxu0 0
      %4765 = vmatpush1.bf16.msra.mxu0 %v4665
      %4766 = vmatprep.subr.bf16.mxu0 0
      %4767 = vmatpush1.bf16.msra.mxu0 %v4664
      %4768 = vmatprep.subr.bf16.mxu0 0
      %4769 = vmatpush1.bf16.msra.mxu0 %v4663
      %4770 = vmatprep.subr.bf16.mxu0 0
      %4771 = vmatpush1.bf16.msra.mxu0 %v4662
      %4772 = vmatprep.subr.bf16.mxu0 0
      %4773 = vmatpush2.bf16.msra.mxu0 %v4677
      %4774 = vmatprep.subr.bf16.mxu0 0
      %4775 = vmatpush2.bf16.msra.mxu0 %v4676
      %4776 = vmatprep.subr.bf16.mxu0 0
      %4777 = vmatpush2.bf16.msra.mxu0 %v4675
      %4778 = vmatprep.subr.bf16.mxu0 0
      %4779 = vmatpush2.bf16.msra.mxu0 %v4674
      %4780 = vmatprep.subr.bf16.mxu0 0
      %4781 = vmatpush2.bf16.msra.mxu0 %v4673
      %4782 = vmatprep.subr.bf16.mxu0 0
      %4783 = vmatpush2.bf16.msra.mxu0 %v4672
      %4784 = vmatprep.subr.bf16.mxu0 0
      %4785 = vmatpush2.bf16.msra.mxu0 %v4671
      %4786 = vmatprep.subr.bf16.mxu0 0
      %4787 = vmatpush2.bf16.msra.mxu0 %v4670
      %4788 = vmatprep.mubr.bf16.mxu0 %v839
      %4789 = vmatmul.mubr.bf16.gmra.mxu0 %v838
      %v4790 = vpop.f32.mrf.mxu0
      %v4791 = vadd.f32 %v4751, %v4790
      %v4792 = vpop.f32.mrf.mxu0
      %v4793 = vpop.f32.mrf.mxu0
      %v4794 = vpop.f32.mrf.mxu0
      %4795 = vdwg.mxu0
      %4796 = vmatprep.subr.bf16.mxu0 0
      %4797 = vmatpush1.bf16.msra.mxu0 0
      %4798 = vmatprep.subr.bf16.mxu0 0
      %4799 = vmatpush1.bf16.msra.mxu0 0
      %4800 = vmatprep.subr.bf16.mxu0 0
      %4801 = vmatpush1.bf16.msra.mxu0 0
      %4802 = vmatprep.subr.bf16.mxu0 0
      %4803 = vmatpush1.bf16.msra.mxu0 0
      %4804 = vmatprep.subr.bf16.mxu0 0
      %4805 = vmatpush1.bf16.msra.mxu0 0
      %4806 = vmatprep.subr.bf16.mxu0 0
      %4807 = vmatpush1.bf16.msra.mxu0 0
      %4808 = vmatprep.subr.bf16.mxu0 0
      %4809 = vmatpush1.bf16.msra.mxu0 %v4714
      %4810 = vmatprep.subr.bf16.mxu0 0
      %4811 = vmatpush1.bf16.msra.mxu0 %v4678
      %4812 = vmatprep.subr.bf16.mxu0 0
      %4813 = vmatpush2.bf16.msra.mxu0 0
      %4814 = vmatprep.subr.bf16.mxu0 0
      %4815 = vmatpush2.bf16.msra.mxu0 0
      %4816 = vmatprep.subr.bf16.mxu0 0
      %4817 = vmatpush2.bf16.msra.mxu0 0
      %4818 = vmatprep.subr.bf16.mxu0 0
      %4819 = vmatpush2.bf16.msra.mxu0 0
      %4820 = vmatprep.subr.bf16.mxu0 0
      %4821 = vmatpush2.bf16.msra.mxu0 0
      %4822 = vmatprep.subr.bf16.mxu0 0
      %4823 = vmatpush2.bf16.msra.mxu0 0
      %4824 = vmatprep.subr.bf16.mxu0 0
      %4825 = vmatpush2.bf16.msra.mxu0 0
      %4826 = vmatprep.subr.bf16.mxu0 0
      %4827 = vmatpush2.bf16.msra.mxu0 0
      %4828 = vmatprep.mubr.bf16.mxu0 0
      %4829 = vmatmul.mubr.bf16.gmra.mxu0 %v1111
      %v4830 = vpop.f32.mrf.mxu0
      %v4831 = vadd.f32 %v4791, %v4830
      %v4832 = vpop.f32.mrf.mxu0
      %v4833 = vpop.f32.mrf.mxu0
      %v4834 = vpop.f32.mrf.mxu0
      %4835 = vdwg.mxu0
      %s4836 = scalar_lea.vmem %s4, 64
      %v4837 = vld [vmem:[%s4836] sm:$0xf]
      %v4838 = vld [vmem:[%s4836 + $0x4] sm:$0xf]
      %v4839 = vpack.c.bf16 %v4831, %v4831
      %v4842 = vunpack.c.l.b16 %v4837
      %v4843 = vunpack.c.l.b16 %v4838
      %v4844 = vpack.c.b16 %v4843, %v4842
      %v4846 = vsel %vm1643, %v4844, 0
      %v4849 = vsel %vm1647, %v4839, 0
      %4851 = vmatprep.subr.bf16.mxu0 0
      %4852 = vmatpush1.bf16.msra.mxu0 0
      %4853 = vmatprep.subr.bf16.mxu0 0
      %4854 = vmatpush1.bf16.msra.mxu0 0
      %4855 = vmatprep.subr.bf16.mxu0 0
      %4856 = vmatpush1.bf16.msra.mxu0 0
      %4857 = vmatprep.subr.bf16.mxu0 0
      %4858 = vmatpush1.bf16.msra.mxu0 0
      %4859 = vmatprep.subr.bf16.mxu0 0
      %4860 = vmatpush1.bf16.msra.mxu0 0
      %4861 = vmatprep.subr.bf16.mxu0 0
      %4862 = vmatpush1.bf16.msra.mxu0 0
      %4863 = vmatprep.subr.bf16.mxu0 0
      %4864 = vmatpush1.bf16.msra.mxu0 0
      %4865 = vmatprep.subr.bf16.mxu0 0
      %4866 = vmatpush1.bf16.msra.mxu0 %v4849
      %4867 = vmatprep.subr.bf16.mxu0 0
      %4868 = vmatpush2.bf16.msra.mxu0 0
      %4869 = vmatprep.subr.bf16.mxu0 0
      %4870 = vmatpush2.bf16.msra.mxu0 0
      %4871 = vmatprep.subr.bf16.mxu0 0
      %4872 = vmatpush2.bf16.msra.mxu0 0
      %4873 = vmatprep.subr.bf16.mxu0 0
      %4874 = vmatpush2.bf16.msra.mxu0 0
      %4875 = vmatprep.subr.bf16.mxu0 0
      %4876 = vmatpush2.bf16.msra.mxu0 0
      %4877 = vmatprep.subr.bf16.mxu0 0
      %4878 = vmatpush2.bf16.msra.mxu0 0
      %4879 = vmatprep.subr.bf16.mxu0 0
      %4880 = vmatpush2.bf16.msra.mxu0 0
      %4881 = vmatprep.subr.bf16.mxu0 0
      %4882 = vmatpush2.bf16.msra.mxu0 0
      %4883 = vmatprep.mubr.bf16.mxu0 0
      %4884 = vmatmul.mubr.bf16.gmra.mxu0 %v4846
      %v4885 = vpop.f32.mrf.mxu0
      %v4886 = vadd.f32 0.0, %v4885
      %v4887 = vpop.f32.mrf.mxu0
      %v4888 = vpop.f32.mrf.mxu0
      %v4889 = vadd.f32 0.0, %v4888
      %v4890 = vpop.f32.mrf.mxu0
      %4891 = vdwg.mxu0
      %v4892 = vadd.f32 %v4442, %v4886
      %v4893 = vadd.f32 %v4443, %v4889
      %v4894 = vld [vmem:[%s5] sm:$0xff]
      %v4895 = vld [vmem:[%s5 + $0x8] sm:$0xff]
      %4897 = vset.pattern.permute.xlu0 0
      %4898 = vperm.xlu0 %4897, %v4894
      %v4899 = vpop.permute.xlu0 %4898
      %4902 = vset.pattern.permute.xlu0 0
      %4903 = vperm.xlu0 %4902, %v4895
      %v4904 = vpop.permute.xlu0 %4903
      %v4906 = vadd.f32 %v4892, %v4899
      %v4907 = vadd.f32 %v4893, %v4904
      %v4908 = vmax.f32 %v4906, 0.0
      %v4909 = vmax.f32 %v4907, 0.0
      %v4910 = vpack.c.bf16 %v4909, %v4908
      %v4911 = vld [vmem:[%s6] sm:$0xf]
      %v4912 = vld [vmem:[%s6 + $0x4] sm:$0xf]
      %v4913 = vld [vmem:[%s6 + $0x8] sm:$0xf]
      %v4914 = vld [vmem:[%s6 + $0xc] sm:$0xf]
      %v4915 = vld [vmem:[%s6 + $0x10] sm:$0xf]
      %v4916 = vld [vmem:[%s6 + $0x14] sm:$0xf]
      %v4917 = vld [vmem:[%s6 + $0x18] sm:$0xf]
      %v4918 = vld [vmem:[%s6 + $0x1c] sm:$0xf]
      %v4919 = vld [vmem:[%s6 + $0x20] sm:$0xf]
      %v4920 = vld [vmem:[%s6 + $0x24] sm:$0xf]
      %v4921 = vld [vmem:[%s6 + $0x28] sm:$0xf]
      %v4922 = vld [vmem:[%s6 + $0x2c] sm:$0xf]
      %v4923 = vld [vmem:[%s6 + $0x30] sm:$0xf]
      %v4924 = vld [vmem:[%s6 + $0x34] sm:$0xf]
      %v4925 = vld [vmem:[%s6 + $0x38] sm:$0xf]
      %v4926 = vld [vmem:[%s6 + $0x3c] sm:$0x1]
      %v4943 = vunpack.c.l.b16 %v4911
      %v4944 = vunpack.c.l.b16 %v4912
      %v4945 = vunpack.c.l.b16 %v4913
      %v4946 = vunpack.c.l.b16 %v4914
      %v4947 = vunpack.c.l.b16 %v4915
      %v4948 = vunpack.c.l.b16 %v4916
      %v4949 = vunpack.c.l.b16 %v4917
      %v4950 = vunpack.c.l.b16 %v4918
      %v4951 = vunpack.c.l.b16 %v4919
      %v4952 = vunpack.c.l.b16 %v4920
      %v4953 = vunpack.c.l.b16 %v4921
      %v4954 = vunpack.c.l.b16 %v4922
      %v4955 = vunpack.c.l.b16 %v4923
      %v4956 = vunpack.c.l.b16 %v4924
      %v4957 = vunpack.c.l.b16 %v4925
      %v4958 = vunpack.c.l.b16 %v4926
      %v4959 = vpack.c.b16 %v4944, %v4943
      %v4960 = vpack.c.b16 %v4946, %v4945
      %v4961 = vpack.c.b16 %v4948, %v4947
      %v4962 = vpack.c.b16 %v4950, %v4949
      %v4963 = vpack.c.b16 %v4952, %v4951
      %v4964 = vpack.c.b16 %v4954, %v4953
      %v4965 = vpack.c.b16 %v4956, %v4955
      %v4966 = vpack.c.b16 %v4958, %v4957
      %vm4974 = vcmask 990208
      %v4976 = vsel %vm4974, %v4910, 0
      %vm4978 = vcmask 1044480
      %v4979 = vsel %vm1647, 4294967295, 65535
      %v4980 = vsel %vm4978, %v4979, 0
      %v4982 = vand.u32 %v4966, %v4980
      %4984 = vmatprep.subr.bf16.mxu0 0
      %4985 = vmatpush1.bf16.msra.mxu0 %v4982
      %4986 = vmatprep.subr.bf16.mxu0 0
      %4987 = vmatpush1.bf16.msra.mxu0 %v4965
      %4988 = vmatprep.subr.bf16.mxu0 0
      %4989 = vmatpush1.bf16.msra.mxu0 %v4964
      %4990 = vmatprep.subr.bf16.mxu0 0
      %4991 = vmatpush1.bf16.msra.mxu0 %v4963
      %4992 = vmatprep.subr.bf16.mxu0 0
      %4993 = vmatpush1.bf16.msra.mxu0 %v4962
      %4994 = vmatprep.subr.bf16.mxu0 0
      %4995 = vmatpush1.bf16.msra.mxu0 %v4961
      %4996 = vmatprep.subr.bf16.mxu0 0
      %4997 = vmatpush1.bf16.msra.mxu0 %v4960
      %4998 = vmatprep.subr.bf16.mxu0 0
      %4999 = vmatpush1.bf16.msra.mxu0 %v4959
      %5000 = vmatprep.subr.bf16.mxu0 0
      %5001 = vmatpush2.bf16.msra.mxu0 0
      %5002 = vmatprep.subr.bf16.mxu0 0
      %5003 = vmatpush2.bf16.msra.mxu0 0
      %5004 = vmatprep.subr.bf16.mxu0 0
      %5005 = vmatpush2.bf16.msra.mxu0 0
      %5006 = vmatprep.subr.bf16.mxu0 0
      %5007 = vmatpush2.bf16.msra.mxu0 0
      %5008 = vmatprep.subr.bf16.mxu0 0
      %5009 = vmatpush2.bf16.msra.mxu0 0
      %5010 = vmatprep.subr.bf16.mxu0 0
      %5011 = vmatpush2.bf16.msra.mxu0 0
      %5012 = vmatprep.subr.bf16.mxu0 0
      %5013 = vmatpush2.bf16.msra.mxu0 0
      %5014 = vmatprep.subr.bf16.mxu0 0
      %5015 = vmatpush2.bf16.msra.mxu0 0
      %5016 = vmatprep.mubr.bf16.mxu0 0
      %5017 = vmatmul.mubr.bf16.gmra.mxu0 %v4976
      %v5018 = vpop.f32.mrf.mxu0
      %v5019 = vadd.f32 0.0, %v5018
      %v5020 = vpop.f32.mrf.mxu0
      %v5021 = vpop.f32.mrf.mxu0
      %v5022 = vadd.f32 0.0, %v5021
      %v5023 = vpop.f32.mrf.mxu0
      %5024 = vdwg.mxu0
      %v5025 = vld [vmem:[%s7] sm:$0xf]
      %v5026 = vld [vmem:[%s7 + $0x4] sm:$0xf]
      %v5027 = vld [vmem:[%s7 + $0x8] sm:$0xf]
      %v5028 = vld [vmem:[%s7 + $0xc] sm:$0xf]
      %v5029 = vpack.c.bf16 %v5022, %v5019
      %s5030 = scalar_lea.vmem %s6, 64
      %v5031 = vld [vmem:[%s5030] sm:$0xf]
      %v5032 = vld [vmem:[%s5030 + $0x4] sm:$0xf]
      %v5033 = vld [vmem:[%s5030 + $0x8] sm:$0xf]
      %v5034 = vld [vmem:[%s5030 + $0xc] sm:$0xf]
      %v5035 = vld [vmem:[%s5030 + $0x10] sm:$0xf]
      %v5036 = vld [vmem:[%s5030 + $0x14] sm:$0xf]
      %v5037 = vld [vmem:[%s5030 + $0x18] sm:$0xf]
      %v5038 = vld [vmem:[%s5030 + $0x1c] sm:$0xf]
      %v5039 = vld [vmem:[%s5030 + $0x20] sm:$0xf]
      %v5040 = vld [vmem:[%s5030 + $0x24] sm:$0xf]
      %v5041 = vld [vmem:[%s5030 + $0x28] sm:$0xf]
      %v5042 = vld [vmem:[%s5030 + $0x2c] sm:$0xf]
      %v5043 = vld [vmem:[%s5030 + $0x30] sm:$0xf]
      %v5044 = vld [vmem:[%s5030 + $0x34] sm:$0xf]
      %v5045 = vld [vmem:[%s5030 + $0x38] sm:$0xf]
      %v5046 = vld [vmem:[%s5030 + $0x3c] sm:$0x1]
      %v5063 = vunpack.c.l.b16 %v5031
      %v5064 = vunpack.c.l.b16 %v5032
      %v5065 = vunpack.c.l.b16 %v5033
      %v5066 = vunpack.c.l.b16 %v5034
      %v5067 = vunpack.c.l.b16 %v5035
      %v5068 = vunpack.c.l.b16 %v5036
      %v5069 = vunpack.c.l.b16 %v5037
      %v5070 = vunpack.c.l.b16 %v5038
      %v5071 = vunpack.c.l.b16 %v5039
      %v5072 = vunpack.c.l.b16 %v5040
      %v5073 = vunpack.c.l.b16 %v5041
      %v5074 = vunpack.c.l.b16 %v5042
      %v5075 = vunpack.c.l.b16 %v5043
      %v5076 = vunpack.c.l.b16 %v5044
      %v5077 = vunpack.c.l.b16 %v5045
      %v5078 = vunpack.c.l.b16 %v5046
      %v5079 = vpack.c.b16 %v5064, %v5063
      %v5080 = vpack.c.b16 %v5066, %v5065
      %v5081 = vpack.c.b16 %v5068, %v5067
      %v5082 = vpack.c.b16 %v5070, %v5069
      %v5083 = vpack.c.b16 %v5072, %v5071
      %v5084 = vpack.c.b16 %v5074, %v5073
      %v5085 = vpack.c.b16 %v5076, %v5075
      %v5086 = vpack.c.b16 %v5078, %v5077
      %v5095 = vand.u32 %v5086, %v4980
      %5097 = vmatprep.subr.bf16.mxu0 0
      %5098 = vmatpush1.bf16.msra.mxu0 %v5095
      %5099 = vmatprep.subr.bf16.mxu0 0
      %5100 = vmatpush1.bf16.msra.mxu0 %v5085
      %5101 = vmatprep.subr.bf16.mxu0 0
      %5102 = vmatpush1.bf16.msra.mxu0 %v5084
      %5103 = vmatprep.subr.bf16.mxu0 0
      %5104 = vmatpush1.bf16.msra.mxu0 %v5083
      %5105 = vmatprep.subr.bf16.mxu0 0
      %5106 = vmatpush1.bf16.msra.mxu0 %v5082
      %5107 = vmatprep.subr.bf16.mxu0 0
      %5108 = vmatpush1.bf16.msra.mxu0 %v5081
      %5109 = vmatprep.subr.bf16.mxu0 0
      %5110 = vmatpush1.bf16.msra.mxu0 %v5080
      %5111 = vmatprep.subr.bf16.mxu0 0
      %5112 = vmatpush1.bf16.msra.mxu0 %v5079
      %5113 = vmatprep.subr.bf16.mxu0 0
      %5114 = vmatpush2.bf16.msra.mxu0 0
      %5115 = vmatprep.subr.bf16.mxu0 0
      %5116 = vmatpush2.bf16.msra.mxu0 0
      %5117 = vmatprep.subr.bf16.mxu0 0
      %5118 = vmatpush2.bf16.msra.mxu0 0
      %5119 = vmatprep.subr.bf16.mxu0 0
      %5120 = vmatpush2.bf16.msra.mxu0 0
      %5121 = vmatprep.subr.bf16.mxu0 0
      %5122 = vmatpush2.bf16.msra.mxu0 0
      %5123 = vmatprep.subr.bf16.mxu0 0
      %5124 = vmatpush2.bf16.msra.mxu0 0
      %5125 = vmatprep.subr.bf16.mxu0 0
      %5126 = vmatpush2.bf16.msra.mxu0 0
      %5127 = vmatprep.subr.bf16.mxu0 0
      %5128 = vmatpush2.bf16.msra.mxu0 0
      %5129 = vmatprep.mubr.bf16.mxu0 0
      %5130 = vmatmul.mubr.bf16.gmra.mxu0 %v4976
      %v5131 = vpop.f32.mrf.mxu0
      %v5132 = vadd.f32 0.0, %v5131
      %v5133 = vpop.f32.mrf.mxu0
      %v5134 = vpop.f32.mrf.mxu0
      %v5135 = vadd.f32 0.0, %v5134
      %v5136 = vpop.f32.mrf.mxu0
      %5137 = vdwg.mxu0
      %s5138 = scalar_lea.vmem %s7, 16
      %v5139 = vld [vmem:[%s5138] sm:$0xf]
      %v5140 = vld [vmem:[%s5138 + $0x4] sm:$0xf]
      %v5141 = vld [vmem:[%s5138 + $0x8] sm:$0xf]
      %v5142 = vld [vmem:[%s5138 + $0xc] sm:$0xf]
      %v5143 = vpack.c.bf16 %v5135, %v5132
      %v5148 = vunpack.c.l.b16 %v5139
      %v5149 = vunpack.c.l.b16 %v5140
      %v5150 = vunpack.c.l.b16 %v5141
      %v5151 = vunpack.c.l.b16 %v5142
      %v5152 = vpack.c.b16 %v5149, %v5148
      %v5153 = vpack.c.b16 %v5151, %v5150
      %vm5154 = vcmask 130048
      %v5156 = vsel %vm5154, %v5152, 0
      %v5159 = vsel %vm5154, %v5153, 0
      %5161 = vmatprep.subr.bf16.mxu0 0
      %5162 = vmatpush1.bf16.msra.mxu0 0
      %5163 = vmatprep.subr.bf16.mxu0 0
      %5164 = vmatpush1.bf16.msra.mxu0 0
      %5165 = vmatprep.subr.bf16.mxu0 0
      %5166 = vmatpush1.bf16.msra.mxu0 0
      %5167 = vmatprep.subr.bf16.mxu0 0
      %5168 = vmatpush1.bf16.msra.mxu0 0
      %5169 = vmatprep.subr.bf16.mxu0 0
      %5170 = vmatpush1.bf16.msra.mxu0 0
      %5171 = vmatprep.subr.bf16.mxu0 0
      %5172 = vmatpush1.bf16.msra.mxu0 0
      %5173 = vmatprep.subr.bf16.mxu0 0
      %5174 = vmatpush1.bf16.msra.mxu0 0
      %5175 = vmatprep.subr.bf16.mxu0 0
      %5176 = vmatpush1.bf16.msra.mxu0 %v5143
      %5177 = vmatprep.subr.bf16.mxu0 0
      %5178 = vmatpush2.bf16.msra.mxu0 0
      %5179 = vmatprep.subr.bf16.mxu0 0
      %5180 = vmatpush2.bf16.msra.mxu0 0
      %5181 = vmatprep.subr.bf16.mxu0 0
      %5182 = vmatpush2.bf16.msra.mxu0 0
      %5183 = vmatprep.subr.bf16.mxu0 0
      %5184 = vmatpush2.bf16.msra.mxu0 0
      %5185 = vmatprep.subr.bf16.mxu0 0
      %5186 = vmatpush2.bf16.msra.mxu0 0
      %5187 = vmatprep.subr.bf16.mxu0 0
      %5188 = vmatpush2.bf16.msra.mxu0 0
      %5189 = vmatprep.subr.bf16.mxu0 0
      %5190 = vmatpush2.bf16.msra.mxu0 0
      %5191 = vmatprep.subr.bf16.mxu0 0
      %5192 = vmatpush2.bf16.msra.mxu0 0
      %5193 = vmatprep.mubr.bf16.mxu0 0
      %5194 = vmatmul.mubr.bf16.gmra.mxu0 %v5156
      %v5195 = vpop.f32.mrf.mxu0
      %v5196 = vadd.f32 0.0, %v5195
      %v5197 = vpop.f32.mrf.mxu0
      %v5198 = vpop.f32.mrf.mxu0
      %v5199 = vadd.f32 0.0, %v5198
      %v5200 = vpop.f32.mrf.mxu0
      %5201 = vmatprep.mubr.bf16.mxu0 0
      %5202 = vmatmul.mubr.bf16.gmra.mxu0 %v5159
      %v5203 = vpop.f32.mrf.mxu0
      %v5204 = vadd.f32 0.0, %v5203
      %v5205 = vpop.f32.mrf.mxu0
      %v5206 = vpop.f32.mrf.mxu0
      %v5207 = vadd.f32 0.0, %v5206
      %v5208 = vpop.f32.mrf.mxu0
      %5209 = vdwg.mxu0
      %v5214 = vunpack.c.l.b16 %v5025
      %v5215 = vunpack.c.l.b16 %v5026
      %v5216 = vunpack.c.l.b16 %v5027
      %v5217 = vunpack.c.l.b16 %v5028
      %v5218 = vpack.c.b16 %v5215, %v5214
      %v5219 = vpack.c.b16 %v5217, %v5216
      %v5221 = vsel %vm5154, %v5218, 0
      %v5224 = vsel %vm5154, %v5219, 0
      %5226 = vmatprep.subr.bf16.mxu0 0
      %5227 = vmatpush1.bf16.msra.mxu0 0
      %5228 = vmatprep.subr.bf16.mxu0 0
      %5229 = vmatpush1.bf16.msra.mxu0 0
      %5230 = vmatprep.subr.bf16.mxu0 0
      %5231 = vmatpush1.bf16.msra.mxu0 0
      %5232 = vmatprep.subr.bf16.mxu0 0
      %5233 = vmatpush1.bf16.msra.mxu0 0
      %5234 = vmatprep.subr.bf16.mxu0 0
      %5235 = vmatpush1.bf16.msra.mxu0 0
      %5236 = vmatprep.subr.bf16.mxu0 0
      %5237 = vmatpush1.bf16.msra.mxu0 0
      %5238 = vmatprep.subr.bf16.mxu0 0
      %5239 = vmatpush1.bf16.msra.mxu0 0
      %5240 = vmatprep.subr.bf16.mxu0 0
      %5241 = vmatpush1.bf16.msra.mxu0 %v5029
      %5242 = vmatprep.subr.bf16.mxu0 0
      %5243 = vmatpush2.bf16.msra.mxu0 0
      %5244 = vmatprep.subr.bf16.mxu0 0
      %5245 = vmatpush2.bf16.msra.mxu0 0
      %5246 = vmatprep.subr.bf16.mxu0 0
      %5247 = vmatpush2.bf16.msra.mxu0 0
      %5248 = vmatprep.subr.bf16.mxu0 0
      %5249 = vmatpush2.bf16.msra.mxu0 0
      %5250 = vmatprep.subr.bf16.mxu0 0
      %5251 = vmatpush2.bf16.msra.mxu0 0
      %5252 = vmatprep.subr.bf16.mxu0 0
      %5253 = vmatpush2.bf16.msra.mxu0 0
      %5254 = vmatprep.subr.bf16.mxu0 0
      %5255 = vmatpush2.bf16.msra.mxu0 0
      %5256 = vmatprep.subr.bf16.mxu0 0
      %5257 = vmatpush2.bf16.msra.mxu0 0
      %5258 = vmatprep.mubr.bf16.mxu0 0
      %5259 = vmatmul.mubr.bf16.gmra.mxu0 %v5221
      %v5260 = vpop.f32.mrf.mxu0
      %v5261 = vadd.f32 %v5196, %v5260
      %v5262 = vpop.f32.mrf.mxu0
      %v5263 = vpop.f32.mrf.mxu0
      %v5264 = vadd.f32 %v5199, %v5263
      %v5265 = vpop.f32.mrf.mxu0
      %5266 = vmatprep.mubr.bf16.mxu0 0
      %5267 = vmatmul.mubr.bf16.gmra.mxu0 %v5224
      %v5268 = vpop.f32.mrf.mxu0
      %v5269 = vadd.f32 %v5204, %v5268
      %v5270 = vpop.f32.mrf.mxu0
      %v5271 = vpop.f32.mrf.mxu0
      %v5272 = vadd.f32 %v5207, %v5271
      %v5273 = vpop.f32.mrf.mxu0
      %5274 = vdwg.mxu0
      %s5275 = scalar_lea.vmem %s6, 128
      %v5276 = vld [vmem:[%s5275] sm:$0xf]
      %v5277 = vld [vmem:[%s5275 + $0x4] sm:$0xf]
      %v5278 = vld [vmem:[%s5275 + $0x8] sm:$0xf]
      %v5279 = vld [vmem:[%s5275 + $0xc] sm:$0xf]
      %v5280 = vld [vmem:[%s5275 + $0x10] sm:$0xf]
      %v5281 = vld [vmem:[%s5275 + $0x14] sm:$0xf]
      %v5282 = vld [vmem:[%s5275 + $0x18] sm:$0xf]
      %v5283 = vld [vmem:[%s5275 + $0x1c] sm:$0xf]
      %v5284 = vld [vmem:[%s5275 + $0x20] sm:$0xf]
      %v5285 = vld [vmem:[%s5275 + $0x24] sm:$0xf]
      %v5286 = vld [vmem:[%s5275 + $0x28] sm:$0xf]
      %v5287 = vld [vmem:[%s5275 + $0x2c] sm:$0xf]
      %v5288 = vld [vmem:[%s5275 + $0x30] sm:$0xf]
      %v5289 = vld [vmem:[%s5275 + $0x34] sm:$0xf]
      %v5290 = vld [vmem:[%s5275 + $0x38] sm:$0xf]
      %v5291 = vld [vmem:[%s5275 + $0x3c] sm:$0x1]
      %v5308 = vunpack.c.l.b16 %v5276
      %v5309 = vunpack.c.l.b16 %v5277
      %v5310 = vunpack.c.l.b16 %v5278
      %v5311 = vunpack.c.l.b16 %v5279
      %v5312 = vunpack.c.l.b16 %v5280
      %v5313 = vunpack.c.l.b16 %v5281
      %v5314 = vunpack.c.l.b16 %v5282
      %v5315 = vunpack.c.l.b16 %v5283
      %v5316 = vunpack.c.l.b16 %v5284
      %v5317 = vunpack.c.l.b16 %v5285
      %v5318 = vunpack.c.l.b16 %v5286
      %v5319 = vunpack.c.l.b16 %v5287
      %v5320 = vunpack.c.l.b16 %v5288
      %v5321 = vunpack.c.l.b16 %v5289
      %v5322 = vunpack.c.l.b16 %v5290
      %v5323 = vunpack.c.l.b16 %v5291
      %v5324 = vpack.c.b16 %v5309, %v5308
      %v5325 = vpack.c.b16 %v5311, %v5310
      %v5326 = vpack.c.b16 %v5313, %v5312
      %v5327 = vpack.c.b16 %v5315, %v5314
      %v5328 = vpack.c.b16 %v5317, %v5316
      %v5329 = vpack.c.b16 %v5319, %v5318
      %v5330 = vpack.c.b16 %v5321, %v5320
      %v5331 = vpack.c.b16 %v5323, %v5322
      %v5340 = vand.u32 %v5331, %v4980
      %5342 = vmatprep.subr.bf16.mxu0 0
      %5343 = vmatpush1.bf16.msra.mxu0 %v5340
      %5344 = vmatprep.subr.bf16.mxu0 0
      %5345 = vmatpush1.bf16.msra.mxu0 %v5330
      %5346 = vmatprep.subr.bf16.mxu0 0
      %5347 = vmatpush1.bf16.msra.mxu0 %v5329
      %5348 = vmatprep.subr.bf16.mxu0 0
      %5349 = vmatpush1.bf16.msra.mxu0 %v5328
      %5350 = vmatprep.subr.bf16.mxu0 0
      %5351 = vmatpush1.bf16.msra.mxu0 %v5327
      %5352 = vmatprep.subr.bf16.mxu0 0
      %5353 = vmatpush1.bf16.msra.mxu0 %v5326
      %5354 = vmatprep.subr.bf16.mxu0 0
      %5355 = vmatpush1.bf16.msra.mxu0 %v5325
      %5356 = vmatprep.subr.bf16.mxu0 0
      %5357 = vmatpush1.bf16.msra.mxu0 %v5324
      %5358 = vmatprep.subr.bf16.mxu0 0
      %5359 = vmatpush2.bf16.msra.mxu0 0
      %5360 = vmatprep.subr.bf16.mxu0 0
      %5361 = vmatpush2.bf16.msra.mxu0 0
      %5362 = vmatprep.subr.bf16.mxu0 0
      %5363 = vmatpush2.bf16.msra.mxu0 0
      %5364 = vmatprep.subr.bf16.mxu0 0
      %5365 = vmatpush2.bf16.msra.mxu0 0
      %5366 = vmatprep.subr.bf16.mxu0 0
      %5367 = vmatpush2.bf16.msra.mxu0 0
      %5368 = vmatprep.subr.bf16.mxu0 0
      %5369 = vmatpush2.bf16.msra.mxu0 0
      %5370 = vmatprep.subr.bf16.mxu0 0
      %5371 = vmatpush2.bf16.msra.mxu0 0
      %5372 = vmatprep.subr.bf16.mxu0 0
      %5373 = vmatpush2.bf16.msra.mxu0 0
      %5374 = vmatprep.mubr.bf16.mxu0 0
      %5375 = vmatmul.mubr.bf16.gmra.mxu0 %v4976
      %v5376 = vpop.f32.mrf.mxu0
      %v5377 = vadd.f32 0.0, %v5376
      %v5378 = vpop.f32.mrf.mxu0
      %v5379 = vpop.f32.mrf.mxu0
      %v5380 = vadd.f32 0.0, %v5379
      %v5381 = vpop.f32.mrf.mxu0
      %5382 = vdwg.mxu0
      %s5383 = scalar_lea.vmem %s7, 32
      %v5384 = vld [vmem:[%s5383] sm:$0xf]
      %v5385 = vld [vmem:[%s5383 + $0x4] sm:$0xf]
      %v5386 = vld [vmem:[%s5383 + $0x8] sm:$0xf]
      %v5387 = vld [vmem:[%s5383 + $0xc] sm:$0xf]
      %v5388 = vpack.c.bf16 %v5380, %v5377
      %v5393 = vunpack.c.l.b16 %v5384
      %v5394 = vunpack.c.l.b16 %v5385
      %v5395 = vunpack.c.l.b16 %v5386
      %v5396 = vunpack.c.l.b16 %v5387
      %v5397 = vpack.c.b16 %v5394, %v5393
      %v5398 = vpack.c.b16 %v5396, %v5395
      %v5400 = vsel %vm5154, %v5397, 0
      %v5403 = vsel %vm5154, %v5398, 0
      %5405 = vmatprep.subr.bf16.mxu0 0
      %5406 = vmatpush1.bf16.msra.mxu0 0
      %5407 = vmatprep.subr.bf16.mxu0 0
      %5408 = vmatpush1.bf16.msra.mxu0 0
      %5409 = vmatprep.subr.bf16.mxu0 0
      %5410 = vmatpush1.bf16.msra.mxu0 0
      %5411 = vmatprep.subr.bf16.mxu0 0
      %5412 = vmatpush1.bf16.msra.mxu0 0
      %5413 = vmatprep.subr.bf16.mxu0 0
      %5414 = vmatpush1.bf16.msra.mxu0 0
      %5415 = vmatprep.subr.bf16.mxu0 0
      %5416 = vmatpush1.bf16.msra.mxu0 0
      %5417 = vmatprep.subr.bf16.mxu0 0
      %5418 = vmatpush1.bf16.msra.mxu0 0
      %5419 = vmatprep.subr.bf16.mxu0 0
      %5420 = vmatpush1.bf16.msra.mxu0 %v5388
      %5421 = vmatprep.subr.bf16.mxu0 0
      %5422 = vmatpush2.bf16.msra.mxu0 0
      %5423 = vmatprep.subr.bf16.mxu0 0
      %5424 = vmatpush2.bf16.msra.mxu0 0
      %5425 = vmatprep.subr.bf16.mxu0 0
      %5426 = vmatpush2.bf16.msra.mxu0 0
      %5427 = vmatprep.subr.bf16.mxu0 0
      %5428 = vmatpush2.bf16.msra.mxu0 0
      %5429 = vmatprep.subr.bf16.mxu0 0
      %5430 = vmatpush2.bf16.msra.mxu0 0
      %5431 = vmatprep.subr.bf16.mxu0 0
      %5432 = vmatpush2.bf16.msra.mxu0 0
      %5433 = vmatprep.subr.bf16.mxu0 0
      %5434 = vmatpush2.bf16.msra.mxu0 0
      %5435 = vmatprep.subr.bf16.mxu0 0
      %5436 = vmatpush2.bf16.msra.mxu0 0
      %5437 = vmatprep.mubr.bf16.mxu0 0
      %5438 = vmatmul.mubr.bf16.gmra.mxu0 %v5400
      %v5439 = vpop.f32.mrf.mxu0
      %v5440 = vadd.f32 0.0, %v5439
      %v5441 = vpop.f32.mrf.mxu0
      %v5442 = vpop.f32.mrf.mxu0
      %v5443 = vadd.f32 0.0, %v5442
      %v5444 = vpop.f32.mrf.mxu0
      %5445 = vmatprep.mubr.bf16.mxu0 0
      %5446 = vmatmul.mubr.bf16.gmra.mxu0 %v5403
      %v5447 = vpop.f32.mrf.mxu0
      %v5448 = vadd.f32 0.0, %v5447
      %v5449 = vpop.f32.mrf.mxu0
      %v5450 = vpop.f32.mrf.mxu0
      %v5451 = vadd.f32 0.0, %v5450
      %v5452 = vpop.f32.mrf.mxu0
      %5453 = vdwg.mxu0
      %v5454 = vadd.f32 %v5261, %v5440
      %v5455 = vadd.f32 %v5264, %v5443
      %v5456 = vadd.f32 %v5269, %v5448
      %v5457 = vadd.f32 %v5272, %v5451
      %s5458 = scalar_lea.vmem %s6, 192
      %v5459 = vld [vmem:[%s5458] sm:$0xf]
      %v5460 = vld [vmem:[%s5458 + $0x4] sm:$0xf]
      %v5461 = vld [vmem:[%s5458 + $0x8] sm:$0xf]
      %v5462 = vld [vmem:[%s5458 + $0xc] sm:$0xf]
      %v5463 = vld [vmem:[%s5458 + $0x10] sm:$0xf]
      %v5464 = vld [vmem:[%s5458 + $0x14] sm:$0xf]
      %v5465 = vld [vmem:[%s5458 + $0x18] sm:$0xf]
      %v5466 = vld [vmem:[%s5458 + $0x1c] sm:$0xf]
      %v5467 = vld [vmem:[%s5458 + $0x20] sm:$0xf]
      %v5468 = vld [vmem:[%s5458 + $0x24] sm:$0xf]
      %v5469 = vld [vmem:[%s5458 + $0x28] sm:$0xf]
      %v5470 = vld [vmem:[%s5458 + $0x2c] sm:$0xf]
      %v5471 = vld [vmem:[%s5458 + $0x30] sm:$0xf]
      %v5472 = vld [vmem:[%s5458 + $0x34] sm:$0xf]
      %v5473 = vld [vmem:[%s5458 + $0x38] sm:$0xf]
      %v5474 = vld [vmem:[%s5458 + $0x3c] sm:$0x1]
      %v5491 = vunpack.c.l.b16 %v5459
      %v5492 = vunpack.c.l.b16 %v5460
      %v5493 = vunpack.c.l.b16 %v5461
      %v5494 = vunpack.c.l.b16 %v5462
      %v5495 = vunpack.c.l.b16 %v5463
      %v5496 = vunpack.c.l.b16 %v5464
      %v5497 = vunpack.c.l.b16 %v5465
      %v5498 = vunpack.c.l.b16 %v5466
      %v5499 = vunpack.c.l.b16 %v5467
      %v5500 = vunpack.c.l.b16 %v5468
      %v5501 = vunpack.c.l.b16 %v5469
      %v5502 = vunpack.c.l.b16 %v5470
      %v5503 = vunpack.c.l.b16 %v5471
      %v5504 = vunpack.c.l.b16 %v5472
      %v5505 = vunpack.c.l.b16 %v5473
      %v5506 = vunpack.c.l.b16 %v5474
      %v5507 = vpack.c.b16 %v5492, %v5491
      %v5508 = vpack.c.b16 %v5494, %v5493
      %v5509 = vpack.c.b16 %v5496, %v5495
      %v5510 = vpack.c.b16 %v5498, %v5497
      %v5511 = vpack.c.b16 %v5500, %v5499
      %v5512 = vpack.c.b16 %v5502, %v5501
      %v5513 = vpack.c.b16 %v5504, %v5503
      %v5514 = vpack.c.b16 %v5506, %v5505
      %v5523 = vand.u32 %v5514, %v4980
      %5525 = vmatprep.subr.bf16.mxu0 0
      %5526 = vmatpush1.bf16.msra.mxu0 %v5523
      %5527 = vmatprep.subr.bf16.mxu0 0
      %5528 = vmatpush1.bf16.msra.mxu0 %v5513
      %5529 = vmatprep.subr.bf16.mxu0 0
      %5530 = vmatpush1.bf16.msra.mxu0 %v5512
      %5531 = vmatprep.subr.bf16.mxu0 0
      %5532 = vmatpush1.bf16.msra.mxu0 %v5511
      %5533 = vmatprep.subr.bf16.mxu0 0
      %5534 = vmatpush1.bf16.msra.mxu0 %v5510
      %5535 = vmatprep.subr.bf16.mxu0 0
      %5536 = vmatpush1.bf16.msra.mxu0 %v5509
      %5537 = vmatprep.subr.bf16.mxu0 0
      %5538 = vmatpush1.bf16.msra.mxu0 %v5508
      %5539 = vmatprep.subr.bf16.mxu0 0
      %5540 = vmatpush1.bf16.msra.mxu0 %v5507
      %5541 = vmatprep.subr.bf16.mxu0 0
      %5542 = vmatpush2.bf16.msra.mxu0 0
      %5543 = vmatprep.subr.bf16.mxu0 0
      %5544 = vmatpush2.bf16.msra.mxu0 0
      %5545 = vmatprep.subr.bf16.mxu0 0
      %5546 = vmatpush2.bf16.msra.mxu0 0
      %5547 = vmatprep.subr.bf16.mxu0 0
      %5548 = vmatpush2.bf16.msra.mxu0 0
      %5549 = vmatprep.subr.bf16.mxu0 0
      %5550 = vmatpush2.bf16.msra.mxu0 0
      %5551 = vmatprep.subr.bf16.mxu0 0
      %5552 = vmatpush2.bf16.msra.mxu0 0
      %5553 = vmatprep.subr.bf16.mxu0 0
      %5554 = vmatpush2.bf16.msra.mxu0 0
      %5555 = vmatprep.subr.bf16.mxu0 0
      %5556 = vmatpush2.bf16.msra.mxu0 0
      %5557 = vmatprep.mubr.bf16.mxu0 0
      %5558 = vmatmul.mubr.bf16.gmra.mxu0 %v4976
      %v5559 = vpop.f32.mrf.mxu0
      %v5560 = vadd.f32 0.0, %v5559
      %v5561 = vpop.f32.mrf.mxu0
      %v5562 = vpop.f32.mrf.mxu0
      %v5563 = vadd.f32 0.0, %v5562
      %v5564 = vpop.f32.mrf.mxu0
      %5565 = vdwg.mxu0
      %s5566 = scalar_lea.vmem %s7, 48
      %v5567 = vld [vmem:[%s5566] sm:$0xf]
      %v5568 = vld [vmem:[%s5566 + $0x4] sm:$0xf]
      %v5569 = vld [vmem:[%s5566 + $0x8] sm:$0xf]
      %v5570 = vld [vmem:[%s5566 + $0xc] sm:$0xf]
      %v5571 = vpack.c.bf16 %v5563, %v5560
      %v5576 = vunpack.c.l.b16 %v5567
      %v5577 = vunpack.c.l.b16 %v5568
      %v5578 = vunpack.c.l.b16 %v5569
      %v5579 = vunpack.c.l.b16 %v5570
      %v5580 = vpack.c.b16 %v5577, %v5576
      %v5581 = vpack.c.b16 %v5579, %v5578
      %v5583 = vsel %vm5154, %v5580, 0
      %v5586 = vsel %vm5154, %v5581, 0
      %5588 = vmatprep.subr.bf16.mxu0 0
      %5589 = vmatpush1.bf16.msra.mxu0 0
      %5590 = vmatprep.subr.bf16.mxu0 0
      %5591 = vmatpush1.bf16.msra.mxu0 0
      %5592 = vmatprep.subr.bf16.mxu0 0
      %5593 = vmatpush1.bf16.msra.mxu0 0
      %5594 = vmatprep.subr.bf16.mxu0 0
      %5595 = vmatpush1.bf16.msra.mxu0 0
      %5596 = vmatprep.subr.bf16.mxu0 0
      %5597 = vmatpush1.bf16.msra.mxu0 0
      %5598 = vmatprep.subr.bf16.mxu0 0
      %5599 = vmatpush1.bf16.msra.mxu0 0
      %5600 = vmatprep.subr.bf16.mxu0 0
      %5601 = vmatpush1.bf16.msra.mxu0 0
      %5602 = vmatprep.subr.bf16.mxu0 0
      %5603 = vmatpush1.bf16.msra.mxu0 %v5571
      %5604 = vmatprep.subr.bf16.mxu0 0
      %5605 = vmatpush2.bf16.msra.mxu0 0
      %5606 = vmatprep.subr.bf16.mxu0 0
      %5607 = vmatpush2.bf16.msra.mxu0 0
      %5608 = vmatprep.subr.bf16.mxu0 0
      %5609 = vmatpush2.bf16.msra.mxu0 0
      %5610 = vmatprep.subr.bf16.mxu0 0
      %5611 = vmatpush2.bf16.msra.mxu0 0
      %5612 = vmatprep.subr.bf16.mxu0 0
      %5613 = vmatpush2.bf16.msra.mxu0 0
      %5614 = vmatprep.subr.bf16.mxu0 0
      %5615 = vmatpush2.bf16.msra.mxu0 0
      %5616 = vmatprep.subr.bf16.mxu0 0
      %5617 = vmatpush2.bf16.msra.mxu0 0
      %5618 = vmatprep.subr.bf16.mxu0 0
      %5619 = vmatpush2.bf16.msra.mxu0 0
      %5620 = vmatprep.mubr.bf16.mxu0 0
      %5621 = vmatmul.mubr.bf16.gmra.mxu0 %v5583
      %v5622 = vpop.f32.mrf.mxu0
      %v5623 = vadd.f32 0.0, %v5622
      %v5624 = vpop.f32.mrf.mxu0
      %v5625 = vpop.f32.mrf.mxu0
      %v5626 = vadd.f32 0.0, %v5625
      %v5627 = vpop.f32.mrf.mxu0
      %5628 = vmatprep.mubr.bf16.mxu0 0
      %5629 = vmatmul.mubr.bf16.gmra.mxu0 %v5586
      %v5630 = vpop.f32.mrf.mxu0
      %v5631 = vadd.f32 0.0, %v5630
      %v5632 = vpop.f32.mrf.mxu0
      %v5633 = vpop.f32.mrf.mxu0
      %v5634 = vadd.f32 0.0, %v5633
      %v5635 = vpop.f32.mrf.mxu0
      %5636 = vdwg.mxu0
      %v5637 = vadd.f32 %v5454, %v5623
      %v5638 = vadd.f32 %v5455, %v5626
      %v5639 = vadd.f32 %v5456, %v5631
      %v5640 = vadd.f32 %v5457, %v5634
      %s5641 = scalar_lea.vmem %s6, 256
      %v5642 = vld [vmem:[%s5641] sm:$0xf]
      %v5643 = vld [vmem:[%s5641 + $0x4] sm:$0xf]
      %v5644 = vld [vmem:[%s5641 + $0x8] sm:$0xf]
      %v5645 = vld [vmem:[%s5641 + $0xc] sm:$0xf]
      %v5646 = vld [vmem:[%s5641 + $0x10] sm:$0xf]
      %v5647 = vld [vmem:[%s5641 + $0x14] sm:$0xf]
      %v5648 = vld [vmem:[%s5641 + $0x18] sm:$0xf]
      %v5649 = vld [vmem:[%s5641 + $0x1c] sm:$0xf]
      %v5650 = vld [vmem:[%s5641 + $0x20] sm:$0xf]
      %v5651 = vld [vmem:[%s5641 + $0x24] sm:$0xf]
      %v5652 = vld [vmem:[%s5641 + $0x28] sm:$0xf]
      %v5653 = vld [vmem:[%s5641 + $0x2c] sm:$0xf]
      %v5654 = vld [vmem:[%s5641 + $0x30] sm:$0xf]
      %v5655 = vld [vmem:[%s5641 + $0x34] sm:$0xf]
      %v5656 = vld [vmem:[%s5641 + $0x38] sm:$0xf]
      %v5657 = vld [vmem:[%s5641 + $0x3c] sm:$0x1]
      %v5674 = vunpack.c.l.b16 %v5642
      %v5675 = vunpack.c.l.b16 %v5643
      %v5676 = vunpack.c.l.b16 %v5644
      %v5677 = vunpack.c.l.b16 %v5645
      %v5678 = vunpack.c.l.b16 %v5646
      %v5679 = vunpack.c.l.b16 %v5647
      %v5680 = vunpack.c.l.b16 %v5648
      %v5681 = vunpack.c.l.b16 %v5649
      %v5682 = vunpack.c.l.b16 %v5650
      %v5683 = vunpack.c.l.b16 %v5651
      %v5684 = vunpack.c.l.b16 %v5652
      %v5685 = vunpack.c.l.b16 %v5653
      %v5686 = vunpack.c.l.b16 %v5654
      %v5687 = vunpack.c.l.b16 %v5655
      %v5688 = vunpack.c.l.b16 %v5656
      %v5689 = vunpack.c.l.b16 %v5657
      %v5690 = vpack.c.b16 %v5675, %v5674
      %v5691 = vpack.c.b16 %v5677, %v5676
      %v5692 = vpack.c.b16 %v5679, %v5678
      %v5693 = vpack.c.b16 %v5681, %v5680
      %v5694 = vpack.c.b16 %v5683, %v5682
      %v5695 = vpack.c.b16 %v5685, %v5684
      %v5696 = vpack.c.b16 %v5687, %v5686
      %v5697 = vpack.c.b16 %v5689, %v5688
      %v5706 = vand.u32 %v5697, %v4980
      %5708 = vmatprep.subr.bf16.mxu0 0
      %5709 = vmatpush1.bf16.msra.mxu0 %v5706
      %5710 = vmatprep.subr.bf16.mxu0 0
      %5711 = vmatpush1.bf16.msra.mxu0 %v5696
      %5712 = vmatprep.subr.bf16.mxu0 0
      %5713 = vmatpush1.bf16.msra.mxu0 %v5695
      %5714 = vmatprep.subr.bf16.mxu0 0
      %5715 = vmatpush1.bf16.msra.mxu0 %v5694
      %5716 = vmatprep.subr.bf16.mxu0 0
      %5717 = vmatpush1.bf16.msra.mxu0 %v5693
      %5718 = vmatprep.subr.bf16.mxu0 0
      %5719 = vmatpush1.bf16.msra.mxu0 %v5692
      %5720 = vmatprep.subr.bf16.mxu0 0
      %5721 = vmatpush1.bf16.msra.mxu0 %v5691
      %5722 = vmatprep.subr.bf16.mxu0 0
      %5723 = vmatpush1.bf16.msra.mxu0 %v5690
      %5724 = vmatprep.subr.bf16.mxu0 0
      %5725 = vmatpush2.bf16.msra.mxu0 0
      %5726 = vmatprep.subr.bf16.mxu0 0
      %5727 = vmatpush2.bf16.msra.mxu0 0
      %5728 = vmatprep.subr.bf16.mxu0 0
      %5729 = vmatpush2.bf16.msra.mxu0 0
      %5730 = vmatprep.subr.bf16.mxu0 0
      %5731 = vmatpush2.bf16.msra.mxu0 0
      %5732 = vmatprep.subr.bf16.mxu0 0
      %5733 = vmatpush2.bf16.msra.mxu0 0
      %5734 = vmatprep.subr.bf16.mxu0 0
      %5735 = vmatpush2.bf16.msra.mxu0 0
      %5736 = vmatprep.subr.bf16.mxu0 0
      %5737 = vmatpush2.bf16.msra.mxu0 0
      %5738 = vmatprep.subr.bf16.mxu0 0
      %5739 = vmatpush2.bf16.msra.mxu0 0
      %5740 = vmatprep.mubr.bf16.mxu0 0
      %5741 = vmatmul.mubr.bf16.gmra.mxu0 %v4976
      %v5742 = vpop.f32.mrf.mxu0
      %v5743 = vadd.f32 0.0, %v5742
      %v5744 = vpop.f32.mrf.mxu0
      %v5745 = vpop.f32.mrf.mxu0
      %v5746 = vadd.f32 0.0, %v5745
      %v5747 = vpop.f32.mrf.mxu0
      %5748 = vdwg.mxu0
      %s5749 = scalar_lea.vmem %s7, 64
      %v5750 = vld [vmem:[%s5749] sm:$0xf]
      %v5751 = vld [vmem:[%s5749 + $0x4] sm:$0xf]
      %v5752 = vld [vmem:[%s5749 + $0x8] sm:$0xf]
      %v5753 = vld [vmem:[%s5749 + $0xc] sm:$0xf]
      %v5754 = vpack.c.bf16 %v5746, %v5743
      %v5759 = vunpack.c.l.b16 %v5750
      %v5760 = vunpack.c.l.b16 %v5751
      %v5761 = vunpack.c.l.b16 %v5752
      %v5762 = vunpack.c.l.b16 %v5753
      %v5763 = vpack.c.b16 %v5760, %v5759
      %v5764 = vpack.c.b16 %v5762, %v5761
      %v5766 = vsel %vm5154, %v5763, 0
      %v5769 = vsel %vm5154, %v5764, 0
      %5771 = vmatprep.subr.bf16.mxu0 0
      %5772 = vmatpush1.bf16.msra.mxu0 0
      %5773 = vmatprep.subr.bf16.mxu0 0
      %5774 = vmatpush1.bf16.msra.mxu0 0
      %5775 = vmatprep.subr.bf16.mxu0 0
      %5776 = vmatpush1.bf16.msra.mxu0 0
      %5777 = vmatprep.subr.bf16.mxu0 0
      %5778 = vmatpush1.bf16.msra.mxu0 0
      %5779 = vmatprep.subr.bf16.mxu0 0
      %5780 = vmatpush1.bf16.msra.mxu0 0
      %5781 = vmatprep.subr.bf16.mxu0 0
      %5782 = vmatpush1.bf16.msra.mxu0 0
      %5783 = vmatprep.subr.bf16.mxu0 0
      %5784 = vmatpush1.bf16.msra.mxu0 0
      %5785 = vmatprep.subr.bf16.mxu0 0
      %5786 = vmatpush1.bf16.msra.mxu0 %v5754
      %5787 = vmatprep.subr.bf16.mxu0 0
      %5788 = vmatpush2.bf16.msra.mxu0 0
      %5789 = vmatprep.subr.bf16.mxu0 0
      %5790 = vmatpush2.bf16.msra.mxu0 0
      %5791 = vmatprep.subr.bf16.mxu0 0
      %5792 = vmatpush2.bf16.msra.mxu0 0
      %5793 = vmatprep.subr.bf16.mxu0 0
      %5794 = vmatpush2.bf16.msra.mxu0 0
      %5795 = vmatprep.subr.bf16.mxu0 0
      %5796 = vmatpush2.bf16.msra.mxu0 0
      %5797 = vmatprep.subr.bf16.mxu0 0
      %5798 = vmatpush2.bf16.msra.mxu0 0
      %5799 = vmatprep.subr.bf16.mxu0 0
      %5800 = vmatpush2.bf16.msra.mxu0 0
      %5801 = vmatprep.subr.bf16.mxu0 0
      %5802 = vmatpush2.bf16.msra.mxu0 0
      %5803 = vmatprep.mubr.bf16.mxu0 0
      %5804 = vmatmul.mubr.bf16.gmra.mxu0 %v5766
      %v5805 = vpop.f32.mrf.mxu0
      %v5806 = vadd.f32 0.0, %v5805
      %v5807 = vpop.f32.mrf.mxu0
      %v5808 = vpop.f32.mrf.mxu0
      %v5809 = vadd.f32 0.0, %v5808
      %v5810 = vpop.f32.mrf.mxu0
      %5811 = vmatprep.mubr.bf16.mxu0 0
      %5812 = vmatmul.mubr.bf16.gmra.mxu0 %v5769
      %v5813 = vpop.f32.mrf.mxu0
      %v5814 = vadd.f32 0.0, %v5813
      %v5815 = vpop.f32.mrf.mxu0
      %v5816 = vpop.f32.mrf.mxu0
      %v5817 = vadd.f32 0.0, %v5816
      %v5818 = vpop.f32.mrf.mxu0
      %5819 = vdwg.mxu0
      %v5820 = vadd.f32 %v5637, %v5806
      %v5821 = vadd.f32 %v5638, %v5809
      %v5822 = vadd.f32 %v5639, %v5814
      %v5823 = vadd.f32 %v5640, %v5817
      %s5824 = scalar_lea.vmem %s6, 320
      %v5825 = vld [vmem:[%s5824] sm:$0xf]
      %v5826 = vld [vmem:[%s5824 + $0x4] sm:$0xf]
      %v5827 = vld [vmem:[%s5824 + $0x8] sm:$0xf]
      %v5828 = vld [vmem:[%s5824 + $0xc] sm:$0xf]
      %v5829 = vld [vmem:[%s5824 + $0x10] sm:$0xf]
      %v5830 = vld [vmem:[%s5824 + $0x14] sm:$0xf]
      %v5831 = vld [vmem:[%s5824 + $0x18] sm:$0xf]
      %v5832 = vld [vmem:[%s5824 + $0x1c] sm:$0xf]
      %v5833 = vld [vmem:[%s5824 + $0x20] sm:$0xf]
      %v5834 = vld [vmem:[%s5824 + $0x24] sm:$0xf]
      %v5835 = vld [vmem:[%s5824 + $0x28] sm:$0xf]
      %v5836 = vld [vmem:[%s5824 + $0x2c] sm:$0xf]
      %v5837 = vld [vmem:[%s5824 + $0x30] sm:$0xf]
      %v5838 = vld [vmem:[%s5824 + $0x34] sm:$0xf]
      %v5839 = vld [vmem:[%s5824 + $0x38] sm:$0xf]
      %v5840 = vld [vmem:[%s5824 + $0x3c] sm:$0x1]
      %v5857 = vunpack.c.l.b16 %v5825
      %v5858 = vunpack.c.l.b16 %v5826
      %v5859 = vunpack.c.l.b16 %v5827
      %v5860 = vunpack.c.l.b16 %v5828
      %v5861 = vunpack.c.l.b16 %v5829
      %v5862 = vunpack.c.l.b16 %v5830
      %v5863 = vunpack.c.l.b16 %v5831
      %v5864 = vunpack.c.l.b16 %v5832
      %v5865 = vunpack.c.l.b16 %v5833
      %v5866 = vunpack.c.l.b16 %v5834
      %v5867 = vunpack.c.l.b16 %v5835
      %v5868 = vunpack.c.l.b16 %v5836
      %v5869 = vunpack.c.l.b16 %v5837
      %v5870 = vunpack.c.l.b16 %v5838
      %v5871 = vunpack.c.l.b16 %v5839
      %v5872 = vunpack.c.l.b16 %v5840
      %v5873 = vpack.c.b16 %v5858, %v5857
      %v5874 = vpack.c.b16 %v5860, %v5859
      %v5875 = vpack.c.b16 %v5862, %v5861
      %v5876 = vpack.c.b16 %v5864, %v5863
      %v5877 = vpack.c.b16 %v5866, %v5865
      %v5878 = vpack.c.b16 %v5868, %v5867
      %v5879 = vpack.c.b16 %v5870, %v5869
      %v5880 = vpack.c.b16 %v5872, %v5871
      %v5889 = vand.u32 %v5880, %v4980
      %5891 = vmatprep.subr.bf16.mxu0 0
      %5892 = vmatpush1.bf16.msra.mxu0 %v5889
      %5893 = vmatprep.subr.bf16.mxu0 0
      %5894 = vmatpush1.bf16.msra.mxu0 %v5879
      %5895 = vmatprep.subr.bf16.mxu0 0
      %5896 = vmatpush1.bf16.msra.mxu0 %v5878
      %5897 = vmatprep.subr.bf16.mxu0 0
      %5898 = vmatpush1.bf16.msra.mxu0 %v5877
      %5899 = vmatprep.subr.bf16.mxu0 0
      %5900 = vmatpush1.bf16.msra.mxu0 %v5876
      %5901 = vmatprep.subr.bf16.mxu0 0
      %5902 = vmatpush1.bf16.msra.mxu0 %v5875
      %5903 = vmatprep.subr.bf16.mxu0 0
      %5904 = vmatpush1.bf16.msra.mxu0 %v5874
      %5905 = vmatprep.subr.bf16.mxu0 0
      %5906 = vmatpush1.bf16.msra.mxu0 %v5873
      %5907 = vmatprep.subr.bf16.mxu0 0
      %5908 = vmatpush2.bf16.msra.mxu0 0
      %5909 = vmatprep.subr.bf16.mxu0 0
      %5910 = vmatpush2.bf16.msra.mxu0 0
      %5911 = vmatprep.subr.bf16.mxu0 0
      %5912 = vmatpush2.bf16.msra.mxu0 0
      %5913 = vmatprep.subr.bf16.mxu0 0
      %5914 = vmatpush2.bf16.msra.mxu0 0
      %5915 = vmatprep.subr.bf16.mxu0 0
      %5916 = vmatpush2.bf16.msra.mxu0 0
      %5917 = vmatprep.subr.bf16.mxu0 0
      %5918 = vmatpush2.bf16.msra.mxu0 0
      %5919 = vmatprep.subr.bf16.mxu0 0
      %5920 = vmatpush2.bf16.msra.mxu0 0
      %5921 = vmatprep.subr.bf16.mxu0 0
      %5922 = vmatpush2.bf16.msra.mxu0 0
      %5923 = vmatprep.mubr.bf16.mxu0 0
      %5924 = vmatmul.mubr.bf16.gmra.mxu0 %v4976
      %v5925 = vpop.f32.mrf.mxu0
      %v5926 = vadd.f32 0.0, %v5925
      %v5927 = vpop.f32.mrf.mxu0
      %v5928 = vpop.f32.mrf.mxu0
      %v5929 = vadd.f32 0.0, %v5928
      %v5930 = vpop.f32.mrf.mxu0
      %5931 = vdwg.mxu0
      %s5932 = scalar_lea.vmem %s7, 80
      %v5933 = vld [vmem:[%s5932] sm:$0xf]
      %v5934 = vld [vmem:[%s5932 + $0x4] sm:$0xf]
      %v5935 = vld [vmem:[%s5932 + $0x8] sm:$0xf]
      %v5936 = vld [vmem:[%s5932 + $0xc] sm:$0xf]
      %v5937 = vpack.c.bf16 %v5929, %v5926
      %v5942 = vunpack.c.l.b16 %v5933
      %v5943 = vunpack.c.l.b16 %v5934
      %v5944 = vunpack.c.l.b16 %v5935
      %v5945 = vunpack.c.l.b16 %v5936
      %v5946 = vpack.c.b16 %v5943, %v5942
      %v5947 = vpack.c.b16 %v5945, %v5944
      %v5949 = vsel %vm5154, %v5946, 0
      %v5952 = vsel %vm5154, %v5947, 0
      %5954 = vmatprep.subr.bf16.mxu0 0
      %5955 = vmatpush1.bf16.msra.mxu0 0
      %5956 = vmatprep.subr.bf16.mxu0 0
      %5957 = vmatpush1.bf16.msra.mxu0 0
      %5958 = vmatprep.subr.bf16.mxu0 0
      %5959 = vmatpush1.bf16.msra.mxu0 0
      %5960 = vmatprep.subr.bf16.mxu0 0
      %5961 = vmatpush1.bf16.msra.mxu0 0
      %5962 = vmatprep.subr.bf16.mxu0 0
      %5963 = vmatpush1.bf16.msra.mxu0 0
      %5964 = vmatprep.subr.bf16.mxu0 0
      %5965 = vmatpush1.bf16.msra.mxu0 0
      %5966 = vmatprep.subr.bf16.mxu0 0
      %5967 = vmatpush1.bf16.msra.mxu0 0
      %5968 = vmatprep.subr.bf16.mxu0 0
      %5969 = vmatpush1.bf16.msra.mxu0 %v5937
      %5970 = vmatprep.subr.bf16.mxu0 0
      %5971 = vmatpush2.bf16.msra.mxu0 0
      %5972 = vmatprep.subr.bf16.mxu0 0
      %5973 = vmatpush2.bf16.msra.mxu0 0
      %5974 = vmatprep.subr.bf16.mxu0 0
      %5975 = vmatpush2.bf16.msra.mxu0 0
      %5976 = vmatprep.subr.bf16.mxu0 0
      %5977 = vmatpush2.bf16.msra.mxu0 0
      %5978 = vmatprep.subr.bf16.mxu0 0
      %5979 = vmatpush2.bf16.msra.mxu0 0
      %5980 = vmatprep.subr.bf16.mxu0 0
      %5981 = vmatpush2.bf16.msra.mxu0 0
      %5982 = vmatprep.subr.bf16.mxu0 0
      %5983 = vmatpush2.bf16.msra.mxu0 0
      %5984 = vmatprep.subr.bf16.mxu0 0
      %5985 = vmatpush2.bf16.msra.mxu0 0
      %5986 = vmatprep.mubr.bf16.mxu0 0
      %5987 = vmatmul.mubr.bf16.gmra.mxu0 %v5949
      %v5988 = vpop.f32.mrf.mxu0
      %v5989 = vadd.f32 0.0, %v5988
      %v5990 = vpop.f32.mrf.mxu0
      %v5991 = vpop.f32.mrf.mxu0
      %v5992 = vadd.f32 0.0, %v5991
      %v5993 = vpop.f32.mrf.mxu0
      %5994 = vmatprep.mubr.bf16.mxu0 0
      %5995 = vmatmul.mubr.bf16.gmra.mxu0 %v5952
      %v5996 = vpop.f32.mrf.mxu0
      %v5997 = vadd.f32 0.0, %v5996
      %v5998 = vpop.f32.mrf.mxu0
      %v5999 = vpop.f32.mrf.mxu0
      %v6000 = vadd.f32 0.0, %v5999
      %v6001 = vpop.f32.mrf.mxu0
      %6002 = vdwg.mxu0
      %v6003 = vadd.f32 %v5820, %v5989
      %v6004 = vadd.f32 %v5821, %v5992
      %v6005 = vadd.f32 %v5822, %v5997
      %v6006 = vadd.f32 %v5823, %v6000
      %s6007 = scalar_lea.vmem %s6, 384
      %v6008 = vld [vmem:[%s6007] sm:$0xf]
      %v6009 = vld [vmem:[%s6007 + $0x4] sm:$0xf]
      %v6010 = vld [vmem:[%s6007 + $0x8] sm:$0xf]
      %v6011 = vld [vmem:[%s6007 + $0xc] sm:$0xf]
      %v6012 = vld [vmem:[%s6007 + $0x10] sm:$0xf]
      %v6013 = vld [vmem:[%s6007 + $0x14] sm:$0xf]
      %v6014 = vld [vmem:[%s6007 + $0x18] sm:$0xf]
      %v6015 = vld [vmem:[%s6007 + $0x1c] sm:$0xf]
      %v6016 = vld [vmem:[%s6007 + $0x20] sm:$0xf]
      %v6017 = vld [vmem:[%s6007 + $0x24] sm:$0xf]
      %v6018 = vld [vmem:[%s6007 + $0x28] sm:$0xf]
      %v6019 = vld [vmem:[%s6007 + $0x2c] sm:$0xf]
      %v6020 = vld [vmem:[%s6007 + $0x30] sm:$0xf]
      %v6021 = vld [vmem:[%s6007 + $0x34] sm:$0xf]
      %v6022 = vld [vmem:[%s6007 + $0x38] sm:$0xf]
      %v6023 = vld [vmem:[%s6007 + $0x3c] sm:$0x1]
      %v6040 = vunpack.c.l.b16 %v6008
      %v6041 = vunpack.c.l.b16 %v6009
      %v6042 = vunpack.c.l.b16 %v6010
      %v6043 = vunpack.c.l.b16 %v6011
      %v6044 = vunpack.c.l.b16 %v6012
      %v6045 = vunpack.c.l.b16 %v6013
      %v6046 = vunpack.c.l.b16 %v6014
      %v6047 = vunpack.c.l.b16 %v6015
      %v6048 = vunpack.c.l.b16 %v6016
      %v6049 = vunpack.c.l.b16 %v6017
      %v6050 = vunpack.c.l.b16 %v6018
      %v6051 = vunpack.c.l.b16 %v6019
      %v6052 = vunpack.c.l.b16 %v6020
      %v6053 = vunpack.c.l.b16 %v6021
      %v6054 = vunpack.c.l.b16 %v6022
      %v6055 = vunpack.c.l.b16 %v6023
      %v6056 = vpack.c.b16 %v6041, %v6040
      %v6057 = vpack.c.b16 %v6043, %v6042
      %v6058 = vpack.c.b16 %v6045, %v6044
      %v6059 = vpack.c.b16 %v6047, %v6046
      %v6060 = vpack.c.b16 %v6049, %v6048
      %v6061 = vpack.c.b16 %v6051, %v6050
      %v6062 = vpack.c.b16 %v6053, %v6052
      %v6063 = vpack.c.b16 %v6055, %v6054
      %v6072 = vand.u32 %v6063, %v4980
      %6074 = vmatprep.subr.bf16.mxu0 0
      %6075 = vmatpush1.bf16.msra.mxu0 %v6072
      %6076 = vmatprep.subr.bf16.mxu0 0
      %6077 = vmatpush1.bf16.msra.mxu0 %v6062
      %6078 = vmatprep.subr.bf16.mxu0 0
      %6079 = vmatpush1.bf16.msra.mxu0 %v6061
      %6080 = vmatprep.subr.bf16.mxu0 0
      %6081 = vmatpush1.bf16.msra.mxu0 %v6060
      %6082 = vmatprep.subr.bf16.mxu0 0
      %6083 = vmatpush1.bf16.msra.mxu0 %v6059
      %6084 = vmatprep.subr.bf16.mxu0 0
      %6085 = vmatpush1.bf16.msra.mxu0 %v6058
      %6086 = vmatprep.subr.bf16.mxu0 0
      %6087 = vmatpush1.bf16.msra.mxu0 %v6057
      %6088 = vmatprep.subr.bf16.mxu0 0
      %6089 = vmatpush1.bf16.msra.mxu0 %v6056
      %6090 = vmatprep.subr.bf16.mxu0 0
      %6091 = vmatpush2.bf16.msra.mxu0 0
      %6092 = vmatprep.subr.bf16.mxu0 0
      %6093 = vmatpush2.bf16.msra.mxu0 0
      %6094 = vmatprep.subr.bf16.mxu0 0
      %6095 = vmatpush2.bf16.msra.mxu0 0
      %6096 = vmatprep.subr.bf16.mxu0 0
      %6097 = vmatpush2.bf16.msra.mxu0 0
      %6098 = vmatprep.subr.bf16.mxu0 0
      %6099 = vmatpush2.bf16.msra.mxu0 0
      %6100 = vmatprep.subr.bf16.mxu0 0
      %6101 = vmatpush2.bf16.msra.mxu0 0
      %6102 = vmatprep.subr.bf16.mxu0 0
      %6103 = vmatpush2.bf16.msra.mxu0 0
      %6104 = vmatprep.subr.bf16.mxu0 0
      %6105 = vmatpush2.bf16.msra.mxu0 0
      %6106 = vmatprep.mubr.bf16.mxu0 0
      %6107 = vmatmul.mubr.bf16.gmra.mxu0 %v4976
      %v6108 = vpop.f32.mrf.mxu0
      %v6109 = vadd.f32 0.0, %v6108
      %v6110 = vpop.f32.mrf.mxu0
      %v6111 = vpop.f32.mrf.mxu0
      %v6112 = vadd.f32 0.0, %v6111
      %v6113 = vpop.f32.mrf.mxu0
      %6114 = vdwg.mxu0
      %s6115 = scalar_lea.vmem %s7, 96
      %v6116 = vld [vmem:[%s6115] sm:$0xf]
      %v6117 = vld [vmem:[%s6115 + $0x4] sm:$0xf]
      %v6118 = vld [vmem:[%s6115 + $0x8] sm:$0xf]
      %v6119 = vld [vmem:[%s6115 + $0xc] sm:$0xf]
      %v6120 = vpack.c.bf16 %v6112, %v6109
      %v6125 = vunpack.c.l.b16 %v6116
      %v6126 = vunpack.c.l.b16 %v6117
      %v6127 = vunpack.c.l.b16 %v6118
      %v6128 = vunpack.c.l.b16 %v6119
      %v6129 = vpack.c.b16 %v6126, %v6125
      %v6130 = vpack.c.b16 %v6128, %v6127
      %v6132 = vsel %vm5154, %v6129, 0
      %v6135 = vsel %vm5154, %v6130, 0
      %6137 = vmatprep.subr.bf16.mxu0 0
      %6138 = vmatpush1.bf16.msra.mxu0 0
      %6139 = vmatprep.subr.bf16.mxu0 0
      %6140 = vmatpush1.bf16.msra.mxu0 0
      %6141 = vmatprep.subr.bf16.mxu0 0
      %6142 = vmatpush1.bf16.msra.mxu0 0
      %6143 = vmatprep.subr.bf16.mxu0 0
      %6144 = vmatpush1.bf16.msra.mxu0 0
      %6145 = vmatprep.subr.bf16.mxu0 0
      %6146 = vmatpush1.bf16.msra.mxu0 0
      %6147 = vmatprep.subr.bf16.mxu0 0
      %6148 = vmatpush1.bf16.msra.mxu0 0
      %6149 = vmatprep.subr.bf16.mxu0 0
      %6150 = vmatpush1.bf16.msra.mxu0 0
      %6151 = vmatprep.subr.bf16.mxu0 0
      %6152 = vmatpush1.bf16.msra.mxu0 %v6120
      %6153 = vmatprep.subr.bf16.mxu0 0
      %6154 = vmatpush2.bf16.msra.mxu0 0
      %6155 = vmatprep.subr.bf16.mxu0 0
      %6156 = vmatpush2.bf16.msra.mxu0 0
      %6157 = vmatprep.subr.bf16.mxu0 0
      %6158 = vmatpush2.bf16.msra.mxu0 0
      %6159 = vmatprep.subr.bf16.mxu0 0
      %6160 = vmatpush2.bf16.msra.mxu0 0
      %6161 = vmatprep.subr.bf16.mxu0 0
      %6162 = vmatpush2.bf16.msra.mxu0 0
      %6163 = vmatprep.subr.bf16.mxu0 0
      %6164 = vmatpush2.bf16.msra.mxu0 0
      %6165 = vmatprep.subr.bf16.mxu0 0
      %6166 = vmatpush2.bf16.msra.mxu0 0
      %6167 = vmatprep.subr.bf16.mxu0 0
      %6168 = vmatpush2.bf16.msra.mxu0 0
      %6169 = vmatprep.mubr.bf16.mxu0 0
      %6170 = vmatmul.mubr.bf16.gmra.mxu0 %v6132
      %v6171 = vpop.f32.mrf.mxu0
      %v6172 = vadd.f32 0.0, %v6171
      %v6173 = vpop.f32.mrf.mxu0
      %v6174 = vpop.f32.mrf.mxu0
      %v6175 = vadd.f32 0.0, %v6174
      %v6176 = vpop.f32.mrf.mxu0
      %6177 = vmatprep.mubr.bf16.mxu0 0
      %6178 = vmatmul.mubr.bf16.gmra.mxu0 %v6135
      %v6179 = vpop.f32.mrf.mxu0
      %v6180 = vadd.f32 0.0, %v6179
      %v6181 = vpop.f32.mrf.mxu0
      %v6182 = vpop.f32.mrf.mxu0
      %v6183 = vadd.f32 0.0, %v6182
      %v6184 = vpop.f32.mrf.mxu0
      %6185 = vdwg.mxu0
      %v6186 = vadd.f32 %v6003, %v6172
      %v6187 = vadd.f32 %v6004, %v6175
      %v6188 = vadd.f32 %v6005, %v6180
      %v6189 = vadd.f32 %v6006, %v6183
      %s6190 = scalar_lea.vmem %s6, 448
      %v6191 = vld [vmem:[%s6190] sm:$0xf]
      %v6192 = vld [vmem:[%s6190 + $0x4] sm:$0xf]
      %v6193 = vld [vmem:[%s6190 + $0x8] sm:$0xf]
      %v6194 = vld [vmem:[%s6190 + $0xc] sm:$0xf]
      %v6195 = vld [vmem:[%s6190 + $0x10] sm:$0xf]
      %v6196 = vld [vmem:[%s6190 + $0x14] sm:$0xf]
      %v6197 = vld [vmem:[%s6190 + $0x18] sm:$0xf]
      %v6198 = vld [vmem:[%s6190 + $0x1c] sm:$0xf]
      %v6199 = vld [vmem:[%s6190 + $0x20] sm:$0xf]
      %v6200 = vld [vmem:[%s6190 + $0x24] sm:$0xf]
      %v6201 = vld [vmem:[%s6190 + $0x28] sm:$0xf]
      %v6202 = vld [vmem:[%s6190 + $0x2c] sm:$0xf]
      %v6203 = vld [vmem:[%s6190 + $0x30] sm:$0xf]
      %v6204 = vld [vmem:[%s6190 + $0x34] sm:$0xf]
      %v6205 = vld [vmem:[%s6190 + $0x38] sm:$0xf]
      %v6206 = vld [vmem:[%s6190 + $0x3c] sm:$0x1]
      %v6223 = vunpack.c.l.b16 %v6191
      %v6224 = vunpack.c.l.b16 %v6192
      %v6225 = vunpack.c.l.b16 %v6193
      %v6226 = vunpack.c.l.b16 %v6194
      %v6227 = vunpack.c.l.b16 %v6195
      %v6228 = vunpack.c.l.b16 %v6196
      %v6229 = vunpack.c.l.b16 %v6197
      %v6230 = vunpack.c.l.b16 %v6198
      %v6231 = vunpack.c.l.b16 %v6199
      %v6232 = vunpack.c.l.b16 %v6200
      %v6233 = vunpack.c.l.b16 %v6201
      %v6234 = vunpack.c.l.b16 %v6202
      %v6235 = vunpack.c.l.b16 %v6203
      %v6236 = vunpack.c.l.b16 %v6204
      %v6237 = vunpack.c.l.b16 %v6205
      %v6238 = vunpack.c.l.b16 %v6206
      %v6239 = vpack.c.b16 %v6224, %v6223
      %v6240 = vpack.c.b16 %v6226, %v6225
      %v6241 = vpack.c.b16 %v6228, %v6227
      %v6242 = vpack.c.b16 %v6230, %v6229
      %v6243 = vpack.c.b16 %v6232, %v6231
      %v6244 = vpack.c.b16 %v6234, %v6233
      %v6245 = vpack.c.b16 %v6236, %v6235
      %v6246 = vpack.c.b16 %v6238, %v6237
      %v6255 = vand.u32 %v6246, %v4980
      %6257 = vmatprep.subr.bf16.mxu0 0
      %6258 = vmatpush1.bf16.msra.mxu0 %v6255
      %6259 = vmatprep.subr.bf16.mxu0 0
      %6260 = vmatpush1.bf16.msra.mxu0 %v6245
      %6261 = vmatprep.subr.bf16.mxu0 0
      %6262 = vmatpush1.bf16.msra.mxu0 %v6244
      %6263 = vmatprep.subr.bf16.mxu0 0
      %6264 = vmatpush1.bf16.msra.mxu0 %v6243
      %6265 = vmatprep.subr.bf16.mxu0 0
      %6266 = vmatpush1.bf16.msra.mxu0 %v6242
      %6267 = vmatprep.subr.bf16.mxu0 0
      %6268 = vmatpush1.bf16.msra.mxu0 %v6241
      %6269 = vmatprep.subr.bf16.mxu0 0
      %6270 = vmatpush1.bf16.msra.mxu0 %v6240
      %6271 = vmatprep.subr.bf16.mxu0 0
      %6272 = vmatpush1.bf16.msra.mxu0 %v6239
      %6273 = vmatprep.subr.bf16.mxu0 0
      %6274 = vmatpush2.bf16.msra.mxu0 0
      %6275 = vmatprep.subr.bf16.mxu0 0
      %6276 = vmatpush2.bf16.msra.mxu0 0
      %6277 = vmatprep.subr.bf16.mxu0 0
      %6278 = vmatpush2.bf16.msra.mxu0 0
      %6279 = vmatprep.subr.bf16.mxu0 0
      %6280 = vmatpush2.bf16.msra.mxu0 0
      %6281 = vmatprep.subr.bf16.mxu0 0
      %6282 = vmatpush2.bf16.msra.mxu0 0
      %6283 = vmatprep.subr.bf16.mxu0 0
      %6284 = vmatpush2.bf16.msra.mxu0 0
      %6285 = vmatprep.subr.bf16.mxu0 0
      %6286 = vmatpush2.bf16.msra.mxu0 0
      %6287 = vmatprep.subr.bf16.mxu0 0
      %6288 = vmatpush2.bf16.msra.mxu0 0
      %6289 = vmatprep.mubr.bf16.mxu0 0
      %6290 = vmatmul.mubr.bf16.gmra.mxu0 %v4976
      %v6291 = vpop.f32.mrf.mxu0
      %v6292 = vadd.f32 0.0, %v6291
      %v6293 = vpop.f32.mrf.mxu0
      %v6294 = vpop.f32.mrf.mxu0
      %v6295 = vadd.f32 0.0, %v6294
      %v6296 = vpop.f32.mrf.mxu0
      %6297 = vdwg.mxu0
      %s6298 = scalar_lea.vmem %s7, 112
      %v6299 = vld [vmem:[%s6298] sm:$0xf]
      %v6300 = vld [vmem:[%s6298 + $0x4] sm:$0xf]
      %v6301 = vld [vmem:[%s6298 + $0x8] sm:$0xf]
      %v6302 = vld [vmem:[%s6298 + $0xc] sm:$0xf]
      %v6303 = vpack.c.bf16 %v6295, %v6292
      %v6308 = vunpack.c.l.b16 %v6299
      %v6309 = vunpack.c.l.b16 %v6300
      %v6310 = vunpack.c.l.b16 %v6301
      %v6311 = vunpack.c.l.b16 %v6302
      %v6312 = vpack.c.b16 %v6309, %v6308
      %v6313 = vpack.c.b16 %v6311, %v6310
      %v6315 = vsel %vm5154, %v6312, 0
      %v6318 = vsel %vm5154, %v6313, 0
      %6320 = vmatprep.subr.bf16.mxu0 0
      %6321 = vmatpush1.bf16.msra.mxu0 0
      %6322 = vmatprep.subr.bf16.mxu0 0
      %6323 = vmatpush1.bf16.msra.mxu0 0
      %6324 = vmatprep.subr.bf16.mxu0 0
      %6325 = vmatpush1.bf16.msra.mxu0 0
      %6326 = vmatprep.subr.bf16.mxu0 0
      %6327 = vmatpush1.bf16.msra.mxu0 0
      %6328 = vmatprep.subr.bf16.mxu0 0
      %6329 = vmatpush1.bf16.msra.mxu0 0
      %6330 = vmatprep.subr.bf16.mxu0 0
      %6331 = vmatpush1.bf16.msra.mxu0 0
      %6332 = vmatprep.subr.bf16.mxu0 0
      %6333 = vmatpush1.bf16.msra.mxu0 0
      %6334 = vmatprep.subr.bf16.mxu0 0
      %6335 = vmatpush1.bf16.msra.mxu0 %v6303
      %6336 = vmatprep.subr.bf16.mxu0 0
      %6337 = vmatpush2.bf16.msra.mxu0 0
      %6338 = vmatprep.subr.bf16.mxu0 0
      %6339 = vmatpush2.bf16.msra.mxu0 0
      %6340 = vmatprep.subr.bf16.mxu0 0
      %6341 = vmatpush2.bf16.msra.mxu0 0
      %6342 = vmatprep.subr.bf16.mxu0 0
      %6343 = vmatpush2.bf16.msra.mxu0 0
      %6344 = vmatprep.subr.bf16.mxu0 0
      %6345 = vmatpush2.bf16.msra.mxu0 0
      %6346 = vmatprep.subr.bf16.mxu0 0
      %6347 = vmatpush2.bf16.msra.mxu0 0
      %6348 = vmatprep.subr.bf16.mxu0 0
      %6349 = vmatpush2.bf16.msra.mxu0 0
      %6350 = vmatprep.subr.bf16.mxu0 0
      %6351 = vmatpush2.bf16.msra.mxu0 0
      %6352 = vmatprep.mubr.bf16.mxu0 0
      %6353 = vmatmul.mubr.bf16.gmra.mxu0 %v6315
      %v6354 = vpop.f32.mrf.mxu0
      %v6355 = vadd.f32 0.0, %v6354
      %v6356 = vpop.f32.mrf.mxu0
      %v6357 = vpop.f32.mrf.mxu0
      %v6358 = vadd.f32 0.0, %v6357
      %v6359 = vpop.f32.mrf.mxu0
      %6360 = vmatprep.mubr.bf16.mxu0 0
      %6361 = vmatmul.mubr.bf16.gmra.mxu0 %v6318
      %v6362 = vpop.f32.mrf.mxu0
      %v6363 = vadd.f32 0.0, %v6362
      %v6364 = vpop.f32.mrf.mxu0
      %v6365 = vpop.f32.mrf.mxu0
      %v6366 = vadd.f32 0.0, %v6365
      %v6367 = vpop.f32.mrf.mxu0
      %6368 = vdwg.mxu0
      %v6369 = vadd.f32 %v6186, %v6355
      %v6370 = vadd.f32 %v6187, %v6358
      %v6371 = vadd.f32 %v6188, %v6363
      %v6372 = vadd.f32 %v6189, %v6366
      %s6373 = scalar_lea.vmem %s6, 512
      %v6374 = vld [vmem:[%s6373] sm:$0xf]
      %v6375 = vld [vmem:[%s6373 + $0x4] sm:$0xf]
      %v6376 = vld [vmem:[%s6373 + $0x8] sm:$0xf]
      %v6377 = vld [vmem:[%s6373 + $0xc] sm:$0xf]
      %v6378 = vld [vmem:[%s6373 + $0x10] sm:$0xf]
      %v6379 = vld [vmem:[%s6373 + $0x14] sm:$0xf]
      %v6380 = vld [vmem:[%s6373 + $0x18] sm:$0xf]
      %v6381 = vld [vmem:[%s6373 + $0x1c] sm:$0xf]
      %v6382 = vld [vmem:[%s6373 + $0x20] sm:$0xf]
      %v6383 = vld [vmem:[%s6373 + $0x24] sm:$0xf]
      %v6384 = vld [vmem:[%s6373 + $0x28] sm:$0xf]
      %v6385 = vld [vmem:[%s6373 + $0x2c] sm:$0xf]
      %v6386 = vld [vmem:[%s6373 + $0x30] sm:$0xf]
      %v6387 = vld [vmem:[%s6373 + $0x34] sm:$0xf]
      %v6388 = vld [vmem:[%s6373 + $0x38] sm:$0xf]
      %v6389 = vld [vmem:[%s6373 + $0x3c] sm:$0x1]
      %v6406 = vunpack.c.l.b16 %v6374
      %v6407 = vunpack.c.l.b16 %v6375
      %v6408 = vunpack.c.l.b16 %v6376
      %v6409 = vunpack.c.l.b16 %v6377
      %v6410 = vunpack.c.l.b16 %v6378
      %v6411 = vunpack.c.l.b16 %v6379
      %v6412 = vunpack.c.l.b16 %v6380
      %v6413 = vunpack.c.l.b16 %v6381
      %v6414 = vunpack.c.l.b16 %v6382
      %v6415 = vunpack.c.l.b16 %v6383
      %v6416 = vunpack.c.l.b16 %v6384
      %v6417 = vunpack.c.l.b16 %v6385
      %v6418 = vunpack.c.l.b16 %v6386
      %v6419 = vunpack.c.l.b16 %v6387
      %v6420 = vunpack.c.l.b16 %v6388
      %v6421 = vunpack.c.l.b16 %v6389
      %v6422 = vpack.c.b16 %v6407, %v6406
      %v6423 = vpack.c.b16 %v6409, %v6408
      %v6424 = vpack.c.b16 %v6411, %v6410
      %v6425 = vpack.c.b16 %v6413, %v6412
      %v6426 = vpack.c.b16 %v6415, %v6414
      %v6427 = vpack.c.b16 %v6417, %v6416
      %v6428 = vpack.c.b16 %v6419, %v6418
      %v6429 = vpack.c.b16 %v6421, %v6420
      %v6438 = vand.u32 %v6429, %v4980
      %6440 = vmatprep.subr.bf16.mxu0 0
      %6441 = vmatpush1.bf16.msra.mxu0 %v6438
      %6442 = vmatprep.subr.bf16.mxu0 0
      %6443 = vmatpush1.bf16.msra.mxu0 %v6428
      %6444 = vmatprep.subr.bf16.mxu0 0
      %6445 = vmatpush1.bf16.msra.mxu0 %v6427
      %6446 = vmatprep.subr.bf16.mxu0 0
      %6447 = vmatpush1.bf16.msra.mxu0 %v6426
      %6448 = vmatprep.subr.bf16.mxu0 0
      %6449 = vmatpush1.bf16.msra.mxu0 %v6425
      %6450 = vmatprep.subr.bf16.mxu0 0
      %6451 = vmatpush1.bf16.msra.mxu0 %v6424
      %6452 = vmatprep.subr.bf16.mxu0 0
      %6453 = vmatpush1.bf16.msra.mxu0 %v6423
      %6454 = vmatprep.subr.bf16.mxu0 0
      %6455 = vmatpush1.bf16.msra.mxu0 %v6422
      %6456 = vmatprep.subr.bf16.mxu0 0
      %6457 = vmatpush2.bf16.msra.mxu0 0
      %6458 = vmatprep.subr.bf16.mxu0 0
      %6459 = vmatpush2.bf16.msra.mxu0 0
      %6460 = vmatprep.subr.bf16.mxu0 0
      %6461 = vmatpush2.bf16.msra.mxu0 0
      %6462 = vmatprep.subr.bf16.mxu0 0
      %6463 = vmatpush2.bf16.msra.mxu0 0
      %6464 = vmatprep.subr.bf16.mxu0 0
      %6465 = vmatpush2.bf16.msra.mxu0 0
      %6466 = vmatprep.subr.bf16.mxu0 0
      %6467 = vmatpush2.bf16.msra.mxu0 0
      %6468 = vmatprep.subr.bf16.mxu0 0
      %6469 = vmatpush2.bf16.msra.mxu0 0
      %6470 = vmatprep.subr.bf16.mxu0 0
      %6471 = vmatpush2.bf16.msra.mxu0 0
      %6472 = vmatprep.mubr.bf16.mxu0 0
      %6473 = vmatmul.mubr.bf16.gmra.mxu0 %v4976
      %v6474 = vpop.f32.mrf.mxu0
      %v6475 = vadd.f32 0.0, %v6474
      %v6476 = vpop.f32.mrf.mxu0
      %v6477 = vpop.f32.mrf.mxu0
      %v6478 = vadd.f32 0.0, %v6477
      %v6479 = vpop.f32.mrf.mxu0
      %6480 = vdwg.mxu0
      %s6481 = scalar_lea.vmem %s7, 128
      %v6482 = vld [vmem:[%s6481] sm:$0xf]
      %v6483 = vld [vmem:[%s6481 + $0x4] sm:$0xf]
      %v6484 = vld [vmem:[%s6481 + $0x8] sm:$0xf]
      %v6485 = vld [vmem:[%s6481 + $0xc] sm:$0xf]
      %v6486 = vpack.c.bf16 %v6478, %v6475
      %v6491 = vunpack.c.l.b16 %v6482
      %v6492 = vunpack.c.l.b16 %v6483
      %v6493 = vunpack.c.l.b16 %v6484
      %v6494 = vunpack.c.l.b16 %v6485
      %v6495 = vpack.c.b16 %v6492, %v6491
      %v6496 = vpack.c.b16 %v6494, %v6493
      %v6498 = vsel %vm5154, %v6495, 0
      %v6501 = vsel %vm5154, %v6496, 0
      %6503 = vmatprep.subr.bf16.mxu0 0
      %6504 = vmatpush1.bf16.msra.mxu0 0
      %6505 = vmatprep.subr.bf16.mxu0 0
      %6506 = vmatpush1.bf16.msra.mxu0 0
      %6507 = vmatprep.subr.bf16.mxu0 0
      %6508 = vmatpush1.bf16.msra.mxu0 0
      %6509 = vmatprep.subr.bf16.mxu0 0
      %6510 = vmatpush1.bf16.msra.mxu0 0
      %6511 = vmatprep.subr.bf16.mxu0 0
      %6512 = vmatpush1.bf16.msra.mxu0 0
      %6513 = vmatprep.subr.bf16.mxu0 0
      %6514 = vmatpush1.bf16.msra.mxu0 0
      %6515 = vmatprep.subr.bf16.mxu0 0
      %6516 = vmatpush1.bf16.msra.mxu0 0
      %6517 = vmatprep.subr.bf16.mxu0 0
      %6518 = vmatpush1.bf16.msra.mxu0 %v6486
      %6519 = vmatprep.subr.bf16.mxu0 0
      %6520 = vmatpush2.bf16.msra.mxu0 0
      %6521 = vmatprep.subr.bf16.mxu0 0
      %6522 = vmatpush2.bf16.msra.mxu0 0
      %6523 = vmatprep.subr.bf16.mxu0 0
      %6524 = vmatpush2.bf16.msra.mxu0 0
      %6525 = vmatprep.subr.bf16.mxu0 0
      %6526 = vmatpush2.bf16.msra.mxu0 0
      %6527 = vmatprep.subr.bf16.mxu0 0
      %6528 = vmatpush2.bf16.msra.mxu0 0
      %6529 = vmatprep.subr.bf16.mxu0 0
      %6530 = vmatpush2.bf16.msra.mxu0 0
      %6531 = vmatprep.subr.bf16.mxu0 0
      %6532 = vmatpush2.bf16.msra.mxu0 0
      %6533 = vmatprep.subr.bf16.mxu0 0
      %6534 = vmatpush2.bf16.msra.mxu0 0
      %6535 = vmatprep.mubr.bf16.mxu0 0
      %6536 = vmatmul.mubr.bf16.gmra.mxu0 %v6498
      %v6537 = vpop.f32.mrf.mxu0
      %v6538 = vadd.f32 0.0, %v6537
      %v6539 = vpop.f32.mrf.mxu0
      %v6540 = vpop.f32.mrf.mxu0
      %v6541 = vadd.f32 0.0, %v6540
      %v6542 = vpop.f32.mrf.mxu0
      %6543 = vmatprep.mubr.bf16.mxu0 0
      %6544 = vmatmul.mubr.bf16.gmra.mxu0 %v6501
      %v6545 = vpop.f32.mrf.mxu0
      %v6546 = vadd.f32 0.0, %v6545
      %v6547 = vpop.f32.mrf.mxu0
      %v6548 = vpop.f32.mrf.mxu0
      %v6549 = vadd.f32 0.0, %v6548
      %v6550 = vpop.f32.mrf.mxu0
      %6551 = vdwg.mxu0
      %v6552 = vadd.f32 %v6369, %v6538
      %v6553 = vadd.f32 %v6370, %v6541
      %v6554 = vadd.f32 %v6371, %v6546
      %v6555 = vadd.f32 %v6372, %v6549
      %v6556 = vld [vmem:[%s8] sm:$0xff]
      %v6557 = vld [vmem:[%s8 + $0x8] sm:$0xff]
      %v6558 = vld [vmem:[%s8 + $0x10] sm:$0xff]
      %v6559 = vld [vmem:[%s8 + $0x18] sm:$0xff]
      %6561 = vset.pattern.permute.xlu0 0
      %6562 = vperm.xlu0 %6561, %v6556
      %v6563 = vpop.permute.xlu0 %6562
      %6566 = vset.pattern.permute.xlu0 0
      %6567 = vperm.xlu0 %6566, %v6557
      %v6568 = vpop.permute.xlu0 %6567
      %6571 = vset.pattern.permute.xlu0 0
      %6572 = vperm.xlu0 %6571, %v6558
      %v6573 = vpop.permute.xlu0 %6572
      %6576 = vset.pattern.permute.xlu0 0
      %6577 = vperm.xlu0 %6576, %v6559
      %v6578 = vpop.permute.xlu0 %6577
      %v6580 = vadd.f32 %v6552, %v6563
      %v6581 = vadd.f32 %v6553, %v6568
      %v6582 = vadd.f32 %v6554, %v6573
      %v6583 = vadd.f32 %v6555, %v6578
      %v6584 = vmax.f32 %v6580, 0.0
      %v6585 = vmax.f32 %v6581, 0.0
      %v6586 = vmax.f32 %v6582, 0.0
      %v6587 = vmax.f32 %v6583, 0.0
      %v6588 = vpack.c.bf16 %v6585, %v6584
      %v6589 = vpack.c.bf16 %v6587, %v6586
      %v6590 = vld [vmem:[%s9] sm:$0xf]
      %v6591 = vld [vmem:[%s9 + $0x4] sm:$0xf]
      %v6592 = vld [vmem:[%s9 + $0x8] sm:$0xf]
      %v6593 = vld [vmem:[%s9 + $0xc] sm:$0x1]
      %v6598 = vunpack.c.l.b16 %v6590
      %v6599 = vunpack.c.l.b16 %v6591
      %v6600 = vunpack.c.l.b16 %v6592
      %v6601 = vunpack.c.l.b16 %v6593
      %v6602 = vpack.c.b16 %v6599, %v6598
      %v6603 = vpack.c.b16 %v6601, %v6600
      %vm6605 = vcmask 203776
      %v6607 = vsel %vm6605, %v6588, 0
      %v6610 = vsel %vm6605, %v6589, 0
      %v6613 = vand.u32 %v6603, %v4980
      %6615 = vmatprep.subr.bf16.mxu0 0
      %6616 = vmatpush1.bf16.msra.mxu0 0
      %6617 = vmatprep.subr.bf16.mxu0 0
      %6618 = vmatpush1.bf16.msra.mxu0 0
      %6619 = vmatprep.subr.bf16.mxu0 0
      %6620 = vmatpush1.bf16.msra.mxu0 0
      %6621 = vmatprep.subr.bf16.mxu0 0
      %6622 = vmatpush1.bf16.msra.mxu0 0
      %6623 = vmatprep.subr.bf16.mxu0 0
      %6624 = vmatpush1.bf16.msra.mxu0 0
      %6625 = vmatprep.subr.bf16.mxu0 0
      %6626 = vmatpush1.bf16.msra.mxu0 0
      %6627 = vmatprep.subr.bf16.mxu0 0
      %6628 = vmatpush1.bf16.msra.mxu0 %v6613
      %6629 = vmatprep.subr.bf16.mxu0 0
      %6630 = vmatpush1.bf16.msra.mxu0 %v6602
      %6631 = vmatprep.subr.bf16.mxu0 0
      %6632 = vmatpush2.bf16.msra.mxu0 0
      %6633 = vmatprep.subr.bf16.mxu0 0
      %6634 = vmatpush2.bf16.msra.mxu0 0
      %6635 = vmatprep.subr.bf16.mxu0 0
      %6636 = vmatpush2.bf16.msra.mxu0 0
      %6637 = vmatprep.subr.bf16.mxu0 0
      %6638 = vmatpush2.bf16.msra.mxu0 0
      %6639 = vmatprep.subr.bf16.mxu0 0
      %6640 = vmatpush2.bf16.msra.mxu0 0
      %6641 = vmatprep.subr.bf16.mxu0 0
      %6642 = vmatpush2.bf16.msra.mxu0 0
      %6643 = vmatprep.subr.bf16.mxu0 0
      %6644 = vmatpush2.bf16.msra.mxu0 0
      %6645 = vmatprep.subr.bf16.mxu0 0
      %6646 = vmatpush2.bf16.msra.mxu0 0
      %6647 = vmatprep.mubr.bf16.mxu0 0
      %6648 = vmatmul.mubr.bf16.gmra.mxu0 %v6607
      %v6649 = vpop.f32.mrf.mxu0
      %v6650 = vadd.f32 0.0, %v6649
      %v6651 = vpop.f32.mrf.mxu0
      %v6652 = vpop.f32.mrf.mxu0
      %v6653 = vadd.f32 0.0, %v6652
      %v6654 = vpop.f32.mrf.mxu0
      %6655 = vmatprep.mubr.bf16.mxu0 0
      %6656 = vmatmul.mubr.bf16.gmra.mxu0 %v6610
      %v6657 = vpop.f32.mrf.mxu0
      %v6658 = vadd.f32 0.0, %v6657
      %v6659 = vpop.f32.mrf.mxu0
      %v6660 = vpop.f32.mrf.mxu0
      %v6661 = vadd.f32 0.0, %v6660
      %v6662 = vpop.f32.mrf.mxu0
      %6663 = vdwg.mxu0
      %v6664 = vld [vmem:[%s10] sm:$0xf]
      %v6665 = vld [vmem:[%s10 + $0x4] sm:$0xf]
      %v6666 = vld [vmem:[%s10 + $0x8] sm:$0xf]
      %v6667 = vld [vmem:[%s10 + $0xc] sm:$0xf]
      %v6668 = vld [vmem:[%s10 + $0x10] sm:$0xf]
      %v6669 = vld [vmem:[%s10 + $0x14] sm:$0xf]
      %v6670 = vld [vmem:[%s10 + $0x18] sm:$0xf]
      %v6671 = vld [vmem:[%s10 + $0x1c] sm:$0xf]
      %v6672 = vpack.c.bf16 %v6653, %v6650
      %v6673 = vpack.c.bf16 %v6661, %v6658
      %s6674 = scalar_lea.vmem %s9, 16
      %v6675 = vld [vmem:[%s6674] sm:$0xf]
      %v6676 = vld [vmem:[%s6674 + $0x4] sm:$0xf]
      %v6677 = vld [vmem:[%s6674 + $0x8] sm:$0xf]
      %v6678 = vld [vmem:[%s6674 + $0xc] sm:$0x1]
      %v6683 = vunpack.c.l.b16 %v6675
      %v6684 = vunpack.c.l.b16 %v6676
      %v6685 = vunpack.c.l.b16 %v6677
      %v6686 = vunpack.c.l.b16 %v6678
      %v6687 = vpack.c.b16 %v6684, %v6683
      %v6688 = vpack.c.b16 %v6686, %v6685
      %v6691 = vand.u32 %v6688, %v4980
      %6693 = vmatprep.subr.bf16.mxu0 0
      %6694 = vmatpush1.bf16.msra.mxu0 0
      %6695 = vmatprep.subr.bf16.mxu0 0
      %6696 = vmatpush1.bf16.msra.mxu0 0
      %6697 = vmatprep.subr.bf16.mxu0 0
      %6698 = vmatpush1.bf16.msra.mxu0 0
      %6699 = vmatprep.subr.bf16.mxu0 0
      %6700 = vmatpush1.bf16.msra.mxu0 0
      %6701 = vmatprep.subr.bf16.mxu0 0
      %6702 = vmatpush1.bf16.msra.mxu0 0
      %6703 = vmatprep.subr.bf16.mxu0 0
      %6704 = vmatpush1.bf16.msra.mxu0 0
      %6705 = vmatprep.subr.bf16.mxu0 0
      %6706 = vmatpush1.bf16.msra.mxu0 %v6691
      %6707 = vmatprep.subr.bf16.mxu0 0
      %6708 = vmatpush1.bf16.msra.mxu0 %v6687
      %6709 = vmatprep.subr.bf16.mxu0 0
      %6710 = vmatpush2.bf16.msra.mxu0 0
      %6711 = vmatprep.subr.bf16.mxu0 0
      %6712 = vmatpush2.bf16.msra.mxu0 0
      %6713 = vmatprep.subr.bf16.mxu0 0
      %6714 = vmatpush2.bf16.msra.mxu0 0
      %6715 = vmatprep.subr.bf16.mxu0 0
      %6716 = vmatpush2.bf16.msra.mxu0 0
      %6717 = vmatprep.subr.bf16.mxu0 0
      %6718 = vmatpush2.bf16.msra.mxu0 0
      %6719 = vmatprep.subr.bf16.mxu0 0
      %6720 = vmatpush2.bf16.msra.mxu0 0
      %6721 = vmatprep.subr.bf16.mxu0 0
      %6722 = vmatpush2.bf16.msra.mxu0 0
      %6723 = vmatprep.subr.bf16.mxu0 0
      %6724 = vmatpush2.bf16.msra.mxu0 0
      %6725 = vmatprep.mubr.bf16.mxu0 0
      %6726 = vmatmul.mubr.bf16.gmra.mxu0 %v6607
      %v6727 = vpop.f32.mrf.mxu0
      %v6728 = vadd.f32 0.0, %v6727
      %v6729 = vpop.f32.mrf.mxu0
      %v6730 = vpop.f32.mrf.mxu0
      %v6731 = vadd.f32 0.0, %v6730
      %v6732 = vpop.f32.mrf.mxu0
      %6733 = vmatprep.mubr.bf16.mxu0 0
      %6734 = vmatmul.mubr.bf16.gmra.mxu0 %v6610
      %v6735 = vpop.f32.mrf.mxu0
      %v6736 = vadd.f32 0.0, %v6735
      %v6737 = vpop.f32.mrf.mxu0
      %v6738 = vpop.f32.mrf.mxu0
      %v6739 = vadd.f32 0.0, %v6738
      %v6740 = vpop.f32.mrf.mxu0
      %6741 = vdwg.mxu0
      %s6742 = scalar_lea.vmem %s10, 32
      %v6743 = vld [vmem:[%s6742] sm:$0xf]
      %v6744 = vld [vmem:[%s6742 + $0x4] sm:$0xf]
      %v6745 = vld [vmem:[%s6742 + $0x8] sm:$0xf]
      %v6746 = vld [vmem:[%s6742 + $0xc] sm:$0xf]
      %v6747 = vld [vmem:[%s6742 + $0x10] sm:$0xf]
      %v6748 = vld [vmem:[%s6742 + $0x14] sm:$0xf]
      %v6749 = vld [vmem:[%s6742 + $0x18] sm:$0xf]
      %v6750 = vld [vmem:[%s6742 + $0x1c] sm:$0xf]
      %v6751 = vpack.c.bf16 %v6731, %v6728
      %v6752 = vpack.c.bf16 %v6739, %v6736
      %v6761 = vunpack.c.l.b16 %v6743
      %v6762 = vunpack.c.l.b16 %v6744
      %v6763 = vunpack.c.l.b16 %v6745
      %v6764 = vunpack.c.l.b16 %v6746
      %v6765 = vunpack.c.l.b16 %v6747
      %v6766 = vunpack.c.l.b16 %v6748
      %v6767 = vunpack.c.l.b16 %v6749
      %v6768 = vunpack.c.l.b16 %v6750
      %v6769 = vpack.c.b16 %v6762, %v6761
      %v6770 = vpack.c.b16 %v6764, %v6763
      %v6771 = vpack.c.b16 %v6766, %v6765
      %v6772 = vpack.c.b16 %v6768, %v6767
      %vm6773 = vcmask 261120
      %v6775 = vsel %vm6773, %v6769, 0
      %v6778 = vsel %vm6773, %v6770, 0
      %v6781 = vsel %vm6773, %v6771, 0
      %v6784 = vsel %vm6773, %v6772, 0
      %6786 = vmatprep.subr.bf16.mxu0 0
      %6787 = vmatpush1.bf16.msra.mxu0 0
      %6788 = vmatprep.subr.bf16.mxu0 0
      %6789 = vmatpush1.bf16.msra.mxu0 0
      %6790 = vmatprep.subr.bf16.mxu0 0
      %6791 = vmatpush1.bf16.msra.mxu0 0
      %6792 = vmatprep.subr.bf16.mxu0 0
      %6793 = vmatpush1.bf16.msra.mxu0 0
      %6794 = vmatprep.subr.bf16.mxu0 0
      %6795 = vmatpush1.bf16.msra.mxu0 0
      %6796 = vmatprep.subr.bf16.mxu0 0
      %6797 = vmatpush1.bf16.msra.mxu0 0
      %6798 = vmatprep.subr.bf16.mxu0 0
      %6799 = vmatpush1.bf16.msra.mxu0 %v6752
      %6800 = vmatprep.subr.bf16.mxu0 0
      %6801 = vmatpush1.bf16.msra.mxu0 %v6751
      %6802 = vmatprep.subr.bf16.mxu0 0
      %6803 = vmatpush2.bf16.msra.mxu0 0
      %6804 = vmatprep.subr.bf16.mxu0 0
      %6805 = vmatpush2.bf16.msra.mxu0 0
      %6806 = vmatprep.subr.bf16.mxu0 0
      %6807 = vmatpush2.bf16.msra.mxu0 0
      %6808 = vmatprep.subr.bf16.mxu0 0
      %6809 = vmatpush2.bf16.msra.mxu0 0
      %6810 = vmatprep.subr.bf16.mxu0 0
      %6811 = vmatpush2.bf16.msra.mxu0 0
      %6812 = vmatprep.subr.bf16.mxu0 0
      %6813 = vmatpush2.bf16.msra.mxu0 0
      %6814 = vmatprep.subr.bf16.mxu0 0
      %6815 = vmatpush2.bf16.msra.mxu0 0
      %6816 = vmatprep.subr.bf16.mxu0 0
      %6817 = vmatpush2.bf16.msra.mxu0 0
      %6818 = vmatprep.mubr.bf16.mxu0 0
      %6819 = vmatmul.mubr.bf16.gmra.mxu0 %v6775
      %v6820 = vpop.f32.mrf.mxu0
      %v6821 = vadd.f32 0.0, %v6820
      %v6822 = vpop.f32.mrf.mxu0
      %v6823 = vpop.f32.mrf.mxu0
      %v6824 = vadd.f32 0.0, %v6823
      %v6825 = vpop.f32.mrf.mxu0
      %6826 = vmatprep.mubr.bf16.mxu0 0
      %6827 = vmatmul.mubr.bf16.gmra.mxu0 %v6778
      %v6828 = vpop.f32.mrf.mxu0
      %v6829 = vadd.f32 0.0, %v6828
      %v6830 = vpop.f32.mrf.mxu0
      %v6831 = vpop.f32.mrf.mxu0
      %v6832 = vadd.f32 0.0, %v6831
      %v6833 = vpop.f32.mrf.mxu0
      %6834 = vmatprep.mubr.bf16.mxu0 0
      %6835 = vmatmul.mubr.bf16.gmra.mxu0 %v6781
      %v6836 = vpop.f32.mrf.mxu0
      %v6837 = vadd.f32 0.0, %v6836
      %v6838 = vpop.f32.mrf.mxu0
      %v6839 = vpop.f32.mrf.mxu0
      %v6840 = vadd.f32 0.0, %v6839
      %v6841 = vpop.f32.mrf.mxu0
      %6842 = vmatprep.mubr.bf16.mxu0 0
      %6843 = vmatmul.mubr.bf16.gmra.mxu0 %v6784
      %v6844 = vpop.f32.mrf.mxu0
      %v6845 = vadd.f32 0.0, %v6844
      %v6846 = vpop.f32.mrf.mxu0
      %v6847 = vpop.f32.mrf.mxu0
      %v6848 = vadd.f32 0.0, %v6847
      %v6849 = vpop.f32.mrf.mxu0
      %6850 = vdwg.mxu0
      %v6859 = vunpack.c.l.b16 %v6664
      %v6860 = vunpack.c.l.b16 %v6665
      %v6861 = vunpack.c.l.b16 %v6666
      %v6862 = vunpack.c.l.b16 %v6667
      %v6863 = vunpack.c.l.b16 %v6668
      %v6864 = vunpack.c.l.b16 %v6669
      %v6865 = vunpack.c.l.b16 %v6670
      %v6866 = vunpack.c.l.b16 %v6671
      %v6867 = vpack.c.b16 %v6860, %v6859
      %v6868 = vpack.c.b16 %v6862, %v6861
      %v6869 = vpack.c.b16 %v6864, %v6863
      %v6870 = vpack.c.b16 %v6866, %v6865
      %v6872 = vsel %vm6773, %v6867, 0
      %v6875 = vsel %vm6773, %v6868, 0
      %v6878 = vsel %vm6773, %v6869, 0
      %v6881 = vsel %vm6773, %v6870, 0
      %6883 = vmatprep.subr.bf16.mxu0 0
      %6884 = vmatpush1.bf16.msra.mxu0 0
      %6885 = vmatprep.subr.bf16.mxu0 0
      %6886 = vmatpush1.bf16.msra.mxu0 0
      %6887 = vmatprep.subr.bf16.mxu0 0
      %6888 = vmatpush1.bf16.msra.mxu0 0
      %6889 = vmatprep.subr.bf16.mxu0 0
      %6890 = vmatpush1.bf16.msra.mxu0 0
      %6891 = vmatprep.subr.bf16.mxu0 0
      %6892 = vmatpush1.bf16.msra.mxu0 0
      %6893 = vmatprep.subr.bf16.mxu0 0
      %6894 = vmatpush1.bf16.msra.mxu0 0
      %6895 = vmatprep.subr.bf16.mxu0 0
      %6896 = vmatpush1.bf16.msra.mxu0 %v6673
      %6897 = vmatprep.subr.bf16.mxu0 0
      %6898 = vmatpush1.bf16.msra.mxu0 %v6672
      %6899 = vmatprep.subr.bf16.mxu0 0
      %6900 = vmatpush2.bf16.msra.mxu0 0
      %6901 = vmatprep.subr.bf16.mxu0 0
      %6902 = vmatpush2.bf16.msra.mxu0 0
      %6903 = vmatprep.subr.bf16.mxu0 0
      %6904 = vmatpush2.bf16.msra.mxu0 0
      %6905 = vmatprep.subr.bf16.mxu0 0
      %6906 = vmatpush2.bf16.msra.mxu0 0
      %6907 = vmatprep.subr.bf16.mxu0 0
      %6908 = vmatpush2.bf16.msra.mxu0 0
      %6909 = vmatprep.subr.bf16.mxu0 0
      %6910 = vmatpush2.bf16.msra.mxu0 0
      %6911 = vmatprep.subr.bf16.mxu0 0
      %6912 = vmatpush2.bf16.msra.mxu0 0
      %6913 = vmatprep.subr.bf16.mxu0 0
      %6914 = vmatpush2.bf16.msra.mxu0 0
      %6915 = vmatprep.mubr.bf16.mxu0 0
      %6916 = vmatmul.mubr.bf16.gmra.mxu0 %v6872
      %v6917 = vpop.f32.mrf.mxu0
      %v6918 = vadd.f32 %v6821, %v6917
      %v6919 = vpop.f32.mrf.mxu0
      %v6920 = vpop.f32.mrf.mxu0
      %v6921 = vadd.f32 %v6824, %v6920
      %v6922 = vpop.f32.mrf.mxu0
      %6923 = vmatprep.mubr.bf16.mxu0 0
      %6924 = vmatmul.mubr.bf16.gmra.mxu0 %v6875
      %v6925 = vpop.f32.mrf.mxu0
      %v6926 = vadd.f32 %v6829, %v6925
      %v6927 = vpop.f32.mrf.mxu0
      %v6928 = vpop.f32.mrf.mxu0
      %v6929 = vadd.f32 %v6832, %v6928
      %v6930 = vpop.f32.mrf.mxu0
      %6931 = vmatprep.mubr.bf16.mxu0 0
      %6932 = vmatmul.mubr.bf16.gmra.mxu0 %v6878
      %v6933 = vpop.f32.mrf.mxu0
      %v6934 = vadd.f32 %v6837, %v6933
      %v6935 = vpop.f32.mrf.mxu0
      %v6936 = vpop.f32.mrf.mxu0
      %v6937 = vadd.f32 %v6840, %v6936
      %v6938 = vpop.f32.mrf.mxu0
      %6939 = vmatprep.mubr.bf16.mxu0 0
      %6940 = vmatmul.mubr.bf16.gmra.mxu0 %v6881
      %v6941 = vpop.f32.mrf.mxu0
      %v6942 = vadd.f32 %v6845, %v6941
      %v6943 = vpop.f32.mrf.mxu0
      %v6944 = vpop.f32.mrf.mxu0
      %v6945 = vadd.f32 %v6848, %v6944
      %v6946 = vpop.f32.mrf.mxu0
      %6947 = vdwg.mxu0
      %s6948 = scalar_lea.vmem %s9, 32
      %v6949 = vld [vmem:[%s6948] sm:$0xf]
      %v6950 = vld [vmem:[%s6948 + $0x4] sm:$0xf]
      %v6951 = vld [vmem:[%s6948 + $0x8] sm:$0xf]
      %v6952 = vld [vmem:[%s6948 + $0xc] sm:$0x1]
      %v6957 = vunpack.c.l.b16 %v6949
      %v6958 = vunpack.c.l.b16 %v6950
      %v6959 = vunpack.c.l.b16 %v6951
      %v6960 = vunpack.c.l.b16 %v6952
      %v6961 = vpack.c.b16 %v6958, %v6957
      %v6962 = vpack.c.b16 %v6960, %v6959
      %v6965 = vand.u32 %v6962, %v4980
      %6967 = vmatprep.subr.bf16.mxu0 0
      %6968 = vmatpush1.bf16.msra.mxu0 0
      %6969 = vmatprep.subr.bf16.mxu0 0
      %6970 = vmatpush1.bf16.msra.mxu0 0
      %6971 = vmatprep.subr.bf16.mxu0 0
      %6972 = vmatpush1.bf16.msra.mxu0 0
      %6973 = vmatprep.subr.bf16.mxu0 0
      %6974 = vmatpush1.bf16.msra.mxu0 0
      %6975 = vmatprep.subr.bf16.mxu0 0
      %6976 = vmatpush1.bf16.msra.mxu0 0
      %6977 = vmatprep.subr.bf16.mxu0 0
      %6978 = vmatpush1.bf16.msra.mxu0 0
      %6979 = vmatprep.subr.bf16.mxu0 0
      %6980 = vmatpush1.bf16.msra.mxu0 %v6965
      %6981 = vmatprep.subr.bf16.mxu0 0
      %6982 = vmatpush1.bf16.msra.mxu0 %v6961
      %6983 = vmatprep.subr.bf16.mxu0 0
      %6984 = vmatpush2.bf16.msra.mxu0 0
      %6985 = vmatprep.subr.bf16.mxu0 0
      %6986 = vmatpush2.bf16.msra.mxu0 0
      %6987 = vmatprep.subr.bf16.mxu0 0
      %6988 = vmatpush2.bf16.msra.mxu0 0
      %6989 = vmatprep.subr.bf16.mxu0 0
      %6990 = vmatpush2.bf16.msra.mxu0 0
      %6991 = vmatprep.subr.bf16.mxu0 0
      %6992 = vmatpush2.bf16.msra.mxu0 0
      %6993 = vmatprep.subr.bf16.mxu0 0
      %6994 = vmatpush2.bf16.msra.mxu0 0
      %6995 = vmatprep.subr.bf16.mxu0 0
      %6996 = vmatpush2.bf16.msra.mxu0 0
      %6997 = vmatprep.subr.bf16.mxu0 0
      %6998 = vmatpush2.bf16.msra.mxu0 0
      %6999 = vmatprep.mubr.bf16.mxu0 0
      %7000 = vmatmul.mubr.bf16.gmra.mxu0 %v6607
      %v7001 = vpop.f32.mrf.mxu0
      %v7002 = vadd.f32 0.0, %v7001
      %v7003 = vpop.f32.mrf.mxu0
      %v7004 = vpop.f32.mrf.mxu0
      %v7005 = vadd.f32 0.0, %v7004
      %v7006 = vpop.f32.mrf.mxu0
      %7007 = vmatprep.mubr.bf16.mxu0 0
      %7008 = vmatmul.mubr.bf16.gmra.mxu0 %v6610
      %v7009 = vpop.f32.mrf.mxu0
      %v7010 = vadd.f32 0.0, %v7009
      %v7011 = vpop.f32.mrf.mxu0
      %v7012 = vpop.f32.mrf.mxu0
      %v7013 = vadd.f32 0.0, %v7012
      %v7014 = vpop.f32.mrf.mxu0
      %7015 = vdwg.mxu0
      %s7016 = scalar_lea.vmem %s10, 64
      %v7017 = vld [vmem:[%s7016] sm:$0xf]
      %v7018 = vld [vmem:[%s7016 + $0x4] sm:$0xf]
      %v7019 = vld [vmem:[%s7016 + $0x8] sm:$0xf]
      %v7020 = vld [vmem:[%s7016 + $0xc] sm:$0xf]
      %v7021 = vld [vmem:[%s7016 + $0x10] sm:$0xf]
      %v7022 = vld [vmem:[%s7016 + $0x14] sm:$0xf]
      %v7023 = vld [vmem:[%s7016 + $0x18] sm:$0xf]
      %v7024 = vld [vmem:[%s7016 + $0x1c] sm:$0xf]
      %v7025 = vpack.c.bf16 %v7005, %v7002
      %v7026 = vpack.c.bf16 %v7013, %v7010
      %v7035 = vunpack.c.l.b16 %v7017
      %v7036 = vunpack.c.l.b16 %v7018
      %v7037 = vunpack.c.l.b16 %v7019
      %v7038 = vunpack.c.l.b16 %v7020
      %v7039 = vunpack.c.l.b16 %v7021
      %v7040 = vunpack.c.l.b16 %v7022
      %v7041 = vunpack.c.l.b16 %v7023
      %v7042 = vunpack.c.l.b16 %v7024
      %v7043 = vpack.c.b16 %v7036, %v7035
      %v7044 = vpack.c.b16 %v7038, %v7037
      %v7045 = vpack.c.b16 %v7040, %v7039
      %v7046 = vpack.c.b16 %v7042, %v7041
      %v7048 = vsel %vm6773, %v7043, 0
      %v7051 = vsel %vm6773, %v7044, 0
      %v7054 = vsel %vm6773, %v7045, 0
      %v7057 = vsel %vm6773, %v7046, 0
      %7059 = vmatprep.subr.bf16.mxu0 0
      %7060 = vmatpush1.bf16.msra.mxu0 0
      %7061 = vmatprep.subr.bf16.mxu0 0
      %7062 = vmatpush1.bf16.msra.mxu0 0
      %7063 = vmatprep.subr.bf16.mxu0 0
      %7064 = vmatpush1.bf16.msra.mxu0 0
      %7065 = vmatprep.subr.bf16.mxu0 0
      %7066 = vmatpush1.bf16.msra.mxu0 0
      %7067 = vmatprep.subr.bf16.mxu0 0
      %7068 = vmatpush1.bf16.msra.mxu0 0
      %7069 = vmatprep.subr.bf16.mxu0 0
      %7070 = vmatpush1.bf16.msra.mxu0 0
      %7071 = vmatprep.subr.bf16.mxu0 0
      %7072 = vmatpush1.bf16.msra.mxu0 %v7026
      %7073 = vmatprep.subr.bf16.mxu0 0
      %7074 = vmatpush1.bf16.msra.mxu0 %v7025
      %7075 = vmatprep.subr.bf16.mxu0 0
      %7076 = vmatpush2.bf16.msra.mxu0 0
      %7077 = vmatprep.subr.bf16.mxu0 0
      %7078 = vmatpush2.bf16.msra.mxu0 0
      %7079 = vmatprep.subr.bf16.mxu0 0
      %7080 = vmatpush2.bf16.msra.mxu0 0
      %7081 = vmatprep.subr.bf16.mxu0 0
      %7082 = vmatpush2.bf16.msra.mxu0 0
      %7083 = vmatprep.subr.bf16.mxu0 0
      %7084 = vmatpush2.bf16.msra.mxu0 0
      %7085 = vmatprep.subr.bf16.mxu0 0
      %7086 = vmatpush2.bf16.msra.mxu0 0
      %7087 = vmatprep.subr.bf16.mxu0 0
      %7088 = vmatpush2.bf16.msra.mxu0 0
      %7089 = vmatprep.subr.bf16.mxu0 0
      %7090 = vmatpush2.bf16.msra.mxu0 0
      %7091 = vmatprep.mubr.bf16.mxu0 0
      %7092 = vmatmul.mubr.bf16.gmra.mxu0 %v7048
      %v7093 = vpop.f32.mrf.mxu0
      %v7094 = vadd.f32 0.0, %v7093
      %v7095 = vpop.f32.mrf.mxu0
      %v7096 = vpop.f32.mrf.mxu0
      %v7097 = vadd.f32 0.0, %v7096
      %v7098 = vpop.f32.mrf.mxu0
      %7099 = vmatprep.mubr.bf16.mxu0 0
      %7100 = vmatmul.mubr.bf16.gmra.mxu0 %v7051
      %v7101 = vpop.f32.mrf.mxu0
      %v7102 = vadd.f32 0.0, %v7101
      %v7103 = vpop.f32.mrf.mxu0
      %v7104 = vpop.f32.mrf.mxu0
      %v7105 = vadd.f32 0.0, %v7104
      %v7106 = vpop.f32.mrf.mxu0
      %7107 = vmatprep.mubr.bf16.mxu0 0
      %7108 = vmatmul.mubr.bf16.gmra.mxu0 %v7054
      %v7109 = vpop.f32.mrf.mxu0
      %v7110 = vadd.f32 0.0, %v7109
      %v7111 = vpop.f32.mrf.mxu0
      %v7112 = vpop.f32.mrf.mxu0
      %v7113 = vadd.f32 0.0, %v7112
      %v7114 = vpop.f32.mrf.mxu0
      %7115 = vmatprep.mubr.bf16.mxu0 0
      %7116 = vmatmul.mubr.bf16.gmra.mxu0 %v7057
      %v7117 = vpop.f32.mrf.mxu0
      %v7118 = vadd.f32 0.0, %v7117
      %v7119 = vpop.f32.mrf.mxu0
      %v7120 = vpop.f32.mrf.mxu0
      %v7121 = vadd.f32 0.0, %v7120
      %v7122 = vpop.f32.mrf.mxu0
      %7123 = vdwg.mxu0
      %v7124 = vadd.f32 %v6918, %v7094
      %v7125 = vadd.f32 %v6921, %v7097
      %v7126 = vadd.f32 %v6926, %v7102
      %v7127 = vadd.f32 %v6929, %v7105
      %v7128 = vadd.f32 %v6934, %v7110
      %v7129 = vadd.f32 %v6937, %v7113
      %v7130 = vadd.f32 %v6942, %v7118
      %v7131 = vadd.f32 %v6945, %v7121
      %s7132 = scalar_lea.vmem %s9, 48
      %v7133 = vld [vmem:[%s7132] sm:$0xf]
      %v7134 = vld [vmem:[%s7132 + $0x4] sm:$0xf]
      %v7135 = vld [vmem:[%s7132 + $0x8] sm:$0xf]
      %v7136 = vld [vmem:[%s7132 + $0xc] sm:$0x1]
      %v7141 = vunpack.c.l.b16 %v7133
      %v7142 = vunpack.c.l.b16 %v7134
      %v7143 = vunpack.c.l.b16 %v7135
      %v7144 = vunpack.c.l.b16 %v7136
      %v7145 = vpack.c.b16 %v7142, %v7141
      %v7146 = vpack.c.b16 %v7144, %v7143
      %v7149 = vand.u32 %v7146, %v4980
      %7151 = vmatprep.subr.bf16.mxu0 0
      %7152 = vmatpush1.bf16.msra.mxu0 0
      %7153 = vmatprep.subr.bf16.mxu0 0
      %7154 = vmatpush1.bf16.msra.mxu0 0
      %7155 = vmatprep.subr.bf16.mxu0 0
      %7156 = vmatpush1.bf16.msra.mxu0 0
      %7157 = vmatprep.subr.bf16.mxu0 0
      %7158 = vmatpush1.bf16.msra.mxu0 0
      %7159 = vmatprep.subr.bf16.mxu0 0
      %7160 = vmatpush1.bf16.msra.mxu0 0
      %7161 = vmatprep.subr.bf16.mxu0 0
      %7162 = vmatpush1.bf16.msra.mxu0 0
      %7163 = vmatprep.subr.bf16.mxu0 0
      %7164 = vmatpush1.bf16.msra.mxu0 %v7149
      %7165 = vmatprep.subr.bf16.mxu0 0
      %7166 = vmatpush1.bf16.msra.mxu0 %v7145
      %7167 = vmatprep.subr.bf16.mxu0 0
      %7168 = vmatpush2.bf16.msra.mxu0 0
      %7169 = vmatprep.subr.bf16.mxu0 0
      %7170 = vmatpush2.bf16.msra.mxu0 0
      %7171 = vmatprep.subr.bf16.mxu0 0
      %7172 = vmatpush2.bf16.msra.mxu0 0
      %7173 = vmatprep.subr.bf16.mxu0 0
      %7174 = vmatpush2.bf16.msra.mxu0 0
      %7175 = vmatprep.subr.bf16.mxu0 0
      %7176 = vmatpush2.bf16.msra.mxu0 0
      %7177 = vmatprep.subr.bf16.mxu0 0
      %7178 = vmatpush2.bf16.msra.mxu0 0
      %7179 = vmatprep.subr.bf16.mxu0 0
      %7180 = vmatpush2.bf16.msra.mxu0 0
      %7181 = vmatprep.subr.bf16.mxu0 0
      %7182 = vmatpush2.bf16.msra.mxu0 0
      %7183 = vmatprep.mubr.bf16.mxu0 0
      %7184 = vmatmul.mubr.bf16.gmra.mxu0 %v6607
      %v7185 = vpop.f32.mrf.mxu0
      %v7186 = vadd.f32 0.0, %v7185
      %v7187 = vpop.f32.mrf.mxu0
      %v7188 = vpop.f32.mrf.mxu0
      %v7189 = vadd.f32 0.0, %v7188
      %v7190 = vpop.f32.mrf.mxu0
      %7191 = vmatprep.mubr.bf16.mxu0 0
      %7192 = vmatmul.mubr.bf16.gmra.mxu0 %v6610
      %v7193 = vpop.f32.mrf.mxu0
      %v7194 = vadd.f32 0.0, %v7193
      %v7195 = vpop.f32.mrf.mxu0
      %v7196 = vpop.f32.mrf.mxu0
      %v7197 = vadd.f32 0.0, %v7196
      %v7198 = vpop.f32.mrf.mxu0
      %7199 = vdwg.mxu0
      %s7200 = scalar_lea.vmem %s10, 96
      %v7201 = vld [vmem:[%s7200] sm:$0xf]
      %v7202 = vld [vmem:[%s7200 + $0x4] sm:$0xf]
      %v7203 = vld [vmem:[%s7200 + $0x8] sm:$0xf]
      %v7204 = vld [vmem:[%s7200 + $0xc] sm:$0xf]
      %v7205 = vld [vmem:[%s7200 + $0x10] sm:$0xf]
      %v7206 = vld [vmem:[%s7200 + $0x14] sm:$0xf]
      %v7207 = vld [vmem:[%s7200 + $0x18] sm:$0xf]
      %v7208 = vld [vmem:[%s7200 + $0x1c] sm:$0xf]
      %v7209 = vpack.c.bf16 %v7189, %v7186
      %v7210 = vpack.c.bf16 %v7197, %v7194
      %v7219 = vunpack.c.l.b16 %v7201
      %v7220 = vunpack.c.l.b16 %v7202
      %v7221 = vunpack.c.l.b16 %v7203
      %v7222 = vunpack.c.l.b16 %v7204
      %v7223 = vunpack.c.l.b16 %v7205
      %v7224 = vunpack.c.l.b16 %v7206
      %v7225 = vunpack.c.l.b16 %v7207
      %v7226 = vunpack.c.l.b16 %v7208
      %v7227 = vpack.c.b16 %v7220, %v7219
      %v7228 = vpack.c.b16 %v7222, %v7221
      %v7229 = vpack.c.b16 %v7224, %v7223
      %v7230 = vpack.c.b16 %v7226, %v7225
      %v7232 = vsel %vm6773, %v7227, 0
      %v7235 = vsel %vm6773, %v7228, 0
      %v7238 = vsel %vm6773, %v7229, 0
      %v7241 = vsel %vm6773, %v7230, 0
      %7243 = vmatprep.subr.bf16.mxu0 0
      %7244 = vmatpush1.bf16.msra.mxu0 0
      %7245 = vmatprep.subr.bf16.mxu0 0
      %7246 = vmatpush1.bf16.msra.mxu0 0
      %7247 = vmatprep.subr.bf16.mxu0 0
      %7248 = vmatpush1.bf16.msra.mxu0 0
      %7249 = vmatprep.subr.bf16.mxu0 0
      %7250 = vmatpush1.bf16.msra.mxu0 0
      %7251 = vmatprep.subr.bf16.mxu0 0
      %7252 = vmatpush1.bf16.msra.mxu0 0
      %7253 = vmatprep.subr.bf16.mxu0 0
      %7254 = vmatpush1.bf16.msra.mxu0 0
      %7255 = vmatprep.subr.bf16.mxu0 0
      %7256 = vmatpush1.bf16.msra.mxu0 %v7210
      %7257 = vmatprep.subr.bf16.mxu0 0
      %7258 = vmatpush1.bf16.msra.mxu0 %v7209
      %7259 = vmatprep.subr.bf16.mxu0 0
      %7260 = vmatpush2.bf16.msra.mxu0 0
      %7261 = vmatprep.subr.bf16.mxu0 0
      %7262 = vmatpush2.bf16.msra.mxu0 0
      %7263 = vmatprep.subr.bf16.mxu0 0
      %7264 = vmatpush2.bf16.msra.mxu0 0
      %7265 = vmatprep.subr.bf16.mxu0 0
      %7266 = vmatpush2.bf16.msra.mxu0 0
      %7267 = vmatprep.subr.bf16.mxu0 0
      %7268 = vmatpush2.bf16.msra.mxu0 0
      %7269 = vmatprep.subr.bf16.mxu0 0
      %7270 = vmatpush2.bf16.msra.mxu0 0
      %7271 = vmatprep.subr.bf16.mxu0 0
      %7272 = vmatpush2.bf16.msra.mxu0 0
      %7273 = vmatprep.subr.bf16.mxu0 0
      %7274 = vmatpush2.bf16.msra.mxu0 0
      %7275 = vmatprep.mubr.bf16.mxu0 0
      %7276 = vmatmul.mubr.bf16.gmra.mxu0 %v7232
      %v7277 = vpop.f32.mrf.mxu0
      %v7278 = vadd.f32 0.0, %v7277
      %v7279 = vpop.f32.mrf.mxu0
      %v7280 = vpop.f32.mrf.mxu0
      %v7281 = vadd.f32 0.0, %v7280
      %v7282 = vpop.f32.mrf.mxu0
      %7283 = vmatprep.mubr.bf16.mxu0 0
      %7284 = vmatmul.mubr.bf16.gmra.mxu0 %v7235
      %v7285 = vpop.f32.mrf.mxu0
      %v7286 = vadd.f32 0.0, %v7285
      %v7287 = vpop.f32.mrf.mxu0
      %v7288 = vpop.f32.mrf.mxu0
      %v7289 = vadd.f32 0.0, %v7288
      %v7290 = vpop.f32.mrf.mxu0
      %7291 = vmatprep.mubr.bf16.mxu0 0
      %7292 = vmatmul.mubr.bf16.gmra.mxu0 %v7238
      %v7293 = vpop.f32.mrf.mxu0
      %v7294 = vadd.f32 0.0, %v7293
      %v7295 = vpop.f32.mrf.mxu0
      %v7296 = vpop.f32.mrf.mxu0
      %v7297 = vadd.f32 0.0, %v7296
      %v7298 = vpop.f32.mrf.mxu0
      %7299 = vmatprep.mubr.bf16.mxu0 0
      %7300 = vmatmul.mubr.bf16.gmra.mxu0 %v7241
      %v7301 = vpop.f32.mrf.mxu0
      %v7302 = vadd.f32 0.0, %v7301
      %v7303 = vpop.f32.mrf.mxu0
      %v7304 = vpop.f32.mrf.mxu0
      %v7305 = vadd.f32 0.0, %v7304
      %v7306 = vpop.f32.mrf.mxu0
      %7307 = vdwg.mxu0
      %v7308 = vadd.f32 %v7124, %v7278
      %v7309 = vadd.f32 %v7125, %v7281
      %v7310 = vadd.f32 %v7126, %v7286
      %v7311 = vadd.f32 %v7127, %v7289
      %v7312 = vadd.f32 %v7128, %v7294
      %v7313 = vadd.f32 %v7129, %v7297
      %v7314 = vadd.f32 %v7130, %v7302
      %v7315 = vadd.f32 %v7131, %v7305
      %s7316 = scalar_lea.vmem %s9, 64
      %v7317 = vld [vmem:[%s7316] sm:$0xf]
      %v7318 = vld [vmem:[%s7316 + $0x4] sm:$0xf]
      %v7319 = vld [vmem:[%s7316 + $0x8] sm:$0xf]
      %v7320 = vld [vmem:[%s7316 + $0xc] sm:$0x1]
      %v7325 = vunpack.c.l.b16 %v7317
      %v7326 = vunpack.c.l.b16 %v7318
      %v7327 = vunpack.c.l.b16 %v7319
      %v7328 = vunpack.c.l.b16 %v7320
      %v7329 = vpack.c.b16 %v7326, %v7325
      %v7330 = vpack.c.b16 %v7328, %v7327
      %v7333 = vand.u32 %v7330, %v4980
      %7335 = vmatprep.subr.bf16.mxu0 0
      %7336 = vmatpush1.bf16.msra.mxu0 0
      %7337 = vmatprep.subr.bf16.mxu0 0
      %7338 = vmatpush1.bf16.msra.mxu0 0
      %7339 = vmatprep.subr.bf16.mxu0 0
      %7340 = vmatpush1.bf16.msra.mxu0 0
      %7341 = vmatprep.subr.bf16.mxu0 0
      %7342 = vmatpush1.bf16.msra.mxu0 0
      %7343 = vmatprep.subr.bf16.mxu0 0
      %7344 = vmatpush1.bf16.msra.mxu0 0
      %7345 = vmatprep.subr.bf16.mxu0 0
      %7346 = vmatpush1.bf16.msra.mxu0 0
      %7347 = vmatprep.subr.bf16.mxu0 0
      %7348 = vmatpush1.bf16.msra.mxu0 %v7333
      %7349 = vmatprep.subr.bf16.mxu0 0
      %7350 = vmatpush1.bf16.msra.mxu0 %v7329
      %7351 = vmatprep.subr.bf16.mxu0 0
      %7352 = vmatpush2.bf16.msra.mxu0 0
      %7353 = vmatprep.subr.bf16.mxu0 0
      %7354 = vmatpush2.bf16.msra.mxu0 0
      %7355 = vmatprep.subr.bf16.mxu0 0
      %7356 = vmatpush2.bf16.msra.mxu0 0
      %7357 = vmatprep.subr.bf16.mxu0 0
      %7358 = vmatpush2.bf16.msra.mxu0 0
      %7359 = vmatprep.subr.bf16.mxu0 0
      %7360 = vmatpush2.bf16.msra.mxu0 0
      %7361 = vmatprep.subr.bf16.mxu0 0
      %7362 = vmatpush2.bf16.msra.mxu0 0
      %7363 = vmatprep.subr.bf16.mxu0 0
      %7364 = vmatpush2.bf16.msra.mxu0 0
      %7365 = vmatprep.subr.bf16.mxu0 0
      %7366 = vmatpush2.bf16.msra.mxu0 0
      %7367 = vmatprep.mubr.bf16.mxu0 0
      %7368 = vmatmul.mubr.bf16.gmra.mxu0 %v6607
      %v7369 = vpop.f32.mrf.mxu0
      %v7370 = vadd.f32 0.0, %v7369
      %v7371 = vpop.f32.mrf.mxu0
      %v7372 = vpop.f32.mrf.mxu0
      %v7373 = vadd.f32 0.0, %v7372
      %v7374 = vpop.f32.mrf.mxu0
      %7375 = vmatprep.mubr.bf16.mxu0 0
      %7376 = vmatmul.mubr.bf16.gmra.mxu0 %v6610
      %v7377 = vpop.f32.mrf.mxu0
      %v7378 = vadd.f32 0.0, %v7377
      %v7379 = vpop.f32.mrf.mxu0
      %v7380 = vpop.f32.mrf.mxu0
      %v7381 = vadd.f32 0.0, %v7380
      %v7382 = vpop.f32.mrf.mxu0
      %7383 = vdwg.mxu0
      %s7384 = scalar_lea.vmem %s10, 128
      %v7385 = vld [vmem:[%s7384] sm:$0xf]
      %v7386 = vld [vmem:[%s7384 + $0x4] sm:$0xf]
      %v7387 = vld [vmem:[%s7384 + $0x8] sm:$0xf]
      %v7388 = vld [vmem:[%s7384 + $0xc] sm:$0xf]
      %v7389 = vld [vmem:[%s7384 + $0x10] sm:$0xf]
      %v7390 = vld [vmem:[%s7384 + $0x14] sm:$0xf]
      %v7391 = vld [vmem:[%s7384 + $0x18] sm:$0xf]
      %v7392 = vld [vmem:[%s7384 + $0x1c] sm:$0xf]
      %v7393 = vpack.c.bf16 %v7373, %v7370
      %v7394 = vpack.c.bf16 %v7381, %v7378
      %v7403 = vunpack.c.l.b16 %v7385
      %v7404 = vunpack.c.l.b16 %v7386
      %v7405 = vunpack.c.l.b16 %v7387
      %v7406 = vunpack.c.l.b16 %v7388
      %v7407 = vunpack.c.l.b16 %v7389
      %v7408 = vunpack.c.l.b16 %v7390
      %v7409 = vunpack.c.l.b16 %v7391
      %v7410 = vunpack.c.l.b16 %v7392
      %v7411 = vpack.c.b16 %v7404, %v7403
      %v7412 = vpack.c.b16 %v7406, %v7405
      %v7413 = vpack.c.b16 %v7408, %v7407
      %v7414 = vpack.c.b16 %v7410, %v7409
      %v7416 = vsel %vm6773, %v7411, 0
      %v7419 = vsel %vm6773, %v7412, 0
      %v7422 = vsel %vm6773, %v7413, 0
      %v7425 = vsel %vm6773, %v7414, 0
      %7427 = vmatprep.subr.bf16.mxu0 0
      %7428 = vmatpush1.bf16.msra.mxu0 0
      %7429 = vmatprep.subr.bf16.mxu0 0
      %7430 = vmatpush1.bf16.msra.mxu0 0
      %7431 = vmatprep.subr.bf16.mxu0 0
      %7432 = vmatpush1.bf16.msra.mxu0 0
      %7433 = vmatprep.subr.bf16.mxu0 0
      %7434 = vmatpush1.bf16.msra.mxu0 0
      %7435 = vmatprep.subr.bf16.mxu0 0
      %7436 = vmatpush1.bf16.msra.mxu0 0
      %7437 = vmatprep.subr.bf16.mxu0 0
      %7438 = vmatpush1.bf16.msra.mxu0 0
      %7439 = vmatprep.subr.bf16.mxu0 0
      %7440 = vmatpush1.bf16.msra.mxu0 %v7394
      %7441 = vmatprep.subr.bf16.mxu0 0
      %7442 = vmatpush1.bf16.msra.mxu0 %v7393
      %7443 = vmatprep.subr.bf16.mxu0 0
      %7444 = vmatpush2.bf16.msra.mxu0 0
      %7445 = vmatprep.subr.bf16.mxu0 0
      %7446 = vmatpush2.bf16.msra.mxu0 0
      %7447 = vmatprep.subr.bf16.mxu0 0
      %7448 = vmatpush2.bf16.msra.mxu0 0
      %7449 = vmatprep.subr.bf16.mxu0 0
      %7450 = vmatpush2.bf16.msra.mxu0 0
      %7451 = vmatprep.subr.bf16.mxu0 0
      %7452 = vmatpush2.bf16.msra.mxu0 0
      %7453 = vmatprep.subr.bf16.mxu0 0
      %7454 = vmatpush2.bf16.msra.mxu0 0
      %7455 = vmatprep.subr.bf16.mxu0 0
      %7456 = vmatpush2.bf16.msra.mxu0 0
      %7457 = vmatprep.subr.bf16.mxu0 0
      %7458 = vmatpush2.bf16.msra.mxu0 0
      %7459 = vmatprep.mubr.bf16.mxu0 0
      %7460 = vmatmul.mubr.bf16.gmra.mxu0 %v7416
      %v7461 = vpop.f32.mrf.mxu0
      %v7462 = vadd.f32 0.0, %v7461
      %v7463 = vpop.f32.mrf.mxu0
      %v7464 = vpop.f32.mrf.mxu0
      %v7465 = vadd.f32 0.0, %v7464
      %v7466 = vpop.f32.mrf.mxu0
      %7467 = vmatprep.mubr.bf16.mxu0 0
      %7468 = vmatmul.mubr.bf16.gmra.mxu0 %v7419
      %v7469 = vpop.f32.mrf.mxu0
      %v7470 = vadd.f32 0.0, %v7469
      %v7471 = vpop.f32.mrf.mxu0
      %v7472 = vpop.f32.mrf.mxu0
      %v7473 = vadd.f32 0.0, %v7472
      %v7474 = vpop.f32.mrf.mxu0
      %7475 = vmatprep.mubr.bf16.mxu0 0
      %7476 = vmatmul.mubr.bf16.gmra.mxu0 %v7422
      %v7477 = vpop.f32.mrf.mxu0
      %v7478 = vadd.f32 0.0, %v7477
      %v7479 = vpop.f32.mrf.mxu0
      %v7480 = vpop.f32.mrf.mxu0
      %v7481 = vadd.f32 0.0, %v7480
      %v7482 = vpop.f32.mrf.mxu0
      %7483 = vmatprep.mubr.bf16.mxu0 0
      %7484 = vmatmul.mubr.bf16.gmra.mxu0 %v7425
      %v7485 = vpop.f32.mrf.mxu0
      %v7486 = vadd.f32 0.0, %v7485
      %v7487 = vpop.f32.mrf.mxu0
      %v7488 = vpop.f32.mrf.mxu0
      %v7489 = vadd.f32 0.0, %v7488
      %v7490 = vpop.f32.mrf.mxu0
      %7491 = vdwg.mxu0
      %v7492 = vadd.f32 %v7308, %v7462
      %v7493 = vadd.f32 %v7309, %v7465
      %v7494 = vadd.f32 %v7310, %v7470
      %v7495 = vadd.f32 %v7311, %v7473
      %v7496 = vadd.f32 %v7312, %v7478
      %v7497 = vadd.f32 %v7313, %v7481
      %v7498 = vadd.f32 %v7314, %v7486
      %v7499 = vadd.f32 %v7315, %v7489
      %s7500 = scalar_lea.vmem %s9, 80
      %v7501 = vld [vmem:[%s7500] sm:$0xf]
      %v7502 = vld [vmem:[%s7500 + $0x4] sm:$0xf]
      %v7503 = vld [vmem:[%s7500 + $0x8] sm:$0xf]
      %v7504 = vld [vmem:[%s7500 + $0xc] sm:$0x1]
      %v7509 = vunpack.c.l.b16 %v7501
      %v7510 = vunpack.c.l.b16 %v7502
      %v7511 = vunpack.c.l.b16 %v7503
      %v7512 = vunpack.c.l.b16 %v7504
      %v7513 = vpack.c.b16 %v7510, %v7509
      %v7514 = vpack.c.b16 %v7512, %v7511
      %v7517 = vand.u32 %v7514, %v4980
      %7519 = vmatprep.subr.bf16.mxu0 0
      %7520 = vmatpush1.bf16.msra.mxu0 0
      %7521 = vmatprep.subr.bf16.mxu0 0
      %7522 = vmatpush1.bf16.msra.mxu0 0
      %7523 = vmatprep.subr.bf16.mxu0 0
      %7524 = vmatpush1.bf16.msra.mxu0 0
      %7525 = vmatprep.subr.bf16.mxu0 0
      %7526 = vmatpush1.bf16.msra.mxu0 0
      %7527 = vmatprep.subr.bf16.mxu0 0
      %7528 = vmatpush1.bf16.msra.mxu0 0
      %7529 = vmatprep.subr.bf16.mxu0 0
      %7530 = vmatpush1.bf16.msra.mxu0 0
      %7531 = vmatprep.subr.bf16.mxu0 0
      %7532 = vmatpush1.bf16.msra.mxu0 %v7517
      %7533 = vmatprep.subr.bf16.mxu0 0
      %7534 = vmatpush1.bf16.msra.mxu0 %v7513
      %7535 = vmatprep.subr.bf16.mxu0 0
      %7536 = vmatpush2.bf16.msra.mxu0 0
      %7537 = vmatprep.subr.bf16.mxu0 0
      %7538 = vmatpush2.bf16.msra.mxu0 0
      %7539 = vmatprep.subr.bf16.mxu0 0
      %7540 = vmatpush2.bf16.msra.mxu0 0
      %7541 = vmatprep.subr.bf16.mxu0 0
      %7542 = vmatpush2.bf16.msra.mxu0 0
      %7543 = vmatprep.subr.bf16.mxu0 0
      %7544 = vmatpush2.bf16.msra.mxu0 0
      %7545 = vmatprep.subr.bf16.mxu0 0
      %7546 = vmatpush2.bf16.msra.mxu0 0
      %7547 = vmatprep.subr.bf16.mxu0 0
      %7548 = vmatpush2.bf16.msra.mxu0 0
      %7549 = vmatprep.subr.bf16.mxu0 0
      %7550 = vmatpush2.bf16.msra.mxu0 0
      %7551 = vmatprep.mubr.bf16.mxu0 0
      %7552 = vmatmul.mubr.bf16.gmra.mxu0 %v6607
      %v7553 = vpop.f32.mrf.mxu0
      %v7554 = vadd.f32 0.0, %v7553
      %v7555 = vpop.f32.mrf.mxu0
      %v7556 = vpop.f32.mrf.mxu0
      %v7557 = vadd.f32 0.0, %v7556
      %v7558 = vpop.f32.mrf.mxu0
      %7559 = vmatprep.mubr.bf16.mxu0 0
      %7560 = vmatmul.mubr.bf16.gmra.mxu0 %v6610
      %v7561 = vpop.f32.mrf.mxu0
      %v7562 = vadd.f32 0.0, %v7561
      %v7563 = vpop.f32.mrf.mxu0
      %v7564 = vpop.f32.mrf.mxu0
      %v7565 = vadd.f32 0.0, %v7564
      %v7566 = vpop.f32.mrf.mxu0
      %7567 = vdwg.mxu0
      %s7568 = scalar_lea.vmem %s10, 160
      %v7569 = vld [vmem:[%s7568] sm:$0xf]
      %v7570 = vld [vmem:[%s7568 + $0x4] sm:$0xf]
      %v7571 = vld [vmem:[%s7568 + $0x8] sm:$0xf]
      %v7572 = vld [vmem:[%s7568 + $0xc] sm:$0xf]
      %v7573 = vld [vmem:[%s7568 + $0x10] sm:$0xf]
      %v7574 = vld [vmem:[%s7568 + $0x14] sm:$0xf]
      %v7575 = vld [vmem:[%s7568 + $0x18] sm:$0xf]
      %v7576 = vld [vmem:[%s7568 + $0x1c] sm:$0xf]
      %v7577 = vpack.c.bf16 %v7557, %v7554
      %v7578 = vpack.c.bf16 %v7565, %v7562
      %v7587 = vunpack.c.l.b16 %v7569
      %v7588 = vunpack.c.l.b16 %v7570
      %v7589 = vunpack.c.l.b16 %v7571
      %v7590 = vunpack.c.l.b16 %v7572
      %v7591 = vunpack.c.l.b16 %v7573
      %v7592 = vunpack.c.l.b16 %v7574
      %v7593 = vunpack.c.l.b16 %v7575
      %v7594 = vunpack.c.l.b16 %v7576
      %v7595 = vpack.c.b16 %v7588, %v7587
      %v7596 = vpack.c.b16 %v7590, %v7589
      %v7597 = vpack.c.b16 %v7592, %v7591
      %v7598 = vpack.c.b16 %v7594, %v7593
      %v7600 = vsel %vm6773, %v7595, 0
      %v7603 = vsel %vm6773, %v7596, 0
      %v7606 = vsel %vm6773, %v7597, 0
      %v7609 = vsel %vm6773, %v7598, 0
      %7611 = vmatprep.subr.bf16.mxu0 0
      %7612 = vmatpush1.bf16.msra.mxu0 0
      %7613 = vmatprep.subr.bf16.mxu0 0
      %7614 = vmatpush1.bf16.msra.mxu0 0
      %7615 = vmatprep.subr.bf16.mxu0 0
      %7616 = vmatpush1.bf16.msra.mxu0 0
      %7617 = vmatprep.subr.bf16.mxu0 0
      %7618 = vmatpush1.bf16.msra.mxu0 0
      %7619 = vmatprep.subr.bf16.mxu0 0
      %7620 = vmatpush1.bf16.msra.mxu0 0
      %7621 = vmatprep.subr.bf16.mxu0 0
      %7622 = vmatpush1.bf16.msra.mxu0 0
      %7623 = vmatprep.subr.bf16.mxu0 0
      %7624 = vmatpush1.bf16.msra.mxu0 %v7578
      %7625 = vmatprep.subr.bf16.mxu0 0
      %7626 = vmatpush1.bf16.msra.mxu0 %v7577
      %7627 = vmatprep.subr.bf16.mxu0 0
      %7628 = vmatpush2.bf16.msra.mxu0 0
      %7629 = vmatprep.subr.bf16.mxu0 0
      %7630 = vmatpush2.bf16.msra.mxu0 0
      %7631 = vmatprep.subr.bf16.mxu0 0
      %7632 = vmatpush2.bf16.msra.mxu0 0
      %7633 = vmatprep.subr.bf16.mxu0 0
      %7634 = vmatpush2.bf16.msra.mxu0 0
      %7635 = vmatprep.subr.bf16.mxu0 0
      %7636 = vmatpush2.bf16.msra.mxu0 0
      %7637 = vmatprep.subr.bf16.mxu0 0
      %7638 = vmatpush2.bf16.msra.mxu0 0
      %7639 = vmatprep.subr.bf16.mxu0 0
      %7640 = vmatpush2.bf16.msra.mxu0 0
      %7641 = vmatprep.subr.bf16.mxu0 0
      %7642 = vmatpush2.bf16.msra.mxu0 0
      %7643 = vmatprep.mubr.bf16.mxu0 0
      %7644 = vmatmul.mubr.bf16.gmra.mxu0 %v7600
      %v7645 = vpop.f32.mrf.mxu0
      %v7646 = vadd.f32 0.0, %v7645
      %v7647 = vpop.f32.mrf.mxu0
      %v7648 = vpop.f32.mrf.mxu0
      %v7649 = vadd.f32 0.0, %v7648
      %v7650 = vpop.f32.mrf.mxu0
      %7651 = vmatprep.mubr.bf16.mxu0 0
      %7652 = vmatmul.mubr.bf16.gmra.mxu0 %v7603
      %v7653 = vpop.f32.mrf.mxu0
      %v7654 = vadd.f32 0.0, %v7653
      %v7655 = vpop.f32.mrf.mxu0
      %v7656 = vpop.f32.mrf.mxu0
      %v7657 = vadd.f32 0.0, %v7656
      %v7658 = vpop.f32.mrf.mxu0
      %7659 = vmatprep.mubr.bf16.mxu0 0
      %7660 = vmatmul.mubr.bf16.gmra.mxu0 %v7606
      %v7661 = vpop.f32.mrf.mxu0
      %v7662 = vadd.f32 0.0, %v7661
      %v7663 = vpop.f32.mrf.mxu0
      %v7664 = vpop.f32.mrf.mxu0
      %v7665 = vadd.f32 0.0, %v7664
      %v7666 = vpop.f32.mrf.mxu0
      %7667 = vmatprep.mubr.bf16.mxu0 0
      %7668 = vmatmul.mubr.bf16.gmra.mxu0 %v7609
      %v7669 = vpop.f32.mrf.mxu0
      %v7670 = vadd.f32 0.0, %v7669
      %v7671 = vpop.f32.mrf.mxu0
      %v7672 = vpop.f32.mrf.mxu0
      %v7673 = vadd.f32 0.0, %v7672
      %v7674 = vpop.f32.mrf.mxu0
      %7675 = vdwg.mxu0
      %v7676 = vadd.f32 %v7492, %v7646
      %v7677 = vadd.f32 %v7493, %v7649
      %v7678 = vadd.f32 %v7494, %v7654
      %v7679 = vadd.f32 %v7495, %v7657
      %v7680 = vadd.f32 %v7496, %v7662
      %v7681 = vadd.f32 %v7497, %v7665
      %v7682 = vadd.f32 %v7498, %v7670
      %v7683 = vadd.f32 %v7499, %v7673
      %s7684 = scalar_lea.vmem %s9, 96
      %v7685 = vld [vmem:[%s7684] sm:$0xf]
      %v7686 = vld [vmem:[%s7684 + $0x4] sm:$0xf]
      %v7687 = vld [vmem:[%s7684 + $0x8] sm:$0xf]
      %v7688 = vld [vmem:[%s7684 + $0xc] sm:$0x1]
      %v7693 = vunpack.c.l.b16 %v7685
      %v7694 = vunpack.c.l.b16 %v7686
      %v7695 = vunpack.c.l.b16 %v7687
      %v7696 = vunpack.c.l.b16 %v7688
      %v7697 = vpack.c.b16 %v7694, %v7693
      %v7698 = vpack.c.b16 %v7696, %v7695
      %v7701 = vand.u32 %v7698, %v4980
      %7703 = vmatprep.subr.bf16.mxu0 0
      %7704 = vmatpush1.bf16.msra.mxu0 0
      %7705 = vmatprep.subr.bf16.mxu0 0
      %7706 = vmatpush1.bf16.msra.mxu0 0
      %7707 = vmatprep.subr.bf16.mxu0 0
      %7708 = vmatpush1.bf16.msra.mxu0 0
      %7709 = vmatprep.subr.bf16.mxu0 0
      %7710 = vmatpush1.bf16.msra.mxu0 0
      %7711 = vmatprep.subr.bf16.mxu0 0
      %7712 = vmatpush1.bf16.msra.mxu0 0
      %7713 = vmatprep.subr.bf16.mxu0 0
      %7714 = vmatpush1.bf16.msra.mxu0 0
      %7715 = vmatprep.subr.bf16.mxu0 0
      %7716 = vmatpush1.bf16.msra.mxu0 %v7701
      %7717 = vmatprep.subr.bf16.mxu0 0
      %7718 = vmatpush1.bf16.msra.mxu0 %v7697
      %7719 = vmatprep.subr.bf16.mxu0 0
      %7720 = vmatpush2.bf16.msra.mxu0 0
      %7721 = vmatprep.subr.bf16.mxu0 0
      %7722 = vmatpush2.bf16.msra.mxu0 0
      %7723 = vmatprep.subr.bf16.mxu0 0
      %7724 = vmatpush2.bf16.msra.mxu0 0
      %7725 = vmatprep.subr.bf16.mxu0 0
      %7726 = vmatpush2.bf16.msra.mxu0 0
      %7727 = vmatprep.subr.bf16.mxu0 0
      %7728 = vmatpush2.bf16.msra.mxu0 0
      %7729 = vmatprep.subr.bf16.mxu0 0
      %7730 = vmatpush2.bf16.msra.mxu0 0
      %7731 = vmatprep.subr.bf16.mxu0 0
      %7732 = vmatpush2.bf16.msra.mxu0 0
      %7733 = vmatprep.subr.bf16.mxu0 0
      %7734 = vmatpush2.bf16.msra.mxu0 0
      %7735 = vmatprep.mubr.bf16.mxu0 0
      %7736 = vmatmul.mubr.bf16.gmra.mxu0 %v6607
      %v7737 = vpop.f32.mrf.mxu0
      %v7738 = vadd.f32 0.0, %v7737
      %v7739 = vpop.f32.mrf.mxu0
      %v7740 = vpop.f32.mrf.mxu0
      %v7741 = vadd.f32 0.0, %v7740
      %v7742 = vpop.f32.mrf.mxu0
      %7743 = vmatprep.mubr.bf16.mxu0 0
      %7744 = vmatmul.mubr.bf16.gmra.mxu0 %v6610
      %v7745 = vpop.f32.mrf.mxu0
      %v7746 = vadd.f32 0.0, %v7745
      %v7747 = vpop.f32.mrf.mxu0
      %v7748 = vpop.f32.mrf.mxu0
      %v7749 = vadd.f32 0.0, %v7748
      %v7750 = vpop.f32.mrf.mxu0
      %7751 = vdwg.mxu0
      %s7752 = scalar_lea.vmem %s10, 192
      %v7753 = vld [vmem:[%s7752] sm:$0xf]
      %v7754 = vld [vmem:[%s7752 + $0x4] sm:$0xf]
      %v7755 = vld [vmem:[%s7752 + $0x8] sm:$0xf]
      %v7756 = vld [vmem:[%s7752 + $0xc] sm:$0xf]
      %v7757 = vld [vmem:[%s7752 + $0x10] sm:$0xf]
      %v7758 = vld [vmem:[%s7752 + $0x14] sm:$0xf]
      %v7759 = vld [vmem:[%s7752 + $0x18] sm:$0xf]
      %v7760 = vld [vmem:[%s7752 + $0x1c] sm:$0xf]
      %v7761 = vpack.c.bf16 %v7741, %v7738
      %v7762 = vpack.c.bf16 %v7749, %v7746
      %v7771 = vunpack.c.l.b16 %v7753
      %v7772 = vunpack.c.l.b16 %v7754
      %v7773 = vunpack.c.l.b16 %v7755
      %v7774 = vunpack.c.l.b16 %v7756
      %v7775 = vunpack.c.l.b16 %v7757
      %v7776 = vunpack.c.l.b16 %v7758
      %v7777 = vunpack.c.l.b16 %v7759
      %v7778 = vunpack.c.l.b16 %v7760
      %v7779 = vpack.c.b16 %v7772, %v7771
      %v7780 = vpack.c.b16 %v7774, %v7773
      %v7781 = vpack.c.b16 %v7776, %v7775
      %v7782 = vpack.c.b16 %v7778, %v7777
      %v7784 = vsel %vm6773, %v7779, 0
      %v7787 = vsel %vm6773, %v7780, 0
      %v7790 = vsel %vm6773, %v7781, 0
      %v7793 = vsel %vm6773, %v7782, 0
      %7795 = vmatprep.subr.bf16.mxu0 0
      %7796 = vmatpush1.bf16.msra.mxu0 0
      %7797 = vmatprep.subr.bf16.mxu0 0
      %7798 = vmatpush1.bf16.msra.mxu0 0
      %7799 = vmatprep.subr.bf16.mxu0 0
      %7800 = vmatpush1.bf16.msra.mxu0 0
      %7801 = vmatprep.subr.bf16.mxu0 0
      %7802 = vmatpush1.bf16.msra.mxu0 0
      %7803 = vmatprep.subr.bf16.mxu0 0
      %7804 = vmatpush1.bf16.msra.mxu0 0
      %7805 = vmatprep.subr.bf16.mxu0 0
      %7806 = vmatpush1.bf16.msra.mxu0 0
      %7807 = vmatprep.subr.bf16.mxu0 0
      %7808 = vmatpush1.bf16.msra.mxu0 %v7762
      %7809 = vmatprep.subr.bf16.mxu0 0
      %7810 = vmatpush1.bf16.msra.mxu0 %v7761
      %7811 = vmatprep.subr.bf16.mxu0 0
      %7812 = vmatpush2.bf16.msra.mxu0 0
      %7813 = vmatprep.subr.bf16.mxu0 0
      %7814 = vmatpush2.bf16.msra.mxu0 0
      %7815 = vmatprep.subr.bf16.mxu0 0
      %7816 = vmatpush2.bf16.msra.mxu0 0
      %7817 = vmatprep.subr.bf16.mxu0 0
      %7818 = vmatpush2.bf16.msra.mxu0 0
      %7819 = vmatprep.subr.bf16.mxu0 0
      %7820 = vmatpush2.bf16.msra.mxu0 0
      %7821 = vmatprep.subr.bf16.mxu0 0
      %7822 = vmatpush2.bf16.msra.mxu0 0
      %7823 = vmatprep.subr.bf16.mxu0 0
      %7824 = vmatpush2.bf16.msra.mxu0 0
      %7825 = vmatprep.subr.bf16.mxu0 0
      %7826 = vmatpush2.bf16.msra.mxu0 0
      %7827 = vmatprep.mubr.bf16.mxu0 0
      %7828 = vmatmul.mubr.bf16.gmra.mxu0 %v7784
      %v7829 = vpop.f32.mrf.mxu0
      %v7830 = vadd.f32 0.0, %v7829
      %v7831 = vpop.f32.mrf.mxu0
      %v7832 = vpop.f32.mrf.mxu0
      %v7833 = vadd.f32 0.0, %v7832
      %v7834 = vpop.f32.mrf.mxu0
      %7835 = vmatprep.mubr.bf16.mxu0 0
      %7836 = vmatmul.mubr.bf16.gmra.mxu0 %v7787
      %v7837 = vpop.f32.mrf.mxu0
      %v7838 = vadd.f32 0.0, %v7837
      %v7839 = vpop.f32.mrf.mxu0
      %v7840 = vpop.f32.mrf.mxu0
      %v7841 = vadd.f32 0.0, %v7840
      %v7842 = vpop.f32.mrf.mxu0
      %7843 = vmatprep.mubr.bf16.mxu0 0
      %7844 = vmatmul.mubr.bf16.gmra.mxu0 %v7790
      %v7845 = vpop.f32.mrf.mxu0
      %v7846 = vadd.f32 0.0, %v7845
      %v7847 = vpop.f32.mrf.mxu0
      %v7848 = vpop.f32.mrf.mxu0
      %v7849 = vadd.f32 0.0, %v7848
      %v7850 = vpop.f32.mrf.mxu0
      %7851 = vmatprep.mubr.bf16.mxu0 0
      %7852 = vmatmul.mubr.bf16.gmra.mxu0 %v7793
      %v7853 = vpop.f32.mrf.mxu0
      %v7854 = vadd.f32 0.0, %v7853
      %v7855 = vpop.f32.mrf.mxu0
      %v7856 = vpop.f32.mrf.mxu0
      %v7857 = vadd.f32 0.0, %v7856
      %v7858 = vpop.f32.mrf.mxu0
      %7859 = vdwg.mxu0
      %v7860 = vadd.f32 %v7676, %v7830
      %v7861 = vadd.f32 %v7677, %v7833
      %v7862 = vadd.f32 %v7678, %v7838
      %v7863 = vadd.f32 %v7679, %v7841
      %v7864 = vadd.f32 %v7680, %v7846
      %v7865 = vadd.f32 %v7681, %v7849
      %v7866 = vadd.f32 %v7682, %v7854
      %v7867 = vadd.f32 %v7683, %v7857
      %s7868 = scalar_lea.vmem %s9, 112
      %v7869 = vld [vmem:[%s7868] sm:$0xf]
      %v7870 = vld [vmem:[%s7868 + $0x4] sm:$0xf]
      %v7871 = vld [vmem:[%s7868 + $0x8] sm:$0xf]
      %v7872 = vld [vmem:[%s7868 + $0xc] sm:$0x1]
      %v7877 = vunpack.c.l.b16 %v7869
      %v7878 = vunpack.c.l.b16 %v7870
      %v7879 = vunpack.c.l.b16 %v7871
      %v7880 = vunpack.c.l.b16 %v7872
      %v7881 = vpack.c.b16 %v7878, %v7877
      %v7882 = vpack.c.b16 %v7880, %v7879
      %v7885 = vand.u32 %v7882, %v4980
      %7887 = vmatprep.subr.bf16.mxu0 0
      %7888 = vmatpush1.bf16.msra.mxu0 0
      %7889 = vmatprep.subr.bf16.mxu0 0
      %7890 = vmatpush1.bf16.msra.mxu0 0
      %7891 = vmatprep.subr.bf16.mxu0 0
      %7892 = vmatpush1.bf16.msra.mxu0 0
      %7893 = vmatprep.subr.bf16.mxu0 0
      %7894 = vmatpush1.bf16.msra.mxu0 0
      %7895 = vmatprep.subr.bf16.mxu0 0
      %7896 = vmatpush1.bf16.msra.mxu0 0
      %7897 = vmatprep.subr.bf16.mxu0 0
      %7898 = vmatpush1.bf16.msra.mxu0 0
      %7899 = vmatprep.subr.bf16.mxu0 0
      %7900 = vmatpush1.bf16.msra.mxu0 %v7885
      %7901 = vmatprep.subr.bf16.mxu0 0
      %7902 = vmatpush1.bf16.msra.mxu0 %v7881
      %7903 = vmatprep.subr.bf16.mxu0 0
      %7904 = vmatpush2.bf16.msra.mxu0 0
      %7905 = vmatprep.subr.bf16.mxu0 0
      %7906 = vmatpush2.bf16.msra.mxu0 0
      %7907 = vmatprep.subr.bf16.mxu0 0
      %7908 = vmatpush2.bf16.msra.mxu0 0
      %7909 = vmatprep.subr.bf16.mxu0 0
      %7910 = vmatpush2.bf16.msra.mxu0 0
      %7911 = vmatprep.subr.bf16.mxu0 0
      %7912 = vmatpush2.bf16.msra.mxu0 0
      %7913 = vmatprep.subr.bf16.mxu0 0
      %7914 = vmatpush2.bf16.msra.mxu0 0
      %7915 = vmatprep.subr.bf16.mxu0 0
      %7916 = vmatpush2.bf16.msra.mxu0 0
      %7917 = vmatprep.subr.bf16.mxu0 0
      %7918 = vmatpush2.bf16.msra.mxu0 0
      %7919 = vmatprep.mubr.bf16.mxu0 0
      %7920 = vmatmul.mubr.bf16.gmra.mxu0 %v6607
      %v7921 = vpop.f32.mrf.mxu0
      %v7922 = vadd.f32 0.0, %v7921
      %v7923 = vpop.f32.mrf.mxu0
      %v7924 = vpop.f32.mrf.mxu0
      %v7925 = vadd.f32 0.0, %v7924
      %v7926 = vpop.f32.mrf.mxu0
      %7927 = vmatprep.mubr.bf16.mxu0 0
      %7928 = vmatmul.mubr.bf16.gmra.mxu0 %v6610
      %v7929 = vpop.f32.mrf.mxu0
      %v7930 = vadd.f32 0.0, %v7929
      %v7931 = vpop.f32.mrf.mxu0
      %v7932 = vpop.f32.mrf.mxu0
      %v7933 = vadd.f32 0.0, %v7932
      %v7934 = vpop.f32.mrf.mxu0
      %7935 = vdwg.mxu0
      %s7936 = scalar_lea.vmem %s10, 224
      %v7937 = vld [vmem:[%s7936] sm:$0xf]
      %v7938 = vld [vmem:[%s7936 + $0x4] sm:$0xf]
      %v7939 = vld [vmem:[%s7936 + $0x8] sm:$0xf]
      %v7940 = vld [vmem:[%s7936 + $0xc] sm:$0xf]
      %v7941 = vld [vmem:[%s7936 + $0x10] sm:$0xf]
      %v7942 = vld [vmem:[%s7936 + $0x14] sm:$0xf]
      %v7943 = vld [vmem:[%s7936 + $0x18] sm:$0xf]
      %v7944 = vld [vmem:[%s7936 + $0x1c] sm:$0xf]
      %v7945 = vpack.c.bf16 %v7925, %v7922
      %v7946 = vpack.c.bf16 %v7933, %v7930
      %v7955 = vunpack.c.l.b16 %v7937
      %v7956 = vunpack.c.l.b16 %v7938
      %v7957 = vunpack.c.l.b16 %v7939
      %v7958 = vunpack.c.l.b16 %v7940
      %v7959 = vunpack.c.l.b16 %v7941
      %v7960 = vunpack.c.l.b16 %v7942
      %v7961 = vunpack.c.l.b16 %v7943
      %v7962 = vunpack.c.l.b16 %v7944
      %v7963 = vpack.c.b16 %v7956, %v7955
      %v7964 = vpack.c.b16 %v7958, %v7957
      %v7965 = vpack.c.b16 %v7960, %v7959
      %v7966 = vpack.c.b16 %v7962, %v7961
      %v7968 = vsel %vm6773, %v7963, 0
      %v7971 = vsel %vm6773, %v7964, 0
      %v7974 = vsel %vm6773, %v7965, 0
      %v7977 = vsel %vm6773, %v7966, 0
      %7979 = vmatprep.subr.bf16.mxu0 0
      %7980 = vmatpush1.bf16.msra.mxu0 0
      %7981 = vmatprep.subr.bf16.mxu0 0
      %7982 = vmatpush1.bf16.msra.mxu0 0
      %7983 = vmatprep.subr.bf16.mxu0 0
      %7984 = vmatpush1.bf16.msra.mxu0 0
      %7985 = vmatprep.subr.bf16.mxu0 0
      %7986 = vmatpush1.bf16.msra.mxu0 0
      %7987 = vmatprep.subr.bf16.mxu0 0
      %7988 = vmatpush1.bf16.msra.mxu0 0
      %7989 = vmatprep.subr.bf16.mxu0 0
      %7990 = vmatpush1.bf16.msra.mxu0 0
      %7991 = vmatprep.subr.bf16.mxu0 0
      %7992 = vmatpush1.bf16.msra.mxu0 %v7946
      %7993 = vmatprep.subr.bf16.mxu0 0
      %7994 = vmatpush1.bf16.msra.mxu0 %v7945
      %7995 = vmatprep.subr.bf16.mxu0 0
      %7996 = vmatpush2.bf16.msra.mxu0 0
      %7997 = vmatprep.subr.bf16.mxu0 0
      %7998 = vmatpush2.bf16.msra.mxu0 0
      %7999 = vmatprep.subr.bf16.mxu0 0
      %8000 = vmatpush2.bf16.msra.mxu0 0
      %8001 = vmatprep.subr.bf16.mxu0 0
      %8002 = vmatpush2.bf16.msra.mxu0 0
      %8003 = vmatprep.subr.bf16.mxu0 0
      %8004 = vmatpush2.bf16.msra.mxu0 0
      %8005 = vmatprep.subr.bf16.mxu0 0
      %8006 = vmatpush2.bf16.msra.mxu0 0
      %8007 = vmatprep.subr.bf16.mxu0 0
      %8008 = vmatpush2.bf16.msra.mxu0 0
      %8009 = vmatprep.subr.bf16.mxu0 0
      %8010 = vmatpush2.bf16.msra.mxu0 0
      %8011 = vmatprep.mubr.bf16.mxu0 0
      %8012 = vmatmul.mubr.bf16.gmra.mxu0 %v7968
      %v8013 = vpop.f32.mrf.mxu0
      %v8014 = vadd.f32 0.0, %v8013
      %v8015 = vpop.f32.mrf.mxu0
      %v8016 = vpop.f32.mrf.mxu0
      %v8017 = vadd.f32 0.0, %v8016
      %v8018 = vpop.f32.mrf.mxu0
      %8019 = vmatprep.mubr.bf16.mxu0 0
      %8020 = vmatmul.mubr.bf16.gmra.mxu0 %v7971
      %v8021 = vpop.f32.mrf.mxu0
      %v8022 = vadd.f32 0.0, %v8021
      %v8023 = vpop.f32.mrf.mxu0
      %v8024 = vpop.f32.mrf.mxu0
      %v8025 = vadd.f32 0.0, %v8024
      %v8026 = vpop.f32.mrf.mxu0
      %8027 = vmatprep.mubr.bf16.mxu0 0
      %8028 = vmatmul.mubr.bf16.gmra.mxu0 %v7974
      %v8029 = vpop.f32.mrf.mxu0
      %v8030 = vadd.f32 0.0, %v8029
      %v8031 = vpop.f32.mrf.mxu0
      %v8032 = vpop.f32.mrf.mxu0
      %v8033 = vadd.f32 0.0, %v8032
      %v8034 = vpop.f32.mrf.mxu0
      %8035 = vmatprep.mubr.bf16.mxu0 0
      %8036 = vmatmul.mubr.bf16.gmra.mxu0 %v7977
      %v8037 = vpop.f32.mrf.mxu0
      %v8038 = vadd.f32 0.0, %v8037
      %v8039 = vpop.f32.mrf.mxu0
      %v8040 = vpop.f32.mrf.mxu0
      %v8041 = vadd.f32 0.0, %v8040
      %v8042 = vpop.f32.mrf.mxu0
      %8043 = vdwg.mxu0
      %v8044 = vadd.f32 %v7860, %v8014
      %v8045 = vadd.f32 %v7861, %v8017
      %v8046 = vadd.f32 %v7862, %v8022
      %v8047 = vadd.f32 %v7863, %v8025
      %v8048 = vadd.f32 %v7864, %v8030
      %v8049 = vadd.f32 %v7865, %v8033
      %v8050 = vadd.f32 %v7866, %v8038
      %v8051 = vadd.f32 %v7867, %v8041
      %s8052 = scalar_lea.vmem %s9, 128
      %v8053 = vld [vmem:[%s8052] sm:$0xf]
      %v8054 = vld [vmem:[%s8052 + $0x4] sm:$0xf]
      %v8055 = vld [vmem:[%s8052 + $0x8] sm:$0xf]
      %v8056 = vld [vmem:[%s8052 + $0xc] sm:$0x1]
      %v8061 = vunpack.c.l.b16 %v8053
      %v8062 = vunpack.c.l.b16 %v8054
      %v8063 = vunpack.c.l.b16 %v8055
      %v8064 = vunpack.c.l.b16 %v8056
      %v8065 = vpack.c.b16 %v8062, %v8061
      %v8066 = vpack.c.b16 %v8064, %v8063
      %v8069 = vand.u32 %v8066, %v4980
      %8071 = vmatprep.subr.bf16.mxu0 0
      %8072 = vmatpush1.bf16.msra.mxu0 0
      %8073 = vmatprep.subr.bf16.mxu0 0
      %8074 = vmatpush1.bf16.msra.mxu0 0
      %8075 = vmatprep.subr.bf16.mxu0 0
      %8076 = vmatpush1.bf16.msra.mxu0 0
      %8077 = vmatprep.subr.bf16.mxu0 0
      %8078 = vmatpush1.bf16.msra.mxu0 0
      %8079 = vmatprep.subr.bf16.mxu0 0
      %8080 = vmatpush1.bf16.msra.mxu0 0
      %8081 = vmatprep.subr.bf16.mxu0 0
      %8082 = vmatpush1.bf16.msra.mxu0 0
      %8083 = vmatprep.subr.bf16.mxu0 0
      %8084 = vmatpush1.bf16.msra.mxu0 %v8069
      %8085 = vmatprep.subr.bf16.mxu0 0
      %8086 = vmatpush1.bf16.msra.mxu0 %v8065
      %8087 = vmatprep.subr.bf16.mxu0 0
      %8088 = vmatpush2.bf16.msra.mxu0 0
      %8089 = vmatprep.subr.bf16.mxu0 0
      %8090 = vmatpush2.bf16.msra.mxu0 0
      %8091 = vmatprep.subr.bf16.mxu0 0
      %8092 = vmatpush2.bf16.msra.mxu0 0
      %8093 = vmatprep.subr.bf16.mxu0 0
      %8094 = vmatpush2.bf16.msra.mxu0 0
      %8095 = vmatprep.subr.bf16.mxu0 0
      %8096 = vmatpush2.bf16.msra.mxu0 0
      %8097 = vmatprep.subr.bf16.mxu0 0
      %8098 = vmatpush2.bf16.msra.mxu0 0
      %8099 = vmatprep.subr.bf16.mxu0 0
      %8100 = vmatpush2.bf16.msra.mxu0 0
      %8101 = vmatprep.subr.bf16.mxu0 0
      %8102 = vmatpush2.bf16.msra.mxu0 0
      %8103 = vmatprep.mubr.bf16.mxu0 0
      %8104 = vmatmul.mubr.bf16.gmra.mxu0 %v6607
      %v8105 = vpop.f32.mrf.mxu0
      %v8106 = vadd.f32 0.0, %v8105
      %v8107 = vpop.f32.mrf.mxu0
      %v8108 = vpop.f32.mrf.mxu0
      %v8109 = vadd.f32 0.0, %v8108
      %v8110 = vpop.f32.mrf.mxu0
      %8111 = vmatprep.mubr.bf16.mxu0 0
      %8112 = vmatmul.mubr.bf16.gmra.mxu0 %v6610
      %v8113 = vpop.f32.mrf.mxu0
      %v8114 = vadd.f32 0.0, %v8113
      %v8115 = vpop.f32.mrf.mxu0
      %v8116 = vpop.f32.mrf.mxu0
      %v8117 = vadd.f32 0.0, %v8116
      %v8118 = vpop.f32.mrf.mxu0
      %8119 = vdwg.mxu0
      %s8120 = scalar_lea.vmem %s10, 256
      %v8121 = vld [vmem:[%s8120] sm:$0xf]
      %v8122 = vld [vmem:[%s8120 + $0x4] sm:$0xf]
      %v8123 = vld [vmem:[%s8120 + $0x8] sm:$0xf]
      %v8124 = vld [vmem:[%s8120 + $0xc] sm:$0xf]
      %v8125 = vld [vmem:[%s8120 + $0x10] sm:$0xf]
      %v8126 = vld [vmem:[%s8120 + $0x14] sm:$0xf]
      %v8127 = vld [vmem:[%s8120 + $0x18] sm:$0xf]
      %v8128 = vld [vmem:[%s8120 + $0x1c] sm:$0xf]
      %v8129 = vpack.c.bf16 %v8109, %v8106
      %v8130 = vpack.c.bf16 %v8117, %v8114
      %v8139 = vunpack.c.l.b16 %v8121
      %v8140 = vunpack.c.l.b16 %v8122
      %v8141 = vunpack.c.l.b16 %v8123
      %v8142 = vunpack.c.l.b16 %v8124
      %v8143 = vunpack.c.l.b16 %v8125
      %v8144 = vunpack.c.l.b16 %v8126
      %v8145 = vunpack.c.l.b16 %v8127
      %v8146 = vunpack.c.l.b16 %v8128
      %v8147 = vpack.c.b16 %v8140, %v8139
      %v8148 = vpack.c.b16 %v8142, %v8141
      %v8149 = vpack.c.b16 %v8144, %v8143
      %v8150 = vpack.c.b16 %v8146, %v8145
      %v8152 = vsel %vm6773, %v8147, 0
      %v8155 = vsel %vm6773, %v8148, 0
      %v8158 = vsel %vm6773, %v8149, 0
      %v8161 = vsel %vm6773, %v8150, 0
      %8163 = vmatprep.subr.bf16.mxu0 0
      %8164 = vmatpush1.bf16.msra.mxu0 0
      %8165 = vmatprep.subr.bf16.mxu0 0
      %8166 = vmatpush1.bf16.msra.mxu0 0
      %8167 = vmatprep.subr.bf16.mxu0 0
      %8168 = vmatpush1.bf16.msra.mxu0 0
      %8169 = vmatprep.subr.bf16.mxu0 0
      %8170 = vmatpush1.bf16.msra.mxu0 0
      %8171 = vmatprep.subr.bf16.mxu0 0
      %8172 = vmatpush1.bf16.msra.mxu0 0
      %8173 = vmatprep.subr.bf16.mxu0 0
      %8174 = vmatpush1.bf16.msra.mxu0 0
      %8175 = vmatprep.subr.bf16.mxu0 0
      %8176 = vmatpush1.bf16.msra.mxu0 %v8130
      %8177 = vmatprep.subr.bf16.mxu0 0
      %8178 = vmatpush1.bf16.msra.mxu0 %v8129
      %8179 = vmatprep.subr.bf16.mxu0 0
      %8180 = vmatpush2.bf16.msra.mxu0 0
      %8181 = vmatprep.subr.bf16.mxu0 0
      %8182 = vmatpush2.bf16.msra.mxu0 0
      %8183 = vmatprep.subr.bf16.mxu0 0
      %8184 = vmatpush2.bf16.msra.mxu0 0
      %8185 = vmatprep.subr.bf16.mxu0 0
      %8186 = vmatpush2.bf16.msra.mxu0 0
      %8187 = vmatprep.subr.bf16.mxu0 0
      %8188 = vmatpush2.bf16.msra.mxu0 0
      %8189 = vmatprep.subr.bf16.mxu0 0
      %8190 = vmatpush2.bf16.msra.mxu0 0
      %8191 = vmatprep.subr.bf16.mxu0 0
      %8192 = vmatpush2.bf16.msra.mxu0 0
      %8193 = vmatprep.subr.bf16.mxu0 0
      %8194 = vmatpush2.bf16.msra.mxu0 0
      %8195 = vmatprep.mubr.bf16.mxu0 0
      %8196 = vmatmul.mubr.bf16.gmra.mxu0 %v8152
      %v8197 = vpop.f32.mrf.mxu0
      %v8198 = vadd.f32 0.0, %v8197
      %v8199 = vpop.f32.mrf.mxu0
      %v8200 = vpop.f32.mrf.mxu0
      %v8201 = vadd.f32 0.0, %v8200
      %v8202 = vpop.f32.mrf.mxu0
      %8203 = vmatprep.mubr.bf16.mxu0 0
      %8204 = vmatmul.mubr.bf16.gmra.mxu0 %v8155
      %v8205 = vpop.f32.mrf.mxu0
      %v8206 = vadd.f32 0.0, %v8205
      %v8207 = vpop.f32.mrf.mxu0
      %v8208 = vpop.f32.mrf.mxu0
      %v8209 = vadd.f32 0.0, %v8208
      %v8210 = vpop.f32.mrf.mxu0
      %8211 = vmatprep.mubr.bf16.mxu0 0
      %8212 = vmatmul.mubr.bf16.gmra.mxu0 %v8158
      %v8213 = vpop.f32.mrf.mxu0
      %v8214 = vadd.f32 0.0, %v8213
      %v8215 = vpop.f32.mrf.mxu0
      %v8216 = vpop.f32.mrf.mxu0
      %v8217 = vadd.f32 0.0, %v8216
      %v8218 = vpop.f32.mrf.mxu0
      %8219 = vmatprep.mubr.bf16.mxu0 0
      %8220 = vmatmul.mubr.bf16.gmra.mxu0 %v8161
      %v8221 = vpop.f32.mrf.mxu0
      %v8222 = vadd.f32 0.0, %v8221
      %v8223 = vpop.f32.mrf.mxu0
      %v8224 = vpop.f32.mrf.mxu0
      %v8225 = vadd.f32 0.0, %v8224
      %v8226 = vpop.f32.mrf.mxu0
      %8227 = vdwg.mxu0
      %v8228 = vadd.f32 %v8044, %v8198
      %v8229 = vadd.f32 %v8045, %v8201
      %v8230 = vadd.f32 %v8046, %v8206
      %v8231 = vadd.f32 %v8047, %v8209
      %v8232 = vadd.f32 %v8048, %v8214
      %v8233 = vadd.f32 %v8049, %v8217
      %v8234 = vadd.f32 %v8050, %v8222
      %v8235 = vadd.f32 %v8051, %v8225
      %v8236 = vld [vmem:[%s11] sm:$0xff]
      %v8237 = vld [vmem:[%s11 + $0x8] sm:$0xff]
      %v8238 = vld [vmem:[%s11 + $0x10] sm:$0xff]
      %v8239 = vld [vmem:[%s11 + $0x18] sm:$0xff]
      %v8240 = vld [vmem:[%s11 + $0x20] sm:$0xff]
      %v8241 = vld [vmem:[%s11 + $0x28] sm:$0xff]
      %v8242 = vld [vmem:[%s11 + $0x30] sm:$0xff]
      %v8243 = vld [vmem:[%s11 + $0x38] sm:$0xff]
      %8245 = vset.pattern.permute.xlu0 0
      %8246 = vperm.xlu0 %8245, %v8236
      %v8247 = vpop.permute.xlu0 %8246
      %8250 = vset.pattern.permute.xlu0 0
      %8251 = vperm.xlu0 %8250, %v8237
      %v8252 = vpop.permute.xlu0 %8251
      %8255 = vset.pattern.permute.xlu0 0
      %8256 = vperm.xlu0 %8255, %v8238
      %v8257 = vpop.permute.xlu0 %8256
      %8260 = vset.pattern.permute.xlu0 0
      %8261 = vperm.xlu0 %8260, %v8239
      %v8262 = vpop.permute.xlu0 %8261
      %8265 = vset.pattern.permute.xlu0 0
      %8266 = vperm.xlu0 %8265, %v8240
      %v8267 = vpop.permute.xlu0 %8266
      %8270 = vset.pattern.permute.xlu0 0
      %8271 = vperm.xlu0 %8270, %v8241
      %v8272 = vpop.permute.xlu0 %8271
      %8275 = vset.pattern.permute.xlu0 0
      %8276 = vperm.xlu0 %8275, %v8242
      %v8277 = vpop.permute.xlu0 %8276
      %8280 = vset.pattern.permute.xlu0 0
      %8281 = vperm.xlu0 %8280, %v8243
      %v8282 = vpop.permute.xlu0 %8281
      %v8284 = vadd.f32 %v8228, %v8247
      %v8285 = vadd.f32 %v8229, %v8252
      %v8286 = vadd.f32 %v8230, %v8257
      %v8287 = vadd.f32 %v8231, %v8262
      %v8288 = vadd.f32 %v8232, %v8267
      %v8289 = vadd.f32 %v8233, %v8272
      %v8290 = vadd.f32 %v8234, %v8277
      %v8291 = vadd.f32 %v8235, %v8282
      %v8292 = vmax.f32 %v8284, 0.0
      %v8293 = vmax.f32 %v8285, 0.0
      %v8294 = vmax.f32 %v8286, 0.0
      %v8295 = vmax.f32 %v8287, 0.0
      %v8296 = vmax.f32 %v8288, 0.0
      %v8297 = vmax.f32 %v8289, 0.0
      %v8298 = vmax.f32 %v8290, 0.0
      %v8299 = vmax.f32 %v8291, 0.0
      %v8300 = vpack.c.bf16 %v8293, %v8292
      %v8301 = vpack.c.bf16 %v8295, %v8294
      %v8302 = vpack.c.bf16 %v8297, %v8296
      %v8303 = vpack.c.bf16 %v8299, %v8298
      %v8304 = vld [vmem:[%s12] sm:$0xf]
      %v8305 = vld [vmem:[%s12 + $0x4] sm:$0x1]
      %v8308 = vunpack.c.l.b16 %v8304
      %v8309 = vunpack.c.l.b16 %v8305
      %v8310 = vpack.c.b16 %v8309, %v8308
      %vm8311 = vcmask 72704
      %v8313 = vsel %vm8311, %v8300, 0
      %v8316 = vsel %vm8311, %v8301, 0
      %v8319 = vsel %vm8311, %v8302, 0
      %v8322 = vsel %vm8311, %v8303, 0
      %v8325 = vand.u32 %v8310, %v4980
      %8327 = vmatprep.subr.bf16.mxu0 0
      %8328 = vmatpush1.bf16.msra.mxu0 0
      %8329 = vmatprep.subr.bf16.mxu0 0
      %8330 = vmatpush1.bf16.msra.mxu0 0
      %8331 = vmatprep.subr.bf16.mxu0 0
      %8332 = vmatpush1.bf16.msra.mxu0 0
      %8333 = vmatprep.subr.bf16.mxu0 0
      %8334 = vmatpush1.bf16.msra.mxu0 0
      %8335 = vmatprep.subr.bf16.mxu0 0
      %8336 = vmatpush1.bf16.msra.mxu0 0
      %8337 = vmatprep.subr.bf16.mxu0 0
      %8338 = vmatpush1.bf16.msra.mxu0 0
      %8339 = vmatprep.subr.bf16.mxu0 0
      %8340 = vmatpush1.bf16.msra.mxu0 0
      %8341 = vmatprep.subr.bf16.mxu0 0
      %8342 = vmatpush1.bf16.msra.mxu0 %v8325
      %8343 = vmatprep.subr.bf16.mxu0 0
      %8344 = vmatpush2.bf16.msra.mxu0 0
      %8345 = vmatprep.subr.bf16.mxu0 0
      %8346 = vmatpush2.bf16.msra.mxu0 0
      %8347 = vmatprep.subr.bf16.mxu0 0
      %8348 = vmatpush2.bf16.msra.mxu0 0
      %8349 = vmatprep.subr.bf16.mxu0 0
      %8350 = vmatpush2.bf16.msra.mxu0 0
      %8351 = vmatprep.subr.bf16.mxu0 0
      %8352 = vmatpush2.bf16.msra.mxu0 0
      %8353 = vmatprep.subr.bf16.mxu0 0
      %8354 = vmatpush2.bf16.msra.mxu0 0
      %8355 = vmatprep.subr.bf16.mxu0 0
      %8356 = vmatpush2.bf16.msra.mxu0 0
      %8357 = vmatprep.subr.bf16.mxu0 0
      %8358 = vmatpush2.bf16.msra.mxu0 0
      %8359 = vmatprep.mubr.bf16.mxu0 0
      %8360 = vmatmul.mubr.bf16.gmra.mxu0 %v8313
      %v8361 = vpop.f32.mrf.mxu0
      %v8362 = vadd.f32 0.0, %v8361
      %v8363 = vpop.f32.mrf.mxu0
      %v8364 = vpop.f32.mrf.mxu0
      %v8365 = vadd.f32 0.0, %v8364
      %v8366 = vpop.f32.mrf.mxu0
      %8367 = vmatprep.mubr.bf16.mxu0 0
      %8368 = vmatmul.mubr.bf16.gmra.mxu0 %v8316
      %v8369 = vpop.f32.mrf.mxu0
      %v8370 = vadd.f32 0.0, %v8369
      %v8371 = vpop.f32.mrf.mxu0
      %v8372 = vpop.f32.mrf.mxu0
      %v8373 = vadd.f32 0.0, %v8372
      %v8374 = vpop.f32.mrf.mxu0
      %8375 = vmatprep.mubr.bf16.mxu0 0
      %8376 = vmatmul.mubr.bf16.gmra.mxu0 %v8319
      %v8377 = vpop.f32.mrf.mxu0
      %v8378 = vadd.f32 0.0, %v8377
      %v8379 = vpop.f32.mrf.mxu0
      %v8380 = vpop.f32.mrf.mxu0
      %v8381 = vadd.f32 0.0, %v8380
      %v8382 = vpop.f32.mrf.mxu0
      %8383 = vmatprep.mubr.bf16.mxu0 0
      %8384 = vmatmul.mubr.bf16.gmra.mxu0 %v8322
      %v8385 = vpop.f32.mrf.mxu0
      %v8386 = vadd.f32 0.0, %v8385
      %v8387 = vpop.f32.mrf.mxu0
      %v8388 = vpop.f32.mrf.mxu0
      %v8389 = vadd.f32 0.0, %v8388
      %v8390 = vpop.f32.mrf.mxu0
      %8391 = vdwg.mxu0
      %v8392 = vld [vmem:[%s13] sm:$0xf]
      %v8393 = vld [vmem:[%s13 + $0x4] sm:$0xf]
      %v8394 = vld [vmem:[%s13 + $0x8] sm:$0xf]
      %v8395 = vld [vmem:[%s13 + $0xc] sm:$0xf]
      %v8396 = vld [vmem:[%s13 + $0x10] sm:$0xf]
      %v8397 = vld [vmem:[%s13 + $0x14] sm:$0xf]
      %v8398 = vld [vmem:[%s13 + $0x18] sm:$0xf]
      %v8399 = vld [vmem:[%s13 + $0x1c] sm:$0xf]
      %v8400 = vld [vmem:[%s13 + $0x20] sm:$0xf]
      %v8401 = vld [vmem:[%s13 + $0x24] sm:$0xf]
      %v8402 = vld [vmem:[%s13 + $0x28] sm:$0xf]
      %v8403 = vld [vmem:[%s13 + $0x2c] sm:$0xf]
      %v8404 = vld [vmem:[%s13 + $0x30] sm:$0xf]
      %v8405 = vld [vmem:[%s13 + $0x34] sm:$0xf]
      %v8406 = vld [vmem:[%s13 + $0x38] sm:$0xf]
      %v8407 = vld [vmem:[%s13 + $0x3c] sm:$0xf]
      %v8408 = vpack.c.bf16 %v8365, %v8362
      %v8409 = vpack.c.bf16 %v8373, %v8370
      %v8410 = vpack.c.bf16 %v8381, %v8378
      %v8411 = vpack.c.bf16 %v8389, %v8386
      %s8412 = scalar_lea.vmem %s12, 8
      %v8413 = vld [vmem:[%s8412] sm:$0xf]
      %v8414 = vld [vmem:[%s8412 + $0x4] sm:$0x1]
      %v8417 = vunpack.c.l.b16 %v8413
      %v8418 = vunpack.c.l.b16 %v8414
      %v8419 = vpack.c.b16 %v8418, %v8417
      %v8421 = vand.u32 %v8419, %v4980
      %8423 = vmatprep.subr.bf16.mxu0 0
      %8424 = vmatpush1.bf16.msra.mxu0 0
      %8425 = vmatprep.subr.bf16.mxu0 0
      %8426 = vmatpush1.bf16.msra.mxu0 0
      %8427 = vmatprep.subr.bf16.mxu0 0
      %8428 = vmatpush1.bf16.msra.mxu0 0
      %8429 = vmatprep.subr.bf16.mxu0 0
      %8430 = vmatpush1.bf16.msra.mxu0 0
      %8431 = vmatprep.subr.bf16.mxu0 0
      %8432 = vmatpush1.bf16.msra.mxu0 0
      %8433 = vmatprep.subr.bf16.mxu0 0
      %8434 = vmatpush1.bf16.msra.mxu0 0
      %8435 = vmatprep.subr.bf16.mxu0 0
      %8436 = vmatpush1.bf16.msra.mxu0 0
      %8437 = vmatprep.subr.bf16.mxu0 0
      %8438 = vmatpush1.bf16.msra.mxu0 %v8421
      %8439 = vmatprep.subr.bf16.mxu0 0
      %8440 = vmatpush2.bf16.msra.mxu0 0
      %8441 = vmatprep.subr.bf16.mxu0 0
      %8442 = vmatpush2.bf16.msra.mxu0 0
      %8443 = vmatprep.subr.bf16.mxu0 0
      %8444 = vmatpush2.bf16.msra.mxu0 0
      %8445 = vmatprep.subr.bf16.mxu0 0
      %8446 = vmatpush2.bf16.msra.mxu0 0
      %8447 = vmatprep.subr.bf16.mxu0 0
      %8448 = vmatpush2.bf16.msra.mxu0 0
      %8449 = vmatprep.subr.bf16.mxu0 0
      %8450 = vmatpush2.bf16.msra.mxu0 0
      %8451 = vmatprep.subr.bf16.mxu0 0
      %8452 = vmatpush2.bf16.msra.mxu0 0
      %8453 = vmatprep.subr.bf16.mxu0 0
      %8454 = vmatpush2.bf16.msra.mxu0 0
      %8455 = vmatprep.mubr.bf16.mxu0 0
      %8456 = vmatmul.mubr.bf16.gmra.mxu0 %v8313
      %v8457 = vpop.f32.mrf.mxu0
      %v8458 = vadd.f32 0.0, %v8457
      %v8459 = vpop.f32.mrf.mxu0
      %v8460 = vpop.f32.mrf.mxu0
      %v8461 = vadd.f32 0.0, %v8460
      %v8462 = vpop.f32.mrf.mxu0
      %8463 = vmatprep.mubr.bf16.mxu0 0
      %8464 = vmatmul.mubr.bf16.gmra.mxu0 %v8316
      %v8465 = vpop.f32.mrf.mxu0
      %v8466 = vadd.f32 0.0, %v8465
      %v8467 = vpop.f32.mrf.mxu0
      %v8468 = vpop.f32.mrf.mxu0
      %v8469 = vadd.f32 0.0, %v8468
      %v8470 = vpop.f32.mrf.mxu0
      %8471 = vmatprep.mubr.bf16.mxu0 0
      %8472 = vmatmul.mubr.bf16.gmra.mxu0 %v8319
      %v8473 = vpop.f32.mrf.mxu0
      %v8474 = vadd.f32 0.0, %v8473
      %v8475 = vpop.f32.mrf.mxu0
      %v8476 = vpop.f32.mrf.mxu0
      %v8477 = vadd.f32 0.0, %v8476
      %v8478 = vpop.f32.mrf.mxu0
      %8479 = vmatprep.mubr.bf16.mxu0 0
      %8480 = vmatmul.mubr.bf16.gmra.mxu0 %v8322
      %v8481 = vpop.f32.mrf.mxu0
      %v8482 = vadd.f32 0.0, %v8481
      %v8483 = vpop.f32.mrf.mxu0
      %v8484 = vpop.f32.mrf.mxu0
      %v8485 = vadd.f32 0.0, %v8484
      %v8486 = vpop.f32.mrf.mxu0
      %8487 = vdwg.mxu0
      %s8488 = scalar_lea.vmem %s13, 64
      %v8489 = vld [vmem:[%s8488] sm:$0xf]
      %v8490 = vld [vmem:[%s8488 + $0x4] sm:$0xf]
      %v8491 = vld [vmem:[%s8488 + $0x8] sm:$0xf]
      %v8492 = vld [vmem:[%s8488 + $0xc] sm:$0xf]
      %v8493 = vld [vmem:[%s8488 + $0x10] sm:$0xf]
      %v8494 = vld [vmem:[%s8488 + $0x14] sm:$0xf]
      %v8495 = vld [vmem:[%s8488 + $0x18] sm:$0xf]
      %v8496 = vld [vmem:[%s8488 + $0x1c] sm:$0xf]
      %v8497 = vld [vmem:[%s8488 + $0x20] sm:$0xf]
      %v8498 = vld [vmem:[%s8488 + $0x24] sm:$0xf]
      %v8499 = vld [vmem:[%s8488 + $0x28] sm:$0xf]
      %v8500 = vld [vmem:[%s8488 + $0x2c] sm:$0xf]
      %v8501 = vld [vmem:[%s8488 + $0x30] sm:$0xf]
      %v8502 = vld [vmem:[%s8488 + $0x34] sm:$0xf]
      %v8503 = vld [vmem:[%s8488 + $0x38] sm:$0xf]
      %v8504 = vld [vmem:[%s8488 + $0x3c] sm:$0xf]
      %v8505 = vpack.c.bf16 %v8461, %v8458
      %v8506 = vpack.c.bf16 %v8469, %v8466
      %v8507 = vpack.c.bf16 %v8477, %v8474
      %v8508 = vpack.c.bf16 %v8485, %v8482
      %v8525 = vunpack.c.l.b16 %v8489
      %v8526 = vunpack.c.l.b16 %v8490
      %v8527 = vunpack.c.l.b16 %v8491
      %v8528 = vunpack.c.l.b16 %v8492
      %v8529 = vunpack.c.l.b16 %v8493
      %v8530 = vunpack.c.l.b16 %v8494
      %v8531 = vunpack.c.l.b16 %v8495
      %v8532 = vunpack.c.l.b16 %v8496
      %v8533 = vunpack.c.l.b16 %v8497
      %v8534 = vunpack.c.l.b16 %v8498
      %v8535 = vunpack.c.l.b16 %v8499
      %v8536 = vunpack.c.l.b16 %v8500
      %v8537 = vunpack.c.l.b16 %v8501
      %v8538 = vunpack.c.l.b16 %v8502
      %v8539 = vunpack.c.l.b16 %v8503
      %v8540 = vunpack.c.l.b16 %v8504
      %v8541 = vpack.c.b16 %v8526, %v8525
      %v8542 = vpack.c.b16 %v8528, %v8527
      %v8543 = vpack.c.b16 %v8530, %v8529
      %v8544 = vpack.c.b16 %v8532, %v8531
      %v8545 = vpack.c.b16 %v8534, %v8533
      %v8546 = vpack.c.b16 %v8536, %v8535
      %v8547 = vpack.c.b16 %v8538, %v8537
      %v8548 = vpack.c.b16 %v8540, %v8539
      %vm8549 = vcmask 523264
      %v8551 = vsel %vm8549, %v8541, 0
      %v8554 = vsel %vm8549, %v8542, 0
      %v8557 = vsel %vm8549, %v8543, 0
      %v8560 = vsel %vm8549, %v8544, 0
      %v8563 = vsel %vm8549, %v8545, 0
      %v8566 = vsel %vm8549, %v8546, 0
      %v8569 = vsel %vm8549, %v8547, 0
      %v8572 = vsel %vm8549, %v8548, 0
      %8574 = vmatprep.subr.bf16.mxu0 0
      %8575 = vmatpush1.bf16.msra.mxu0 0
      %8576 = vmatprep.subr.bf16.mxu0 0
      %8577 = vmatpush1.bf16.msra.mxu0 0
      %8578 = vmatprep.subr.bf16.mxu0 0
      %8579 = vmatpush1.bf16.msra.mxu0 0
      %8580 = vmatprep.subr.bf16.mxu0 0
      %8581 = vmatpush1.bf16.msra.mxu0 0
      %8582 = vmatprep.subr.bf16.mxu0 0
      %8583 = vmatpush1.bf16.msra.mxu0 %v8508
      %8584 = vmatprep.subr.bf16.mxu0 0
      %8585 = vmatpush1.bf16.msra.mxu0 %v8507
      %8586 = vmatprep.subr.bf16.mxu0 0
      %8587 = vmatpush1.bf16.msra.mxu0 %v8506
      %8588 = vmatprep.subr.bf16.mxu0 0
      %8589 = vmatpush1.bf16.msra.mxu0 %v8505
      %8590 = vmatprep.subr.bf16.mxu0 0
      %8591 = vmatpush2.bf16.msra.mxu0 0
      %8592 = vmatprep.subr.bf16.mxu0 0
      %8593 = vmatpush2.bf16.msra.mxu0 0
      %8594 = vmatprep.subr.bf16.mxu0 0
      %8595 = vmatpush2.bf16.msra.mxu0 0
      %8596 = vmatprep.subr.bf16.mxu0 0
      %8597 = vmatpush2.bf16.msra.mxu0 0
      %8598 = vmatprep.subr.bf16.mxu0 0
      %8599 = vmatpush2.bf16.msra.mxu0 0
      %8600 = vmatprep.subr.bf16.mxu0 0
      %8601 = vmatpush2.bf16.msra.mxu0 0
      %8602 = vmatprep.subr.bf16.mxu0 0
      %8603 = vmatpush2.bf16.msra.mxu0 0
      %8604 = vmatprep.subr.bf16.mxu0 0
      %8605 = vmatpush2.bf16.msra.mxu0 0
      %8606 = vmatprep.mubr.bf16.mxu0 0
      %8607 = vmatmul.mubr.bf16.gmra.mxu0 %v8551
      %v8608 = vpop.f32.mrf.mxu0
      %v8609 = vadd.f32 0.0, %v8608
      %v8610 = vpop.f32.mrf.mxu0
      %v8611 = vpop.f32.mrf.mxu0
      %v8612 = vadd.f32 0.0, %v8611
      %v8613 = vpop.f32.mrf.mxu0
      %8614 = vmatprep.mubr.bf16.mxu0 0
      %8615 = vmatmul.mubr.bf16.gmra.mxu0 %v8554
      %v8616 = vpop.f32.mrf.mxu0
      %v8617 = vadd.f32 0.0, %v8616
      %v8618 = vpop.f32.mrf.mxu0
      %v8619 = vpop.f32.mrf.mxu0
      %v8620 = vadd.f32 0.0, %v8619
      %v8621 = vpop.f32.mrf.mxu0
      %8622 = vmatprep.mubr.bf16.mxu0 0
      %8623 = vmatmul.mubr.bf16.gmra.mxu0 %v8557
      %v8624 = vpop.f32.mrf.mxu0
      %v8625 = vadd.f32 0.0, %v8624
      %v8626 = vpop.f32.mrf.mxu0
      %v8627 = vpop.f32.mrf.mxu0
      %v8628 = vadd.f32 0.0, %v8627
      %v8629 = vpop.f32.mrf.mxu0
      %8630 = vmatprep.mubr.bf16.mxu0 0
      %8631 = vmatmul.mubr.bf16.gmra.mxu0 %v8560
      %v8632 = vpop.f32.mrf.mxu0
      %v8633 = vadd.f32 0.0, %v8632
      %v8634 = vpop.f32.mrf.mxu0
      %v8635 = vpop.f32.mrf.mxu0
      %v8636 = vadd.f32 0.0, %v8635
      %v8637 = vpop.f32.mrf.mxu0
      %8638 = vmatprep.mubr.bf16.mxu0 0
      %8639 = vmatmul.mubr.bf16.gmra.mxu0 %v8563
      %v8640 = vpop.f32.mrf.mxu0
      %v8641 = vadd.f32 0.0, %v8640
      %v8642 = vpop.f32.mrf.mxu0
      %v8643 = vpop.f32.mrf.mxu0
      %v8644 = vadd.f32 0.0, %v8643
      %v8645 = vpop.f32.mrf.mxu0
      %8646 = vmatprep.mubr.bf16.mxu0 0
      %8647 = vmatmul.mubr.bf16.gmra.mxu0 %v8566
      %v8648 = vpop.f32.mrf.mxu0
      %v8649 = vadd.f32 0.0, %v8648
      %v8650 = vpop.f32.mrf.mxu0
      %v8651 = vpop.f32.mrf.mxu0
      %v8652 = vadd.f32 0.0, %v8651
      %v8653 = vpop.f32.mrf.mxu0
      %8654 = vmatprep.mubr.bf16.mxu0 0
      %8655 = vmatmul.mubr.bf16.gmra.mxu0 %v8569
      %v8656 = vpop.f32.mrf.mxu0
      %v8657 = vadd.f32 0.0, %v8656
      %v8658 = vpop.f32.mrf.mxu0
      %v8659 = vpop.f32.mrf.mxu0
      %v8660 = vadd.f32 0.0, %v8659
      %v8661 = vpop.f32.mrf.mxu0
      %8662 = vmatprep.mubr.bf16.mxu0 0
      %8663 = vmatmul.mubr.bf16.gmra.mxu0 %v8572
      %v8664 = vpop.f32.mrf.mxu0
      %v8665 = vadd.f32 0.0, %v8664
      %v8666 = vpop.f32.mrf.mxu0
      %v8667 = vpop.f32.mrf.mxu0
      %v8668 = vadd.f32 0.0, %v8667
      %v8669 = vpop.f32.mrf.mxu0
      %8670 = vdwg.mxu0
      %v8687 = vunpack.c.l.b16 %v8392
      %v8688 = vunpack.c.l.b16 %v8393
      %v8689 = vunpack.c.l.b16 %v8394
      %v8690 = vunpack.c.l.b16 %v8395
      %v8691 = vunpack.c.l.b16 %v8396
      %v8692 = vunpack.c.l.b16 %v8397
      %v8693 = vunpack.c.l.b16 %v8398
      %v8694 = vunpack.c.l.b16 %v8399
      %v8695 = vunpack.c.l.b16 %v8400
      %v8696 = vunpack.c.l.b16 %v8401
      %v8697 = vunpack.c.l.b16 %v8402
      %v8698 = vunpack.c.l.b16 %v8403
      %v8699 = vunpack.c.l.b16 %v8404
      %v8700 = vunpack.c.l.b16 %v8405
      %v8701 = vunpack.c.l.b16 %v8406
      %v8702 = vunpack.c.l.b16 %v8407
      %v8703 = vpack.c.b16 %v8688, %v8687
      %v8704 = vpack.c.b16 %v8690, %v8689
      %v8705 = vpack.c.b16 %v8692, %v8691
      %v8706 = vpack.c.b16 %v8694, %v8693
      %v8707 = vpack.c.b16 %v8696, %v8695
      %v8708 = vpack.c.b16 %v8698, %v8697
      %v8709 = vpack.c.b16 %v8700, %v8699
      %v8710 = vpack.c.b16 %v8702, %v8701
      %v8712 = vsel %vm8549, %v8703, 0
      %v8715 = vsel %vm8549, %v8704, 0
      %v8718 = vsel %vm8549, %v8705, 0
      %v8721 = vsel %vm8549, %v8706, 0
      %v8724 = vsel %vm8549, %v8707, 0
      %v8727 = vsel %vm8549, %v8708, 0
      %v8730 = vsel %vm8549, %v8709, 0
      %v8733 = vsel %vm8549, %v8710, 0
      %8735 = vmatprep.subr.bf16.mxu0 0
      %8736 = vmatpush1.bf16.msra.mxu0 0
      %8737 = vmatprep.subr.bf16.mxu0 0
      %8738 = vmatpush1.bf16.msra.mxu0 0
      %8739 = vmatprep.subr.bf16.mxu0 0
      %8740 = vmatpush1.bf16.msra.mxu0 0
      %8741 = vmatprep.subr.bf16.mxu0 0
      %8742 = vmatpush1.bf16.msra.mxu0 0
      %8743 = vmatprep.subr.bf16.mxu0 0
      %8744 = vmatpush1.bf16.msra.mxu0 %v8411
      %8745 = vmatprep.subr.bf16.mxu0 0
      %8746 = vmatpush1.bf16.msra.mxu0 %v8410
      %8747 = vmatprep.subr.bf16.mxu0 0
      %8748 = vmatpush1.bf16.msra.mxu0 %v8409
      %8749 = vmatprep.subr.bf16.mxu0 0
      %8750 = vmatpush1.bf16.msra.mxu0 %v8408
      %8751 = vmatprep.subr.bf16.mxu0 0
      %8752 = vmatpush2.bf16.msra.mxu0 0
      %8753 = vmatprep.subr.bf16.mxu0 0
      %8754 = vmatpush2.bf16.msra.mxu0 0
      %8755 = vmatprep.subr.bf16.mxu0 0
      %8756 = vmatpush2.bf16.msra.mxu0 0
      %8757 = vmatprep.subr.bf16.mxu0 0
      %8758 = vmatpush2.bf16.msra.mxu0 0
      %8759 = vmatprep.subr.bf16.mxu0 0
      %8760 = vmatpush2.bf16.msra.mxu0 0
      %8761 = vmatprep.subr.bf16.mxu0 0
      %8762 = vmatpush2.bf16.msra.mxu0 0
      %8763 = vmatprep.subr.bf16.mxu0 0
      %8764 = vmatpush2.bf16.msra.mxu0 0
      %8765 = vmatprep.subr.bf16.mxu0 0
      %8766 = vmatpush2.bf16.msra.mxu0 0
      %8767 = vmatprep.mubr.bf16.mxu0 0
      %8768 = vmatmul.mubr.bf16.gmra.mxu0 %v8712
      %v8769 = vpop.f32.mrf.mxu0
      %v8770 = vadd.f32 %v8609, %v8769
      %v8771 = vpop.f32.mrf.mxu0
      %v8772 = vpop.f32.mrf.mxu0
      %v8773 = vadd.f32 %v8612, %v8772
      %v8774 = vpop.f32.mrf.mxu0
      %8775 = vmatprep.mubr.bf16.mxu0 0
      %8776 = vmatmul.mubr.bf16.gmra.mxu0 %v8715
      %v8777 = vpop.f32.mrf.mxu0
      %v8778 = vadd.f32 %v8617, %v8777
      %v8779 = vpop.f32.mrf.mxu0
      %v8780 = vpop.f32.mrf.mxu0
      %v8781 = vadd.f32 %v8620, %v8780
      %v8782 = vpop.f32.mrf.mxu0
      %8783 = vmatprep.mubr.bf16.mxu0 0
      %8784 = vmatmul.mubr.bf16.gmra.mxu0 %v8718
      %v8785 = vpop.f32.mrf.mxu0
      %v8786 = vadd.f32 %v8625, %v8785
      %v8787 = vpop.f32.mrf.mxu0
      %v8788 = vpop.f32.mrf.mxu0
      %v8789 = vadd.f32 %v8628, %v8788
      %v8790 = vpop.f32.mrf.mxu0
      %8791 = vmatprep.mubr.bf16.mxu0 0
      %8792 = vmatmul.mubr.bf16.gmra.mxu0 %v8721
      %v8793 = vpop.f32.mrf.mxu0
      %v8794 = vadd.f32 %v8633, %v8793
      %v8795 = vpop.f32.mrf.mxu0
      %v8796 = vpop.f32.mrf.mxu0
      %v8797 = vadd.f32 %v8636, %v8796
      %v8798 = vpop.f32.mrf.mxu0
      %8799 = vmatprep.mubr.bf16.mxu0 0
      %8800 = vmatmul.mubr.bf16.gmra.mxu0 %v8724
      %v8801 = vpop.f32.mrf.mxu0
      %v8802 = vadd.f32 %v8641, %v8801
      %v8803 = vpop.f32.mrf.mxu0
      %v8804 = vpop.f32.mrf.mxu0
      %v8805 = vadd.f32 %v8644, %v8804
      %v8806 = vpop.f32.mrf.mxu0
      %8807 = vmatprep.mubr.bf16.mxu0 0
      %8808 = vmatmul.mubr.bf16.gmra.mxu0 %v8727
      %v8809 = vpop.f32.mrf.mxu0
      %v8810 = vadd.f32 %v8649, %v8809
      %v8811 = vpop.f32.mrf.mxu0
      %v8812 = vpop.f32.mrf.mxu0
      %v8813 = vadd.f32 %v8652, %v8812
      %v8814 = vpop.f32.mrf.mxu0
      %8815 = vmatprep.mubr.bf16.mxu0 0
      %8816 = vmatmul.mubr.bf16.gmra.mxu0 %v8730
      %v8817 = vpop.f32.mrf.mxu0
      %v8818 = vadd.f32 %v8657, %v8817
      %v8819 = vpop.f32.mrf.mxu0
      %v8820 = vpop.f32.mrf.mxu0
      %v8821 = vadd.f32 %v8660, %v8820
      %v8822 = vpop.f32.mrf.mxu0
      %8823 = vmatprep.mubr.bf16.mxu0 0
      %8824 = vmatmul.mubr.bf16.gmra.mxu0 %v8733
      %v8825 = vpop.f32.mrf.mxu0
      %v8826 = vadd.f32 %v8665, %v8825
      %v8827 = vpop.f32.mrf.mxu0
      %v8828 = vpop.f32.mrf.mxu0
      %v8829 = vadd.f32 %v8668, %v8828
      %v8830 = vpop.f32.mrf.mxu0
      %8831 = vdwg.mxu0
      %s8832 = scalar_lea.vmem %s12, 16
      %v8833 = vld [vmem:[%s8832] sm:$0xf]
      %v8834 = vld [vmem:[%s8832 + $0x4] sm:$0x1]
      %v8837 = vunpack.c.l.b16 %v8833
      %v8838 = vunpack.c.l.b16 %v8834
      %v8839 = vpack.c.b16 %v8838, %v8837
      %v8841 = vand.u32 %v8839, %v4980
      %8843 = vmatprep.subr.bf16.mxu0 0
      %8844 = vmatpush1.bf16.msra.mxu0 0
      %8845 = vmatprep.subr.bf16.mxu0 0
      %8846 = vmatpush1.bf16.msra.mxu0 0
      %8847 = vmatprep.subr.bf16.mxu0 0
      %8848 = vmatpush1.bf16.msra.mxu0 0
      %8849 = vmatprep.subr.bf16.mxu0 0
      %8850 = vmatpush1.bf16.msra.mxu0 0
      %8851 = vmatprep.subr.bf16.mxu0 0
      %8852 = vmatpush1.bf16.msra.mxu0 0
      %8853 = vmatprep.subr.bf16.mxu0 0
      %8854 = vmatpush1.bf16.msra.mxu0 0
      %8855 = vmatprep.subr.bf16.mxu0 0
      %8856 = vmatpush1.bf16.msra.mxu0 0
      %8857 = vmatprep.subr.bf16.mxu0 0
      %8858 = vmatpush1.bf16.msra.mxu0 %v8841
      %8859 = vmatprep.subr.bf16.mxu0 0
      %8860 = vmatpush2.bf16.msra.mxu0 0
      %8861 = vmatprep.subr.bf16.mxu0 0
      %8862 = vmatpush2.bf16.msra.mxu0 0
      %8863 = vmatprep.subr.bf16.mxu0 0
      %8864 = vmatpush2.bf16.msra.mxu0 0
      %8865 = vmatprep.subr.bf16.mxu0 0
      %8866 = vmatpush2.bf16.msra.mxu0 0
      %8867 = vmatprep.subr.bf16.mxu0 0
      %8868 = vmatpush2.bf16.msra.mxu0 0
      %8869 = vmatprep.subr.bf16.mxu0 0
      %8870 = vmatpush2.bf16.msra.mxu0 0
      %8871 = vmatprep.subr.bf16.mxu0 0
      %8872 = vmatpush2.bf16.msra.mxu0 0
      %8873 = vmatprep.subr.bf16.mxu0 0
      %8874 = vmatpush2.bf16.msra.mxu0 0
      %8875 = vmatprep.mubr.bf16.mxu0 0
      %8876 = vmatmul.mubr.bf16.gmra.mxu0 %v8313
      %v8877 = vpop.f32.mrf.mxu0
      %v8878 = vadd.f32 0.0, %v8877
      %v8879 = vpop.f32.mrf.mxu0
      %v8880 = vpop.f32.mrf.mxu0
      %v8881 = vadd.f32 0.0, %v8880
      %v8882 = vpop.f32.mrf.mxu0
      %8883 = vmatprep.mubr.bf16.mxu0 0
      %8884 = vmatmul.mubr.bf16.gmra.mxu0 %v8316
      %v8885 = vpop.f32.mrf.mxu0
      %v8886 = vadd.f32 0.0, %v8885
      %v8887 = vpop.f32.mrf.mxu0
      %v8888 = vpop.f32.mrf.mxu0
      %v8889 = vadd.f32 0.0, %v8888
      %v8890 = vpop.f32.mrf.mxu0
      %8891 = vmatprep.mubr.bf16.mxu0 0
      %8892 = vmatmul.mubr.bf16.gmra.mxu0 %v8319
      %v8893 = vpop.f32.mrf.mxu0
      %v8894 = vadd.f32 0.0, %v8893
      %v8895 = vpop.f32.mrf.mxu0
      %v8896 = vpop.f32.mrf.mxu0
      %v8897 = vadd.f32 0.0, %v8896
      %v8898 = vpop.f32.mrf.mxu0
      %8899 = vmatprep.mubr.bf16.mxu0 0
      %8900 = vmatmul.mubr.bf16.gmra.mxu0 %v8322
      %v8901 = vpop.f32.mrf.mxu0
      %v8902 = vadd.f32 0.0, %v8901
      %v8903 = vpop.f32.mrf.mxu0
      %v8904 = vpop.f32.mrf.mxu0
      %v8905 = vadd.f32 0.0, %v8904
      %v8906 = vpop.f32.mrf.mxu0
      %8907 = vdwg.mxu0
      %s8908 = scalar_lea.vmem %s13, 128
      %v8909 = vld [vmem:[%s8908] sm:$0xf]
      %v8910 = vld [vmem:[%s8908 + $0x4] sm:$0xf]
      %v8911 = vld [vmem:[%s8908 + $0x8] sm:$0xf]
      %v8912 = vld [vmem:[%s8908 + $0xc] sm:$0xf]
      %v8913 = vld [vmem:[%s8908 + $0x10] sm:$0xf]
      %v8914 = vld [vmem:[%s8908 + $0x14] sm:$0xf]
      %v8915 = vld [vmem:[%s8908 + $0x18] sm:$0xf]
      %v8916 = vld [vmem:[%s8908 + $0x1c] sm:$0xf]
      %v8917 = vld [vmem:[%s8908 + $0x20] sm:$0xf]
      %v8918 = vld [vmem:[%s8908 + $0x24] sm:$0xf]
      %v8919 = vld [vmem:[%s8908 + $0x28] sm:$0xf]
      %v8920 = vld [vmem:[%s8908 + $0x2c] sm:$0xf]
      %v8921 = vld [vmem:[%s8908 + $0x30] sm:$0xf]
      %v8922 = vld [vmem:[%s8908 + $0x34] sm:$0xf]
      %v8923 = vld [vmem:[%s8908 + $0x38] sm:$0xf]
      %v8924 = vld [vmem:[%s8908 + $0x3c] sm:$0xf]
      %v8925 = vpack.c.bf16 %v8881, %v8878
      %v8926 = vpack.c.bf16 %v8889, %v8886
      %v8927 = vpack.c.bf16 %v8897, %v8894
      %v8928 = vpack.c.bf16 %v8905, %v8902
      %v8945 = vunpack.c.l.b16 %v8909
      %v8946 = vunpack.c.l.b16 %v8910
      %v8947 = vunpack.c.l.b16 %v8911
      %v8948 = vunpack.c.l.b16 %v8912
      %v8949 = vunpack.c.l.b16 %v8913
      %v8950 = vunpack.c.l.b16 %v8914
      %v8951 = vunpack.c.l.b16 %v8915
      %v8952 = vunpack.c.l.b16 %v8916
      %v8953 = vunpack.c.l.b16 %v8917
      %v8954 = vunpack.c.l.b16 %v8918
      %v8955 = vunpack.c.l.b16 %v8919
      %v8956 = vunpack.c.l.b16 %v8920
      %v8957 = vunpack.c.l.b16 %v8921
      %v8958 = vunpack.c.l.b16 %v8922
      %v8959 = vunpack.c.l.b16 %v8923
      %v8960 = vunpack.c.l.b16 %v8924
      %v8961 = vpack.c.b16 %v8946, %v8945
      %v8962 = vpack.c.b16 %v8948, %v8947
      %v8963 = vpack.c.b16 %v8950, %v8949
      %v8964 = vpack.c.b16 %v8952, %v8951
      %v8965 = vpack.c.b16 %v8954, %v8953
      %v8966 = vpack.c.b16 %v8956, %v8955
      %v8967 = vpack.c.b16 %v8958, %v8957
      %v8968 = vpack.c.b16 %v8960, %v8959
      %v8970 = vsel %vm8549, %v8961, 0
      %v8973 = vsel %vm8549, %v8962, 0
      %v8976 = vsel %vm8549, %v8963, 0
      %v8979 = vsel %vm8549, %v8964, 0
      %v8982 = vsel %vm8549, %v8965, 0
      %v8985 = vsel %vm8549, %v8966, 0
      %v8988 = vsel %vm8549, %v8967, 0
      %v8991 = vsel %vm8549, %v8968, 0
      %8993 = vmatprep.subr.bf16.mxu0 0
      %8994 = vmatpush1.bf16.msra.mxu0 0
      %8995 = vmatprep.subr.bf16.mxu0 0
      %8996 = vmatpush1.bf16.msra.mxu0 0
      %8997 = vmatprep.subr.bf16.mxu0 0
      %8998 = vmatpush1.bf16.msra.mxu0 0
      %8999 = vmatprep.subr.bf16.mxu0 0
      %9000 = vmatpush1.bf16.msra.mxu0 0
      %9001 = vmatprep.subr.bf16.mxu0 0
      %9002 = vmatpush1.bf16.msra.mxu0 %v8928
      %9003 = vmatprep.subr.bf16.mxu0 0
      %9004 = vmatpush1.bf16.msra.mxu0 %v8927
      %9005 = vmatprep.subr.bf16.mxu0 0
      %9006 = vmatpush1.bf16.msra.mxu0 %v8926
      %9007 = vmatprep.subr.bf16.mxu0 0
      %9008 = vmatpush1.bf16.msra.mxu0 %v8925
      %9009 = vmatprep.subr.bf16.mxu0 0
      %9010 = vmatpush2.bf16.msra.mxu0 0
      %9011 = vmatprep.subr.bf16.mxu0 0
      %9012 = vmatpush2.bf16.msra.mxu0 0
      %9013 = vmatprep.subr.bf16.mxu0 0
      %9014 = vmatpush2.bf16.msra.mxu0 0
      %9015 = vmatprep.subr.bf16.mxu0 0
      %9016 = vmatpush2.bf16.msra.mxu0 0
      %9017 = vmatprep.subr.bf16.mxu0 0
      %9018 = vmatpush2.bf16.msra.mxu0 0
      %9019 = vmatprep.subr.bf16.mxu0 0
      %9020 = vmatpush2.bf16.msra.mxu0 0
      %9021 = vmatprep.subr.bf16.mxu0 0
      %9022 = vmatpush2.bf16.msra.mxu0 0
      %9023 = vmatprep.subr.bf16.mxu0 0
      %9024 = vmatpush2.bf16.msra.mxu0 0
      %9025 = vmatprep.mubr.bf16.mxu0 0
      %9026 = vmatmul.mubr.bf16.gmra.mxu0 %v8970
      %v9027 = vpop.f32.mrf.mxu0
      %v9028 = vadd.f32 0.0, %v9027
      %v9029 = vpop.f32.mrf.mxu0
      %v9030 = vpop.f32.mrf.mxu0
      %v9031 = vadd.f32 0.0, %v9030
      %v9032 = vpop.f32.mrf.mxu0
      %9033 = vmatprep.mubr.bf16.mxu0 0
      %9034 = vmatmul.mubr.bf16.gmra.mxu0 %v8973
      %v9035 = vpop.f32.mrf.mxu0
      %v9036 = vadd.f32 0.0, %v9035
      %v9037 = vpop.f32.mrf.mxu0
      %v9038 = vpop.f32.mrf.mxu0
      %v9039 = vadd.f32 0.0, %v9038
      %v9040 = vpop.f32.mrf.mxu0
      %9041 = vmatprep.mubr.bf16.mxu0 0
      %9042 = vmatmul.mubr.bf16.gmra.mxu0 %v8976
      %v9043 = vpop.f32.mrf.mxu0
      %v9044 = vadd.f32 0.0, %v9043
      %v9045 = vpop.f32.mrf.mxu0
      %v9046 = vpop.f32.mrf.mxu0
      %v9047 = vadd.f32 0.0, %v9046
      %v9048 = vpop.f32.mrf.mxu0
      %9049 = vmatprep.mubr.bf16.mxu0 0
      %9050 = vmatmul.mubr.bf16.gmra.mxu0 %v8979
      %v9051 = vpop.f32.mrf.mxu0
      %v9052 = vadd.f32 0.0, %v9051
      %v9053 = vpop.f32.mrf.mxu0
      %v9054 = vpop.f32.mrf.mxu0
      %v9055 = vadd.f32 0.0, %v9054
      %v9056 = vpop.f32.mrf.mxu0
      %9057 = vmatprep.mubr.bf16.mxu0 0
      %9058 = vmatmul.mubr.bf16.gmra.mxu0 %v8982
      %v9059 = vpop.f32.mrf.mxu0
      %v9060 = vadd.f32 0.0, %v9059
      %v9061 = vpop.f32.mrf.mxu0
      %v9062 = vpop.f32.mrf.mxu0
      %v9063 = vadd.f32 0.0, %v9062
      %v9064 = vpop.f32.mrf.mxu0
      %9065 = vmatprep.mubr.bf16.mxu0 0
      %9066 = vmatmul.mubr.bf16.gmra.mxu0 %v8985
      %v9067 = vpop.f32.mrf.mxu0
      %v9068 = vadd.f32 0.0, %v9067
      %v9069 = vpop.f32.mrf.mxu0
      %v9070 = vpop.f32.mrf.mxu0
      %v9071 = vadd.f32 0.0, %v9070
      %v9072 = vpop.f32.mrf.mxu0
      %9073 = vmatprep.mubr.bf16.mxu0 0
      %9074 = vmatmul.mubr.bf16.gmra.mxu0 %v8988
      %v9075 = vpop.f32.mrf.mxu0
      %v9076 = vadd.f32 0.0, %v9075
      %v9077 = vpop.f32.mrf.mxu0
      %v9078 = vpop.f32.mrf.mxu0
      %v9079 = vadd.f32 0.0, %v9078
      %v9080 = vpop.f32.mrf.mxu0
      %9081 = vmatprep.mubr.bf16.mxu0 0
      %9082 = vmatmul.mubr.bf16.gmra.mxu0 %v8991
      %v9083 = vpop.f32.mrf.mxu0
      %v9084 = vadd.f32 0.0, %v9083
      %v9085 = vpop.f32.mrf.mxu0
      %v9086 = vpop.f32.mrf.mxu0
      %v9087 = vadd.f32 0.0, %v9086
      %v9088 = vpop.f32.mrf.mxu0
      %9089 = vdwg.mxu0
      %v9090 = vadd.f32 %v8770, %v9028
      %v9091 = vadd.f32 %v8773, %v9031
      %v9092 = vadd.f32 %v8778, %v9036
      %v9093 = vadd.f32 %v8781, %v9039
      %v9094 = vadd.f32 %v8786, %v9044
      %v9095 = vadd.f32 %v8789, %v9047
      %v9096 = vadd.f32 %v8794, %v9052
      %v9097 = vadd.f32 %v8797, %v9055
      %v9098 = vadd.f32 %v8802, %v9060
      %v9099 = vadd.f32 %v8805, %v9063
      %v9100 = vadd.f32 %v8810, %v9068
      %v9101 = vadd.f32 %v8813, %v9071
      %v9102 = vadd.f32 %v8818, %v9076
      %v9103 = vadd.f32 %v8821, %v9079
      %v9104 = vadd.f32 %v8826, %v9084
      %v9105 = vadd.f32 %v8829, %v9087
      %s9106 = scalar_lea.vmem %s12, 24
      %v9107 = vld [vmem:[%s9106] sm:$0xf]
      %v9108 = vld [vmem:[%s9106 + $0x4] sm:$0x1]
      %v9111 = vunpack.c.l.b16 %v9107
      %v9112 = vunpack.c.l.b16 %v9108
      %v9113 = vpack.c.b16 %v9112, %v9111
      %v9115 = vand.u32 %v9113, %v4980
      %9117 = vmatprep.subr.bf16.mxu0 0
      %9118 = vmatpush1.bf16.msra.mxu0 0
      %9119 = vmatprep.subr.bf16.mxu0 0
      %9120 = vmatpush1.bf16.msra.mxu0 0
      %9121 = vmatprep.subr.bf16.mxu0 0
      %9122 = vmatpush1.bf16.msra.mxu0 0
      %9123 = vmatprep.subr.bf16.mxu0 0
      %9124 = vmatpush1.bf16.msra.mxu0 0
      %9125 = vmatprep.subr.bf16.mxu0 0
      %9126 = vmatpush1.bf16.msra.mxu0 0
      %9127 = vmatprep.subr.bf16.mxu0 0
      %9128 = vmatpush1.bf16.msra.mxu0 0
      %9129 = vmatprep.subr.bf16.mxu0 0
      %9130 = vmatpush1.bf16.msra.mxu0 0
      %9131 = vmatprep.subr.bf16.mxu0 0
      %9132 = vmatpush1.bf16.msra.mxu0 %v9115
      %9133 = vmatprep.subr.bf16.mxu0 0
      %9134 = vmatpush2.bf16.msra.mxu0 0
      %9135 = vmatprep.subr.bf16.mxu0 0
      %9136 = vmatpush2.bf16.msra.mxu0 0
      %9137 = vmatprep.subr.bf16.mxu0 0
      %9138 = vmatpush2.bf16.msra.mxu0 0
      %9139 = vmatprep.subr.bf16.mxu0 0
      %9140 = vmatpush2.bf16.msra.mxu0 0
      %9141 = vmatprep.subr.bf16.mxu0 0
      %9142 = vmatpush2.bf16.msra.mxu0 0
      %9143 = vmatprep.subr.bf16.mxu0 0
      %9144 = vmatpush2.bf16.msra.mxu0 0
      %9145 = vmatprep.subr.bf16.mxu0 0
      %9146 = vmatpush2.bf16.msra.mxu0 0
      %9147 = vmatprep.subr.bf16.mxu0 0
      %9148 = vmatpush2.bf16.msra.mxu0 0
      %9149 = vmatprep.mubr.bf16.mxu0 0
      %9150 = vmatmul.mubr.bf16.gmra.mxu0 %v8313
      %v9151 = vpop.f32.mrf.mxu0
      %v9152 = vadd.f32 0.0, %v9151
      %v9153 = vpop.f32.mrf.mxu0
      %v9154 = vpop.f32.mrf.mxu0
      %v9155 = vadd.f32 0.0, %v9154
      %v9156 = vpop.f32.mrf.mxu0
      %9157 = vmatprep.mubr.bf16.mxu0 0
      %9158 = vmatmul.mubr.bf16.gmra.mxu0 %v8316
      %v9159 = vpop.f32.mrf.mxu0
      %v9160 = vadd.f32 0.0, %v9159
      %v9161 = vpop.f32.mrf.mxu0
      %v9162 = vpop.f32.mrf.mxu0
      %v9163 = vadd.f32 0.0, %v9162
      %v9164 = vpop.f32.mrf.mxu0
      %9165 = vmatprep.mubr.bf16.mxu0 0
      %9166 = vmatmul.mubr.bf16.gmra.mxu0 %v8319
      %v9167 = vpop.f32.mrf.mxu0
      %v9168 = vadd.f32 0.0, %v9167
      %v9169 = vpop.f32.mrf.mxu0
      %v9170 = vpop.f32.mrf.mxu0
      %v9171 = vadd.f32 0.0, %v9170
      %v9172 = vpop.f32.mrf.mxu0
      %9173 = vmatprep.mubr.bf16.mxu0 0
      %9174 = vmatmul.mubr.bf16.gmra.mxu0 %v8322
      %v9175 = vpop.f32.mrf.mxu0
      %v9176 = vadd.f32 0.0, %v9175
      %v9177 = vpop.f32.mrf.mxu0
      %v9178 = vpop.f32.mrf.mxu0
      %v9179 = vadd.f32 0.0, %v9178
      %v9180 = vpop.f32.mrf.mxu0
      %9181 = vdwg.mxu0
      %s9182 = scalar_lea.vmem %s13, 192
      %v9183 = vld [vmem:[%s9182] sm:$0xf]
      %v9184 = vld [vmem:[%s9182 + $0x4] sm:$0xf]
      %v9185 = vld [vmem:[%s9182 + $0x8] sm:$0xf]
      %v9186 = vld [vmem:[%s9182 + $0xc] sm:$0xf]
      %v9187 = vld [vmem:[%s9182 + $0x10] sm:$0xf]
      %v9188 = vld [vmem:[%s9182 + $0x14] sm:$0xf]
      %v9189 = vld [vmem:[%s9182 + $0x18] sm:$0xf]
      %v9190 = vld [vmem:[%s9182 + $0x1c] sm:$0xf]
      %v9191 = vld [vmem:[%s9182 + $0x20] sm:$0xf]
      %v9192 = vld [vmem:[%s9182 + $0x24] sm:$0xf]
      %v9193 = vld [vmem:[%s9182 + $0x28] sm:$0xf]
      %v9194 = vld [vmem:[%s9182 + $0x2c] sm:$0xf]
      %v9195 = vld [vmem:[%s9182 + $0x30] sm:$0xf]
      %v9196 = vld [vmem:[%s9182 + $0x34] sm:$0xf]
      %v9197 = vld [vmem:[%s9182 + $0x38] sm:$0xf]
      %v9198 = vld [vmem:[%s9182 + $0x3c] sm:$0xf]
      %v9199 = vpack.c.bf16 %v9155, %v9152
      %v9200 = vpack.c.bf16 %v9163, %v9160
      %v9201 = vpack.c.bf16 %v9171, %v9168
      %v9202 = vpack.c.bf16 %v9179, %v9176
      %v9219 = vunpack.c.l.b16 %v9183
      %v9220 = vunpack.c.l.b16 %v9184
      %v9221 = vunpack.c.l.b16 %v9185
      %v9222 = vunpack.c.l.b16 %v9186
      %v9223 = vunpack.c.l.b16 %v9187
      %v9224 = vunpack.c.l.b16 %v9188
      %v9225 = vunpack.c.l.b16 %v9189
      %v9226 = vunpack.c.l.b16 %v9190
      %v9227 = vunpack.c.l.b16 %v9191
      %v9228 = vunpack.c.l.b16 %v9192
      %v9229 = vunpack.c.l.b16 %v9193
      %v9230 = vunpack.c.l.b16 %v9194
      %v9231 = vunpack.c.l.b16 %v9195
      %v9232 = vunpack.c.l.b16 %v9196
      %v9233 = vunpack.c.l.b16 %v9197
      %v9234 = vunpack.c.l.b16 %v9198
      %v9235 = vpack.c.b16 %v9220, %v9219
      %v9236 = vpack.c.b16 %v9222, %v9221
      %v9237 = vpack.c.b16 %v9224, %v9223
      %v9238 = vpack.c.b16 %v9226, %v9225
      %v9239 = vpack.c.b16 %v9228, %v9227
      %v9240 = vpack.c.b16 %v9230, %v9229
      %v9241 = vpack.c.b16 %v9232, %v9231
      %v9242 = vpack.c.b16 %v9234, %v9233
      %v9244 = vsel %vm8549, %v9235, 0
      %v9247 = vsel %vm8549, %v9236, 0
      %v9250 = vsel %vm8549, %v9237, 0
      %v9253 = vsel %vm8549, %v9238, 0
      %v9256 = vsel %vm8549, %v9239, 0
      %v9259 = vsel %vm8549, %v9240, 0
      %v9262 = vsel %vm8549, %v9241, 0
      %v9265 = vsel %vm8549, %v9242, 0
      %9267 = vmatprep.subr.bf16.mxu0 0
      %9268 = vmatpush1.bf16.msra.mxu0 0
      %9269 = vmatprep.subr.bf16.mxu0 0
      %9270 = vmatpush1.bf16.msra.mxu0 0
      %9271 = vmatprep.subr.bf16.mxu0 0
      %9272 = vmatpush1.bf16.msra.mxu0 0
      %9273 = vmatprep.subr.bf16.mxu0 0
      %9274 = vmatpush1.bf16.msra.mxu0 0
      %9275 = vmatprep.subr.bf16.mxu0 0
      %9276 = vmatpush1.bf16.msra.mxu0 %v9202
      %9277 = vmatprep.subr.bf16.mxu0 0
      %9278 = vmatpush1.bf16.msra.mxu0 %v9201
      %9279 = vmatprep.subr.bf16.mxu0 0
      %9280 = vmatpush1.bf16.msra.mxu0 %v9200
      %9281 = vmatprep.subr.bf16.mxu0 0
      %9282 = vmatpush1.bf16.msra.mxu0 %v9199
      %9283 = vmatprep.subr.bf16.mxu0 0
      %9284 = vmatpush2.bf16.msra.mxu0 0
      %9285 = vmatprep.subr.bf16.mxu0 0
      %9286 = vmatpush2.bf16.msra.mxu0 0
      %9287 = vmatprep.subr.bf16.mxu0 0
      %9288 = vmatpush2.bf16.msra.mxu0 0
      %9289 = vmatprep.subr.bf16.mxu0 0
      %9290 = vmatpush2.bf16.msra.mxu0 0
      %9291 = vmatprep.subr.bf16.mxu0 0
      %9292 = vmatpush2.bf16.msra.mxu0 0
      %9293 = vmatprep.subr.bf16.mxu0 0
      %9294 = vmatpush2.bf16.msra.mxu0 0
      %9295 = vmatprep.subr.bf16.mxu0 0
      %9296 = vmatpush2.bf16.msra.mxu0 0
      %9297 = vmatprep.subr.bf16.mxu0 0
      %9298 = vmatpush2.bf16.msra.mxu0 0
      %9299 = vmatprep.mubr.bf16.mxu0 0
      %9300 = vmatmul.mubr.bf16.gmra.mxu0 %v9244
      %v9301 = vpop.f32.mrf.mxu0
      %v9302 = vadd.f32 0.0, %v9301
      %v9303 = vpop.f32.mrf.mxu0
      %v9304 = vpop.f32.mrf.mxu0
      %v9305 = vadd.f32 0.0, %v9304
      %v9306 = vpop.f32.mrf.mxu0
      %9307 = vmatprep.mubr.bf16.mxu0 0
      %9308 = vmatmul.mubr.bf16.gmra.mxu0 %v9247
      %v9309 = vpop.f32.mrf.mxu0
      %v9310 = vadd.f32 0.0, %v9309
      %v9311 = vpop.f32.mrf.mxu0
      %v9312 = vpop.f32.mrf.mxu0
      %v9313 = vadd.f32 0.0, %v9312
      %v9314 = vpop.f32.mrf.mxu0
      %9315 = vmatprep.mubr.bf16.mxu0 0
      %9316 = vmatmul.mubr.bf16.gmra.mxu0 %v9250
      %v9317 = vpop.f32.mrf.mxu0
      %v9318 = vadd.f32 0.0, %v9317
      %v9319 = vpop.f32.mrf.mxu0
      %v9320 = vpop.f32.mrf.mxu0
      %v9321 = vadd.f32 0.0, %v9320
      %v9322 = vpop.f32.mrf.mxu0
      %9323 = vmatprep.mubr.bf16.mxu0 0
      %9324 = vmatmul.mubr.bf16.gmra.mxu0 %v9253
      %v9325 = vpop.f32.mrf.mxu0
      %v9326 = vadd.f32 0.0, %v9325
      %v9327 = vpop.f32.mrf.mxu0
      %v9328 = vpop.f32.mrf.mxu0
      %v9329 = vadd.f32 0.0, %v9328
      %v9330 = vpop.f32.mrf.mxu0
      %9331 = vmatprep.mubr.bf16.mxu0 0
      %9332 = vmatmul.mubr.bf16.gmra.mxu0 %v9256
      %v9333 = vpop.f32.mrf.mxu0
      %v9334 = vadd.f32 0.0, %v9333
      %v9335 = vpop.f32.mrf.mxu0
      %v9336 = vpop.f32.mrf.mxu0
      %v9337 = vadd.f32 0.0, %v9336
      %v9338 = vpop.f32.mrf.mxu0
      %9339 = vmatprep.mubr.bf16.mxu0 0
      %9340 = vmatmul.mubr.bf16.gmra.mxu0 %v9259
      %v9341 = vpop.f32.mrf.mxu0
      %v9342 = vadd.f32 0.0, %v9341
      %v9343 = vpop.f32.mrf.mxu0
      %v9344 = vpop.f32.mrf.mxu0
      %v9345 = vadd.f32 0.0, %v9344
      %v9346 = vpop.f32.mrf.mxu0
      %9347 = vmatprep.mubr.bf16.mxu0 0
      %9348 = vmatmul.mubr.bf16.gmra.mxu0 %v9262
      %v9349 = vpop.f32.mrf.mxu0
      %v9350 = vadd.f32 0.0, %v9349
      %v9351 = vpop.f32.mrf.mxu0
      %v9352 = vpop.f32.mrf.mxu0
      %v9353 = vadd.f32 0.0, %v9352
      %v9354 = vpop.f32.mrf.mxu0
      %9355 = vmatprep.mubr.bf16.mxu0 0
      %9356 = vmatmul.mubr.bf16.gmra.mxu0 %v9265
      %v9357 = vpop.f32.mrf.mxu0
      %v9358 = vadd.f32 0.0, %v9357
      %v9359 = vpop.f32.mrf.mxu0
      %v9360 = vpop.f32.mrf.mxu0
      %v9361 = vadd.f32 0.0, %v9360
      %v9362 = vpop.f32.mrf.mxu0
      %9363 = vdwg.mxu0
      %v9364 = vadd.f32 %v9090, %v9302
      %v9365 = vadd.f32 %v9091, %v9305
      %v9366 = vadd.f32 %v9092, %v9310
      %v9367 = vadd.f32 %v9093, %v9313
      %v9368 = vadd.f32 %v9094, %v9318
      %v9369 = vadd.f32 %v9095, %v9321
      %v9370 = vadd.f32 %v9096, %v9326
      %v9371 = vadd.f32 %v9097, %v9329
      %v9372 = vadd.f32 %v9098, %v9334
      %v9373 = vadd.f32 %v9099, %v9337
      %v9374 = vadd.f32 %v9100, %v9342
      %v9375 = vadd.f32 %v9101, %v9345
      %v9376 = vadd.f32 %v9102, %v9350
      %v9377 = vadd.f32 %v9103, %v9353
      %v9378 = vadd.f32 %v9104, %v9358
      %v9379 = vadd.f32 %v9105, %v9361
      %s9380 = scalar_lea.vmem %s12, 32
      %v9381 = vld [vmem:[%s9380] sm:$0xf]
      %v9382 = vld [vmem:[%s9380 + $0x4] sm:$0x1]
      %v9385 = vunpack.c.l.b16 %v9381
      %v9386 = vunpack.c.l.b16 %v9382
      %v9387 = vpack.c.b16 %v9386, %v9385
      %v9389 = vand.u32 %v9387, %v4980
      %9391 = vmatprep.subr.bf16.mxu0 0
      %9392 = vmatpush1.bf16.msra.mxu0 0
      %9393 = vmatprep.subr.bf16.mxu0 0
      %9394 = vmatpush1.bf16.msra.mxu0 0
      %9395 = vmatprep.subr.bf16.mxu0 0
      %9396 = vmatpush1.bf16.msra.mxu0 0
      %9397 = vmatprep.subr.bf16.mxu0 0
      %9398 = vmatpush1.bf16.msra.mxu0 0
      %9399 = vmatprep.subr.bf16.mxu0 0
      %9400 = vmatpush1.bf16.msra.mxu0 0
      %9401 = vmatprep.subr.bf16.mxu0 0
      %9402 = vmatpush1.bf16.msra.mxu0 0
      %9403 = vmatprep.subr.bf16.mxu0 0
      %9404 = vmatpush1.bf16.msra.mxu0 0
      %9405 = vmatprep.subr.bf16.mxu0 0
      %9406 = vmatpush1.bf16.msra.mxu0 %v9389
      %9407 = vmatprep.subr.bf16.mxu0 0
      %9408 = vmatpush2.bf16.msra.mxu0 0
      %9409 = vmatprep.subr.bf16.mxu0 0
      %9410 = vmatpush2.bf16.msra.mxu0 0
      %9411 = vmatprep.subr.bf16.mxu0 0
      %9412 = vmatpush2.bf16.msra.mxu0 0
      %9413 = vmatprep.subr.bf16.mxu0 0
      %9414 = vmatpush2.bf16.msra.mxu0 0
      %9415 = vmatprep.subr.bf16.mxu0 0
      %9416 = vmatpush2.bf16.msra.mxu0 0
      %9417 = vmatprep.subr.bf16.mxu0 0
      %9418 = vmatpush2.bf16.msra.mxu0 0
      %9419 = vmatprep.subr.bf16.mxu0 0
      %9420 = vmatpush2.bf16.msra.mxu0 0
      %9421 = vmatprep.subr.bf16.mxu0 0
      %9422 = vmatpush2.bf16.msra.mxu0 0
      %9423 = vmatprep.mubr.bf16.mxu0 0
      %9424 = vmatmul.mubr.bf16.gmra.mxu0 %v8313
      %v9425 = vpop.f32.mrf.mxu0
      %v9426 = vadd.f32 0.0, %v9425
      %v9427 = vpop.f32.mrf.mxu0
      %v9428 = vpop.f32.mrf.mxu0
      %v9429 = vadd.f32 0.0, %v9428
      %v9430 = vpop.f32.mrf.mxu0
      %9431 = vmatprep.mubr.bf16.mxu0 0
      %9432 = vmatmul.mubr.bf16.gmra.mxu0 %v8316
      %v9433 = vpop.f32.mrf.mxu0
      %v9434 = vadd.f32 0.0, %v9433
      %v9435 = vpop.f32.mrf.mxu0
      %v9436 = vpop.f32.mrf.mxu0
      %v9437 = vadd.f32 0.0, %v9436
      %v9438 = vpop.f32.mrf.mxu0
      %9439 = vmatprep.mubr.bf16.mxu0 0
      %9440 = vmatmul.mubr.bf16.gmra.mxu0 %v8319
      %v9441 = vpop.f32.mrf.mxu0
      %v9442 = vadd.f32 0.0, %v9441
      %v9443 = vpop.f32.mrf.mxu0
      %v9444 = vpop.f32.mrf.mxu0
      %v9445 = vadd.f32 0.0, %v9444
      %v9446 = vpop.f32.mrf.mxu0
      %9447 = vmatprep.mubr.bf16.mxu0 0
      %9448 = vmatmul.mubr.bf16.gmra.mxu0 %v8322
      %v9449 = vpop.f32.mrf.mxu0
      %v9450 = vadd.f32 0.0, %v9449
      %v9451 = vpop.f32.mrf.mxu0
      %v9452 = vpop.f32.mrf.mxu0
      %v9453 = vadd.f32 0.0, %v9452
      %v9454 = vpop.f32.mrf.mxu0
      %9455 = vdwg.mxu0
      %s9456 = scalar_lea.vmem %s13, 256
      %v9457 = vld [vmem:[%s9456] sm:$0xf]
      %v9458 = vld [vmem:[%s9456 + $0x4] sm:$0xf]
      %v9459 = vld [vmem:[%s9456 + $0x8] sm:$0xf]
      %v9460 = vld [vmem:[%s9456 + $0xc] sm:$0xf]
      %v9461 = vld [vmem:[%s9456 + $0x10] sm:$0xf]
      %v9462 = vld [vmem:[%s9456 + $0x14] sm:$0xf]
      %v9463 = vld [vmem:[%s9456 + $0x18] sm:$0xf]
      %v9464 = vld [vmem:[%s9456 + $0x1c] sm:$0xf]
      %v9465 = vld [vmem:[%s9456 + $0x20] sm:$0xf]
      %v9466 = vld [vmem:[%s9456 + $0x24] sm:$0xf]
      %v9467 = vld [vmem:[%s9456 + $0x28] sm:$0xf]
      %v9468 = vld [vmem:[%s9456 + $0x2c] sm:$0xf]
      %v9469 = vld [vmem:[%s9456 + $0x30] sm:$0xf]
      %v9470 = vld [vmem:[%s9456 + $0x34] sm:$0xf]
      %v9471 = vld [vmem:[%s9456 + $0x38] sm:$0xf]
      %v9472 = vld [vmem:[%s9456 + $0x3c] sm:$0xf]
      %v9473 = vpack.c.bf16 %v9429, %v9426
      %v9474 = vpack.c.bf16 %v9437, %v9434
      %v9475 = vpack.c.bf16 %v9445, %v9442
      %v9476 = vpack.c.bf16 %v9453, %v9450
      %v9493 = vunpack.c.l.b16 %v9457
      %v9494 = vunpack.c.l.b16 %v9458
      %v9495 = vunpack.c.l.b16 %v9459
      %v9496 = vunpack.c.l.b16 %v9460
      %v9497 = vunpack.c.l.b16 %v9461
      %v9498 = vunpack.c.l.b16 %v9462
      %v9499 = vunpack.c.l.b16 %v9463
      %v9500 = vunpack.c.l.b16 %v9464
      %v9501 = vunpack.c.l.b16 %v9465
      %v9502 = vunpack.c.l.b16 %v9466
      %v9503 = vunpack.c.l.b16 %v9467
      %v9504 = vunpack.c.l.b16 %v9468
      %v9505 = vunpack.c.l.b16 %v9469
      %v9506 = vunpack.c.l.b16 %v9470
      %v9507 = vunpack.c.l.b16 %v9471
      %v9508 = vunpack.c.l.b16 %v9472
      %v9509 = vpack.c.b16 %v9494, %v9493
      %v9510 = vpack.c.b16 %v9496, %v9495
      %v9511 = vpack.c.b16 %v9498, %v9497
      %v9512 = vpack.c.b16 %v9500, %v9499
      %v9513 = vpack.c.b16 %v9502, %v9501
      %v9514 = vpack.c.b16 %v9504, %v9503
      %v9515 = vpack.c.b16 %v9506, %v9505
      %v9516 = vpack.c.b16 %v9508, %v9507
      %v9518 = vsel %vm8549, %v9509, 0
      %v9521 = vsel %vm8549, %v9510, 0
      %v9524 = vsel %vm8549, %v9511, 0
      %v9527 = vsel %vm8549, %v9512, 0
      %v9530 = vsel %vm8549, %v9513, 0
      %v9533 = vsel %vm8549, %v9514, 0
      %v9536 = vsel %vm8549, %v9515, 0
      %v9539 = vsel %vm8549, %v9516, 0
      %9541 = vmatprep.subr.bf16.mxu0 0
      %9542 = vmatpush1.bf16.msra.mxu0 0
      %9543 = vmatprep.subr.bf16.mxu0 0
      %9544 = vmatpush1.bf16.msra.mxu0 0
      %9545 = vmatprep.subr.bf16.mxu0 0
      %9546 = vmatpush1.bf16.msra.mxu0 0
      %9547 = vmatprep.subr.bf16.mxu0 0
      %9548 = vmatpush1.bf16.msra.mxu0 0
      %9549 = vmatprep.subr.bf16.mxu0 0
      %9550 = vmatpush1.bf16.msra.mxu0 %v9476
      %9551 = vmatprep.subr.bf16.mxu0 0
      %9552 = vmatpush1.bf16.msra.mxu0 %v9475
      %9553 = vmatprep.subr.bf16.mxu0 0
      %9554 = vmatpush1.bf16.msra.mxu0 %v9474
      %9555 = vmatprep.subr.bf16.mxu0 0
      %9556 = vmatpush1.bf16.msra.mxu0 %v9473
      %9557 = vmatprep.subr.bf16.mxu0 0
      %9558 = vmatpush2.bf16.msra.mxu0 0
      %9559 = vmatprep.subr.bf16.mxu0 0
      %9560 = vmatpush2.bf16.msra.mxu0 0
      %9561 = vmatprep.subr.bf16.mxu0 0
      %9562 = vmatpush2.bf16.msra.mxu0 0
      %9563 = vmatprep.subr.bf16.mxu0 0
      %9564 = vmatpush2.bf16.msra.mxu0 0
      %9565 = vmatprep.subr.bf16.mxu0 0
      %9566 = vmatpush2.bf16.msra.mxu0 0
      %9567 = vmatprep.subr.bf16.mxu0 0
      %9568 = vmatpush2.bf16.msra.mxu0 0
      %9569 = vmatprep.subr.bf16.mxu0 0
      %9570 = vmatpush2.bf16.msra.mxu0 0
      %9571 = vmatprep.subr.bf16.mxu0 0
      %9572 = vmatpush2.bf16.msra.mxu0 0
      %9573 = vmatprep.mubr.bf16.mxu0 0
      %9574 = vmatmul.mubr.bf16.gmra.mxu0 %v9518
      %v9575 = vpop.f32.mrf.mxu0
      %v9576 = vadd.f32 0.0, %v9575
      %v9577 = vpop.f32.mrf.mxu0
      %v9578 = vpop.f32.mrf.mxu0
      %v9579 = vadd.f32 0.0, %v9578
      %v9580 = vpop.f32.mrf.mxu0
      %9581 = vmatprep.mubr.bf16.mxu0 0
      %9582 = vmatmul.mubr.bf16.gmra.mxu0 %v9521
      %v9583 = vpop.f32.mrf.mxu0
      %v9584 = vadd.f32 0.0, %v9583
      %v9585 = vpop.f32.mrf.mxu0
      %v9586 = vpop.f32.mrf.mxu0
      %v9587 = vadd.f32 0.0, %v9586
      %v9588 = vpop.f32.mrf.mxu0
      %9589 = vmatprep.mubr.bf16.mxu0 0
      %9590 = vmatmul.mubr.bf16.gmra.mxu0 %v9524
      %v9591 = vpop.f32.mrf.mxu0
      %v9592 = vadd.f32 0.0, %v9591
      %v9593 = vpop.f32.mrf.mxu0
      %v9594 = vpop.f32.mrf.mxu0
      %v9595 = vadd.f32 0.0, %v9594
      %v9596 = vpop.f32.mrf.mxu0
      %9597 = vmatprep.mubr.bf16.mxu0 0
      %9598 = vmatmul.mubr.bf16.gmra.mxu0 %v9527
      %v9599 = vpop.f32.mrf.mxu0
      %v9600 = vadd.f32 0.0, %v9599
      %v9601 = vpop.f32.mrf.mxu0
      %v9602 = vpop.f32.mrf.mxu0
      %v9603 = vadd.f32 0.0, %v9602
      %v9604 = vpop.f32.mrf.mxu0
      %9605 = vmatprep.mubr.bf16.mxu0 0
      %9606 = vmatmul.mubr.bf16.gmra.mxu0 %v9530
      %v9607 = vpop.f32.mrf.mxu0
      %v9608 = vadd.f32 0.0, %v9607
      %v9609 = vpop.f32.mrf.mxu0
      %v9610 = vpop.f32.mrf.mxu0
      %v9611 = vadd.f32 0.0, %v9610
      %v9612 = vpop.f32.mrf.mxu0
      %9613 = vmatprep.mubr.bf16.mxu0 0
      %9614 = vmatmul.mubr.bf16.gmra.mxu0 %v9533
      %v9615 = vpop.f32.mrf.mxu0
      %v9616 = vadd.f32 0.0, %v9615
      %v9617 = vpop.f32.mrf.mxu0
      %v9618 = vpop.f32.mrf.mxu0
      %v9619 = vadd.f32 0.0, %v9618
      %v9620 = vpop.f32.mrf.mxu0
      %9621 = vmatprep.mubr.bf16.mxu0 0
      %9622 = vmatmul.mubr.bf16.gmra.mxu0 %v9536
      %v9623 = vpop.f32.mrf.mxu0
      %v9624 = vadd.f32 0.0, %v9623
      %v9625 = vpop.f32.mrf.mxu0
      %v9626 = vpop.f32.mrf.mxu0
      %v9627 = vadd.f32 0.0, %v9626
      %v9628 = vpop.f32.mrf.mxu0
      %9629 = vmatprep.mubr.bf16.mxu0 0
      %9630 = vmatmul.mubr.bf16.gmra.mxu0 %v9539
      %v9631 = vpop.f32.mrf.mxu0
      %v9632 = vadd.f32 0.0, %v9631
      %v9633 = vpop.f32.mrf.mxu0
      %v9634 = vpop.f32.mrf.mxu0
      %v9635 = vadd.f32 0.0, %v9634
      %v9636 = vpop.f32.mrf.mxu0
      %9637 = vdwg.mxu0
      %v9638 = vadd.f32 %v9364, %v9576
      %v9639 = vadd.f32 %v9365, %v9579
      %v9640 = vadd.f32 %v9366, %v9584
      %v9641 = vadd.f32 %v9367, %v9587
      %v9642 = vadd.f32 %v9368, %v9592
      %v9643 = vadd.f32 %v9369, %v9595
      %v9644 = vadd.f32 %v9370, %v9600
      %v9645 = vadd.f32 %v9371, %v9603
      %v9646 = vadd.f32 %v9372, %v9608
      %v9647 = vadd.f32 %v9373, %v9611
      %v9648 = vadd.f32 %v9374, %v9616
      %v9649 = vadd.f32 %v9375, %v9619
      %v9650 = vadd.f32 %v9376, %v9624
      %v9651 = vadd.f32 %v9377, %v9627
      %v9652 = vadd.f32 %v9378, %v9632
      %v9653 = vadd.f32 %v9379, %v9635
      %s9654 = scalar_lea.vmem %s12, 40
      %v9655 = vld [vmem:[%s9654] sm:$0xf]
      %v9656 = vld [vmem:[%s9654 + $0x4] sm:$0x1]
      %v9659 = vunpack.c.l.b16 %v9655
      %v9660 = vunpack.c.l.b16 %v9656
      %v9661 = vpack.c.b16 %v9660, %v9659
      %v9663 = vand.u32 %v9661, %v4980
      %9665 = vmatprep.subr.bf16.mxu0 0
      %9666 = vmatpush1.bf16.msra.mxu0 0
      %9667 = vmatprep.subr.bf16.mxu0 0
      %9668 = vmatpush1.bf16.msra.mxu0 0
      %9669 = vmatprep.subr.bf16.mxu0 0
      %9670 = vmatpush1.bf16.msra.mxu0 0
      %9671 = vmatprep.subr.bf16.mxu0 0
      %9672 = vmatpush1.bf16.msra.mxu0 0
      %9673 = vmatprep.subr.bf16.mxu0 0
      %9674 = vmatpush1.bf16.msra.mxu0 0
      %9675 = vmatprep.subr.bf16.mxu0 0
      %9676 = vmatpush1.bf16.msra.mxu0 0
      %9677 = vmatprep.subr.bf16.mxu0 0
      %9678 = vmatpush1.bf16.msra.mxu0 0
      %9679 = vmatprep.subr.bf16.mxu0 0
      %9680 = vmatpush1.bf16.msra.mxu0 %v9663
      %9681 = vmatprep.subr.bf16.mxu0 0
      %9682 = vmatpush2.bf16.msra.mxu0 0
      %9683 = vmatprep.subr.bf16.mxu0 0
      %9684 = vmatpush2.bf16.msra.mxu0 0
      %9685 = vmatprep.subr.bf16.mxu0 0
      %9686 = vmatpush2.bf16.msra.mxu0 0
      %9687 = vmatprep.subr.bf16.mxu0 0
      %9688 = vmatpush2.bf16.msra.mxu0 0
      %9689 = vmatprep.subr.bf16.mxu0 0
      %9690 = vmatpush2.bf16.msra.mxu0 0
      %9691 = vmatprep.subr.bf16.mxu0 0
      %9692 = vmatpush2.bf16.msra.mxu0 0
      %9693 = vmatprep.subr.bf16.mxu0 0
      %9694 = vmatpush2.bf16.msra.mxu0 0
      %9695 = vmatprep.subr.bf16.mxu0 0
      %9696 = vmatpush2.bf16.msra.mxu0 0
      %9697 = vmatprep.mubr.bf16.mxu0 0
      %9698 = vmatmul.mubr.bf16.gmra.mxu0 %v8313
      %v9699 = vpop.f32.mrf.mxu0
      %v9700 = vadd.f32 0.0, %v9699
      %v9701 = vpop.f32.mrf.mxu0
      %v9702 = vpop.f32.mrf.mxu0
      %v9703 = vadd.f32 0.0, %v9702
      %v9704 = vpop.f32.mrf.mxu0
      %9705 = vmatprep.mubr.bf16.mxu0 0
      %9706 = vmatmul.mubr.bf16.gmra.mxu0 %v8316
      %v9707 = vpop.f32.mrf.mxu0
      %v9708 = vadd.f32 0.0, %v9707
      %v9709 = vpop.f32.mrf.mxu0
      %v9710 = vpop.f32.mrf.mxu0
      %v9711 = vadd.f32 0.0, %v9710
      %v9712 = vpop.f32.mrf.mxu0
      %9713 = vmatprep.mubr.bf16.mxu0 0
      %9714 = vmatmul.mubr.bf16.gmra.mxu0 %v8319
      %v9715 = vpop.f32.mrf.mxu0
      %v9716 = vadd.f32 0.0, %v9715
      %v9717 = vpop.f32.mrf.mxu0
      %v9718 = vpop.f32.mrf.mxu0
      %v9719 = vadd.f32 0.0, %v9718
      %v9720 = vpop.f32.mrf.mxu0
      %9721 = vmatprep.mubr.bf16.mxu0 0
      %9722 = vmatmul.mubr.bf16.gmra.mxu0 %v8322
      %v9723 = vpop.f32.mrf.mxu0
      %v9724 = vadd.f32 0.0, %v9723
      %v9725 = vpop.f32.mrf.mxu0
      %v9726 = vpop.f32.mrf.mxu0
      %v9727 = vadd.f32 0.0, %v9726
      %v9728 = vpop.f32.mrf.mxu0
      %9729 = vdwg.mxu0
      %s9730 = scalar_lea.vmem %s13, 320
      %v9731 = vld [vmem:[%s9730] sm:$0xf]
      %v9732 = vld [vmem:[%s9730 + $0x4] sm:$0xf]
      %v9733 = vld [vmem:[%s9730 + $0x8] sm:$0xf]
      %v9734 = vld [vmem:[%s9730 + $0xc] sm:$0xf]
      %v9735 = vld [vmem:[%s9730 + $0x10] sm:$0xf]
      %v9736 = vld [vmem:[%s9730 + $0x14] sm:$0xf]
      %v9737 = vld [vmem:[%s9730 + $0x18] sm:$0xf]
      %v9738 = vld [vmem:[%s9730 + $0x1c] sm:$0xf]
      %v9739 = vld [vmem:[%s9730 + $0x20] sm:$0xf]
      %v9740 = vld [vmem:[%s9730 + $0x24] sm:$0xf]
      %v9741 = vld [vmem:[%s9730 + $0x28] sm:$0xf]
      %v9742 = vld [vmem:[%s9730 + $0x2c] sm:$0xf]
      %v9743 = vld [vmem:[%s9730 + $0x30] sm:$0xf]
      %v9744 = vld [vmem:[%s9730 + $0x34] sm:$0xf]
      %v9745 = vld [vmem:[%s9730 + $0x38] sm:$0xf]
      %v9746 = vld [vmem:[%s9730 + $0x3c] sm:$0xf]
      %v9747 = vpack.c.bf16 %v9703, %v9700
      %v9748 = vpack.c.bf16 %v9711, %v9708
      %v9749 = vpack.c.bf16 %v9719, %v9716
      %v9750 = vpack.c.bf16 %v9727, %v9724
      %v9767 = vunpack.c.l.b16 %v9731
      %v9768 = vunpack.c.l.b16 %v9732
      %v9769 = vunpack.c.l.b16 %v9733
      %v9770 = vunpack.c.l.b16 %v9734
      %v9771 = vunpack.c.l.b16 %v9735
      %v9772 = vunpack.c.l.b16 %v9736
      %v9773 = vunpack.c.l.b16 %v9737
      %v9774 = vunpack.c.l.b16 %v9738
      %v9775 = vunpack.c.l.b16 %v9739
      %v9776 = vunpack.c.l.b16 %v9740
      %v9777 = vunpack.c.l.b16 %v9741
      %v9778 = vunpack.c.l.b16 %v9742
      %v9779 = vunpack.c.l.b16 %v9743
      %v9780 = vunpack.c.l.b16 %v9744
      %v9781 = vunpack.c.l.b16 %v9745
      %v9782 = vunpack.c.l.b16 %v9746
      %v9783 = vpack.c.b16 %v9768, %v9767
      %v9784 = vpack.c.b16 %v9770, %v9769
      %v9785 = vpack.c.b16 %v9772, %v9771
      %v9786 = vpack.c.b16 %v9774, %v9773
      %v9787 = vpack.c.b16 %v9776, %v9775
      %v9788 = vpack.c.b16 %v9778, %v9777
      %v9789 = vpack.c.b16 %v9780, %v9779
      %v9790 = vpack.c.b16 %v9782, %v9781
      %v9792 = vsel %vm8549, %v9783, 0
      %v9795 = vsel %vm8549, %v9784, 0
      %v9798 = vsel %vm8549, %v9785, 0
      %v9801 = vsel %vm8549, %v9786, 0
      %v9804 = vsel %vm8549, %v9787, 0
      %v9807 = vsel %vm8549, %v9788, 0
      %v9810 = vsel %vm8549, %v9789, 0
      %v9813 = vsel %vm8549, %v9790, 0
      %9815 = vmatprep.subr.bf16.mxu0 0
      %9816 = vmatpush1.bf16.msra.mxu0 0
      %9817 = vmatprep.subr.bf16.mxu0 0
      %9818 = vmatpush1.bf16.msra.mxu0 0
      %9819 = vmatprep.subr.bf16.mxu0 0
      %9820 = vmatpush1.bf16.msra.mxu0 0
      %9821 = vmatprep.subr.bf16.mxu0 0
      %9822 = vmatpush1.bf16.msra.mxu0 0
      %9823 = vmatprep.subr.bf16.mxu0 0
      %9824 = vmatpush1.bf16.msra.mxu0 %v9750
      %9825 = vmatprep.subr.bf16.mxu0 0
      %9826 = vmatpush1.bf16.msra.mxu0 %v9749
      %9827 = vmatprep.subr.bf16.mxu0 0
      %9828 = vmatpush1.bf16.msra.mxu0 %v9748
      %9829 = vmatprep.subr.bf16.mxu0 0
      %9830 = vmatpush1.bf16.msra.mxu0 %v9747
      %9831 = vmatprep.subr.bf16.mxu0 0
      %9832 = vmatpush2.bf16.msra.mxu0 0
      %9833 = vmatprep.subr.bf16.mxu0 0
      %9834 = vmatpush2.bf16.msra.mxu0 0
      %9835 = vmatprep.subr.bf16.mxu0 0
      %9836 = vmatpush2.bf16.msra.mxu0 0
      %9837 = vmatprep.subr.bf16.mxu0 0
      %9838 = vmatpush2.bf16.msra.mxu0 0
      %9839 = vmatprep.subr.bf16.mxu0 0
      %9840 = vmatpush2.bf16.msra.mxu0 0
      %9841 = vmatprep.subr.bf16.mxu0 0
      %9842 = vmatpush2.bf16.msra.mxu0 0
      %9843 = vmatprep.subr.bf16.mxu0 0
      %9844 = vmatpush2.bf16.msra.mxu0 0
      %9845 = vmatprep.subr.bf16.mxu0 0
      %9846 = vmatpush2.bf16.msra.mxu0 0
      %9847 = vmatprep.mubr.bf16.mxu0 0
      %9848 = vmatmul.mubr.bf16.gmra.mxu0 %v9792
      %v9849 = vpop.f32.mrf.mxu0
      %v9850 = vadd.f32 0.0, %v9849
      %v9851 = vpop.f32.mrf.mxu0
      %v9852 = vpop.f32.mrf.mxu0
      %v9853 = vadd.f32 0.0, %v9852
      %v9854 = vpop.f32.mrf.mxu0
      %9855 = vmatprep.mubr.bf16.mxu0 0
      %9856 = vmatmul.mubr.bf16.gmra.mxu0 %v9795
      %v9857 = vpop.f32.mrf.mxu0
      %v9858 = vadd.f32 0.0, %v9857
      %v9859 = vpop.f32.mrf.mxu0
      %v9860 = vpop.f32.mrf.mxu0
      %v9861 = vadd.f32 0.0, %v9860
      %v9862 = vpop.f32.mrf.mxu0
      %9863 = vmatprep.mubr.bf16.mxu0 0
      %9864 = vmatmul.mubr.bf16.gmra.mxu0 %v9798
      %v9865 = vpop.f32.mrf.mxu0
      %v9866 = vadd.f32 0.0, %v9865
      %v9867 = vpop.f32.mrf.mxu0
      %v9868 = vpop.f32.mrf.mxu0
      %v9869 = vadd.f32 0.0, %v9868
      %v9870 = vpop.f32.mrf.mxu0
      %9871 = vmatprep.mubr.bf16.mxu0 0
      %9872 = vmatmul.mubr.bf16.gmra.mxu0 %v9801
      %v9873 = vpop.f32.mrf.mxu0
      %v9874 = vadd.f32 0.0, %v9873
      %v9875 = vpop.f32.mrf.mxu0
      %v9876 = vpop.f32.mrf.mxu0
      %v9877 = vadd.f32 0.0, %v9876
      %v9878 = vpop.f32.mrf.mxu0
      %9879 = vmatprep.mubr.bf16.mxu0 0
      %9880 = vmatmul.mubr.bf16.gmra.mxu0 %v9804
      %v9881 = vpop.f32.mrf.mxu0
      %v9882 = vadd.f32 0.0, %v9881
      %v9883 = vpop.f32.mrf.mxu0
      %v9884 = vpop.f32.mrf.mxu0
      %v9885 = vadd.f32 0.0, %v9884
      %v9886 = vpop.f32.mrf.mxu0
      %9887 = vmatprep.mubr.bf16.mxu0 0
      %9888 = vmatmul.mubr.bf16.gmra.mxu0 %v9807
      %v9889 = vpop.f32.mrf.mxu0
      %v9890 = vadd.f32 0.0, %v9889
      %v9891 = vpop.f32.mrf.mxu0
      %v9892 = vpop.f32.mrf.mxu0
      %v9893 = vadd.f32 0.0, %v9892
      %v9894 = vpop.f32.mrf.mxu0
      %9895 = vmatprep.mubr.bf16.mxu0 0
      %9896 = vmatmul.mubr.bf16.gmra.mxu0 %v9810
      %v9897 = vpop.f32.mrf.mxu0
      %v9898 = vadd.f32 0.0, %v9897
      %v9899 = vpop.f32.mrf.mxu0
      %v9900 = vpop.f32.mrf.mxu0
      %v9901 = vadd.f32 0.0, %v9900
      %v9902 = vpop.f32.mrf.mxu0
      %9903 = vmatprep.mubr.bf16.mxu0 0
      %9904 = vmatmul.mubr.bf16.gmra.mxu0 %v9813
      %v9905 = vpop.f32.mrf.mxu0
      %v9906 = vadd.f32 0.0, %v9905
      %v9907 = vpop.f32.mrf.mxu0
      %v9908 = vpop.f32.mrf.mxu0
      %v9909 = vadd.f32 0.0, %v9908
      %v9910 = vpop.f32.mrf.mxu0
      %9911 = vdwg.mxu0
      %v9912 = vadd.f32 %v9638, %v9850
      %v9913 = vadd.f32 %v9639, %v9853
      %v9914 = vadd.f32 %v9640, %v9858
      %v9915 = vadd.f32 %v9641, %v9861
      %v9916 = vadd.f32 %v9642, %v9866
      %v9917 = vadd.f32 %v9643, %v9869
      %v9918 = vadd.f32 %v9644, %v9874
      %v9919 = vadd.f32 %v9645, %v9877
      %v9920 = vadd.f32 %v9646, %v9882
      %v9921 = vadd.f32 %v9647, %v9885
      %v9922 = vadd.f32 %v9648, %v9890
      %v9923 = vadd.f32 %v9649, %v9893
      %v9924 = vadd.f32 %v9650, %v9898
      %v9925 = vadd.f32 %v9651, %v9901
      %v9926 = vadd.f32 %v9652, %v9906
      %v9927 = vadd.f32 %v9653, %v9909
      %s9928 = scalar_lea.vmem %s12, 48
      %v9929 = vld [vmem:[%s9928] sm:$0xf]
      %v9930 = vld [vmem:[%s9928 + $0x4] sm:$0x1]
      %v9933 = vunpack.c.l.b16 %v9929
      %v9934 = vunpack.c.l.b16 %v9930
      %v9935 = vpack.c.b16 %v9934, %v9933
      %v9937 = vand.u32 %v9935, %v4980
      %9939 = vmatprep.subr.bf16.mxu0 0
      %9940 = vmatpush1.bf16.msra.mxu0 0
      %9941 = vmatprep.subr.bf16.mxu0 0
      %9942 = vmatpush1.bf16.msra.mxu0 0
      %9943 = vmatprep.subr.bf16.mxu0 0
      %9944 = vmatpush1.bf16.msra.mxu0 0
      %9945 = vmatprep.subr.bf16.mxu0 0
      %9946 = vmatpush1.bf16.msra.mxu0 0
      %9947 = vmatprep.subr.bf16.mxu0 0
      %9948 = vmatpush1.bf16.msra.mxu0 0
      %9949 = vmatprep.subr.bf16.mxu0 0
      %9950 = vmatpush1.bf16.msra.mxu0 0
      %9951 = vmatprep.subr.bf16.mxu0 0
      %9952 = vmatpush1.bf16.msra.mxu0 0
      %9953 = vmatprep.subr.bf16.mxu0 0
      %9954 = vmatpush1.bf16.msra.mxu0 %v9937
      %9955 = vmatprep.subr.bf16.mxu0 0
      %9956 = vmatpush2.bf16.msra.mxu0 0
      %9957 = vmatprep.subr.bf16.mxu0 0
      %9958 = vmatpush2.bf16.msra.mxu0 0
      %9959 = vmatprep.subr.bf16.mxu0 0
      %9960 = vmatpush2.bf16.msra.mxu0 0
      %9961 = vmatprep.subr.bf16.mxu0 0
      %9962 = vmatpush2.bf16.msra.mxu0 0
      %9963 = vmatprep.subr.bf16.mxu0 0
      %9964 = vmatpush2.bf16.msra.mxu0 0
      %9965 = vmatprep.subr.bf16.mxu0 0
      %9966 = vmatpush2.bf16.msra.mxu0 0
      %9967 = vmatprep.subr.bf16.mxu0 0
      %9968 = vmatpush2.bf16.msra.mxu0 0
      %9969 = vmatprep.subr.bf16.mxu0 0
      %9970 = vmatpush2.bf16.msra.mxu0 0
      %9971 = vmatprep.mubr.bf16.mxu0 0
      %9972 = vmatmul.mubr.bf16.gmra.mxu0 %v8313
      %v9973 = vpop.f32.mrf.mxu0
      %v9974 = vadd.f32 0.0, %v9973
      %v9975 = vpop.f32.mrf.mxu0
      %v9976 = vpop.f32.mrf.mxu0
      %v9977 = vadd.f32 0.0, %v9976
      %v9978 = vpop.f32.mrf.mxu0
      %9979 = vmatprep.mubr.bf16.mxu0 0
      %9980 = vmatmul.mubr.bf16.gmra.mxu0 %v8316
      %v9981 = vpop.f32.mrf.mxu0
      %v9982 = vadd.f32 0.0, %v9981
      %v9983 = vpop.f32.mrf.mxu0
      %v9984 = vpop.f32.mrf.mxu0
      %v9985 = vadd.f32 0.0, %v9984
      %v9986 = vpop.f32.mrf.mxu0
      %9987 = vmatprep.mubr.bf16.mxu0 0
      %9988 = vmatmul.mubr.bf16.gmra.mxu0 %v8319
      %v9989 = vpop.f32.mrf.mxu0
      %v9990 = vadd.f32 0.0, %v9989
      %v9991 = vpop.f32.mrf.mxu0
      %v9992 = vpop.f32.mrf.mxu0
      %v9993 = vadd.f32 0.0, %v9992
      %v9994 = vpop.f32.mrf.mxu0
      %9995 = vmatprep.mubr.bf16.mxu0 0
      %9996 = vmatmul.mubr.bf16.gmra.mxu0 %v8322
      %v9997 = vpop.f32.mrf.mxu0
      %v9998 = vadd.f32 0.0, %v9997
      %v9999 = vpop.f32.mrf.mxu0
      %v10000 = vpop.f32.mrf.mxu0
      %v10001 = vadd.f32 0.0, %v10000
      %v10002 = vpop.f32.mrf.mxu0
      %10003 = vdwg.mxu0
      %s10004 = scalar_lea.vmem %s13, 384
      %v10005 = vld [vmem:[%s10004] sm:$0xf]
      %v10006 = vld [vmem:[%s10004 + $0x4] sm:$0xf]
      %v10007 = vld [vmem:[%s10004 + $0x8] sm:$0xf]
      %v10008 = vld [vmem:[%s10004 + $0xc] sm:$0xf]
      %v10009 = vld [vmem:[%s10004 + $0x10] sm:$0xf]
      %v10010 = vld [vmem:[%s10004 + $0x14] sm:$0xf]
      %v10011 = vld [vmem:[%s10004 + $0x18] sm:$0xf]
      %v10012 = vld [vmem:[%s10004 + $0x1c] sm:$0xf]
      %v10013 = vld [vmem:[%s10004 + $0x20] sm:$0xf]
      %v10014 = vld [vmem:[%s10004 + $0x24] sm:$0xf]
      %v10015 = vld [vmem:[%s10004 + $0x28] sm:$0xf]
      %v10016 = vld [vmem:[%s10004 + $0x2c] sm:$0xf]
      %v10017 = vld [vmem:[%s10004 + $0x30] sm:$0xf]
      %v10018 = vld [vmem:[%s10004 + $0x34] sm:$0xf]
      %v10019 = vld [vmem:[%s10004 + $0x38] sm:$0xf]
      %v10020 = vld [vmem:[%s10004 + $0x3c] sm:$0xf]
      %v10021 = vpack.c.bf16 %v9977, %v9974
      %v10022 = vpack.c.bf16 %v9985, %v9982
      %v10023 = vpack.c.bf16 %v9993, %v9990
      %v10024 = vpack.c.bf16 %v10001, %v9998
      %v10041 = vunpack.c.l.b16 %v10005
      %v10042 = vunpack.c.l.b16 %v10006
      %v10043 = vunpack.c.l.b16 %v10007
      %v10044 = vunpack.c.l.b16 %v10008
      %v10045 = vunpack.c.l.b16 %v10009
      %v10046 = vunpack.c.l.b16 %v10010
      %v10047 = vunpack.c.l.b16 %v10011
      %v10048 = vunpack.c.l.b16 %v10012
      %v10049 = vunpack.c.l.b16 %v10013
      %v10050 = vunpack.c.l.b16 %v10014
      %v10051 = vunpack.c.l.b16 %v10015
      %v10052 = vunpack.c.l.b16 %v10016
      %v10053 = vunpack.c.l.b16 %v10017
      %v10054 = vunpack.c.l.b16 %v10018
      %v10055 = vunpack.c.l.b16 %v10019
      %v10056 = vunpack.c.l.b16 %v10020
      %v10057 = vpack.c.b16 %v10042, %v10041
      %v10058 = vpack.c.b16 %v10044, %v10043
      %v10059 = vpack.c.b16 %v10046, %v10045
      %v10060 = vpack.c.b16 %v10048, %v10047
      %v10061 = vpack.c.b16 %v10050, %v10049
      %v10062 = vpack.c.b16 %v10052, %v10051
      %v10063 = vpack.c.b16 %v10054, %v10053
      %v10064 = vpack.c.b16 %v10056, %v10055
      %v10066 = vsel %vm8549, %v10057, 0
      %v10069 = vsel %vm8549, %v10058, 0
      %v10072 = vsel %vm8549, %v10059, 0
      %v10075 = vsel %vm8549, %v10060, 0
      %v10078 = vsel %vm8549, %v10061, 0
      %v10081 = vsel %vm8549, %v10062, 0
      %v10084 = vsel %vm8549, %v10063, 0
      %v10087 = vsel %vm8549, %v10064, 0
      %10089 = vmatprep.subr.bf16.mxu0 0
      %10090 = vmatpush1.bf16.msra.mxu0 0
      %10091 = vmatprep.subr.bf16.mxu0 0
      %10092 = vmatpush1.bf16.msra.mxu0 0
      %10093 = vmatprep.subr.bf16.mxu0 0
      %10094 = vmatpush1.bf16.msra.mxu0 0
      %10095 = vmatprep.subr.bf16.mxu0 0
      %10096 = vmatpush1.bf16.msra.mxu0 0
      %10097 = vmatprep.subr.bf16.mxu0 0
      %10098 = vmatpush1.bf16.msra.mxu0 %v10024
      %10099 = vmatprep.subr.bf16.mxu0 0
      %10100 = vmatpush1.bf16.msra.mxu0 %v10023
      %10101 = vmatprep.subr.bf16.mxu0 0
      %10102 = vmatpush1.bf16.msra.mxu0 %v10022
      %10103 = vmatprep.subr.bf16.mxu0 0
      %10104 = vmatpush1.bf16.msra.mxu0 %v10021
      %10105 = vmatprep.subr.bf16.mxu0 0
      %10106 = vmatpush2.bf16.msra.mxu0 0
      %10107 = vmatprep.subr.bf16.mxu0 0
      %10108 = vmatpush2.bf16.msra.mxu0 0
      %10109 = vmatprep.subr.bf16.mxu0 0
      %10110 = vmatpush2.bf16.msra.mxu0 0
      %10111 = vmatprep.subr.bf16.mxu0 0
      %10112 = vmatpush2.bf16.msra.mxu0 0
      %10113 = vmatprep.subr.bf16.mxu0 0
      %10114 = vmatpush2.bf16.msra.mxu0 0
      %10115 = vmatprep.subr.bf16.mxu0 0
      %10116 = vmatpush2.bf16.msra.mxu0 0
      %10117 = vmatprep.subr.bf16.mxu0 0
      %10118 = vmatpush2.bf16.msra.mxu0 0
      %10119 = vmatprep.subr.bf16.mxu0 0
      %10120 = vmatpush2.bf16.msra.mxu0 0
      %10121 = vmatprep.mubr.bf16.mxu0 0
      %10122 = vmatmul.mubr.bf16.gmra.mxu0 %v10066
      %v10123 = vpop.f32.mrf.mxu0
      %v10124 = vadd.f32 0.0, %v10123
      %v10125 = vpop.f32.mrf.mxu0
      %v10126 = vpop.f32.mrf.mxu0
      %v10127 = vadd.f32 0.0, %v10126
      %v10128 = vpop.f32.mrf.mxu0
      %10129 = vmatprep.mubr.bf16.mxu0 0
      %10130 = vmatmul.mubr.bf16.gmra.mxu0 %v10069
      %v10131 = vpop.f32.mrf.mxu0
      %v10132 = vadd.f32 0.0, %v10131
      %v10133 = vpop.f32.mrf.mxu0
      %v10134 = vpop.f32.mrf.mxu0
      %v10135 = vadd.f32 0.0, %v10134
      %v10136 = vpop.f32.mrf.mxu0
      %10137 = vmatprep.mubr.bf16.mxu0 0
      %10138 = vmatmul.mubr.bf16.gmra.mxu0 %v10072
      %v10139 = vpop.f32.mrf.mxu0
      %v10140 = vadd.f32 0.0, %v10139
      %v10141 = vpop.f32.mrf.mxu0
      %v10142 = vpop.f32.mrf.mxu0
      %v10143 = vadd.f32 0.0, %v10142
      %v10144 = vpop.f32.mrf.mxu0
      %10145 = vmatprep.mubr.bf16.mxu0 0
      %10146 = vmatmul.mubr.bf16.gmra.mxu0 %v10075
      %v10147 = vpop.f32.mrf.mxu0
      %v10148 = vadd.f32 0.0, %v10147
      %v10149 = vpop.f32.mrf.mxu0
      %v10150 = vpop.f32.mrf.mxu0
      %v10151 = vadd.f32 0.0, %v10150
      %v10152 = vpop.f32.mrf.mxu0
      %10153 = vmatprep.mubr.bf16.mxu0 0
      %10154 = vmatmul.mubr.bf16.gmra.mxu0 %v10078
      %v10155 = vpop.f32.mrf.mxu0
      %v10156 = vadd.f32 0.0, %v10155
      %v10157 = vpop.f32.mrf.mxu0
      %v10158 = vpop.f32.mrf.mxu0
      %v10159 = vadd.f32 0.0, %v10158
      %v10160 = vpop.f32.mrf.mxu0
      %10161 = vmatprep.mubr.bf16.mxu0 0
      %10162 = vmatmul.mubr.bf16.gmra.mxu0 %v10081
      %v10163 = vpop.f32.mrf.mxu0
      %v10164 = vadd.f32 0.0, %v10163
      %v10165 = vpop.f32.mrf.mxu0
      %v10166 = vpop.f32.mrf.mxu0
      %v10167 = vadd.f32 0.0, %v10166
      %v10168 = vpop.f32.mrf.mxu0
      %10169 = vmatprep.mubr.bf16.mxu0 0
      %10170 = vmatmul.mubr.bf16.gmra.mxu0 %v10084
      %v10171 = vpop.f32.mrf.mxu0
      %v10172 = vadd.f32 0.0, %v10171
      %v10173 = vpop.f32.mrf.mxu0
      %v10174 = vpop.f32.mrf.mxu0
      %v10175 = vadd.f32 0.0, %v10174
      %v10176 = vpop.f32.mrf.mxu0
      %10177 = vmatprep.mubr.bf16.mxu0 0
      %10178 = vmatmul.mubr.bf16.gmra.mxu0 %v10087
      %v10179 = vpop.f32.mrf.mxu0
      %v10180 = vadd.f32 0.0, %v10179
      %v10181 = vpop.f32.mrf.mxu0
      %v10182 = vpop.f32.mrf.mxu0
      %v10183 = vadd.f32 0.0, %v10182
      %v10184 = vpop.f32.mrf.mxu0
      %10185 = vdwg.mxu0
      %v10186 = vadd.f32 %v9912, %v10124
      %v10187 = vadd.f32 %v9913, %v10127
      %v10188 = vadd.f32 %v9914, %v10132
      %v10189 = vadd.f32 %v9915, %v10135
      %v10190 = vadd.f32 %v9916, %v10140
      %v10191 = vadd.f32 %v9917, %v10143
      %v10192 = vadd.f32 %v9918, %v10148
      %v10193 = vadd.f32 %v9919, %v10151
      %v10194 = vadd.f32 %v9920, %v10156
      %v10195 = vadd.f32 %v9921, %v10159
      %v10196 = vadd.f32 %v9922, %v10164
      %v10197 = vadd.f32 %v9923, %v10167
      %v10198 = vadd.f32 %v9924, %v10172
      %v10199 = vadd.f32 %v9925, %v10175
      %v10200 = vadd.f32 %v9926, %v10180
      %v10201 = vadd.f32 %v9927, %v10183
      %s10202 = scalar_lea.vmem %s12, 56
      %v10203 = vld [vmem:[%s10202] sm:$0xf]
      %v10204 = vld [vmem:[%s10202 + $0x4] sm:$0x1]
      %v10207 = vunpack.c.l.b16 %v10203
      %v10208 = vunpack.c.l.b16 %v10204
      %v10209 = vpack.c.b16 %v10208, %v10207
      %v10211 = vand.u32 %v10209, %v4980
      %10213 = vmatprep.subr.bf16.mxu0 0
      %10214 = vmatpush1.bf16.msra.mxu0 0
      %10215 = vmatprep.subr.bf16.mxu0 0
      %10216 = vmatpush1.bf16.msra.mxu0 0
      %10217 = vmatprep.subr.bf16.mxu0 0
      %10218 = vmatpush1.bf16.msra.mxu0 0
      %10219 = vmatprep.subr.bf16.mxu0 0
      %10220 = vmatpush1.bf16.msra.mxu0 0
      %10221 = vmatprep.subr.bf16.mxu0 0
      %10222 = vmatpush1.bf16.msra.mxu0 0
      %10223 = vmatprep.subr.bf16.mxu0 0
      %10224 = vmatpush1.bf16.msra.mxu0 0
      %10225 = vmatprep.subr.bf16.mxu0 0
      %10226 = vmatpush1.bf16.msra.mxu0 0
      %10227 = vmatprep.subr.bf16.mxu0 0
      %10228 = vmatpush1.bf16.msra.mxu0 %v10211
      %10229 = vmatprep.subr.bf16.mxu0 0
      %10230 = vmatpush2.bf16.msra.mxu0 0
      %10231 = vmatprep.subr.bf16.mxu0 0
      %10232 = vmatpush2.bf16.msra.mxu0 0
      %10233 = vmatprep.subr.bf16.mxu0 0
      %10234 = vmatpush2.bf16.msra.mxu0 0
      %10235 = vmatprep.subr.bf16.mxu0 0
      %10236 = vmatpush2.bf16.msra.mxu0 0
      %10237 = vmatprep.subr.bf16.mxu0 0
      %10238 = vmatpush2.bf16.msra.mxu0 0
      %10239 = vmatprep.subr.bf16.mxu0 0
      %10240 = vmatpush2.bf16.msra.mxu0 0
      %10241 = vmatprep.subr.bf16.mxu0 0
      %10242 = vmatpush2.bf16.msra.mxu0 0
      %10243 = vmatprep.subr.bf16.mxu0 0
      %10244 = vmatpush2.bf16.msra.mxu0 0
      %10245 = vmatprep.mubr.bf16.mxu0 0
      %10246 = vmatmul.mubr.bf16.gmra.mxu0 %v8313
      %v10247 = vpop.f32.mrf.mxu0
      %v10248 = vadd.f32 0.0, %v10247
      %v10249 = vpop.f32.mrf.mxu0
      %v10250 = vpop.f32.mrf.mxu0
      %v10251 = vadd.f32 0.0, %v10250
      %v10252 = vpop.f32.mrf.mxu0
      %10253 = vmatprep.mubr.bf16.mxu0 0
      %10254 = vmatmul.mubr.bf16.gmra.mxu0 %v8316
      %v10255 = vpop.f32.mrf.mxu0
      %v10256 = vadd.f32 0.0, %v10255
      %v10257 = vpop.f32.mrf.mxu0
      %v10258 = vpop.f32.mrf.mxu0
      %v10259 = vadd.f32 0.0, %v10258
      %v10260 = vpop.f32.mrf.mxu0
      %10261 = vmatprep.mubr.bf16.mxu0 0
      %10262 = vmatmul.mubr.bf16.gmra.mxu0 %v8319
      %v10263 = vpop.f32.mrf.mxu0
      %v10264 = vadd.f32 0.0, %v10263
      %v10265 = vpop.f32.mrf.mxu0
      %v10266 = vpop.f32.mrf.mxu0
      %v10267 = vadd.f32 0.0, %v10266
      %v10268 = vpop.f32.mrf.mxu0
      %10269 = vmatprep.mubr.bf16.mxu0 0
      %10270 = vmatmul.mubr.bf16.gmra.mxu0 %v8322
      %v10271 = vpop.f32.mrf.mxu0
      %v10272 = vadd.f32 0.0, %v10271
      %v10273 = vpop.f32.mrf.mxu0
      %v10274 = vpop.f32.mrf.mxu0
      %v10275 = vadd.f32 0.0, %v10274
      %v10276 = vpop.f32.mrf.mxu0
      %10277 = vdwg.mxu0
      %s10278 = scalar_lea.vmem %s13, 448
      %v10279 = vld [vmem:[%s10278] sm:$0xf]
      %v10280 = vld [vmem:[%s10278 + $0x4] sm:$0xf]
      %v10281 = vld [vmem:[%s10278 + $0x8] sm:$0xf]
      %v10282 = vld [vmem:[%s10278 + $0xc] sm:$0xf]
      %v10283 = vld [vmem:[%s10278 + $0x10] sm:$0xf]
      %v10284 = vld [vmem:[%s10278 + $0x14] sm:$0xf]
      %v10285 = vld [vmem:[%s10278 + $0x18] sm:$0xf]
      %v10286 = vld [vmem:[%s10278 + $0x1c] sm:$0xf]
      %v10287 = vld [vmem:[%s10278 + $0x20] sm:$0xf]
      %v10288 = vld [vmem:[%s10278 + $0x24] sm:$0xf]
      %v10289 = vld [vmem:[%s10278 + $0x28] sm:$0xf]
      %v10290 = vld [vmem:[%s10278 + $0x2c] sm:$0xf]
      %v10291 = vld [vmem:[%s10278 + $0x30] sm:$0xf]
      %v10292 = vld [vmem:[%s10278 + $0x34] sm:$0xf]
      %v10293 = vld [vmem:[%s10278 + $0x38] sm:$0xf]
      %v10294 = vld [vmem:[%s10278 + $0x3c] sm:$0xf]
      %v10295 = vpack.c.bf16 %v10251, %v10248
      %v10296 = vpack.c.bf16 %v10259, %v10256
      %v10297 = vpack.c.bf16 %v10267, %v10264
      %v10298 = vpack.c.bf16 %v10275, %v10272
      %v10315 = vunpack.c.l.b16 %v10279
      %v10316 = vunpack.c.l.b16 %v10280
      %v10317 = vunpack.c.l.b16 %v10281
      %v10318 = vunpack.c.l.b16 %v10282
      %v10319 = vunpack.c.l.b16 %v10283
      %v10320 = vunpack.c.l.b16 %v10284
      %v10321 = vunpack.c.l.b16 %v10285
      %v10322 = vunpack.c.l.b16 %v10286
      %v10323 = vunpack.c.l.b16 %v10287
      %v10324 = vunpack.c.l.b16 %v10288
      %v10325 = vunpack.c.l.b16 %v10289
      %v10326 = vunpack.c.l.b16 %v10290
      %v10327 = vunpack.c.l.b16 %v10291
      %v10328 = vunpack.c.l.b16 %v10292
      %v10329 = vunpack.c.l.b16 %v10293
      %v10330 = vunpack.c.l.b16 %v10294
      %v10331 = vpack.c.b16 %v10316, %v10315
      %v10332 = vpack.c.b16 %v10318, %v10317
      %v10333 = vpack.c.b16 %v10320, %v10319
      %v10334 = vpack.c.b16 %v10322, %v10321
      %v10335 = vpack.c.b16 %v10324, %v10323
      %v10336 = vpack.c.b16 %v10326, %v10325
      %v10337 = vpack.c.b16 %v10328, %v10327
      %v10338 = vpack.c.b16 %v10330, %v10329
      %v10340 = vsel %vm8549, %v10331, 0
      %v10343 = vsel %vm8549, %v10332, 0
      %v10346 = vsel %vm8549, %v10333, 0
      %v10349 = vsel %vm8549, %v10334, 0
      %v10352 = vsel %vm8549, %v10335, 0
      %v10355 = vsel %vm8549, %v10336, 0
      %v10358 = vsel %vm8549, %v10337, 0
      %v10361 = vsel %vm8549, %v10338, 0
      %10363 = vmatprep.subr.bf16.mxu0 0
      %10364 = vmatpush1.bf16.msra.mxu0 0
      %10365 = vmatprep.subr.bf16.mxu0 0
      %10366 = vmatpush1.bf16.msra.mxu0 0
      %10367 = vmatprep.subr.bf16.mxu0 0
      %10368 = vmatpush1.bf16.msra.mxu0 0
      %10369 = vmatprep.subr.bf16.mxu0 0
      %10370 = vmatpush1.bf16.msra.mxu0 0
      %10371 = vmatprep.subr.bf16.mxu0 0
      %10372 = vmatpush1.bf16.msra.mxu0 %v10298
      %10373 = vmatprep.subr.bf16.mxu0 0
      %10374 = vmatpush1.bf16.msra.mxu0 %v10297
      %10375 = vmatprep.subr.bf16.mxu0 0
      %10376 = vmatpush1.bf16.msra.mxu0 %v10296
      %10377 = vmatprep.subr.bf16.mxu0 0
      %10378 = vmatpush1.bf16.msra.mxu0 %v10295
      %10379 = vmatprep.subr.bf16.mxu0 0
      %10380 = vmatpush2.bf16.msra.mxu0 0
      %10381 = vmatprep.subr.bf16.mxu0 0
      %10382 = vmatpush2.bf16.msra.mxu0 0
      %10383 = vmatprep.subr.bf16.mxu0 0
      %10384 = vmatpush2.bf16.msra.mxu0 0
      %10385 = vmatprep.subr.bf16.mxu0 0
      %10386 = vmatpush2.bf16.msra.mxu0 0
      %10387 = vmatprep.subr.bf16.mxu0 0
      %10388 = vmatpush2.bf16.msra.mxu0 0
      %10389 = vmatprep.subr.bf16.mxu0 0
      %10390 = vmatpush2.bf16.msra.mxu0 0
      %10391 = vmatprep.subr.bf16.mxu0 0
      %10392 = vmatpush2.bf16.msra.mxu0 0
      %10393 = vmatprep.subr.bf16.mxu0 0
      %10394 = vmatpush2.bf16.msra.mxu0 0
      %10395 = vmatprep.mubr.bf16.mxu0 0
      %10396 = vmatmul.mubr.bf16.gmra.mxu0 %v10340
      %v10397 = vpop.f32.mrf.mxu0
      %v10398 = vadd.f32 0.0, %v10397
      %v10399 = vpop.f32.mrf.mxu0
      %v10400 = vpop.f32.mrf.mxu0
      %v10401 = vadd.f32 0.0, %v10400
      %v10402 = vpop.f32.mrf.mxu0
      %10403 = vmatprep.mubr.bf16.mxu0 0
      %10404 = vmatmul.mubr.bf16.gmra.mxu0 %v10343
      %v10405 = vpop.f32.mrf.mxu0
      %v10406 = vadd.f32 0.0, %v10405
      %v10407 = vpop.f32.mrf.mxu0
      %v10408 = vpop.f32.mrf.mxu0
      %v10409 = vadd.f32 0.0, %v10408
      %v10410 = vpop.f32.mrf.mxu0
      %10411 = vmatprep.mubr.bf16.mxu0 0
      %10412 = vmatmul.mubr.bf16.gmra.mxu0 %v10346
      %v10413 = vpop.f32.mrf.mxu0
      %v10414 = vadd.f32 0.0, %v10413
      %v10415 = vpop.f32.mrf.mxu0
      %v10416 = vpop.f32.mrf.mxu0
      %v10417 = vadd.f32 0.0, %v10416
      %v10418 = vpop.f32.mrf.mxu0
      %10419 = vmatprep.mubr.bf16.mxu0 0
      %10420 = vmatmul.mubr.bf16.gmra.mxu0 %v10349
      %v10421 = vpop.f32.mrf.mxu0
      %v10422 = vadd.f32 0.0, %v10421
      %v10423 = vpop.f32.mrf.mxu0
      %v10424 = vpop.f32.mrf.mxu0
      %v10425 = vadd.f32 0.0, %v10424
      %v10426 = vpop.f32.mrf.mxu0
      %10427 = vmatprep.mubr.bf16.mxu0 0
      %10428 = vmatmul.mubr.bf16.gmra.mxu0 %v10352
      %v10429 = vpop.f32.mrf.mxu0
      %v10430 = vadd.f32 0.0, %v10429
      %v10431 = vpop.f32.mrf.mxu0
      %v10432 = vpop.f32.mrf.mxu0
      %v10433 = vadd.f32 0.0, %v10432
      %v10434 = vpop.f32.mrf.mxu0
      %10435 = vmatprep.mubr.bf16.mxu0 0
      %10436 = vmatmul.mubr.bf16.gmra.mxu0 %v10355
      %v10437 = vpop.f32.mrf.mxu0
      %v10438 = vadd.f32 0.0, %v10437
      %v10439 = vpop.f32.mrf.mxu0
      %v10440 = vpop.f32.mrf.mxu0
      %v10441 = vadd.f32 0.0, %v10440
      %v10442 = vpop.f32.mrf.mxu0
      %10443 = vmatprep.mubr.bf16.mxu0 0
      %10444 = vmatmul.mubr.bf16.gmra.mxu0 %v10358
      %v10445 = vpop.f32.mrf.mxu0
      %v10446 = vadd.f32 0.0, %v10445
      %v10447 = vpop.f32.mrf.mxu0
      %v10448 = vpop.f32.mrf.mxu0
      %v10449 = vadd.f32 0.0, %v10448
      %v10450 = vpop.f32.mrf.mxu0
      %10451 = vmatprep.mubr.bf16.mxu0 0
      %10452 = vmatmul.mubr.bf16.gmra.mxu0 %v10361
      %v10453 = vpop.f32.mrf.mxu0
      %v10454 = vadd.f32 0.0, %v10453
      %v10455 = vpop.f32.mrf.mxu0
      %v10456 = vpop.f32.mrf.mxu0
      %v10457 = vadd.f32 0.0, %v10456
      %v10458 = vpop.f32.mrf.mxu0
      %10459 = vdwg.mxu0
      %v10460 = vadd.f32 %v10186, %v10398
      %v10461 = vadd.f32 %v10187, %v10401
      %v10462 = vadd.f32 %v10188, %v10406
      %v10463 = vadd.f32 %v10189, %v10409
      %v10464 = vadd.f32 %v10190, %v10414
      %v10465 = vadd.f32 %v10191, %v10417
      %v10466 = vadd.f32 %v10192, %v10422
      %v10467 = vadd.f32 %v10193, %v10425
      %v10468 = vadd.f32 %v10194, %v10430
      %v10469 = vadd.f32 %v10195, %v10433
      %v10470 = vadd.f32 %v10196, %v10438
      %v10471 = vadd.f32 %v10197, %v10441
      %v10472 = vadd.f32 %v10198, %v10446
      %v10473 = vadd.f32 %v10199, %v10449
      %v10474 = vadd.f32 %v10200, %v10454
      %v10475 = vadd.f32 %v10201, %v10457
      %s10476 = scalar_lea.vmem %s12, 64
      %v10477 = vld [vmem:[%s10476] sm:$0xf]
      %v10478 = vld [vmem:[%s10476 + $0x4] sm:$0x1]
      %v10481 = vunpack.c.l.b16 %v10477
      %v10482 = vunpack.c.l.b16 %v10478
      %v10483 = vpack.c.b16 %v10482, %v10481
      %v10485 = vand.u32 %v10483, %v4980
      %10487 = vmatprep.subr.bf16.mxu0 0
      %10488 = vmatpush1.bf16.msra.mxu0 0
      %10489 = vmatprep.subr.bf16.mxu0 0
      %10490 = vmatpush1.bf16.msra.mxu0 0
      %10491 = vmatprep.subr.bf16.mxu0 0
      %10492 = vmatpush1.bf16.msra.mxu0 0
      %10493 = vmatprep.subr.bf16.mxu0 0
      %10494 = vmatpush1.bf16.msra.mxu0 0
      %10495 = vmatprep.subr.bf16.mxu0 0
      %10496 = vmatpush1.bf16.msra.mxu0 0
      %10497 = vmatprep.subr.bf16.mxu0 0
      %10498 = vmatpush1.bf16.msra.mxu0 0
      %10499 = vmatprep.subr.bf16.mxu0 0
      %10500 = vmatpush1.bf16.msra.mxu0 0
      %10501 = vmatprep.subr.bf16.mxu0 0
      %10502 = vmatpush1.bf16.msra.mxu0 %v10485
      %10503 = vmatprep.subr.bf16.mxu0 0
      %10504 = vmatpush2.bf16.msra.mxu0 0
      %10505 = vmatprep.subr.bf16.mxu0 0
      %10506 = vmatpush2.bf16.msra.mxu0 0
      %10507 = vmatprep.subr.bf16.mxu0 0
      %10508 = vmatpush2.bf16.msra.mxu0 0
      %10509 = vmatprep.subr.bf16.mxu0 0
      %10510 = vmatpush2.bf16.msra.mxu0 0
      %10511 = vmatprep.subr.bf16.mxu0 0
      %10512 = vmatpush2.bf16.msra.mxu0 0
      %10513 = vmatprep.subr.bf16.mxu0 0
      %10514 = vmatpush2.bf16.msra.mxu0 0
      %10515 = vmatprep.subr.bf16.mxu0 0
      %10516 = vmatpush2.bf16.msra.mxu0 0
      %10517 = vmatprep.subr.bf16.mxu0 0
      %10518 = vmatpush2.bf16.msra.mxu0 0
      %10519 = vmatprep.mubr.bf16.mxu0 0
      %10520 = vmatmul.mubr.bf16.gmra.mxu0 %v8313
      %v10521 = vpop.f32.mrf.mxu0
      %v10522 = vadd.f32 0.0, %v10521
      %v10523 = vpop.f32.mrf.mxu0
      %v10524 = vpop.f32.mrf.mxu0
      %v10525 = vadd.f32 0.0, %v10524
      %v10526 = vpop.f32.mrf.mxu0
      %10527 = vmatprep.mubr.bf16.mxu0 0
      %10528 = vmatmul.mubr.bf16.gmra.mxu0 %v8316
      %v10529 = vpop.f32.mrf.mxu0
      %v10530 = vadd.f32 0.0, %v10529
      %v10531 = vpop.f32.mrf.mxu0
      %v10532 = vpop.f32.mrf.mxu0
      %v10533 = vadd.f32 0.0, %v10532
      %v10534 = vpop.f32.mrf.mxu0
      %10535 = vmatprep.mubr.bf16.mxu0 0
      %10536 = vmatmul.mubr.bf16.gmra.mxu0 %v8319
      %v10537 = vpop.f32.mrf.mxu0
      %v10538 = vadd.f32 0.0, %v10537
      %v10539 = vpop.f32.mrf.mxu0
      %v10540 = vpop.f32.mrf.mxu0
      %v10541 = vadd.f32 0.0, %v10540
      %v10542 = vpop.f32.mrf.mxu0
      %10543 = vmatprep.mubr.bf16.mxu0 0
      %10544 = vmatmul.mubr.bf16.gmra.mxu0 %v8322
      %v10545 = vpop.f32.mrf.mxu0
      %v10546 = vadd.f32 0.0, %v10545
      %v10547 = vpop.f32.mrf.mxu0
      %v10548 = vpop.f32.mrf.mxu0
      %v10549 = vadd.f32 0.0, %v10548
      %v10550 = vpop.f32.mrf.mxu0
      %10551 = vdwg.mxu0
      %s10552 = scalar_lea.vmem %s13, 512
      %v10553 = vld [vmem:[%s10552] sm:$0xf]
      %v10554 = vld [vmem:[%s10552 + $0x4] sm:$0xf]
      %v10555 = vld [vmem:[%s10552 + $0x8] sm:$0xf]
      %v10556 = vld [vmem:[%s10552 + $0xc] sm:$0xf]
      %v10557 = vld [vmem:[%s10552 + $0x10] sm:$0xf]
      %v10558 = vld [vmem:[%s10552 + $0x14] sm:$0xf]
      %v10559 = vld [vmem:[%s10552 + $0x18] sm:$0xf]
      %v10560 = vld [vmem:[%s10552 + $0x1c] sm:$0xf]
      %v10561 = vld [vmem:[%s10552 + $0x20] sm:$0xf]
      %v10562 = vld [vmem:[%s10552 + $0x24] sm:$0xf]
      %v10563 = vld [vmem:[%s10552 + $0x28] sm:$0xf]
      %v10564 = vld [vmem:[%s10552 + $0x2c] sm:$0xf]
      %v10565 = vld [vmem:[%s10552 + $0x30] sm:$0xf]
      %v10566 = vld [vmem:[%s10552 + $0x34] sm:$0xf]
      %v10567 = vld [vmem:[%s10552 + $0x38] sm:$0xf]
      %v10568 = vld [vmem:[%s10552 + $0x3c] sm:$0xf]
      %v10569 = vpack.c.bf16 %v10525, %v10522
      %v10570 = vpack.c.bf16 %v10533, %v10530
      %v10571 = vpack.c.bf16 %v10541, %v10538
      %v10572 = vpack.c.bf16 %v10549, %v10546
      %v10589 = vunpack.c.l.b16 %v10553
      %v10590 = vunpack.c.l.b16 %v10554
      %v10591 = vunpack.c.l.b16 %v10555
      %v10592 = vunpack.c.l.b16 %v10556
      %v10593 = vunpack.c.l.b16 %v10557
      %v10594 = vunpack.c.l.b16 %v10558
      %v10595 = vunpack.c.l.b16 %v10559
      %v10596 = vunpack.c.l.b16 %v10560
      %v10597 = vunpack.c.l.b16 %v10561
      %v10598 = vunpack.c.l.b16 %v10562
      %v10599 = vunpack.c.l.b16 %v10563
      %v10600 = vunpack.c.l.b16 %v10564
      %v10601 = vunpack.c.l.b16 %v10565
      %v10602 = vunpack.c.l.b16 %v10566
      %v10603 = vunpack.c.l.b16 %v10567
      %v10604 = vunpack.c.l.b16 %v10568
      %v10605 = vpack.c.b16 %v10590, %v10589
      %v10606 = vpack.c.b16 %v10592, %v10591
      %v10607 = vpack.c.b16 %v10594, %v10593
      %v10608 = vpack.c.b16 %v10596, %v10595
      %v10609 = vpack.c.b16 %v10598, %v10597
      %v10610 = vpack.c.b16 %v10600, %v10599
      %v10611 = vpack.c.b16 %v10602, %v10601
      %v10612 = vpack.c.b16 %v10604, %v10603
      %v10614 = vsel %vm8549, %v10605, 0
      %v10617 = vsel %vm8549, %v10606, 0
      %v10620 = vsel %vm8549, %v10607, 0
      %v10623 = vsel %vm8549, %v10608, 0
      %v10626 = vsel %vm8549, %v10609, 0
      %v10629 = vsel %vm8549, %v10610, 0
      %v10632 = vsel %vm8549, %v10611, 0
      %v10635 = vsel %vm8549, %v10612, 0
      %10637 = vmatprep.subr.bf16.mxu0 0
      %10638 = vmatpush1.bf16.msra.mxu0 0
      %10639 = vmatprep.subr.bf16.mxu0 0
      %10640 = vmatpush1.bf16.msra.mxu0 0
      %10641 = vmatprep.subr.bf16.mxu0 0
      %10642 = vmatpush1.bf16.msra.mxu0 0
      %10643 = vmatprep.subr.bf16.mxu0 0
      %10644 = vmatpush1.bf16.msra.mxu0 0
      %10645 = vmatprep.subr.bf16.mxu0 0
      %10646 = vmatpush1.bf16.msra.mxu0 %v10572
      %10647 = vmatprep.subr.bf16.mxu0 0
      %10648 = vmatpush1.bf16.msra.mxu0 %v10571
      %10649 = vmatprep.subr.bf16.mxu0 0
      %10650 = vmatpush1.bf16.msra.mxu0 %v10570
      %10651 = vmatprep.subr.bf16.mxu0 0
      %10652 = vmatpush1.bf16.msra.mxu0 %v10569
      %10653 = vmatprep.subr.bf16.mxu0 0
      %10654 = vmatpush2.bf16.msra.mxu0 0
      %10655 = vmatprep.subr.bf16.mxu0 0
      %10656 = vmatpush2.bf16.msra.mxu0 0
      %10657 = vmatprep.subr.bf16.mxu0 0
      %10658 = vmatpush2.bf16.msra.mxu0 0
      %10659 = vmatprep.subr.bf16.mxu0 0
      %10660 = vmatpush2.bf16.msra.mxu0 0
      %10661 = vmatprep.subr.bf16.mxu0 0
      %10662 = vmatpush2.bf16.msra.mxu0 0
      %10663 = vmatprep.subr.bf16.mxu0 0
      %10664 = vmatpush2.bf16.msra.mxu0 0
      %10665 = vmatprep.subr.bf16.mxu0 0
      %10666 = vmatpush2.bf16.msra.mxu0 0
      %10667 = vmatprep.subr.bf16.mxu0 0
      %10668 = vmatpush2.bf16.msra.mxu0 0
      %10669 = vmatprep.mubr.bf16.mxu0 0
      %10670 = vmatmul.mubr.bf16.gmra.mxu0 %v10614
      %v10671 = vpop.f32.mrf.mxu0
      %v10672 = vadd.f32 0.0, %v10671
      %v10673 = vpop.f32.mrf.mxu0
      %v10674 = vpop.f32.mrf.mxu0
      %v10675 = vadd.f32 0.0, %v10674
      %v10676 = vpop.f32.mrf.mxu0
      %10677 = vmatprep.mubr.bf16.mxu0 0
      %10678 = vmatmul.mubr.bf16.gmra.mxu0 %v10617
      %v10679 = vpop.f32.mrf.mxu0
      %v10680 = vadd.f32 0.0, %v10679
      %v10681 = vpop.f32.mrf.mxu0
      %v10682 = vpop.f32.mrf.mxu0
      %v10683 = vadd.f32 0.0, %v10682
      %v10684 = vpop.f32.mrf.mxu0
      %10685 = vmatprep.mubr.bf16.mxu0 0
      %10686 = vmatmul.mubr.bf16.gmra.mxu0 %v10620
      %v10687 = vpop.f32.mrf.mxu0
      %v10688 = vadd.f32 0.0, %v10687
      %v10689 = vpop.f32.mrf.mxu0
      %v10690 = vpop.f32.mrf.mxu0
      %v10691 = vadd.f32 0.0, %v10690
      %v10692 = vpop.f32.mrf.mxu0
      %10693 = vmatprep.mubr.bf16.mxu0 0
      %10694 = vmatmul.mubr.bf16.gmra.mxu0 %v10623
      %v10695 = vpop.f32.mrf.mxu0
      %v10696 = vadd.f32 0.0, %v10695
      %v10697 = vpop.f32.mrf.mxu0
      %v10698 = vpop.f32.mrf.mxu0
      %v10699 = vadd.f32 0.0, %v10698
      %v10700 = vpop.f32.mrf.mxu0
      %10701 = vmatprep.mubr.bf16.mxu0 0
      %10702 = vmatmul.mubr.bf16.gmra.mxu0 %v10626
      %v10703 = vpop.f32.mrf.mxu0
      %v10704 = vadd.f32 0.0, %v10703
      %v10705 = vpop.f32.mrf.mxu0
      %v10706 = vpop.f32.mrf.mxu0
      %v10707 = vadd.f32 0.0, %v10706
      %v10708 = vpop.f32.mrf.mxu0
      %10709 = vmatprep.mubr.bf16.mxu0 0
      %10710 = vmatmul.mubr.bf16.gmra.mxu0 %v10629
      %v10711 = vpop.f32.mrf.mxu0
      %v10712 = vadd.f32 0.0, %v10711
      %v10713 = vpop.f32.mrf.mxu0
      %v10714 = vpop.f32.mrf.mxu0
      %v10715 = vadd.f32 0.0, %v10714
      %v10716 = vpop.f32.mrf.mxu0
      %10717 = vmatprep.mubr.bf16.mxu0 0
      %10718 = vmatmul.mubr.bf16.gmra.mxu0 %v10632
      %v10719 = vpop.f32.mrf.mxu0
      %v10720 = vadd.f32 0.0, %v10719
      %v10721 = vpop.f32.mrf.mxu0
      %v10722 = vpop.f32.mrf.mxu0
      %v10723 = vadd.f32 0.0, %v10722
      %v10724 = vpop.f32.mrf.mxu0
      %10725 = vmatprep.mubr.bf16.mxu0 0
      %10726 = vmatmul.mubr.bf16.gmra.mxu0 %v10635
      %v10727 = vpop.f32.mrf.mxu0
      %v10728 = vadd.f32 0.0, %v10727
      %v10729 = vpop.f32.mrf.mxu0
      %v10730 = vpop.f32.mrf.mxu0
      %v10731 = vadd.f32 0.0, %v10730
      %v10732 = vpop.f32.mrf.mxu0
      %10733 = vdwg.mxu0
      %v10734 = vadd.f32 %v10460, %v10672
      %v10735 = vadd.f32 %v10461, %v10675
      %v10736 = vadd.f32 %v10462, %v10680
      %v10737 = vadd.f32 %v10463, %v10683
      %v10738 = vadd.f32 %v10464, %v10688
      %v10739 = vadd.f32 %v10465, %v10691
      %v10740 = vadd.f32 %v10466, %v10696
      %v10741 = vadd.f32 %v10467, %v10699
      %v10742 = vadd.f32 %v10468, %v10704
      %v10743 = vadd.f32 %v10469, %v10707
      %v10744 = vadd.f32 %v10470, %v10712
      %v10745 = vadd.f32 %v10471, %v10715
      %v10746 = vadd.f32 %v10472, %v10720
      %v10747 = vadd.f32 %v10473, %v10723
      %v10748 = vadd.f32 %v10474, %v10728
      %v10749 = vadd.f32 %v10475, %v10731
      %v10750 = vld [vmem:[%s14] sm:$0xff]
      %v10751 = vld [vmem:[%s14 + $0x8] sm:$0xff]
      %v10752 = vld [vmem:[%s14 + $0x10] sm:$0xff]
      %v10753 = vld [vmem:[%s14 + $0x18] sm:$0xff]
      %v10754 = vld [vmem:[%s14 + $0x20] sm:$0xff]
      %v10755 = vld [vmem:[%s14 + $0x28] sm:$0xff]
      %v10756 = vld [vmem:[%s14 + $0x30] sm:$0xff]
      %v10757 = vld [vmem:[%s14 + $0x38] sm:$0xff]
      %v10758 = vld [vmem:[%s14 + $0x40] sm:$0xff]
      %v10759 = vld [vmem:[%s14 + $0x48] sm:$0xff]
      %v10760 = vld [vmem:[%s14 + $0x50] sm:$0xff]
      %v10761 = vld [vmem:[%s14 + $0x58] sm:$0xff]
      %v10762 = vld [vmem:[%s14 + $0x60] sm:$0xff]
      %v10763 = vld [vmem:[%s14 + $0x68] sm:$0xff]
      %v10764 = vld [vmem:[%s14 + $0x70] sm:$0xff]
      %v10765 = vld [vmem:[%s14 + $0x78] sm:$0xff]
      %v10766 = vadd.f32 %v10734, %v10750
      %v10767 = vadd.f32 %v10735, %v10751
      %v10768 = vadd.f32 %v10736, %v10752
      %v10769 = vadd.f32 %v10737, %v10753
      %v10770 = vadd.f32 %v10738, %v10754
      %v10771 = vadd.f32 %v10739, %v10755
      %v10772 = vadd.f32 %v10740, %v10756
      %v10773 = vadd.f32 %v10741, %v10757
      %v10774 = vadd.f32 %v10742, %v10758
      %v10775 = vadd.f32 %v10743, %v10759
      %v10776 = vadd.f32 %v10744, %v10760
      %v10777 = vadd.f32 %v10745, %v10761
      %v10778 = vadd.f32 %v10746, %v10762
      %v10779 = vadd.f32 %v10747, %v10763
      %v10780 = vadd.f32 %v10748, %v10764
      %v10781 = vadd.f32 %v10749, %v10765
      %v10782 = vmax.f32 %v10766, 0.0
      %v10783 = vmax.f32 %v10767, 0.0
      %v10784 = vmax.f32 %v10768, 0.0
      %v10785 = vmax.f32 %v10769, 0.0
      %v10786 = vmax.f32 %v10770, 0.0
      %v10787 = vmax.f32 %v10771, 0.0
      %v10788 = vmax.f32 %v10772, 0.0
      %v10789 = vmax.f32 %v10773, 0.0
      %v10790 = vmax.f32 %v10774, 0.0
      %v10791 = vmax.f32 %v10775, 0.0
      %v10792 = vmax.f32 %v10776, 0.0
      %v10793 = vmax.f32 %v10777, 0.0
      %v10794 = vmax.f32 %v10778, 0.0
      %v10795 = vmax.f32 %v10779, 0.0
      %v10796 = vmax.f32 %v10780, 0.0
      %v10797 = vmax.f32 %v10781, 0.0
      %v10798 = vpack.c.bf16 %v10783, %v10782
      %v10799 = vpack.c.bf16 %v10785, %v10784
      %v10800 = vpack.c.bf16 %v10787, %v10786
      %v10801 = vpack.c.bf16 %v10789, %v10788
      %v10802 = vpack.c.bf16 %v10791, %v10790
      %v10803 = vpack.c.bf16 %v10793, %v10792
      %v10804 = vpack.c.bf16 %v10795, %v10794
      %v10805 = vpack.c.bf16 %v10797, %v10796
      %v10806 = vld [vmem:[%s15] sm:$0xf]
      %v10807 = vld [vmem:[%s15 + $0x4] sm:$0xf]
      %v10808 = vld [vmem:[%s15 + $0x8] sm:$0xf]
      %v10809 = vld [vmem:[%s15 + $0xc] sm:$0xf]
      %v10810 = vld [vmem:[%s15 + $0x10] sm:$0xf]
      %v10811 = vld [vmem:[%s15 + $0x14] sm:$0xf]
      %v10812 = vld [vmem:[%s15 + $0x18] sm:$0xf]
      %v10813 = vld [vmem:[%s15 + $0x1c] sm:$0xf]
      %v10814 = vld [vmem:[%s15 + $0x20] sm:$0xf]
      %v10815 = vld [vmem:[%s15 + $0x24] sm:$0xf]
      %v10816 = vld [vmem:[%s15 + $0x28] sm:$0xf]
      %v10817 = vld [vmem:[%s15 + $0x2c] sm:$0xf]
      %v10818 = vld [vmem:[%s15 + $0x30] sm:$0x3]
      %v10819 = vld [vmem:[%s16] sm:$0xff]
      %v10820 = vld [vmem:[%s16 + $0x8] sm:$0xff]
      %v10821 = vld [vmem:[%s16 + $0x10] sm:$0xff]
      %v10822 = vld [vmem:[%s16 + $0x18] sm:$0xff]
      %v10823 = vld [vmem:[%s16 + $0x20] sm:$0xff]
      %v10824 = vld [vmem:[%s16 + $0x28] sm:$0xff]
      %v10825 = vld [vmem:[%s16 + $0x30] sm:$0xff]
      %v10826 = vld [vmem:[%s16 + $0x38] sm:$0xff]
      %v10827 = vld [vmem:[%s16 + $0x40] sm:$0xff]
      %v10828 = vld [vmem:[%s16 + $0x48] sm:$0xff]
      %v10829 = vld [vmem:[%s16 + $0x50] sm:$0xff]
      %v10830 = vld [vmem:[%s16 + $0x58] sm:$0xff]
      %v10831 = vld [vmem:[%s16 + $0x60] sm:$0xf]
      %v10845 = vunpack.c.l.b16 %v10806
      %v10846 = vunpack.c.l.b16 %v10807
      %v10847 = vunpack.c.l.b16 %v10808
      %v10848 = vunpack.c.l.b16 %v10809
      %v10849 = vunpack.c.l.b16 %v10810
      %v10850 = vunpack.c.l.b16 %v10811
      %v10851 = vunpack.c.l.b16 %v10812
      %v10852 = vunpack.c.l.b16 %v10813
      %v10853 = vunpack.c.l.b16 %v10814
      %v10854 = vunpack.c.l.b16 %v10815
      %v10855 = vunpack.c.l.b16 %v10816
      %v10856 = vunpack.c.l.b16 %v10817
      %v10857 = vunpack.c.l.b16 %v10818
      %v10858 = vpack.c.b16 %v10846, %v10845
      %v10859 = vpack.c.b16 %v10848, %v10847
      %v10860 = vpack.c.b16 %v10850, %v10849
      %v10861 = vpack.c.b16 %v10852, %v10851
      %v10862 = vpack.c.b16 %v10854, %v10853
      %v10863 = vpack.c.b16 %v10856, %v10855
      %v10864 = vpack.c.b16 %v10857, %v10857
      %10872 = vmatprep.subr.bf16.mxu0 0
      %10873 = vmatpush1.bf16.msra.mxu0 %v10805
      %10874 = vmatprep.subr.bf16.mxu0 0
      %10875 = vmatpush1.bf16.msra.mxu0 %v10804
      %10876 = vmatprep.subr.bf16.mxu0 0
      %10877 = vmatpush1.bf16.msra.mxu0 %v10803
      %10878 = vmatprep.subr.bf16.mxu0 0
      %10879 = vmatpush1.bf16.msra.mxu0 %v10802
      %10880 = vmatprep.subr.bf16.mxu0 0
      %10881 = vmatpush1.bf16.msra.mxu0 %v10801
      %10882 = vmatprep.subr.bf16.mxu0 0
      %10883 = vmatpush1.bf16.msra.mxu0 %v10800
      %10884 = vmatprep.subr.bf16.mxu0 0
      %10885 = vmatpush1.bf16.msra.mxu0 %v10799
      %10886 = vmatprep.subr.bf16.mxu0 0
      %10887 = vmatpush1.bf16.msra.mxu0 %v10798
      %10888 = vmatprep.subr.bf16.mxu0 0
      %10889 = vmatpush2.bf16.msra.mxu0 0
      %10890 = vmatprep.subr.bf16.mxu0 0
      %10891 = vmatpush2.bf16.msra.mxu0 0
      %10892 = vmatprep.subr.bf16.mxu0 0
      %10893 = vmatpush2.bf16.msra.mxu0 0
      %10894 = vmatprep.subr.bf16.mxu0 0
      %10895 = vmatpush2.bf16.msra.mxu0 0
      %10896 = vmatprep.subr.bf16.mxu0 0
      %10897 = vmatpush2.bf16.msra.mxu0 0
      %10898 = vmatprep.subr.bf16.mxu0 0
      %10899 = vmatpush2.bf16.msra.mxu0 0
      %10900 = vmatprep.subr.bf16.mxu0 0
      %10901 = vmatpush2.bf16.msra.mxu0 0
      %10902 = vmatprep.subr.bf16.mxu0 0
      %10903 = vmatpush2.bf16.msra.mxu0 0
      %10904 = vmatprep.mubr.bf16.mxu0 0
      %10905 = vmatmul.mubr.bf16.gmra.mxu0 %v10858
      %v10906 = vpop.f32.mrf.mxu0
      %v10907 = vadd.f32 %v10819, %v10906
      %v10908 = vpop.f32.mrf.mxu0
      %v10909 = vpop.f32.mrf.mxu0
      %v10910 = vadd.f32 %v10820, %v10909
      %v10911 = vpop.f32.mrf.mxu0
      %10912 = vmatprep.mubr.bf16.mxu0 0
      %10913 = vmatmul.mubr.bf16.gmra.mxu0 %v10859
      %v10914 = vpop.f32.mrf.mxu0
      %v10915 = vadd.f32 %v10821, %v10914
      %v10916 = vpop.f32.mrf.mxu0
      %v10917 = vpop.f32.mrf.mxu0
      %v10918 = vadd.f32 %v10822, %v10917
      %v10919 = vpop.f32.mrf.mxu0
      %10920 = vmatprep.mubr.bf16.mxu0 0
      %10921 = vmatmul.mubr.bf16.gmra.mxu0 %v10860
      %v10922 = vpop.f32.mrf.mxu0
      %v10923 = vadd.f32 %v10823, %v10922
      %v10924 = vpop.f32.mrf.mxu0
      %v10925 = vpop.f32.mrf.mxu0
      %v10926 = vadd.f32 %v10824, %v10925
      %v10927 = vpop.f32.mrf.mxu0
      %10928 = vmatprep.mubr.bf16.mxu0 0
      %10929 = vmatmul.mubr.bf16.gmra.mxu0 %v10861
      %v10930 = vpop.f32.mrf.mxu0
      %v10931 = vadd.f32 %v10825, %v10930
      %v10932 = vpop.f32.mrf.mxu0
      %v10933 = vpop.f32.mrf.mxu0
      %v10934 = vadd.f32 %v10826, %v10933
      %v10935 = vpop.f32.mrf.mxu0
      %10936 = vmatprep.mubr.bf16.mxu0 0
      %10937 = vmatmul.mubr.bf16.gmra.mxu0 %v10862
      %v10938 = vpop.f32.mrf.mxu0
      %v10939 = vadd.f32 %v10827, %v10938
      %v10940 = vpop.f32.mrf.mxu0
      %v10941 = vpop.f32.mrf.mxu0
      %v10942 = vadd.f32 %v10828, %v10941
      %v10943 = vpop.f32.mrf.mxu0
      %10944 = vmatprep.mubr.bf16.mxu0 0
      %10945 = vmatmul.mubr.bf16.gmra.mxu0 %v10863
      %v10946 = vpop.f32.mrf.mxu0
      %v10947 = vadd.f32 %v10829, %v10946
      %v10948 = vpop.f32.mrf.mxu0
      %v10949 = vpop.f32.mrf.mxu0
      %v10950 = vadd.f32 %v10830, %v10949
      %v10951 = vpop.f32.mrf.mxu0
      %10952 = vmatprep.mubr.bf16.mxu0 0
      %10953 = vmatmul.mubr.bf16.gmra.mxu0 %v10864
      %v10954 = vpop.f32.mrf.mxu0
      %v10955 = vadd.f32 %v10831, %v10954
      %v10956 = vpop.f32.mrf.mxu0
      %v10957 = vpop.f32.mrf.mxu0
      %v10958 = vpop.f32.mrf.mxu0
      %10959 = vdwg.mxu0
      %v10960 = vmax.f32 %v10907, 0.0
      %v10961 = vmax.f32 %v10910, 0.0
      %v10962 = vmax.f32 %v10915, 0.0
      %v10963 = vmax.f32 %v10918, 0.0
      %v10964 = vmax.f32 %v10923, 0.0
      %v10965 = vmax.f32 %v10926, 0.0
      %v10966 = vmax.f32 %v10931, 0.0
      %v10967 = vmax.f32 %v10934, 0.0
      %v10968 = vmax.f32 %v10939, 0.0
      %v10969 = vmax.f32 %v10942, 0.0
      %v10970 = vmax.f32 %v10947, 0.0
      %v10971 = vmax.f32 %v10950, 0.0
      %v10972 = vmax.f32 %v10955, 0.0
      %v10973 = vpack.c.bf16 %v10961, %v10960
      %v10974 = vpack.c.bf16 %v10963, %v10962
      %v10975 = vpack.c.bf16 %v10965, %v10964
      %v10976 = vpack.c.bf16 %v10967, %v10966
      %v10977 = vpack.c.bf16 %v10969, %v10968
      %v10978 = vpack.c.bf16 %v10971, %v10970
      %v10979 = vpack.c.bf16 %v10972, %v10972
      %v10980 = vld [vmem:[%s17] sm:$0x1]
      %v10981 = vld [vmem:[#allocation2] sm:$0x1]
      %vm10982 = vcmask 818176
      %v10984 = vsel %vm10982, %v10980, 0
      %v10987 = vsel %vm693, %v10979, 0
      %10989 = vmatprep.subr.bf16.mxu0 0
      %10990 = vmatpush1.bf16.msra.mxu0 0
      %10991 = vmatprep.subr.bf16.mxu0 0
      %10992 = vmatpush1.bf16.msra.mxu0 %v10987
      %10993 = vmatprep.subr.bf16.mxu0 0
      %10994 = vmatpush1.bf16.msra.mxu0 %v10978
      %10995 = vmatprep.subr.bf16.mxu0 0
      %10996 = vmatpush1.bf16.msra.mxu0 %v10977
      %10997 = vmatprep.subr.bf16.mxu0 0
      %10998 = vmatpush1.bf16.msra.mxu0 %v10976
      %10999 = vmatprep.subr.bf16.mxu0 0
      %11000 = vmatpush1.bf16.msra.mxu0 %v10975
      %11001 = vmatprep.subr.bf16.mxu0 0
      %11002 = vmatpush1.bf16.msra.mxu0 %v10974
      %11003 = vmatprep.subr.bf16.mxu0 0
      %11004 = vmatpush1.bf16.msra.mxu0 %v10973
      %11005 = vmatprep.subr.bf16.mxu0 0
      %11006 = vmatpush2.bf16.msra.mxu0 0
      %11007 = vmatprep.subr.bf16.mxu0 0
      %11008 = vmatpush2.bf16.msra.mxu0 0
      %11009 = vmatprep.subr.bf16.mxu0 0
      %11010 = vmatpush2.bf16.msra.mxu0 0
      %11011 = vmatprep.subr.bf16.mxu0 0
      %11012 = vmatpush2.bf16.msra.mxu0 0
      %11013 = vmatprep.subr.bf16.mxu0 0
      %11014 = vmatpush2.bf16.msra.mxu0 0
      %11015 = vmatprep.subr.bf16.mxu0 0
      %11016 = vmatpush2.bf16.msra.mxu0 0
      %11017 = vmatprep.subr.bf16.mxu0 0
      %11018 = vmatpush2.bf16.msra.mxu0 0
      %11019 = vmatprep.subr.bf16.mxu0 0
      %11020 = vmatpush2.bf16.msra.mxu0 0
      %11021 = vmatprep.mubr.bf16.mxu0 0
      %11022 = vmatmul.mubr.bf16.gmra.mxu0 %v10984
      %v11023 = vpop.f32.mrf.mxu0
      %v11024 = vadd.f32 %v10981, %v11023
      %v11025 = vpop.f32.mrf.mxu0
      %v11026 = vpop.f32.mrf.mxu0
      %v11027 = vpop.f32.mrf.mxu0
      %11028 = vdwg.mxu0
      %vm11029 = vcmask 0
      %11030 = vst.msk [vmem:[%s600] sm:$0x1] %vm11029, %v11024
      %p11031 = scmp.lt.s32.totalorder %s32, 1
      %s11032 = scalar_select %p11031, %s32, 1
      %s11033 = scalar_lea.vmem %s19, %s11032
      // Predicated region
      $region97: #{pallas_forward.3} parent=95 // pred_check
        %p11034 = pneg %p454
      $region98: #{pallas_forward.3} parent=95 // pred_check_branch
        %11036 = sbr.rel (%p11034) target = $region100
      $region99: #{pallas_forward.3} parent=95 // pred_region
        _
      $region100: #{pallas_forward.3} parent=95 // pred_fallthru
        _
    $region96: #{pallas_forward.3} parent=5 // pred_fallthru
      _
    %p11037 = scmp.le.s32.totalorder 2, %s27
    // Predicated region
    $region101: #{pallas_forward.3} parent=5 // pred_check
      %p11038 = pneg %p11037
    $region102: #{pallas_forward.3} parent=5 // pred_check_branch
      %11040 = sbr.rel (%p11038) target = $region104
    $region103: #{pallas_forward.3} parent=5 // pred_region
      %s11041 = ssub.s32 %s27, 2
      // Predicated region
      $region105: #{pallas_forward.3} parent=103 // pred_check
        %p11042 = pneg %p460
      $region106: #{pallas_forward.3} parent=103 // pred_check_branch
        %11044 = sbr.rel (%p11042) target = $region108
      $region107: #{pallas_forward.3} parent=103 // pred_region
        %p11045 = scmp.lt.s32.totalorder %s33, 1
        %s11046 = scalar_select %p11045, %s33, 1
        %s11047 = scalar_lea.vmem %s19, %s11046
      $region108: #{pallas_forward.3} parent=103 // pred_fallthru
        _
    $region104: #{pallas_forward.3} parent=5 // pred_fallthru
      _
  $region6: #{pallas_forward.3} parent=0 // loop_footer
    %s31 = sadd.s32 1, %s27
  $region7: #{pallas_forward.3} parent=0 // loop_footer_branch
    %26 = sbr.rel target = $region3
  $region8: #{pallas_forward.3} parent=0 // loop_exit
    _

</llo_original>
